<compile_context>
chip_gen: v7x
topology: tpu7x:2x2x1
jax: 0.10.0
libtpu: 0.0.40
codegen_flags: <defaults>
</compile_context>

<pallas_src>
import functools

import jax
import jax.numpy as jnp
from jax.experimental import pallas as pl
from jax.experimental.pallas import tpu as pltpu


def _round_up(x, m):
    return (x + m - 1) // m * m


def _choose_tiles(n):
    """Pick (n_pad, tile_dst, tile_src) with (8,128)-friendly divisibility."""
    n_pad = _round_up(max(n, 256), 256)
    tile_src = 512 if n_pad >= 512 else 256
    tile_dst = 256
    n_pad = _round_up(n_pad, tile_src)
    return n_pad, tile_dst, tile_src


# ----------------------------------------------------------------------------
# Kernel 1: node projection.
#   xl = x @ W (bf16 out) ; alpha = xl @ [att_l_sel | att_r_sel]  -> [N, 2H]
# ----------------------------------------------------------------------------
def _project_kernel(x_ref, w_ref, attsel_ref, xl_ref, alpha_ref):
    xl = jnp.dot(x_ref[...], w_ref[...], preferred_element_type=jnp.float32)
    xl_bf = xl.astype(jnp.bfloat16)
    xl_ref[...] = xl_bf
    # Single merged per-head reduction (alpha_l | alpha_r) via one MXU matmul.
    alpha_ref[...] = jnp.dot(xl_bf, attsel_ref[...],
                             preferred_element_type=jnp.float32)


def _project(x_bf, w_bf, attsel_bf, *, tile_rows):
    n_pad, fin = x_bf.shape
    hc = w_bf.shape[1]
    two_heads = attsel_bf.shape[1]
    grid = (n_pad // tile_rows,)

    flops = 2 * n_pad * fin * hc + 2 * n_pad * hc * two_heads
    bytes_accessed = (2 * (n_pad * fin + fin * hc + hc * two_heads + n_pad * hc)
                      + 4 * n_pad * two_heads)

    return pl.pallas_call(
        _project_kernel,
        out_shape=(
            jax.ShapeDtypeStruct((n_pad, hc), jnp.bfloat16),
            jax.ShapeDtypeStruct((n_pad, two_heads), jnp.float32),
        ),
        grid=grid,
        in_specs=[
            pl.BlockSpec((tile_rows, fin), lambda i: (i, 0)),     # x row tile
            pl.BlockSpec((fin, hc), lambda i: (0, 0)),            # W (resident)
            pl.BlockSpec((hc, two_heads), lambda i: (0, 0)),      # att selector
        ],
        out_specs=(
            pl.BlockSpec((tile_rows, hc), lambda i: (i, 0)),
            pl.BlockSpec((tile_rows, two_heads), lambda i: (i, 0)),
        ),
        compiler_params=pltpu.CompilerParams(
            dimension_semantics=("parallel",)),
        cost_estimate=pl.CostEstimate(flops=int(flops), transcendentals=0,
                                      bytes_accessed=int(bytes_accessed)),
    )(x_bf, w_bf, attsel_bf)


# ----------------------------------------------------------------------------
# Kernel 2: edge-masked attention with online (flash-style) softmax.
# grid = (dst row tiles [parallel], src col tiles [arbitrary, last]).
# ----------------------------------------------------------------------------
def _attention_kernel(aw_ref, mask_ref, alT_ref, ar_ref, xl_ref, selT_ref,
                      bias_ref, out_ref, m_sc, l_sc, acc_sc,
                      *, heads, out_ch, negative_slope, tile_src, xl_resident):
    k = pl.program_id(1)

    @pl.when(k == 0)
    def _init():
        m_sc[...] = jnp.full(m_sc.shape, -1e30, jnp.float32)
        l_sc[...] = jnp.zeros(l_sc.shape, jnp.float32)
        acc_sc[...] = jnp.zeros(acc_sc.shape, jnp.float32)

    aw = aw_ref[...].astype(jnp.float32)          # [TM, TN] bf16 edge weights
    msk = mask_ref[...].astype(jnp.float32)       # [TM, TN] int8 -> {0,1} f32
    edge = msk > 0.0
    neg_big = jnp.float32(-1e30)
    m_prev = m_sc[...]                            # [TM, H]  (single read)

    if xl_resident:
        src0 = pl.multiple_of(k * tile_src, tile_src)

    m_news, sums, pvs = [], [], []
    for h in range(heads):                        # static unroll over heads
        a_l = alT_ref[h:h + 1, :]                 # [1, TN]  source alpha
        a_r = ar_ref[:, h:h + 1]                  # [TM, 1]  destination alpha
        s = a_r + a_l                             # [TM, TN]
        s = jnp.where(s >= 0.0, s, negative_slope * s)      # LeakyReLU
        s = s * aw                                # scale by edge weight
        s = jnp.where(edge, s, neg_big)           # mask non-edges

        m_new_h = jnp.maximum(m_prev[:, h:h + 1],
                              jnp.max(s, axis=1, keepdims=True))    # [TM, 1]
        p = jnp.exp(s - m_new_h) * msk                              # [TM, TN]
        m_news.append(m_new_h)
        sums.append(jnp.sum(p, axis=1, keepdims=True))

        lo, hi = h * out_ch, (h + 1) * out_ch
        if xl_resident:
            xl_h = xl_ref[pl.ds(src0, tile_src), lo:hi]   # [TN, C] bf16
        else:
            xl_h = xl_ref[:, lo:hi]                       # [TN, C] bf16
        pvs.append(jnp.dot(p.astype(jnp.bfloat16), xl_h,
                           preferred_element_type=jnp.float32))     # [TM, C]

    # Lane-dense batched updates (one store each per k-step).
    m_new = jnp.concatenate(m_news, axis=1)                  # [TM, H]
    scale = jnp.exp(m_prev - m_new)                          # [TM, H]
    l_sc[...] = scale * l_sc[...] + jnp.concatenate(sums, axis=1)
    m_sc[...] = m_new
    scale_full = jnp.dot(scale, selT_ref[...],
                         preferred_element_type=jnp.float32)  # [TM, H*C]
    acc_sc[...] = scale_full * acc_sc[...] + jnp.concatenate(pvs, axis=1)

    @pl.when(k == pl.num_programs(1) - 1)
    def _finalize():
        l = l_sc[...]                                         # [TM, H]
        inv_l = jnp.where(l > 0.0, pl.reciprocal(l, approx=True), 0.0)
        inv_full = jnp.dot(inv_l, selT_ref[...],
                           preferred_element_type=jnp.float32)  # [TM, H*C]
        out_ref[...] = (acc_sc[...] * inv_full
                        + bias_ref[...]).astype(out_ref.dtype)


def _attention(aw_p, mask_p, al_t, ar, xl, sel_t, bias_row, *,
               heads, out_ch, negative_slope, tile_dst, tile_src, xl_resident):
    n_pad = aw_p.shape[0]
    hc = heads * out_ch
    grid = (n_pad // tile_dst, n_pad // tile_src)

    kernel = functools.partial(_attention_kernel, heads=heads, out_ch=out_ch,
                               negative_slope=negative_slope,
                               tile_src=tile_src, xl_resident=xl_resident)

    if xl_resident:
        # xl is fetched once and stays in VMEM for the whole pass.
        xl_spec = pl.BlockSpec((n_pad, hc), lambda i, k: (0, 0))
        xl_bytes = n_pad * hc * 2
    else:
        xl_spec = pl.BlockSpec((tile_src, hc), lambda i, k: (k, 0))
        xl_bytes = grid[0] * n_pad * hc * 2

    flops = n_pad * n_pad * heads * (8 + 2 * out_ch)
    transcendentals = n_pad * n_pad * heads
    bytes_accessed = (3 * n_pad * n_pad            # bf16 aw + int8 mask
                      + xl_bytes
                      + 4 * n_pad * hc             # output
                      + 3 * 4 * n_pad * heads)     # alphas

    # TODO(synk): if xprof still shows exposed DMA on the aw/mask streams,
    # deepen their pipelining with pipeline_mode=pl.Buffered(3).
    return pl.pallas_call(
        kernel,
        out_shape=jax.ShapeDtypeStruct((n_pad, hc), jnp.float32),
        grid=grid,
        in_specs=[
            pl.BlockSpec((tile_dst, tile_src), lambda i, k: (i, k)),  # bf16 weights
            pl.BlockSpec((tile_dst, tile_src), lambda i, k: (i, k)),  # int8 mask
            pl.BlockSpec((heads, tile_src), lambda i, k: (0, k)),     # alpha_l^T
            pl.BlockSpec((tile_dst, heads), lambda i, k: (i, 0)),     # alpha_r
            xl_spec,                                                  # xl (bf16)
            pl.BlockSpec((heads, hc), lambda i, k: (0, 0)),           # head selector
            pl.BlockSpec((1, hc), lambda i, k: (0, 0)),               # bias
        ],
        out_specs=pl.BlockSpec((tile_dst, hc), lambda i, k: (i, 0)),
        scratch_shapes=[
            pltpu.VMEM((tile_dst, heads), jnp.float32),   # running max
            pltpu.VMEM((tile_dst, heads), jnp.float32),   # running denom
            pltpu.VMEM((tile_dst, hc), jnp.float32),      # running numerator
        ],
        compiler_params=pltpu.CompilerParams(
            dimension_semantics=("parallel", "arbitrary")),
        cost_estimate=pl.CostEstimate(flops=int(flops),
                                      transcendentals=int(transcendentals),
                                      bytes_accessed=int(bytes_accessed)),
    )(aw_p, mask_p, al_t, ar, xl, sel_t, bias_row)


# ----------------------------------------------------------------------------
# One SimAttConv layer (eval mode).
# ----------------------------------------------------------------------------
def sim_att_conv(h, aw_p, mask_p, params, *, heads, out_ch, negative_slope,
                 concat, tile_dst, tile_src):
    w = params["w"]            # [F_in, H*C]  (== torch lin_l.weight.T)
    att_l = params["att_l"]    # [H, C]
    att_r = params["att_r"]    # [H, C]
    bias = params["bias"]      # [H*C] if concat else [C]
    hc = heads * out_ch
    n_pad = h.shape[0]

    # Selector sel_t[h, h*C + c] = 1; merged [H*C, 2H] attention selector.
    sel_t = jnp.repeat(jnp.eye(heads, dtype=jnp.float32), out_ch, axis=1)
    attl_mat = sel_t.T * att_l.reshape(hc, 1)     # [H*C, H]
    attr_mat = sel_t.T * att_r.reshape(hc, 1)     # [H*C, H]
    attsel = jnp.concatenate([attl_mat, attr_mat], axis=1).astype(jnp.bfloat16)

    # Project (bf16 operands pre-cast once here; tile_rows decoupled from dst).
    tile_rows = min(512, n_pad)
    xl, alpha = _project(h.astype(jnp.bfloat16), w.astype(jnp.bfloat16),
                         attsel, tile_rows=tile_rows)
    al_t = alpha[:, :heads].T                     # [H, N_pad] (tiny transpose)
    ar = alpha[:, heads:2 * heads]                # [N_pad, H]

    if concat:
        bias_row = bias.reshape(1, hc).astype(jnp.float32)
    else:
        bias_row = jnp.zeros((1, hc), jnp.float32)

    # Keep xl VMEM-resident across the whole attention pass when it fits.
    xl_resident = (n_pad * hc * 2) <= (4 * 1024 * 1024)

    out = _attention(aw_p, mask_p, al_t, ar, xl, sel_t, bias_row,
                     heads=heads, out_ch=out_ch,
                     negative_slope=negative_slope,
                     tile_dst=tile_dst, tile_src=tile_src,
                     xl_resident=xl_resident)

    if not concat:
        # Head-averaging epilogue (cheap, done in the wrapper).
        out = out.reshape(n_pad, heads, out_ch).mean(axis=1) + bias.reshape(1, out_ch)
    return out


# ----------------------------------------------------------------------------
# guideEncoder_body forward: stack of SimAttConv layers.
# ----------------------------------------------------------------------------
def guide_encoder_body_forward(x, edge_index, edge_weight, layer_params, *,
                               heads, negative_slope, concat):
    n = x.shape[0]
    n_pad, tile_dst, tile_src = _choose_tiles(n)

    src = edge_index[0]
    dst = edge_index[1]
    # Dense adjacency glue (row = destination, col = source):
    #   aw  : bf16 summed edge weights (accumulated in f32, then cast),
    #   mask: int8 {0,1} edge indicator (kept separate so zero-weight edges
    #         still participate in the softmax, matching the reference).
    aw = (jnp.zeros((n_pad, n_pad), jnp.float32)
          .at[dst, src].add(edge_weight)).astype(jnp.bfloat16)
    mask = (jnp.zeros((n_pad, n_pad), jnp.float32)
            .at[dst, src].max(jnp.ones(src.shape, jnp.float32))
            ).astype(jnp.int8)

    h = jnp.pad(x.astype(jnp.float32), ((0, n_pad - n), (0, 0)))
    for lp in layer_params:
        out_ch = lp["att_l"].shape[1]
        h = sim_att_conv(h, aw, mask, lp, heads=heads, out_ch=out_ch,
                         negative_slope=negative_slope, concat=concat,
                         tile_dst=tile_dst, tile_src=tile_src)
        # `.flatten(1)` in the reference is a no-op on the 2-D per-layer output.
    return h[:n]


# ----------------------------------------------------------------------------
# Parameter init (glorot for weights/attention vectors, zeros for bias).
# ----------------------------------------------------------------------------
def init_layer_params(key, fin, out_ch, heads, concat):
    k1, k2, k3 = jax.random.split(key, 3)
    hc = heads * out_ch

    def glorot(k, shape, fan_in, fan_out):
        lim = jnp.sqrt(6.0 / (fan_in + fan_out))
        return jax.random.uniform(k, shape, jnp.float32, -lim, lim)

    w = glorot(k1, (fin, hc), fin, hc)
    att_l = glorot(k2, (heads, out_ch), out_ch, out_ch)
    att_r = glorot(k3, (heads, out_ch), out_ch, out_ch)
    bias = jnp.zeros((hc if concat else out_ch,), jnp.float32)
    return {"w": w, "att_l": att_l, "att_r": att_r, "bias": bias}


if __name__ == "__main__":
    key = jax.random.PRNGKey(0)
    k_x, k_w, k_params = jax.random.split(key, 3)

    num_layers = 2
    num_nodes = 200
    nfeat = 16
    nhid = 32
    heads = 4            # heads * nhid = 128 -> lane-dense layer outputs
    concat = True
    negative_slope = 0.2
    # dropout on attention coefficients is train-time only (eval forward here).

    x = jax.random.normal(k_x, (num_nodes, nfeat), jnp.float32)

    # Deterministic sparse graph: each node i sends edges to i+{1,3,7,11} mod N
    # (no self loops, no duplicate edges).
    offsets = jnp.array([1, 3, 7, 11], dtype=jnp.int32)
    src = jnp.repeat(jnp.arange(num_nodes, dtype=jnp.int32), offsets.shape[0])
    dst = (src + jnp.tile(offsets, num_nodes)) % num_nodes
    edge_index = jnp.stack([src, dst], axis=0)
    edge_weight = jax.random.uniform(k_w, (src.shape[0],), jnp.float32, 0.5, 1.5)

    keys = jax.random.split(k_params, num_layers)
    layer_params = []
    fin_l = nfeat
    for l in range(num_layers):
        layer_params.append(init_layer_params(keys[l], fin_l, nhid, heads, concat))
        fin_l = nhid * heads if concat else nhid

    fwd = jax.jit(functools.partial(
        guide_encoder_body_forward, heads=heads,
        negative_slope=negative_slope, concat=concat))

    logits = fwd(x, edge_index, edge_weight, layer_params)
    logits = jax.block_until_ready(logits)

    out_dim = nhid * heads if concat else nhid
    assert logits.shape == (num_nodes, out_dim)
    assert bool(jnp.all(jnp.isfinite(logits)))
    print("KERNEL_OK")
</pallas_src>

<mosaic_0001>
module attributes {stable_mosaic.version = 11 : i64} {
  func.func private @main(%arg0: i32) attributes {dimension_semantics = [#tpu.dimension_semantics<core_parallel>], iteration_bounds = array<i64: 2>, tpu.core_type = #tpu.core_type<sc_scalar_subcore>, window_params = []} {
    return
  }
}

module attributes {stable_mosaic.version = 11 : i64} {
  func.func private @main(%arg0: i32) attributes {dimension_semantics = [#tpu.dimension_semantics<core_parallel>], iteration_bounds = array<i64: 2>, tpu.core_type = #tpu.core_type<sc_scalar_subcore>, window_params = []} {
    return
  }
}

module attributes {stable_mosaic.version = 11 : i64} {
  func.func @_project_kernel(%arg0: i32, %arg1: memref<256x16xbf16, #tpu.memory_space<vmem>>, %arg2: memref<16x128xbf16, #tpu.memory_space<vmem>>, %arg3: memref<128x8xbf16, #tpu.memory_space<vmem>>, %arg4: memref<256x128xbf16, #tpu.memory_space<vmem>>, %arg5: memref<256x8xf32, #tpu.memory_space<vmem>>) attributes {dimension_semantics = [#tpu.dimension_semantics<parallel>], iteration_bounds = array<i64: 1>, scalar_prefetch = 0 : i64, scratch_operands = 0 : i64, tpu.core_type = #tpu.core_type<tc>, window_params = [{transform_indices = @transform_0, window_bounds = array<i64: 256, 16>}, {pipeline_mode = #tpu.pipeline_mode<synchronous>, transform_indices = @transform_1, window_bounds = array<i64: 16, 128>}, {pipeline_mode = #tpu.pipeline_mode<synchronous>, transform_indices = @transform_2, window_bounds = array<i64: 128, 8>}, {transform_indices = @transform_3, window_bounds = array<i64: 256, 128>}, {transform_indices = @transform_4, window_bounds = array<i64: 256, 8>}]} {
    %c0 = arith.constant 0 : index
    %c0_0 = arith.constant 0 : index
    %0 = vector.load %arg1[%c0, %c0_0] : memref<256x16xbf16, #tpu.memory_space<vmem>>, vector<256x16xbf16>
    %c0_1 = arith.constant 0 : index
    %c0_2 = arith.constant 0 : index
    %1 = vector.load %arg2[%c0_1, %c0_2] : memref<16x128xbf16, #tpu.memory_space<vmem>>, vector<16x128xbf16>
    %cst = arith.constant dense<0.000000e+00> : vector<256x128xf32>
    %2 = tpu.matmul %0, %1, %cst {dimension_numbers = #tpu.dot_dimension_numbers<[1], [0], [0], [1], [0, 0, 1, 1], [], []>} : vector<256x16xbf16>, vector<16x128xbf16>, vector<256x128xf32> -> vector<256x128xf32>
    %3 = arith.truncf %2 : vector<256x128xf32> to vector<256x128xbf16>
    %c0_3 = arith.constant 0 : index
    %c0_4 = arith.constant 0 : index
    %4 = vector.load %arg4[%c0_3, %c0_4] : memref<256x128xbf16, #tpu.memory_space<vmem>>, vector<256x128xbf16>
    tpu.vector_store %arg4[%c0_3, %c0_4], %3 {strides = array<i32>} : memref<256x128xbf16, #tpu.memory_space<vmem>>, vector<256x128xbf16>,
    %c0_5 = arith.constant 0 : index
    %c0_6 = arith.constant 0 : index
    %5 = vector.load %arg3[%c0_5, %c0_6] : memref<128x8xbf16, #tpu.memory_space<vmem>>, vector<128x8xbf16>
    %cst_7 = arith.constant dense<0.000000e+00> : vector<256x8xf32>
    %6 = tpu.matmul %3, %5, %cst_7 {dimension_numbers = #tpu.dot_dimension_numbers<[1], [0], [0], [1], [0, 0, 1, 1], [], []>} : vector<256x128xbf16>, vector<128x8xbf16>, vector<256x8xf32> -> vector<256x8xf32>
    %c0_8 = arith.constant 0 : index
    %c0_9 = arith.constant 0 : index
    %7 = vector.load %arg5[%c0_8, %c0_9] : memref<256x8xf32, #tpu.memory_space<vmem>>, vector<256x8xf32>
    tpu.vector_store %arg5[%c0_8, %c0_9], %6 {strides = array<i32>} : memref<256x8xf32, #tpu.memory_space<vmem>>, vector<256x8xf32>,
    return
  }
  func.func @transform_0(%arg0: i32) -> (i32, i32) {
    %c0_i32 = arith.constant 0 : i32
    %c0_i32_0 = arith.constant 0 : i32
    return %arg0, %c0_i32 : i32, i32
  }
  func.func @transform_1(%arg0: i32) -> (i32, i32) {
    %c0_i32 = arith.constant 0 : i32
    %c0_i32_0 = arith.constant 0 : i32
    %c0_i32_1 = arith.constant 0 : i32
    return %c0_i32, %c0_i32_0 : i32, i32
  }
  func.func @transform_2(%arg0: i32) -> (i32, i32) {
    %c0_i32 = arith.constant 0 : i32
    %c0_i32_0 = arith.constant 0 : i32
    %c0_i32_1 = arith.constant 0 : i32
    return %c0_i32, %c0_i32_0 : i32, i32
  }
  func.func @transform_3(%arg0: i32) -> (i32, i32) {
    %c0_i32 = arith.constant 0 : i32
    %c0_i32_0 = arith.constant 0 : i32
    return %arg0, %c0_i32 : i32, i32
  }
  func.func @transform_4(%arg0: i32) -> (i32, i32) {
    %c0_i32 = arith.constant 0 : i32
    %c0_i32_0 = arith.constant 0 : i32
    return %arg0, %c0_i32 : i32, i32
  }
}

module attributes {stable_mosaic.version = 11 : i64} {
  func.func @_attention_kernel(%arg0: i32, %arg1: i32, %arg2: memref<256x256xbf16, #tpu.memory_space<vmem>>, %arg3: memref<256x256xi8, #tpu.memory_space<vmem>>, %arg4: memref<4x256xf32, #tpu.memory_space<vmem>>, %arg5: memref<256x4xf32, #tpu.memory_space<vmem>>, %arg6: memref<256x128xbf16, #tpu.memory_space<vmem>>, %arg7: memref<4x128xf32, #tpu.memory_space<vmem>>, %arg8: memref<1x128xf32, #tpu.memory_space<vmem>>, %arg9: memref<256x128xf32, #tpu.memory_space<vmem>>, %arg10: memref<256x4xf32, #tpu.memory_space<vmem>>, %arg11: memref<256x4xf32, #tpu.memory_space<vmem>>, %arg12: memref<256x128xf32, #tpu.memory_space<vmem>>) attributes {dimension_semantics = [#tpu.dimension_semantics<parallel>, #tpu.dimension_semantics<arbitrary>], iteration_bounds = array<i64: 1, 1>, scalar_prefetch = 0 : i64, scratch_operands = 3 : i64, tpu.core_type = #tpu.core_type<tc>, window_params = [{transform_indices = @transform_0, window_bounds = array<i64: 256, 256>}, {transform_indices = @transform_1, window_bounds = array<i64: 256, 256>}, {transform_indices = @transform_2, window_bounds = array<i64: 4, 256>}, {transform_indices = @transform_3, window_bounds = array<i64: 256, 4>}, {pipeline_mode = #tpu.pipeline_mode<synchronous>, transform_indices = @transform_4, window_bounds = array<i64: 256, 128>}, {pipeline_mode = #tpu.pipeline_mode<synchronous>, transform_indices = @transform_5, window_bounds = array<i64: 4, 128>}, {pipeline_mode = #tpu.pipeline_mode<synchronous>, transform_indices = @transform_6, window_bounds = array<i64: 1, 128>}, {transform_indices = @transform_7, window_bounds = array<i64: 256, 128>}]} {
    %c0_i32 = arith.constant 0 : i32
    %0 = arith.cmpi eq, %arg1, %c0_i32 : i32
    %1 = arith.extui %0 : i1 to i32
    %c0_i32_0 = arith.constant 0 : i32
    %2 = arith.cmpi ne, %1, %c0_i32_0 : i32
    scf.if %2 {
      %cst_59 = arith.constant -1.000000e+30 : f32
      %139 = vector.broadcast %cst_59 : f32 to vector<256x4xf32>
      %c0_60 = arith.constant 0 : index
      %c0_61 = arith.constant 0 : index
      %140 = vector.load %arg10[%c0_60, %c0_61] : memref<256x4xf32, #tpu.memory_space<vmem>>, vector<256x4xf32>
      tpu.vector_store %arg10[%c0_60, %c0_61], %139 {strides = array<i32>} : memref<256x4xf32, #tpu.memory_space<vmem>>, vector<256x4xf32>,
      %cst_62 = arith.constant 0.000000e+00 : f32
      %141 = vector.broadcast %cst_62 : f32 to vector<256x4xf32>
      %c0_63 = arith.constant 0 : index
      %c0_64 = arith.constant 0 : index
      %142 = vector.load %arg11[%c0_63, %c0_64] : memref<256x4xf32, #tpu.memory_space<vmem>>, vector<256x4xf32>
      tpu.vector_store %arg11[%c0_63, %c0_64], %141 {strides = array<i32>} : memref<256x4xf32, #tpu.memory_space<vmem>>, vector<256x4xf32>,
      %cst_65 = arith.constant 0.000000e+00 : f32
      %143 = vector.broadcast %cst_65 : f32 to vector<256x128xf32>
      %c0_66 = arith.constant 0 : index
      %c0_67 = arith.constant 0 : index
      %144 = vector.load %arg12[%c0_66, %c0_67] : memref<256x128xf32, #tpu.memory_space<vmem>>, vector<256x128xf32>
      tpu.vector_store %arg12[%c0_66, %c0_67], %143 {strides = array<i32>} : memref<256x128xf32, #tpu.memory_space<vmem>>, vector<256x128xf32>,
    } else {
    }
    %c0 = arith.constant 0 : index
    %c0_1 = arith.constant 0 : index
    %3 = vector.load %arg2[%c0, %c0_1] : memref<256x256xbf16, #tpu.memory_space<vmem>>, vector<256x256xbf16>
    %4 = arith.extf %3 : vector<256x256xbf16> to vector<256x256xf32>
    %c0_2 = arith.constant 0 : index
    %c0_3 = arith.constant 0 : index
    %5 = vector.load %arg3[%c0_2, %c0_3] : memref<256x256xi8, #tpu.memory_space<vmem>>, vector<256x256xi8>
    %6 = arith.sitofp %5 : vector<256x256xi8> to vector<256x256xf32>
    %cst = arith.constant 0.000000e+00 : f32
    %7 = vector.broadcast %cst : f32 to vector<256x256xf32>
    %8 = arith.cmpf ogt, %6, %7 : vector<256x256xf32>
    %c0_4 = arith.constant 0 : index
    %c0_5 = arith.constant 0 : index
    %9 = vector.load %arg10[%c0_4, %c0_5] : memref<256x4xf32, #tpu.memory_space<vmem>>, vector<256x4xf32>
    %c256_i32 = arith.constant 256 : i32
    %10 = arith.muli %arg1, %c256_i32 : i32
    %11 = tpu.assume_multiple %10, 256 : i32
    %c0_6 = arith.constant 0 : index
    %c0_7 = arith.constant 0 : index
    %12 = vector.load %arg4[%c0_6, %c0_7] : memref<4x256xf32, #tpu.memory_space<vmem>>, vector<1x256xf32>
    %c0_8 = arith.constant 0 : index
    %c0_9 = arith.constant 0 : index
    %13 = vector.load %arg5[%c0_8, %c0_9] : memref<256x4xf32, #tpu.memory_space<vmem>>, vector<256x1xf32>
    %14 = vector.broadcast %13 : vector<256x1xf32> to vector<256x256xf32>
    %15 = vector.broadcast %12 : vector<1x256xf32> to vector<256x256xf32>
    %16 = arith.addf %14, %15 : vector<256x256xf32>
    %cst_10 = arith.constant 0.000000e+00 : f32
    %17 = vector.broadcast %cst_10 : f32 to vector<256x256xf32>
    %18 = arith.cmpf oge, %16, %17 : vector<256x256xf32>
    %cst_11 = arith.constant 2.000000e-01 : f32
    %19 = vector.broadcast %cst_11 : f32 to vector<256x256xf32>
    %20 = arith.mulf %19, %16 : vector<256x256xf32>
    %21 = arith.select %18, %16, %20 : vector<256x256xi1>, vector<256x256xf32>
    %22 = arith.mulf %21, %4 : vector<256x256xf32>
    %cst_12 = arith.constant -1.000000e+30 : f32
    %23 = vector.broadcast %cst_12 : f32 to vector<256x256xf32>
    %24 = arith.select %8, %22, %23 : vector<256x256xi1>, vector<256x256xf32>
    %25 = vector.extract_strided_slice %9 {offsets = [0, 0], sizes = [256, 1], strides = [1, 1]} : vector<256x4xf32> to vector<256x1xf32>
    %cst_13 = arith.constant dense<0xFF800000> : vector<256xf32>
    %26 = vector.multi_reduction <maximumf>, %24, %cst_13 [1] : vector<256x256xf32> to vector<256xf32>
    %27 = vector.shape_cast %26 : vector<256xf32> to vector<256x1xf32>
    %28 = arith.maximumf %25, %27 : vector<256x1xf32>
    %29 = vector.broadcast %28 : vector<256x1xf32> to vector<256x256xf32>
    %30 = arith.subf %24, %29 : vector<256x256xf32>
    %31 = math.exp %30 : vector<256x256xf32>
    %32 = arith.mulf %31, %6 : vector<256x256xf32>
    %cst_14 = arith.constant dense<0.000000e+00> : vector<256xf32>
    %33 = vector.multi_reduction <add>, %32, %cst_14 [1] : vector<256x256xf32> to vector<256xf32>
    %34 = vector.shape_cast %33 : vector<256xf32> to vector<256x1xf32>
    %35 = arith.index_cast %11 : i32 to index
    %c0_15 = arith.constant 0 : index
    %36 = vector.load %arg6[%35, %c0_15] : memref<256x128xbf16, #tpu.memory_space<vmem>>, vector<256x32xbf16>
    %37 = arith.truncf %32 : vector<256x256xf32> to vector<256x256xbf16>
    %cst_16 = arith.constant dense<0.000000e+00> : vector<256x32xf32>
    %38 = tpu.matmul %37, %36, %cst_16 {dimension_numbers = #tpu.dot_dimension_numbers<[1], [0], [0], [1], [0, 0, 1, 1], [], []>} : vector<256x256xbf16>, vector<256x32xbf16>, vector<256x32xf32> -> vector<256x32xf32>
    %c1 = arith.constant 1 : index
    %c0_17 = arith.constant 0 : index
    %39 = vector.load %arg4[%c1, %c0_17] : memref<4x256xf32, #tpu.memory_space<vmem>>, vector<1x256xf32>
    %c0_18 = arith.constant 0 : index
    %c1_19 = arith.constant 1 : index
    %40 = vector.load %arg5[%c0_18, %c1_19] : memref<256x4xf32, #tpu.memory_space<vmem>>, vector<256x1xf32>
    %41 = vector.broadcast %40 : vector<256x1xf32> to vector<256x256xf32>
    %42 = vector.broadcast %39 : vector<1x256xf32> to vector<256x256xf32>
    %43 = arith.addf %41, %42 : vector<256x256xf32>
    %cst_20 = arith.constant 0.000000e+00 : f32
    %44 = vector.broadcast %cst_20 : f32 to vector<256x256xf32>
    %45 = arith.cmpf oge, %43, %44 : vector<256x256xf32>
    %cst_21 = arith.constant 2.000000e-01 : f32
    %46 = vector.broadcast %cst_21 : f32 to vector<256x256xf32>
    %47 = arith.mulf %46, %43 : vector<256x256xf32>
    %48 = arith.select %45, %43, %47 : vector<256x256xi1>, vector<256x256xf32>
    %49 = arith.mulf %48, %4 : vector<256x256xf32>
    %cst_22 = arith.constant -1.000000e+30 : f32
    %50 = vector.broadcast %cst_22 : f32 to vector<256x256xf32>
    %51 = arith.select %8, %49, %50 : vector<256x256xi1>, vector<256x256xf32>
    %52 = vector.extract_strided_slice %9 {offsets = [0, 1], sizes = [256, 1], strides = [1, 1]} : vector<256x4xf32> to vector<256x1xf32>
    %cst_23 = arith.constant dense<0xFF800000> : vector<256xf32>
    %53 = vector.multi_reduction <maximumf>, %51, %cst_23 [1] : vector<256x256xf32> to vector<256xf32>
    %54 = vector.shape_cast %53 : vector<256xf32> to vector<256x1xf32>
    %55 = arith.maximumf %52, %54 : vector<256x1xf32>
    %56 = vector.broadcast %55 : vector<256x1xf32> to vector<256x256xf32>
    %57 = arith.subf %51, %56 : vector<256x256xf32>
    %58 = math.exp %57 : vector<256x256xf32>
    %59 = arith.mulf %58, %6 : vector<256x256xf32>
    %cst_24 = arith.constant dense<0.000000e+00> : vector<256xf32>
    %60 = vector.multi_reduction <add>, %59, %cst_24 [1] : vector<256x256xf32> to vector<256xf32>
    %61 = vector.shape_cast %60 : vector<256xf32> to vector<256x1xf32>
    %62 = arith.index_cast %11 : i32 to index
    %c32 = arith.constant 32 : index
    %63 = vector.load %arg6[%62, %c32] : memref<256x128xbf16, #tpu.memory_space<vmem>>, vector<256x32xbf16>
    %64 = arith.truncf %59 : vector<256x256xf32> to vector<256x256xbf16>
    %cst_25 = arith.constant dense<0.000000e+00> : vector<256x32xf32>
    %65 = tpu.matmul %64, %63, %cst_25 {dimension_numbers = #tpu.dot_dimension_numbers<[1], [0], [0], [1], [0, 0, 1, 1], [], []>} : vector<256x256xbf16>, vector<256x32xbf16>, vector<256x32xf32> -> vector<256x32xf32>
    %c2 = arith.constant 2 : index
    %c0_26 = arith.constant 0 : index
    %66 = vector.load %arg4[%c2, %c0_26] : memref<4x256xf32, #tpu.memory_space<vmem>>, vector<1x256xf32>
    %c0_27 = arith.constant 0 : index
    %c2_28 = arith.constant 2 : index
    %67 = vector.load %arg5[%c0_27, %c2_28] : memref<256x4xf32, #tpu.memory_space<vmem>>, vector<256x1xf32>
    %68 = vector.broadcast %67 : vector<256x1xf32> to vector<256x256xf32>
    %69 = vector.broadcast %66 : vector<1x256xf32> to vector<256x256xf32>
    %70 = arith.addf %68, %69 : vector<256x256xf32>
    %cst_29 = arith.constant 0.000000e+00 : f32
    %71 = vector.broadcast %cst_29 : f32 to vector<256x256xf32>
    %72 = arith.cmpf oge, %70, %71 : vector<256x256xf32>
    %cst_30 = arith.constant 2.000000e-01 : f32
    %73 = vector.broadcast %cst_30 : f32 to vector<256x256xf32>
    %74 = arith.mulf %73, %70 : vector<256x256xf32>
    %75 = arith.select %72, %70, %74 : vector<256x256xi1>, vector<256x256xf32>
    %76 = arith.mulf %75, %4 : vector<256x256xf32>
    %cst_31 = arith.constant -1.000000e+30 : f32
    %77 = vector.broadcast %cst_31 : f32 to vector<256x256xf32>
    %78 = arith.select %8, %76, %77 : vector<256x256xi1>, vector<256x256xf32>
    %79 = vector.extract_strided_slice %9 {offsets = [0, 2], sizes = [256, 1], strides = [1, 1]} : vector<256x4xf32> to vector<256x1xf32>
    %cst_32 = arith.constant dense<0xFF800000> : vector<256xf32>
    %80 = vector.multi_reduction <maximumf>, %78, %cst_32 [1] : vector<256x256xf32> to vector<256xf32>
    %81 = vector.shape_cast %80 : vector<256xf32> to vector<256x1xf32>
    %82 = arith.maximumf %79, %81 : vector<256x1xf32>
    %83 = vector.broadcast %82 : vector<256x1xf32> to vector<256x256xf32>
    %84 = arith.subf %78, %83 : vector<256x256xf32>
    %85 = math.exp %84 : vector<256x256xf32>
    %86 = arith.mulf %85, %6 : vector<256x256xf32>
    %cst_33 = arith.constant dense<0.000000e+00> : vector<256xf32>
    %87 = vector.multi_reduction <add>, %86, %cst_33 [1] : vector<256x256xf32> to vector<256xf32>
    %88 = vector.shape_cast %87 : vector<256xf32> to vector<256x1xf32>
    %89 = arith.index_cast %11 : i32 to index
    %c64 = arith.constant 64 : index
    %90 = vector.load %arg6[%89, %c64] : memref<256x128xbf16, #tpu.memory_space<vmem>>, vector<256x32xbf16>
    %91 = arith.truncf %86 : vector<256x256xf32> to vector<256x256xbf16>
    %cst_34 = arith.constant dense<0.000000e+00> : vector<256x32xf32>
    %92 = tpu.matmul %91, %90, %cst_34 {dimension_numbers = #tpu.dot_dimension_numbers<[1], [0], [0], [1], [0, 0, 1, 1], [], []>} : vector<256x256xbf16>, vector<256x32xbf16>, vector<256x32xf32> -> vector<256x32xf32>
    %c3 = arith.constant 3 : index
    %c0_35 = arith.constant 0 : index
    %93 = vector.load %arg4[%c3, %c0_35] : memref<4x256xf32, #tpu.memory_space<vmem>>, vector<1x256xf32>
    %c0_36 = arith.constant 0 : index
    %c3_37 = arith.constant 3 : index
    %94 = vector.load %arg5[%c0_36, %c3_37] : memref<256x4xf32, #tpu.memory_space<vmem>>, vector<256x1xf32>
    %95 = vector.broadcast %94 : vector<256x1xf32> to vector<256x256xf32>
    %96 = vector.broadcast %93 : vector<1x256xf32> to vector<256x256xf32>
    %97 = arith.addf %95, %96 : vector<256x256xf32>
    %cst_38 = arith.constant 0.000000e+00 : f32
    %98 = vector.broadcast %cst_38 : f32 to vector<256x256xf32>
    %99 = arith.cmpf oge, %97, %98 : vector<256x256xf32>
    %cst_39 = arith.constant 2.000000e-01 : f32
    %100 = vector.broadcast %cst_39 : f32 to vector<256x256xf32>
    %101 = arith.mulf %100, %97 : vector<256x256xf32>
    %102 = arith.select %99, %97, %101 : vector<256x256xi1>, vector<256x256xf32>
    %103 = arith.mulf %102, %4 : vector<256x256xf32>
    %cst_40 = arith.constant -1.000000e+30 : f32
    %104 = vector.broadcast %cst_40 : f32 to vector<256x256xf32>
    %105 = arith.select %8, %103, %104 : vector<256x256xi1>, vector<256x256xf32>
    %106 = vector.extract_strided_slice %9 {offsets = [0, 3], sizes = [256, 1], strides = [1, 1]} : vector<256x4xf32> to vector<256x1xf32>
    %cst_41 = arith.constant dense<0xFF800000> : vector<256xf32>
    %107 = vector.multi_reduction <maximumf>, %105, %cst_41 [1] : vector<256x256xf32> to vector<256xf32>
    %108 = vector.shape_cast %107 : vector<256xf32> to vector<256x1xf32>
    %109 = arith.maximumf %106, %108 : vector<256x1xf32>
    %110 = vector.broadcast %109 : vector<256x1xf32> to vector<256x256xf32>
    %111 = arith.subf %105, %110 : vector<256x256xf32>
    %112 = math.exp %111 : vector<256x256xf32>
    %113 = arith.mulf %112, %6 : vector<256x256xf32>
    %cst_42 = arith.constant dense<0.000000e+00> : vector<256xf32>
    %114 = vector.multi_reduction <add>, %113, %cst_42 [1] : vector<256x256xf32> to vector<256xf32>
    %115 = vector.shape_cast %114 : vector<256xf32> to vector<256x1xf32>
    %116 = arith.index_cast %11 : i32 to index
    %c96 = arith.constant 96 : index
    %117 = vector.load %arg6[%116, %c96] : memref<256x128xbf16, #tpu.memory_space<vmem>>, vector<256x32xbf16>
    %118 = arith.truncf %113 : vector<256x256xf32> to vector<256x256xbf16>
    %cst_43 = arith.constant dense<0.000000e+00> : vector<256x32xf32>
    %119 = tpu.matmul %118, %117, %cst_43 {dimension_numbers = #tpu.dot_dimension_numbers<[1], [0], [0], [1], [0, 0, 1, 1], [], []>} : vector<256x256xbf16>, vector<256x32xbf16>, vector<256x32xf32> -> vector<256x32xf32>
    %120 = tpu.concatenate %28, %55, %82, %109 in 1 : vector<256x1xf32>, vector<256x1xf32>, vector<256x1xf32>, vector<256x1xf32> -> vector<256x4xf32>
    %121 = arith.subf %9, %120 : vector<256x4xf32>
    %122 = math.exp %121 : vector<256x4xf32>
    %c0_44 = arith.constant 0 : index
    %c0_45 = arith.constant 0 : index
    %123 = vector.load %arg11[%c0_44, %c0_45] : memref<256x4xf32, #tpu.memory_space<vmem>>, vector<256x4xf32>
    %124 = arith.mulf %122, %123 : vector<256x4xf32>
    %125 = tpu.concatenate %34, %61, %88, %115 in 1 : vector<256x1xf32>, vector<256x1xf32>, vector<256x1xf32>, vector<256x1xf32> -> vector<256x4xf32>
    %126 = arith.addf %124, %125 : vector<256x4xf32>
    %c0_46 = arith.constant 0 : index
    %c0_47 = arith.constant 0 : index
    %127 = vector.load %arg11[%c0_46, %c0_47] : memref<256x4xf32, #tpu.memory_space<vmem>>, vector<256x4xf32>
    tpu.vector_store %arg11[%c0_46, %c0_47], %126 {strides = array<i32>} : memref<256x4xf32, #tpu.memory_space<vmem>>, vector<256x4xf32>,
    %c0_48 = arith.constant 0 : index
    %c0_49 = arith.constant 0 : index
    %128 = vector.load %arg10[%c0_48, %c0_49] : memref<256x4xf32, #tpu.memory_space<vmem>>, vector<256x4xf32>
    tpu.vector_store %arg10[%c0_48, %c0_49], %120 {strides = array<i32>} : memref<256x4xf32, #tpu.memory_space<vmem>>, vector<256x4xf32>,
    %c0_50 = arith.constant 0 : index
    %c0_51 = arith.constant 0 : index
    %129 = vector.load %arg7[%c0_50, %c0_51] : memref<4x128xf32, #tpu.memory_space<vmem>>, vector<4x128xf32>
    %cst_52 = arith.constant dense<0.000000e+00> : vector<256x128xf32>
    %130 = tpu.matmul %122, %129, %cst_52 {dimension_numbers = #tpu.dot_dimension_numbers<[1], [0], [0], [1], [0, 0, 1, 1], [], []>} : vector<256x4xf32>, vector<4x128xf32>, vector<256x128xf32> -> vector<256x128xf32>
    %c0_53 = arith.constant 0 : index
    %c0_54 = arith.constant 0 : index
    %131 = vector.load %arg12[%c0_53, %c0_54] : memref<256x128xf32, #tpu.memory_space<vmem>>, vector<256x128xf32>
    %132 = arith.mulf %130, %131 : vector<256x128xf32>
    %133 = tpu.concatenate %38, %65, %92, %119 in 1 : vector<256x32xf32>, vector<256x32xf32>, vector<256x32xf32>, vector<256x32xf32> -> vector<256x128xf32>
    %134 = arith.addf %132, %133 : vector<256x128xf32>
    %c0_55 = arith.constant 0 : index
    %c0_56 = arith.constant 0 : index
    %135 = vector.load %arg12[%c0_55, %c0_56] : memref<256x128xf32, #tpu.memory_space<vmem>>, vector<256x128xf32>
    tpu.vector_store %arg12[%c0_55, %c0_56], %134 {strides = array<i32>} : memref<256x128xf32, #tpu.memory_space<vmem>>, vector<256x128xf32>,
    %c0_i32_57 = arith.constant 0 : i32
    %136 = arith.cmpi eq, %arg1, %c0_i32_57 : i32
    %137 = arith.extui %136 : i1 to i32
    %c0_i32_58 = arith.constant 0 : i32
    %138 = arith.cmpi ne, %137, %c0_i32_58 : i32
    scf.if %138 {
      %c0_59 = arith.constant 0 : index
      %c0_60 = arith.constant 0 : index
      %139 = vector.load %arg11[%c0_59, %c0_60] : memref<256x4xf32, #tpu.memory_space<vmem>>, vector<256x4xf32>
      %cst_61 = arith.constant 0.000000e+00 : f32
      %140 = vector.broadcast %cst_61 : f32 to vector<256x4xf32>
      %141 = arith.cmpf ogt, %139, %140 : vector<256x4xf32>
      %142 = tpu.reciprocal %139 {approx = true} : vector<256x4xf32> -> vector<256x4xf32>
      %cst_62 = arith.constant 0.000000e+00 : f32
      %143 = vector.broadcast %cst_62 : f32 to vector<256x4xf32>
      %144 = arith.select %141, %142, %143 : vector<256x4xi1>, vector<256x4xf32>
      %c0_63 = arith.constant 0 : index
      %c0_64 = arith.constant 0 : index
      %145 = vector.load %arg7[%c0_63, %c0_64] : memref<4x128xf32, #tpu.memory_space<vmem>>, vector<4x128xf32>
      %cst_65 = arith.constant dense<0.000000e+00> : vector<256x128xf32>
      %146 = tpu.matmul %144, %145, %cst_65 {dimension_numbers = #tpu.dot_dimension_numbers<[1], [0], [0], [1], [0, 0, 1, 1], [], []>} : vector<256x4xf32>, vector<4x128xf32>, vector<256x128xf32> -> vector<256x128xf32>
      %c0_66 = arith.constant 0 : index
      %c0_67 = arith.constant 0 : index
      %147 = vector.load %arg12[%c0_66, %c0_67] : memref<256x128xf32, #tpu.memory_space<vmem>>, vector<256x128xf32>
      %148 = arith.mulf %147, %146 : vector<256x128xf32>
      %c0_68 = arith.constant 0 : index
      %c0_69 = arith.constant 0 : index
      %149 = vector.load %arg8[%c0_68, %c0_69] : memref<1x128xf32, #tpu.memory_space<vmem>>, vector<1x128xf32>
      %150 = vector.broadcast %149 : vector<1x128xf32> to vector<256x128xf32>
      %151 = arith.addf %148, %150 : vector<256x128xf32>
      %c0_70 = arith.constant 0 : index
      %c0_71 = arith.constant 0 : index
      %152 = vector.load %arg9[%c0_70, %c0_71] : memref<256x128xf32, #tpu.memory_space<vmem>>, vector<256x128xf32>
      tpu.vector_store %arg9[%c0_70, %c0_71], %151 {strides = array<i32>} : memref<256x128xf32, #tpu.memory_space<vmem>>, vector<256x128xf32>,
    } else {
    }
    return
  }
  func.func @transform_0(%arg0: i32, %arg1: i32) -> (i32, i32) {
    %c0_i32 = arith.constant 0 : i32
    return %arg0, %arg1 : i32, i32
  }
  func.func @transform_1(%arg0: i32, %arg1: i32) -> (i32, i32) {
    %c0_i32 = arith.constant 0 : i32
    return %arg0, %arg1 : i32, i32
  }
  func.func @transform_2(%arg0: i32, %arg1: i32) -> (i32, i32) {
    %c0_i32 = arith.constant 0 : i32
    %c0_i32_0 = arith.constant 0 : i32
    return %c0_i32, %arg1 : i32, i32
  }
  func.func @transform_3(%arg0: i32, %arg1: i32) -> (i32, i32) {
    %c0_i32 = arith.constant 0 : i32
    %c0_i32_0 = arith.constant 0 : i32
    return %arg0, %c0_i32 : i32, i32
  }
  func.func @transform_4(%arg0: i32, %arg1: i32) -> (i32, i32) {
    %c0_i32 = arith.constant 0 : i32
    %c0_i32_0 = arith.constant 0 : i32
    %c0_i32_1 = arith.constant 0 : i32
    return %c0_i32, %c0_i32_0 : i32, i32
  }
  func.func @transform_5(%arg0: i32, %arg1: i32) -> (i32, i32) {
    %c0_i32 = arith.constant 0 : i32
    %c0_i32_0 = arith.constant 0 : i32
    %c0_i32_1 = arith.constant 0 : i32
    return %c0_i32, %c0_i32_0 : i32, i32
  }
  func.func @transform_6(%arg0: i32, %arg1: i32) -> (i32, i32) {
    %c0_i32 = arith.constant 0 : i32
    %c0_i32_0 = arith.constant 0 : i32
    %c0_i32_1 = arith.constant 0 : i32
    return %c0_i32, %c0_i32_0 : i32, i32
  }
  func.func @transform_7(%arg0: i32, %arg1: i32) -> (i32, i32) {
    %c0_i32 = arith.constant 0 : i32
    %c0_i32_0 = arith.constant 0 : i32
    return %arg0, %c0_i32 : i32, i32
  }
}

module attributes {stable_mosaic.version = 11 : i64} {
  func.func @_project_kernel(%arg0: i32, %arg1: memref<256x128xbf16, #tpu.memory_space<vmem>>, %arg2: memref<128x128xbf16, #tpu.memory_space<vmem>>, %arg3: memref<128x8xbf16, #tpu.memory_space<vmem>>, %arg4: memref<256x128xbf16, #tpu.memory_space<vmem>>, %arg5: memref<256x8xf32, #tpu.memory_space<vmem>>) attributes {dimension_semantics = [#tpu.dimension_semantics<parallel>], iteration_bounds = array<i64: 1>, scalar_prefetch = 0 : i64, scratch_operands = 0 : i64, tpu.core_type = #tpu.core_type<tc>, window_params = [{transform_indices = @transform_0, window_bounds = array<i64: 256, 128>}, {pipeline_mode = #tpu.pipeline_mode<synchronous>, transform_indices = @transform_1, window_bounds = array<i64: 128, 128>}, {pipeline_mode = #tpu.pipeline_mode<synchronous>, transform_indices = @transform_2, window_bounds = array<i64: 128, 8>}, {transform_indices = @transform_3, window_bounds = array<i64: 256, 128>}, {transform_indices = @transform_4, window_bounds = array<i64: 256, 8>}]} {
    %c0 = arith.constant 0 : index
    %c0_0 = arith.constant 0 : index
    %0 = vector.load %arg1[%c0, %c0_0] : memref<256x128xbf16, #tpu.memory_space<vmem>>, vector<256x128xbf16>
    %c0_1 = arith.constant 0 : index
    %c0_2 = arith.constant 0 : index
    %1 = vector.load %arg2[%c0_1, %c0_2] : memref<128x128xbf16, #tpu.memory_space<vmem>>, vector<128x128xbf16>
    %cst = arith.constant dense<0.000000e+00> : vector<256x128xf32>
    %2 = tpu.matmul %0, %1, %cst {dimension_numbers = #tpu.dot_dimension_numbers<[1], [0], [0], [1], [0, 0, 1, 1], [], []>} : vector<256x128xbf16>, vector<128x128xbf16>, vector<256x128xf32> -> vector<256x128xf32>
    %3 = arith.truncf %2 : vector<256x128xf32> to vector<256x128xbf16>
    %c0_3 = arith.constant 0 : index
    %c0_4 = arith.constant 0 : index
    %4 = vector.load %arg4[%c0_3, %c0_4] : memref<256x128xbf16, #tpu.memory_space<vmem>>, vector<256x128xbf16>
    tpu.vector_store %arg4[%c0_3, %c0_4], %3 {strides = array<i32>} : memref<256x128xbf16, #tpu.memory_space<vmem>>, vector<256x128xbf16>,
    %c0_5 = arith.constant 0 : index
    %c0_6 = arith.constant 0 : index
    %5 = vector.load %arg3[%c0_5, %c0_6] : memref<128x8xbf16, #tpu.memory_space<vmem>>, vector<128x8xbf16>
    %cst_7 = arith.constant dense<0.000000e+00> : vector<256x8xf32>
    %6 = tpu.matmul %3, %5, %cst_7 {dimension_numbers = #tpu.dot_dimension_numbers<[1], [0], [0], [1], [0, 0, 1, 1], [], []>} : vector<256x128xbf16>, vector<128x8xbf16>, vector<256x8xf32> -> vector<256x8xf32>
    %c0_8 = arith.constant 0 : index
    %c0_9 = arith.constant 0 : index
    %7 = vector.load %arg5[%c0_8, %c0_9] : memref<256x8xf32, #tpu.memory_space<vmem>>, vector<256x8xf32>
    tpu.vector_store %arg5[%c0_8, %c0_9], %6 {strides = array<i32>} : memref<256x8xf32, #tpu.memory_space<vmem>>, vector<256x8xf32>,
    return
  }
  func.func @transform_0(%arg0: i32) -> (i32, i32) {
    %c0_i32 = arith.constant 0 : i32
    %c0_i32_0 = arith.constant 0 : i32
    return %arg0, %c0_i32 : i32, i32
  }
  func.func @transform_1(%arg0: i32) -> (i32, i32) {
    %c0_i32 = arith.constant 0 : i32
    %c0_i32_0 = arith.constant 0 : i32
    %c0_i32_1 = arith.constant 0 : i32
    return %c0_i32, %c0_i32_0 : i32, i32
  }
  func.func @transform_2(%arg0: i32) -> (i32, i32) {
    %c0_i32 = arith.constant 0 : i32
    %c0_i32_0 = arith.constant 0 : i32
    %c0_i32_1 = arith.constant 0 : i32
    return %c0_i32, %c0_i32_0 : i32, i32
  }
  func.func @transform_3(%arg0: i32) -> (i32, i32) {
    %c0_i32 = arith.constant 0 : i32
    %c0_i32_0 = arith.constant 0 : i32
    return %arg0, %c0_i32 : i32, i32
  }
  func.func @transform_4(%arg0: i32) -> (i32, i32) {
    %c0_i32 = arith.constant 0 : i32
    %c0_i32_0 = arith.constant 0 : i32
    return %arg0, %c0_i32 : i32, i32
  }
}

</mosaic_0001>

<llo_original>
// kernel: mul.25
$region0: #{mul.25}
  %s0 = inlined_call_operand.vmem [shape: f32[4,32], index: 0, kind: input, shape index: {}]
  %s1 = inlined_call_operand.vmem [shape: f32[128], index: 1, kind: output, shape index: {}]
  $region1: #{mul.25} parent=0
    #allocation0 [shape = 'u8[4096]{0}', space=vmem, size = 0x1000, scoped, tag = 'scoped mem for output reshape']
    #allocation1 [shape = 'u8[4096]{0}', space=vmem, size = 0x1000, scoped, tag = 'scoped mem for input reshape']
    %s3 = sshllo.u32 0, 4
    %v4 = vld [vmem:[%s0] sm:%s3]
    %5 = vst [vmem:[#allocation1] sm:%s3] %v4
    %v6 = vld [vmem:[#allocation1] sm:$0x1]
    %vm7 = vcmask 261120
    %8 = vst.msk [vmem:[#allocation0] sm:$0x1] %vm7, %v6
    %s9 = scalar_lea.vmem [#allocation1], 3
    %v10 = vld [vmem:[%s9] sm:$0x1]
    %11 = vrot.lane.b32.xlu0 %v10, 96
    %v12 = vpop.permute.xlu0 %11
    %vm13 = vcmask 1048320
    %14 = vst.msk [vmem:[#allocation0] sm:$0x1] %vm13, %v12
    %s15 = scalar_lea.vmem [#allocation1], 2
    %v16 = vld [vmem:[%s15] sm:$0x1]
    %17 = vrot.lane.b32.xlu0 %v16, 64
    %v18 = vpop.permute.xlu0 %17
    %vm19 = vcmask 785920
    %20 = vst.msk [vmem:[#allocation0] sm:$0x1] %vm19, %v18
    %s21 = scalar_lea.vmem [#allocation1], 1
    %v22 = vld [vmem:[%s21] sm:$0x1]
    %23 = vrot.lane.b32.xlu0 %v22, 32
    %v24 = vpop.permute.xlu0 %23
    %vm25 = vcmask 523520
    %26 = vst.msk [vmem:[#allocation0] sm:$0x1] %vm25, %v24
    %s28 = sshllo.u32 0, 1
    %v30 = vld [vmem:[#allocation0] sm:%s28]
    %s31 = sshllo.u32 0, 1
    %32 = vst [vmem:[%s1] sm:%s31] %v30

// kernel: guide_encoder_body_forward.4
$region0: #{guide_encoder_body_forward.4}
  #allocation0 [shape = 'u32[]', space=smem, size = 0x4, offset = 0x4, fixed_abs, tag = 'smem constant byte address 0x4 - core index']
  #allocation1 [shape = 'u32[144,128]{1,0:T(1,128)}', space=vmem, size = 0x12000, scoped, tag = 'internal scratch']
  %s0 = inlined_call_operand.vmem [shape: bf16[256,16], index: 0, kind: input, shape index: {}]
  %s1 = inlined_call_operand.vmem [shape: bf16[16,128], index: 1, kind: input, shape index: {}]
  %s2 = inlined_call_operand.vmem [shape: bf16[128,8], index: 2, kind: input, shape index: {}]
  %s3 = inlined_call_operand.vmem [shape: bf16[256,128], index: 3, kind: output, shape index: {0}]
  %s4 = inlined_call_operand.vmem [shape: f32[256,8], index: 4, kind: output, shape index: {1}]
  %5 = xla_tuple %s3, %s4
  %s6 = sld [smem:[#allocation0]]
  $region30: #{guide_encoder_body_forward.4} parent=0
    _
  %s8 = ssub.s32 1, %s6
  %s9 = scalar_select 0, %s8, %s6
  // Predicated region
  $region2: #{guide_encoder_body_forward.4} parent=0 // pred_check
    _
  $region3: #{guide_encoder_body_forward.4} parent=0 // pred_check_branch
    %11 = sbr.rel (0) target = $region5
  $region4: #{guide_encoder_body_forward.4} parent=0 // pred_region
    _
  $region5: #{guide_encoder_body_forward.4} parent=0 // pred_fallthru
    _
  // Predicated region
  $region6: #{guide_encoder_body_forward.4} parent=0 // pred_check
    _
  $region7: #{guide_encoder_body_forward.4} parent=0 // pred_check_branch
    %13 = sbr.rel (0) target = $region9
  $region8: #{guide_encoder_body_forward.4} parent=0 // pred_region
    _
  $region9: #{guide_encoder_body_forward.4} parent=0 // pred_fallthru
    _
  // Predicated region
  $region10: #{guide_encoder_body_forward.4} parent=0 // pred_check
    _
  $region11: #{guide_encoder_body_forward.4} parent=0 // pred_check_branch
    %15 = sbr.rel (0) target = $region13
  $region12: #{guide_encoder_body_forward.4} parent=0 // pred_region
    _
  $region13: #{guide_encoder_body_forward.4} parent=0 // pred_fallthru
    _
  %v17 = vld [vmem:[%s0] sm:$0xf]
  %v18 = vld [vmem:[%s0 + $0x4] sm:$0xf]
  %v19 = vld [vmem:[%s0 + $0x8] sm:$0xf]
  %v20 = vld [vmem:[%s0 + $0xc] sm:$0xf]
  %v21 = vld [vmem:[%s0 + $0x10] sm:$0xf]
  %v22 = vld [vmem:[%s0 + $0x14] sm:$0xf]
  %v23 = vld [vmem:[%s0 + $0x18] sm:$0xf]
  %v24 = vld [vmem:[%s0 + $0x1c] sm:$0xf]
  %v25 = vld [vmem:[%s0 + $0x20] sm:$0xf]
  %v26 = vld [vmem:[%s0 + $0x24] sm:$0xf]
  %v27 = vld [vmem:[%s0 + $0x28] sm:$0xf]
  %v28 = vld [vmem:[%s0 + $0x2c] sm:$0xf]
  %v29 = vld [vmem:[%s0 + $0x30] sm:$0xf]
  %v30 = vld [vmem:[%s0 + $0x34] sm:$0xf]
  %v31 = vld [vmem:[%s0 + $0x38] sm:$0xf]
  %v32 = vld [vmem:[%s0 + $0x3c] sm:$0xf]
  %v33 = vld [vmem:[%s0 + $0x40] sm:$0xf]
  %v34 = vld [vmem:[%s0 + $0x44] sm:$0xf]
  %v35 = vld [vmem:[%s0 + $0x48] sm:$0xf]
  %v36 = vld [vmem:[%s0 + $0x4c] sm:$0xf]
  %v37 = vld [vmem:[%s0 + $0x50] sm:$0xf]
  %v38 = vld [vmem:[%s0 + $0x54] sm:$0xf]
  %v39 = vld [vmem:[%s0 + $0x58] sm:$0xf]
  %v40 = vld [vmem:[%s0 + $0x5c] sm:$0xf]
  %v41 = vld [vmem:[%s0 + $0x60] sm:$0xf]
  %v42 = vld [vmem:[%s0 + $0x64] sm:$0xf]
  %v43 = vld [vmem:[%s0 + $0x68] sm:$0xf]
  %v44 = vld [vmem:[%s0 + $0x6c] sm:$0xf]
  %v45 = vld [vmem:[%s0 + $0x70] sm:$0xf]
  %v46 = vld [vmem:[%s0 + $0x74] sm:$0xf]
  %v47 = vld [vmem:[%s0 + $0x78] sm:$0xf]
  %v48 = vld [vmem:[%s0 + $0x7c] sm:$0xf]
  %v49 = vld [vmem:[%s1] sm:$0xf]
  %v50 = vld [vmem:[%s1 + $0x4] sm:$0xf]
  %v83 = vunpack.c.l.b16 %v17
  %v84 = vunpack.c.l.b16 %v18
  %v85 = vunpack.c.l.b16 %v19
  %v86 = vunpack.c.l.b16 %v20
  %v87 = vunpack.c.l.b16 %v21
  %v88 = vunpack.c.l.b16 %v22
  %v89 = vunpack.c.l.b16 %v23
  %v90 = vunpack.c.l.b16 %v24
  %v91 = vunpack.c.l.b16 %v25
  %v92 = vunpack.c.l.b16 %v26
  %v93 = vunpack.c.l.b16 %v27
  %v94 = vunpack.c.l.b16 %v28
  %v95 = vunpack.c.l.b16 %v29
  %v96 = vunpack.c.l.b16 %v30
  %v97 = vunpack.c.l.b16 %v31
  %v98 = vunpack.c.l.b16 %v32
  %v99 = vunpack.c.l.b16 %v33
  %v100 = vunpack.c.l.b16 %v34
  %v101 = vunpack.c.l.b16 %v35
  %v102 = vunpack.c.l.b16 %v36
  %v103 = vunpack.c.l.b16 %v37
  %v104 = vunpack.c.l.b16 %v38
  %v105 = vunpack.c.l.b16 %v39
  %v106 = vunpack.c.l.b16 %v40
  %v107 = vunpack.c.l.b16 %v41
  %v108 = vunpack.c.l.b16 %v42
  %v109 = vunpack.c.l.b16 %v43
  %v110 = vunpack.c.l.b16 %v44
  %v111 = vunpack.c.l.b16 %v45
  %v112 = vunpack.c.l.b16 %v46
  %v113 = vunpack.c.l.b16 %v47
  %v114 = vunpack.c.l.b16 %v48
  %v115 = vpack.c.b16 %v84, %v83
  %v116 = vpack.c.b16 %v86, %v85
  %v117 = vpack.c.b16 %v88, %v87
  %v118 = vpack.c.b16 %v90, %v89
  %v119 = vpack.c.b16 %v92, %v91
  %v120 = vpack.c.b16 %v94, %v93
  %v121 = vpack.c.b16 %v96, %v95
  %v122 = vpack.c.b16 %v98, %v97
  %v123 = vpack.c.b16 %v100, %v99
  %v124 = vpack.c.b16 %v102, %v101
  %v125 = vpack.c.b16 %v104, %v103
  %v126 = vpack.c.b16 %v106, %v105
  %v127 = vpack.c.b16 %v108, %v107
  %v128 = vpack.c.b16 %v110, %v109
  %v129 = vpack.c.b16 %v112, %v111
  %v130 = vpack.c.b16 %v114, %v113
  %v133 = vunpack.c.l.b16 %v49
  %v134 = vunpack.c.l.b16 %v50
  %v135 = vpack.c.b16 %v134, %v133
  %vm137 = vcmask 130048
  %v139 = vsel %vm137, %v115, 0
  %v142 = vsel %vm137, %v116, 0
  %v145 = vsel %vm137, %v117, 0
  %v148 = vsel %vm137, %v118, 0
  %v151 = vsel %vm137, %v119, 0
  %v154 = vsel %vm137, %v120, 0
  %v157 = vsel %vm137, %v121, 0
  %v160 = vsel %vm137, %v122, 0
  %v163 = vsel %vm137, %v123, 0
  %v166 = vsel %vm137, %v124, 0
  %v169 = vsel %vm137, %v125, 0
  %v172 = vsel %vm137, %v126, 0
  %v175 = vsel %vm137, %v127, 0
  %v178 = vsel %vm137, %v128, 0
  %v181 = vsel %vm137, %v129, 0
  %v184 = vsel %vm137, %v130, 0
  %186 = vmatprep.subr.bf16.mxu0 0
  %187 = vmatpush1.bf16.msra.mxu0 %v135
  %188 = vmatprep.subr.bf16.mxu0 0
  %189 = vmatpush1.bf16.msra.mxu0 0
  %190 = vmatprep.subr.bf16.mxu0 0
  %191 = vmatpush1.bf16.msra.mxu0 0
  %192 = vmatprep.subr.bf16.mxu0 0
  %193 = vmatpush1.bf16.msra.mxu0 0
  %194 = vmatprep.subr.bf16.mxu0 0
  %195 = vmatpush1.bf16.msra.mxu0 0
  %196 = vmatprep.subr.bf16.mxu0 0
  %197 = vmatpush1.bf16.msra.mxu0 0
  %198 = vmatprep.subr.bf16.mxu0 0
  %199 = vmatpush1.bf16.msra.mxu0 0
  %200 = vmatprep.subr.bf16.mxu0 0
  %201 = vmatpush1.bf16.msra.mxu0 0
  %202 = vmatprep.subr.bf16.mxu0 0
  %203 = vmatpush1.bf16.msra.mxu0 0
  %204 = vmatprep.subr.bf16.mxu0 0
  %205 = vmatpush1.bf16.msra.mxu0 0
  %206 = vmatprep.subr.bf16.mxu0 0
  %207 = vmatpush1.bf16.msra.mxu0 0
  %208 = vmatprep.subr.bf16.mxu0 0
  %209 = vmatpush1.bf16.msra.mxu0 0
  %210 = vmatprep.subr.bf16.mxu0 0
  %211 = vmatpush1.bf16.msra.mxu0 0
  %212 = vmatprep.subr.bf16.mxu0 0
  %213 = vmatpush1.bf16.msra.mxu0 0
  %214 = vmatprep.subr.bf16.mxu0 0
  %215 = vmatpush1.bf16.msra.mxu0 0
  %216 = vmatprep.subr.bf16.mxu0 0
  %217 = vmatpush1.bf16.msra.mxu0 0
  %218 = vmatprep.mubr.bf16.mxu0 0
  %219 = vmatmul.mubr.bf16.gmra.mrb[0].mxu0 %v139
  %v220 = vpop.f32.mrb[0].mxu0
  %v221 = vadd.f32 0.0, %v220
  %v222 = vpop.f32.mrb[0].mxu0
  %v223 = vpop.f32.mrb[0].mxu0
  %v224 = vadd.f32 0.0, %v223
  %v225 = vpop.f32.mrb[0].mxu0
  %226 = vmatprep.mubr.bf16.mxu0 0
  %227 = vmatmul.mubr.bf16.gmra.mrb[0].mxu0 %v142
  %v228 = vpop.f32.mrb[0].mxu0
  %v229 = vadd.f32 0.0, %v228
  %v230 = vpop.f32.mrb[0].mxu0
  %v231 = vpop.f32.mrb[0].mxu0
  %v232 = vadd.f32 0.0, %v231
  %v233 = vpop.f32.mrb[0].mxu0
  %234 = vmatprep.mubr.bf16.mxu0 0
  %235 = vmatmul.mubr.bf16.gmra.mrb[0].mxu0 %v145
  %v236 = vpop.f32.mrb[0].mxu0
  %v237 = vadd.f32 0.0, %v236
  %v238 = vpop.f32.mrb[0].mxu0
  %v239 = vpop.f32.mrb[0].mxu0
  %v240 = vadd.f32 0.0, %v239
  %v241 = vpop.f32.mrb[0].mxu0
  %242 = vmatprep.mubr.bf16.mxu0 0
  %243 = vmatmul.mubr.bf16.gmra.mrb[0].mxu0 %v148
  %v244 = vpop.f32.mrb[0].mxu0
  %v245 = vadd.f32 0.0, %v244
  %v246 = vpop.f32.mrb[0].mxu0
  %v247 = vpop.f32.mrb[0].mxu0
  %v248 = vadd.f32 0.0, %v247
  %v249 = vpop.f32.mrb[0].mxu0
  %250 = vmatprep.mubr.bf16.mxu0 0
  %251 = vmatmul.mubr.bf16.gmra.mrb[0].mxu0 %v151
  %v252 = vpop.f32.mrb[0].mxu0
  %v253 = vadd.f32 0.0, %v252
  %v254 = vpop.f32.mrb[0].mxu0
  %v255 = vpop.f32.mrb[0].mxu0
  %v256 = vadd.f32 0.0, %v255
  %v257 = vpop.f32.mrb[0].mxu0
  %258 = vmatprep.mubr.bf16.mxu0 0
  %259 = vmatmul.mubr.bf16.gmra.mrb[0].mxu0 %v154
  %v260 = vpop.f32.mrb[0].mxu0
  %v261 = vadd.f32 0.0, %v260
  %v262 = vpop.f32.mrb[0].mxu0
  %v263 = vpop.f32.mrb[0].mxu0
  %v264 = vadd.f32 0.0, %v263
  %v265 = vpop.f32.mrb[0].mxu0
  %266 = vmatprep.mubr.bf16.mxu0 0
  %267 = vmatmul.mubr.bf16.gmra.mrb[0].mxu0 %v157
  %v268 = vpop.f32.mrb[0].mxu0
  %v269 = vadd.f32 0.0, %v268
  %v270 = vpop.f32.mrb[0].mxu0
  %v271 = vpop.f32.mrb[0].mxu0
  %v272 = vadd.f32 0.0, %v271
  %v273 = vpop.f32.mrb[0].mxu0
  %274 = vmatprep.mubr.bf16.mxu0 0
  %275 = vmatmul.mubr.bf16.gmra.mrb[0].mxu0 %v160
  %v276 = vpop.f32.mrb[0].mxu0
  %v277 = vadd.f32 0.0, %v276
  %v278 = vpop.f32.mrb[0].mxu0
  %v279 = vpop.f32.mrb[0].mxu0
  %v280 = vadd.f32 0.0, %v279
  %v281 = vpop.f32.mrb[0].mxu0
  %282 = vmatprep.mubr.bf16.mxu0 0
  %283 = vmatmul.mubr.bf16.gmra.mrb[0].mxu0 %v163
  %v284 = vpop.f32.mrb[0].mxu0
  %v285 = vadd.f32 0.0, %v284
  %v286 = vpop.f32.mrb[0].mxu0
  %v287 = vpop.f32.mrb[0].mxu0
  %v288 = vadd.f32 0.0, %v287
  %v289 = vpop.f32.mrb[0].mxu0
  %290 = vmatprep.mubr.bf16.mxu0 0
  %291 = vmatmul.mubr.bf16.gmra.mrb[0].mxu0 %v166
  %v292 = vpop.f32.mrb[0].mxu0
  %v293 = vadd.f32 0.0, %v292
  %v294 = vpop.f32.mrb[0].mxu0
  %v295 = vpop.f32.mrb[0].mxu0
  %v296 = vadd.f32 0.0, %v295
  %v297 = vpop.f32.mrb[0].mxu0
  %298 = vmatprep.mubr.bf16.mxu0 0
  %299 = vmatmul.mubr.bf16.gmra.mrb[0].mxu0 %v169
  %v300 = vpop.f32.mrb[0].mxu0
  %v301 = vadd.f32 0.0, %v300
  %v302 = vpop.f32.mrb[0].mxu0
  %v303 = vpop.f32.mrb[0].mxu0
  %v304 = vadd.f32 0.0, %v303
  %v305 = vpop.f32.mrb[0].mxu0
  %306 = vmatprep.mubr.bf16.mxu0 0
  %307 = vmatmul.mubr.bf16.gmra.mrb[0].mxu0 %v172
  %v308 = vpop.f32.mrb[0].mxu0
  %v309 = vadd.f32 0.0, %v308
  %v310 = vpop.f32.mrb[0].mxu0
  %v311 = vpop.f32.mrb[0].mxu0
  %v312 = vadd.f32 0.0, %v311
  %v313 = vpop.f32.mrb[0].mxu0
  %314 = vmatprep.mubr.bf16.mxu0 0
  %315 = vmatmul.mubr.bf16.gmra.mrb[0].mxu0 %v175
  %v316 = vpop.f32.mrb[0].mxu0
  %v317 = vadd.f32 0.0, %v316
  %v318 = vpop.f32.mrb[0].mxu0
  %v319 = vpop.f32.mrb[0].mxu0
  %v320 = vadd.f32 0.0, %v319
  %v321 = vpop.f32.mrb[0].mxu0
  %322 = vmatprep.mubr.bf16.mxu0 0
  %323 = vmatmul.mubr.bf16.gmra.mrb[0].mxu0 %v178
  %v324 = vpop.f32.mrb[0].mxu0
  %v325 = vadd.f32 0.0, %v324
  %v326 = vpop.f32.mrb[0].mxu0
  %v327 = vpop.f32.mrb[0].mxu0
  %v328 = vadd.f32 0.0, %v327
  %v329 = vpop.f32.mrb[0].mxu0
  %330 = vmatprep.mubr.bf16.mxu0 0
  %331 = vmatmul.mubr.bf16.gmra.mrb[0].mxu0 %v181
  %v332 = vpop.f32.mrb[0].mxu0
  %v333 = vadd.f32 0.0, %v332
  %v334 = vpop.f32.mrb[0].mxu0
  %v335 = vpop.f32.mrb[0].mxu0
  %v336 = vadd.f32 0.0, %v335
  %v337 = vpop.f32.mrb[0].mxu0
  %338 = vmatprep.mubr.bf16.mxu0 0
  %339 = vmatmul.mubr.bf16.gmra.mrb[0].mxu0 %v184
  %v340 = vpop.f32.mrb[0].mxu0
  %v341 = vadd.f32 0.0, %v340
  %v342 = vpop.f32.mrb[0].mxu0
  %v343 = vpop.f32.mrb[0].mxu0
  %v344 = vadd.f32 0.0, %v343
  %v345 = vpop.f32.mrb[0].mxu0
  %346 = vdwg.mxu0
  %v347 = vpack.c.bf16 %v224, %v221
  %v348 = vpack.c.bf16 %v232, %v229
  %v349 = vpack.c.bf16 %v240, %v237
  %v350 = vpack.c.bf16 %v248, %v245
  %v351 = vpack.c.bf16 %v256, %v253
  %v352 = vpack.c.bf16 %v264, %v261
  %v353 = vpack.c.bf16 %v272, %v269
  %v354 = vpack.c.bf16 %v280, %v277
  %v355 = vpack.c.bf16 %v288, %v285
  %v356 = vpack.c.bf16 %v296, %v293
  %v357 = vpack.c.bf16 %v304, %v301
  %v358 = vpack.c.bf16 %v312, %v309
  %v359 = vpack.c.bf16 %v320, %v317
  %v360 = vpack.c.bf16 %v328, %v325
  %v361 = vpack.c.bf16 %v336, %v333
  %v362 = vpack.c.bf16 %v344, %v341
  %v379 = vunpack.c.l.b16 %v347
  %v380 = vunpack.c.h.b16 %v347
  %v381 = vunpack.c.l.b16 %v348
  %v382 = vunpack.c.h.b16 %v348
  %v383 = vunpack.c.l.b16 %v349
  %v384 = vunpack.c.h.b16 %v349
  %v385 = vunpack.c.l.b16 %v350
  %v386 = vunpack.c.h.b16 %v350
  %v387 = vunpack.c.l.b16 %v351
  %v388 = vunpack.c.h.b16 %v351
  %v389 = vunpack.c.l.b16 %v352
  %v390 = vunpack.c.h.b16 %v352
  %v391 = vunpack.c.l.b16 %v353
  %v392 = vunpack.c.h.b16 %v353
  %v393 = vunpack.c.l.b16 %v354
  %v394 = vunpack.c.h.b16 %v354
  %v395 = vunpack.c.l.b16 %v355
  %v396 = vunpack.c.h.b16 %v355
  %v397 = vunpack.c.l.b16 %v356
  %v398 = vunpack.c.h.b16 %v356
  %v399 = vunpack.c.l.b16 %v357
  %v400 = vunpack.c.h.b16 %v357
  %v401 = vunpack.c.l.b16 %v358
  %v402 = vunpack.c.h.b16 %v358
  %v403 = vunpack.c.l.b16 %v359
  %v404 = vunpack.c.h.b16 %v359
  %v405 = vunpack.c.l.b16 %v360
  %v406 = vunpack.c.h.b16 %v360
  %v407 = vunpack.c.l.b16 %v361
  %v408 = vunpack.c.h.b16 %v361
  %v409 = vunpack.c.l.b16 %v362
  %v410 = vunpack.c.h.b16 %v362
  %v411 = vpack.c.b16 %v379, %v379
  %v412 = vpack.c.b16 %v380, %v380
  %v413 = vpack.c.b16 %v381, %v381
  %v414 = vpack.c.b16 %v382, %v382
  %v415 = vpack.c.b16 %v383, %v383
  %v416 = vpack.c.b16 %v384, %v384
  %v417 = vpack.c.b16 %v385, %v385
  %v418 = vpack.c.b16 %v386, %v386
  %v419 = vpack.c.b16 %v387, %v387
  %v420 = vpack.c.b16 %v388, %v388
  %v421 = vpack.c.b16 %v389, %v389
  %v422 = vpack.c.b16 %v390, %v390
  %v423 = vpack.c.b16 %v391, %v391
  %v424 = vpack.c.b16 %v392, %v392
  %v425 = vpack.c.b16 %v393, %v393
  %v426 = vpack.c.b16 %v394, %v394
  %v427 = vpack.c.b16 %v395, %v395
  %v428 = vpack.c.b16 %v396, %v396
  %v429 = vpack.c.b16 %v397, %v397
  %v430 = vpack.c.b16 %v398, %v398
  %v431 = vpack.c.b16 %v399, %v399
  %v432 = vpack.c.b16 %v400, %v400
  %v433 = vpack.c.b16 %v401, %v401
  %v434 = vpack.c.b16 %v402, %v402
  %v435 = vpack.c.b16 %v403, %v403
  %v436 = vpack.c.b16 %v404, %v404
  %v437 = vpack.c.b16 %v405, %v405
  %v438 = vpack.c.b16 %v406, %v406
  %v439 = vpack.c.b16 %v407, %v407
  %v440 = vpack.c.b16 %v408, %v408
  %v441 = vpack.c.b16 %v409, %v409
  %v442 = vpack.c.b16 %v410, %v410
  %475 = vst [vmem:[%s3] sm:$0xf] %v411
  %476 = vst [vmem:[%s3 + $0x4] sm:$0xf] %v412
  %477 = vst [vmem:[%s3 + $0x8] sm:$0xf] %v413
  %478 = vst [vmem:[%s3 + $0xc] sm:$0xf] %v414
  %479 = vst [vmem:[%s3 + $0x10] sm:$0xf] %v415
  %480 = vst [vmem:[%s3 + $0x14] sm:$0xf] %v416
  %481 = vst [vmem:[%s3 + $0x18] sm:$0xf] %v417
  %482 = vst [vmem:[%s3 + $0x1c] sm:$0xf] %v418
  %483 = vst [vmem:[%s3 + $0x20] sm:$0xf] %v419
  %484 = vst [vmem:[%s3 + $0x24] sm:$0xf] %v420
  %485 = vst [vmem:[%s3 + $0x28] sm:$0xf] %v421
  %486 = vst [vmem:[%s3 + $0x2c] sm:$0xf] %v422
  %487 = vst [vmem:[%s3 + $0x30] sm:$0xf] %v423
  %488 = vst [vmem:[%s3 + $0x34] sm:$0xf] %v424
  %489 = vst [vmem:[%s3 + $0x38] sm:$0xf] %v425
  %490 = vst [vmem:[%s3 + $0x3c] sm:$0xf] %v426
  %491 = vst [vmem:[%s3 + $0x40] sm:$0xf] %v427
  %492 = vst [vmem:[%s3 + $0x44] sm:$0xf] %v428
  %493 = vst [vmem:[%s3 + $0x48] sm:$0xf] %v429
  %494 = vst [vmem:[%s3 + $0x4c] sm:$0xf] %v430
  %495 = vst [vmem:[%s3 + $0x50] sm:$0xf] %v431
  %496 = vst [vmem:[%s3 + $0x54] sm:$0xf] %v432
  %497 = vst [vmem:[%s3 + $0x58] sm:$0xf] %v433
  %498 = vst [vmem:[%s3 + $0x5c] sm:$0xf] %v434
  %499 = vst [vmem:[%s3 + $0x60] sm:$0xf] %v435
  %500 = vst [vmem:[%s3 + $0x64] sm:$0xf] %v436
  %501 = vst [vmem:[%s3 + $0x68] sm:$0xf] %v437
  %502 = vst [vmem:[%s3 + $0x6c] sm:$0xf] %v438
  %503 = vst [vmem:[%s3 + $0x70] sm:$0xf] %v439
  %504 = vst [vmem:[%s3 + $0x74] sm:$0xf] %v440
  %505 = vst [vmem:[%s3 + $0x78] sm:$0xf] %v441
  %506 = vst [vmem:[%s3 + $0x7c] sm:$0xf] %v442
  %v507 = vld [vmem:[%s2] sm:$0xf]
  %v508 = vld [vmem:[%s2 + $0x4] sm:$0xf]
  %v509 = vld [vmem:[%s2 + $0x8] sm:$0xf]
  %v510 = vld [vmem:[%s2 + $0xc] sm:$0xf]
  %v511 = vld [vmem:[%s2 + $0x10] sm:$0xf]
  %v512 = vld [vmem:[%s2 + $0x14] sm:$0xf]
  %v513 = vld [vmem:[%s2 + $0x18] sm:$0xf]
  %v514 = vld [vmem:[%s2 + $0x1c] sm:$0xf]
  %v515 = vld [vmem:[%s2 + $0x20] sm:$0xf]
  %v516 = vld [vmem:[%s2 + $0x24] sm:$0xf]
  %v517 = vld [vmem:[%s2 + $0x28] sm:$0xf]
  %v518 = vld [vmem:[%s2 + $0x2c] sm:$0xf]
  %v519 = vld [vmem:[%s2 + $0x30] sm:$0xf]
  %v520 = vld [vmem:[%s2 + $0x34] sm:$0xf]
  %v521 = vld [vmem:[%s2 + $0x38] sm:$0xf]
  %v522 = vld [vmem:[%s2 + $0x3c] sm:$0xf]
  %v539 = vunpack.c.l.b16 %v507
  %v540 = vunpack.c.l.b16 %v508
  %v541 = vunpack.c.l.b16 %v509
  %v542 = vunpack.c.l.b16 %v510
  %v543 = vunpack.c.l.b16 %v511
  %v544 = vunpack.c.l.b16 %v512
  %v545 = vunpack.c.l.b16 %v513
  %v546 = vunpack.c.l.b16 %v514
  %v547 = vunpack.c.l.b16 %v515
  %v548 = vunpack.c.l.b16 %v516
  %v549 = vunpack.c.l.b16 %v517
  %v550 = vunpack.c.l.b16 %v518
  %v551 = vunpack.c.l.b16 %v519
  %v552 = vunpack.c.l.b16 %v520
  %v553 = vunpack.c.l.b16 %v521
  %v554 = vunpack.c.l.b16 %v522
  %v555 = vpack.c.b16 %v540, %v539
  %v556 = vpack.c.b16 %v542, %v541
  %v557 = vpack.c.b16 %v544, %v543
  %v558 = vpack.c.b16 %v546, %v545
  %v559 = vpack.c.b16 %v548, %v547
  %v560 = vpack.c.b16 %v550, %v549
  %v561 = vpack.c.b16 %v552, %v551
  %v562 = vpack.c.b16 %v554, %v553
  %571 = vmatprep.subr.bf16.mxu0 0
  %572 = vmatpush1.bf16.msra.mxu0 %v555
  %573 = vmatprep.subr.bf16.mxu0 0
  %574 = vmatpush1.bf16.msra.mxu0 %v556
  %575 = vmatprep.subr.bf16.mxu0 0
  %576 = vmatpush1.bf16.msra.mxu0 %v557
  %577 = vmatprep.subr.bf16.mxu0 0
  %578 = vmatpush1.bf16.msra.mxu0 %v558
  %579 = vmatprep.subr.bf16.mxu0 0
  %580 = vmatpush1.bf16.msra.mxu0 %v559
  %581 = vmatprep.subr.bf16.mxu0 0
  %582 = vmatpush1.bf16.msra.mxu0 %v560
  %583 = vmatprep.subr.bf16.mxu0 0
  %584 = vmatpush1.bf16.msra.mxu0 %v561
  %585 = vmatprep.subr.bf16.mxu0 0
  %586 = vmatpush1.bf16.msra.mxu0 %v562
  %587 = vmatprep.subr.bf16.mxu0 0
  %588 = vmatpush1.bf16.msra.mxu0 0
  %589 = vmatprep.subr.bf16.mxu0 0
  %590 = vmatpush1.bf16.msra.mxu0 0
  %591 = vmatprep.subr.bf16.mxu0 0
  %592 = vmatpush1.bf16.msra.mxu0 0
  %593 = vmatprep.subr.bf16.mxu0 0
  %594 = vmatpush1.bf16.msra.mxu0 0
  %595 = vmatprep.subr.bf16.mxu0 0
  %596 = vmatpush1.bf16.msra.mxu0 0
  %597 = vmatprep.subr.bf16.mxu0 0
  %598 = vmatpush1.bf16.msra.mxu0 0
  %599 = vmatprep.subr.bf16.mxu0 0
  %600 = vmatpush1.bf16.msra.mxu0 0
  %601 = vmatprep.subr.bf16.mxu0 0
  %602 = vmatpush1.bf16.msra.mxu0 0
  %603 = vmatprep.mubr.bf16.mxu0 0
  %604 = vmatmul.mubr.bf16.gmra.mrb[0].mxu0 %v347
  %v605 = vpop.f32.mrb[0].mxu0
  %v606 = vadd.f32 0.0, %v605
  %v607 = vpop.f32.mrb[0].mxu0
  %v608 = vpop.f32.mrb[0].mxu0
  %v609 = vadd.f32 0.0, %v608
  %v610 = vpop.f32.mrb[0].mxu0
  %611 = vmatprep.mubr.bf16.mxu0 0
  %612 = vmatmul.mubr.bf16.gmra.mrb[0].mxu0 %v348
  %v613 = vpop.f32.mrb[0].mxu0
  %v614 = vadd.f32 0.0, %v613
  %v615 = vpop.f32.mrb[0].mxu0
  %v616 = vpop.f32.mrb[0].mxu0
  %v617 = vadd.f32 0.0, %v616
  %v618 = vpop.f32.mrb[0].mxu0
  %619 = vmatprep.mubr.bf16.mxu0 0
  %620 = vmatmul.mubr.bf16.gmra.mrb[0].mxu0 %v349
  %v621 = vpop.f32.mrb[0].mxu0
  %v622 = vadd.f32 0.0, %v621
  %v623 = vpop.f32.mrb[0].mxu0
  %v624 = vpop.f32.mrb[0].mxu0
  %v625 = vadd.f32 0.0, %v624
  %v626 = vpop.f32.mrb[0].mxu0
  %627 = vmatprep.mubr.bf16.mxu0 0
  %628 = vmatmul.mubr.bf16.gmra.mrb[0].mxu0 %v350
  %v629 = vpop.f32.mrb[0].mxu0
  %v630 = vadd.f32 0.0, %v629
  %v631 = vpop.f32.mrb[0].mxu0
  %v632 = vpop.f32.mrb[0].mxu0
  %v633 = vadd.f32 0.0, %v632
  %v634 = vpop.f32.mrb[0].mxu0
  %635 = vmatprep.mubr.bf16.mxu0 0
  %636 = vmatmul.mubr.bf16.gmra.mrb[0].mxu0 %v351
  %v637 = vpop.f32.mrb[0].mxu0
  %v638 = vadd.f32 0.0, %v637
  %v639 = vpop.f32.mrb[0].mxu0
  %v640 = vpop.f32.mrb[0].mxu0
  %v641 = vadd.f32 0.0, %v640
  %v642 = vpop.f32.mrb[0].mxu0
  %643 = vmatprep.mubr.bf16.mxu0 0
  %644 = vmatmul.mubr.bf16.gmra.mrb[0].mxu0 %v352
  %v645 = vpop.f32.mrb[0].mxu0
  %v646 = vadd.f32 0.0, %v645
  %v647 = vpop.f32.mrb[0].mxu0
  %v648 = vpop.f32.mrb[0].mxu0
  %v649 = vadd.f32 0.0, %v648
  %v650 = vpop.f32.mrb[0].mxu0
  %651 = vmatprep.mubr.bf16.mxu0 0
  %652 = vmatmul.mubr.bf16.gmra.mrb[0].mxu0 %v353
  %v653 = vpop.f32.mrb[0].mxu0
  %v654 = vadd.f32 0.0, %v653
  %v655 = vpop.f32.mrb[0].mxu0
  %v656 = vpop.f32.mrb[0].mxu0
  %v657 = vadd.f32 0.0, %v656
  %v658 = vpop.f32.mrb[0].mxu0
  %659 = vmatprep.mubr.bf16.mxu0 0
  %660 = vmatmul.mubr.bf16.gmra.mrb[0].mxu0 %v354
  %v661 = vpop.f32.mrb[0].mxu0
  %v662 = vadd.f32 0.0, %v661
  %v663 = vpop.f32.mrb[0].mxu0
  %v664 = vpop.f32.mrb[0].mxu0
  %v665 = vadd.f32 0.0, %v664
  %v666 = vpop.f32.mrb[0].mxu0
  %667 = vmatprep.mubr.bf16.mxu0 0
  %668 = vmatmul.mubr.bf16.gmra.mrb[0].mxu0 %v355
  %v669 = vpop.f32.mrb[0].mxu0
  %v670 = vadd.f32 0.0, %v669
  %v671 = vpop.f32.mrb[0].mxu0
  %v672 = vpop.f32.mrb[0].mxu0
  %v673 = vadd.f32 0.0, %v672
  %v674 = vpop.f32.mrb[0].mxu0
  %675 = vmatprep.mubr.bf16.mxu0 0
  %676 = vmatmul.mubr.bf16.gmra.mrb[0].mxu0 %v356
  %v677 = vpop.f32.mrb[0].mxu0
  %v678 = vadd.f32 0.0, %v677
  %v679 = vpop.f32.mrb[0].mxu0
  %v680 = vpop.f32.mrb[0].mxu0
  %v681 = vadd.f32 0.0, %v680
  %v682 = vpop.f32.mrb[0].mxu0
  %683 = vmatprep.mubr.bf16.mxu0 0
  %684 = vmatmul.mubr.bf16.gmra.mrb[0].mxu0 %v357
  %v685 = vpop.f32.mrb[0].mxu0
  %v686 = vadd.f32 0.0, %v685
  %v687 = vpop.f32.mrb[0].mxu0
  %v688 = vpop.f32.mrb[0].mxu0
  %v689 = vadd.f32 0.0, %v688
  %v690 = vpop.f32.mrb[0].mxu0
  %691 = vmatprep.mubr.bf16.mxu0 0
  %692 = vmatmul.mubr.bf16.gmra.mrb[0].mxu0 %v358
  %v693 = vpop.f32.mrb[0].mxu0
  %v694 = vadd.f32 0.0, %v693
  %v695 = vpop.f32.mrb[0].mxu0
  %v696 = vpop.f32.mrb[0].mxu0
  %v697 = vadd.f32 0.0, %v696
  %v698 = vpop.f32.mrb[0].mxu0
  %699 = vmatprep.mubr.bf16.mxu0 0
  %700 = vmatmul.mubr.bf16.gmra.mrb[0].mxu0 %v359
  %v701 = vpop.f32.mrb[0].mxu0
  %v702 = vadd.f32 0.0, %v701
  %v703 = vpop.f32.mrb[0].mxu0
  %v704 = vpop.f32.mrb[0].mxu0
  %v705 = vadd.f32 0.0, %v704
  %v706 = vpop.f32.mrb[0].mxu0
  %707 = vmatprep.mubr.bf16.mxu0 0
  %708 = vmatmul.mubr.bf16.gmra.mrb[0].mxu0 %v360
  %v709 = vpop.f32.mrb[0].mxu0
  %v710 = vadd.f32 0.0, %v709
  %v711 = vpop.f32.mrb[0].mxu0
  %v712 = vpop.f32.mrb[0].mxu0
  %v713 = vadd.f32 0.0, %v712
  %v714 = vpop.f32.mrb[0].mxu0
  %715 = vmatprep.mubr.bf16.mxu0 0
  %716 = vmatmul.mubr.bf16.gmra.mrb[0].mxu0 %v361
  %v717 = vpop.f32.mrb[0].mxu0
  %v718 = vadd.f32 0.0, %v717
  %v719 = vpop.f32.mrb[0].mxu0
  %v720 = vpop.f32.mrb[0].mxu0
  %v721 = vadd.f32 0.0, %v720
  %v722 = vpop.f32.mrb[0].mxu0
  %723 = vmatprep.mubr.bf16.mxu0 0
  %724 = vmatmul.mubr.bf16.gmra.mrb[0].mxu0 %v362
  %v725 = vpop.f32.mrb[0].mxu0
  %v726 = vadd.f32 0.0, %v725
  %v727 = vpop.f32.mrb[0].mxu0
  %v728 = vpop.f32.mrb[0].mxu0
  %v729 = vadd.f32 0.0, %v728
  %v730 = vpop.f32.mrb[0].mxu0
  %731 = vdwg.mxu0
  %vm732 = vcmask 64512
  %733 = vst.msk [vmem:[%s4] sm:$0xff] %vm732, %v606
  %734 = vst.msk [vmem:[%s4 + $0x8] sm:$0xff] %vm732, %v609
  %735 = vst.msk [vmem:[%s4 + $0x10] sm:$0xff] %vm732, %v614
  %736 = vst.msk [vmem:[%s4 + $0x18] sm:$0xff] %vm732, %v617
  %737 = vst.msk [vmem:[%s4 + $0x20] sm:$0xff] %vm732, %v622
  %738 = vst.msk [vmem:[%s4 + $0x28] sm:$0xff] %vm732, %v625
  %739 = vst.msk [vmem:[%s4 + $0x30] sm:$0xff] %vm732, %v630
  %740 = vst.msk [vmem:[%s4 + $0x38] sm:$0xff] %vm732, %v633
  %741 = vst.msk [vmem:[%s4 + $0x40] sm:$0xff] %vm732, %v638
  %742 = vst.msk [vmem:[%s4 + $0x48] sm:$0xff] %vm732, %v641
  %743 = vst.msk [vmem:[%s4 + $0x50] sm:$0xff] %vm732, %v646
  %744 = vst.msk [vmem:[%s4 + $0x58] sm:$0xff] %vm732, %v649
  %745 = vst.msk [vmem:[%s4 + $0x60] sm:$0xff] %vm732, %v654
  %746 = vst.msk [vmem:[%s4 + $0x68] sm:$0xff] %vm732, %v657
  %747 = vst.msk [vmem:[%s4 + $0x70] sm:$0xff] %vm732, %v662
  %748 = vst.msk [vmem:[%s4 + $0x78] sm:$0xff] %vm732, %v665
  %749 = vst.msk [vmem:[%s4 + $0x80] sm:$0xff] %vm732, %v670
  %750 = vst.msk [vmem:[%s4 + $0x88] sm:$0xff] %vm732, %v673
  %751 = vst.msk [vmem:[%s4 + $0x90] sm:$0xff] %vm732, %v678
  %752 = vst.msk [vmem:[%s4 + $0x98] sm:$0xff] %vm732, %v681
  %753 = vst.msk [vmem:[%s4 + $0xa0] sm:$0xff] %vm732, %v686
  %754 = vst.msk [vmem:[%s4 + $0xa8] sm:$0xff] %vm732, %v689
  %755 = vst.msk [vmem:[%s4 + $0xb0] sm:$0xff] %vm732, %v694
  %756 = vst.msk [vmem:[%s4 + $0xb8] sm:$0xff] %vm732, %v697
  %757 = vst.msk [vmem:[%s4 + $0xc0] sm:$0xff] %vm732, %v702
  %758 = vst.msk [vmem:[%s4 + $0xc8] sm:$0xff] %vm732, %v705
  %759 = vst.msk [vmem:[%s4 + $0xd0] sm:$0xff] %vm732, %v710
  %760 = vst.msk [vmem:[%s4 + $0xd8] sm:$0xff] %vm732, %v713
  %761 = vst.msk [vmem:[%s4 + $0xe0] sm:$0xff] %vm732, %v718
  %762 = vst.msk [vmem:[%s4 + $0xe8] sm:$0xff] %vm732, %v721
  %763 = vst.msk [vmem:[%s4 + $0xf0] sm:$0xff] %vm732, %v726
  %764 = vst.msk [vmem:[%s4 + $0xf8] sm:$0xff] %vm732, %v729
  // Predicated region
  $region14: #{guide_encoder_body_forward.4} parent=0 // pred_check
    _
  $region15: #{guide_encoder_body_forward.4} parent=0 // pred_check_branch
    %766 = sbr.rel (0) target = $region17
  $region16: #{guide_encoder_body_forward.4} parent=0 // pred_region
    _
  $region17: #{guide_encoder_body_forward.4} parent=0 // pred_fallthru
    _
  // Predicated region
  $region18: #{guide_encoder_body_forward.4} parent=0 // pred_check
    _
  $region19: #{guide_encoder_body_forward.4} parent=0 // pred_check_branch
    %768 = sbr.rel (0) target = $region21
  $region20: #{guide_encoder_body_forward.4} parent=0 // pred_region
    _
  $region21: #{guide_encoder_body_forward.4} parent=0 // pred_fallthru
    _
  // Predicated region
  $region22: #{guide_encoder_body_forward.4} parent=0 // pred_check
    _
  $region23: #{guide_encoder_body_forward.4} parent=0 // pred_check_branch
    %770 = sbr.rel (0) target = $region25
  $region24: #{guide_encoder_body_forward.4} parent=0 // pred_region
    _
  $region25: #{guide_encoder_body_forward.4} parent=0 // pred_fallthru
    _
  // Predicated region
  $region26: #{guide_encoder_body_forward.4} parent=0 // pred_check
    _
  $region27: #{guide_encoder_body_forward.4} parent=0 // pred_check_branch
    %772 = sbr.rel (0) target = $region29
  $region28: #{guide_encoder_body_forward.4} parent=0 // pred_region
    _
  $region29: #{guide_encoder_body_forward.4} parent=0 // pred_fallthru
    _

// kernel: guide_encoder_body_forward.6
$region0: #{guide_encoder_body_forward.6}
  #allocation0 [shape = 'u32[]', space=smem, size = 0x4, offset = 0x4, fixed_abs, tag = 'smem constant byte address 0x4 - core index']
  #allocation1 [shape = 'u32[144,128]{1,0:T(1,128)}', space=vmem, size = 0x12000, scoped, tag = 'internal scratch']
  %s0 = inlined_call_operand.vmem [shape: bf16[256,128], index: 0, kind: input, shape index: {}]
  %s1 = inlined_call_operand.vmem [shape: bf16[128,128], index: 1, kind: input, shape index: {}]
  %s2 = inlined_call_operand.vmem [shape: bf16[128,8], index: 2, kind: input, shape index: {}]
  %s3 = inlined_call_operand.vmem [shape: bf16[256,128], index: 3, kind: output, shape index: {0}]
  %s4 = inlined_call_operand.vmem [shape: f32[256,8], index: 4, kind: output, shape index: {1}]
  %5 = xla_tuple %s3, %s4
  %s6 = sld [smem:[#allocation0]]
  $region30: #{guide_encoder_body_forward.6} parent=0
    _
  %s8 = ssub.s32 1, %s6
  %s9 = scalar_select 0, %s8, %s6
  // Predicated region
  $region2: #{guide_encoder_body_forward.6} parent=0 // pred_check
    _
  $region3: #{guide_encoder_body_forward.6} parent=0 // pred_check_branch
    %11 = sbr.rel (0) target = $region5
  $region4: #{guide_encoder_body_forward.6} parent=0 // pred_region
    _
  $region5: #{guide_encoder_body_forward.6} parent=0 // pred_fallthru
    _
  // Predicated region
  $region6: #{guide_encoder_body_forward.6} parent=0 // pred_check
    _
  $region7: #{guide_encoder_body_forward.6} parent=0 // pred_check_branch
    %13 = sbr.rel (0) target = $region9
  $region8: #{guide_encoder_body_forward.6} parent=0 // pred_region
    _
  $region9: #{guide_encoder_body_forward.6} parent=0 // pred_fallthru
    _
  // Predicated region
  $region10: #{guide_encoder_body_forward.6} parent=0 // pred_check
    _
  $region11: #{guide_encoder_body_forward.6} parent=0 // pred_check_branch
    %15 = sbr.rel (0) target = $region13
  $region12: #{guide_encoder_body_forward.6} parent=0 // pred_region
    _
  $region13: #{guide_encoder_body_forward.6} parent=0 // pred_fallthru
    _
  %v17 = vld [vmem:[%s0] sm:$0xf]
  %v18 = vld [vmem:[%s0 + $0x4] sm:$0xf]
  %v19 = vld [vmem:[%s0 + $0x8] sm:$0xf]
  %v20 = vld [vmem:[%s0 + $0xc] sm:$0xf]
  %v21 = vld [vmem:[%s0 + $0x10] sm:$0xf]
  %v22 = vld [vmem:[%s0 + $0x14] sm:$0xf]
  %v23 = vld [vmem:[%s0 + $0x18] sm:$0xf]
  %v24 = vld [vmem:[%s0 + $0x1c] sm:$0xf]
  %v25 = vld [vmem:[%s0 + $0x20] sm:$0xf]
  %v26 = vld [vmem:[%s0 + $0x24] sm:$0xf]
  %v27 = vld [vmem:[%s0 + $0x28] sm:$0xf]
  %v28 = vld [vmem:[%s0 + $0x2c] sm:$0xf]
  %v29 = vld [vmem:[%s0 + $0x30] sm:$0xf]
  %v30 = vld [vmem:[%s0 + $0x34] sm:$0xf]
  %v31 = vld [vmem:[%s0 + $0x38] sm:$0xf]
  %v32 = vld [vmem:[%s0 + $0x3c] sm:$0xf]
  %v33 = vld [vmem:[%s0 + $0x40] sm:$0xf]
  %v34 = vld [vmem:[%s0 + $0x44] sm:$0xf]
  %v35 = vld [vmem:[%s0 + $0x48] sm:$0xf]
  %v36 = vld [vmem:[%s0 + $0x4c] sm:$0xf]
  %v37 = vld [vmem:[%s0 + $0x50] sm:$0xf]
  %v38 = vld [vmem:[%s0 + $0x54] sm:$0xf]
  %v39 = vld [vmem:[%s0 + $0x58] sm:$0xf]
  %v40 = vld [vmem:[%s0 + $0x5c] sm:$0xf]
  %v41 = vld [vmem:[%s0 + $0x60] sm:$0xf]
  %v42 = vld [vmem:[%s0 + $0x64] sm:$0xf]
  %v43 = vld [vmem:[%s0 + $0x68] sm:$0xf]
  %v44 = vld [vmem:[%s0 + $0x6c] sm:$0xf]
  %v45 = vld [vmem:[%s0 + $0x70] sm:$0xf]
  %v46 = vld [vmem:[%s0 + $0x74] sm:$0xf]
  %v47 = vld [vmem:[%s0 + $0x78] sm:$0xf]
  %v48 = vld [vmem:[%s0 + $0x7c] sm:$0xf]
  %v49 = vld [vmem:[%s1] sm:$0xf]
  %v50 = vld [vmem:[%s1 + $0x4] sm:$0xf]
  %v51 = vld [vmem:[%s1 + $0x8] sm:$0xf]
  %v52 = vld [vmem:[%s1 + $0xc] sm:$0xf]
  %v53 = vld [vmem:[%s1 + $0x10] sm:$0xf]
  %v54 = vld [vmem:[%s1 + $0x14] sm:$0xf]
  %v55 = vld [vmem:[%s1 + $0x18] sm:$0xf]
  %v56 = vld [vmem:[%s1 + $0x1c] sm:$0xf]
  %v57 = vld [vmem:[%s1 + $0x20] sm:$0xf]
  %v58 = vld [vmem:[%s1 + $0x24] sm:$0xf]
  %v59 = vld [vmem:[%s1 + $0x28] sm:$0xf]
  %v60 = vld [vmem:[%s1 + $0x2c] sm:$0xf]
  %v61 = vld [vmem:[%s1 + $0x30] sm:$0xf]
  %v62 = vld [vmem:[%s1 + $0x34] sm:$0xf]
  %v63 = vld [vmem:[%s1 + $0x38] sm:$0xf]
  %v64 = vld [vmem:[%s1 + $0x3c] sm:$0xf]
  %v97 = vunpack.c.l.b16 %v17
  %v98 = vunpack.c.l.b16 %v18
  %v99 = vunpack.c.l.b16 %v19
  %v100 = vunpack.c.l.b16 %v20
  %v101 = vunpack.c.l.b16 %v21
  %v102 = vunpack.c.l.b16 %v22
  %v103 = vunpack.c.l.b16 %v23
  %v104 = vunpack.c.l.b16 %v24
  %v105 = vunpack.c.l.b16 %v25
  %v106 = vunpack.c.l.b16 %v26
  %v107 = vunpack.c.l.b16 %v27
  %v108 = vunpack.c.l.b16 %v28
  %v109 = vunpack.c.l.b16 %v29
  %v110 = vunpack.c.l.b16 %v30
  %v111 = vunpack.c.l.b16 %v31
  %v112 = vunpack.c.l.b16 %v32
  %v113 = vunpack.c.l.b16 %v33
  %v114 = vunpack.c.l.b16 %v34
  %v115 = vunpack.c.l.b16 %v35
  %v116 = vunpack.c.l.b16 %v36
  %v117 = vunpack.c.l.b16 %v37
  %v118 = vunpack.c.l.b16 %v38
  %v119 = vunpack.c.l.b16 %v39
  %v120 = vunpack.c.l.b16 %v40
  %v121 = vunpack.c.l.b16 %v41
  %v122 = vunpack.c.l.b16 %v42
  %v123 = vunpack.c.l.b16 %v43
  %v124 = vunpack.c.l.b16 %v44
  %v125 = vunpack.c.l.b16 %v45
  %v126 = vunpack.c.l.b16 %v46
  %v127 = vunpack.c.l.b16 %v47
  %v128 = vunpack.c.l.b16 %v48
  %v129 = vpack.c.b16 %v98, %v97
  %v130 = vpack.c.b16 %v100, %v99
  %v131 = vpack.c.b16 %v102, %v101
  %v132 = vpack.c.b16 %v104, %v103
  %v133 = vpack.c.b16 %v106, %v105
  %v134 = vpack.c.b16 %v108, %v107
  %v135 = vpack.c.b16 %v110, %v109
  %v136 = vpack.c.b16 %v112, %v111
  %v137 = vpack.c.b16 %v114, %v113
  %v138 = vpack.c.b16 %v116, %v115
  %v139 = vpack.c.b16 %v118, %v117
  %v140 = vpack.c.b16 %v120, %v119
  %v141 = vpack.c.b16 %v122, %v121
  %v142 = vpack.c.b16 %v124, %v123
  %v143 = vpack.c.b16 %v126, %v125
  %v144 = vpack.c.b16 %v128, %v127
  %v177 = vunpack.c.l.b16 %v49
  %v178 = vunpack.c.l.b16 %v50
  %v179 = vunpack.c.l.b16 %v51
  %v180 = vunpack.c.l.b16 %v52
  %v181 = vunpack.c.l.b16 %v53
  %v182 = vunpack.c.l.b16 %v54
  %v183 = vunpack.c.l.b16 %v55
  %v184 = vunpack.c.l.b16 %v56
  %v185 = vunpack.c.l.b16 %v57
  %v186 = vunpack.c.l.b16 %v58
  %v187 = vunpack.c.l.b16 %v59
  %v188 = vunpack.c.l.b16 %v60
  %v189 = vunpack.c.l.b16 %v61
  %v190 = vunpack.c.l.b16 %v62
  %v191 = vunpack.c.l.b16 %v63
  %v192 = vunpack.c.l.b16 %v64
  %v193 = vpack.c.b16 %v178, %v177
  %v194 = vpack.c.b16 %v180, %v179
  %v195 = vpack.c.b16 %v182, %v181
  %v196 = vpack.c.b16 %v184, %v183
  %v197 = vpack.c.b16 %v186, %v185
  %v198 = vpack.c.b16 %v188, %v187
  %v199 = vpack.c.b16 %v190, %v189
  %v200 = vpack.c.b16 %v192, %v191
  %209 = vmatprep.subr.bf16.mxu0 0
  %210 = vmatpush1.bf16.msra.mxu0 %v193
  %211 = vmatprep.subr.bf16.mxu0 0
  %212 = vmatpush1.bf16.msra.mxu0 %v194
  %213 = vmatprep.subr.bf16.mxu0 0
  %214 = vmatpush1.bf16.msra.mxu0 %v195
  %215 = vmatprep.subr.bf16.mxu0 0
  %216 = vmatpush1.bf16.msra.mxu0 %v196
  %217 = vmatprep.subr.bf16.mxu0 0
  %218 = vmatpush1.bf16.msra.mxu0 %v197
  %219 = vmatprep.subr.bf16.mxu0 0
  %220 = vmatpush1.bf16.msra.mxu0 %v198
  %221 = vmatprep.subr.bf16.mxu0 0
  %222 = vmatpush1.bf16.msra.mxu0 %v199
  %223 = vmatprep.subr.bf16.mxu0 0
  %224 = vmatpush1.bf16.msra.mxu0 %v200
  %225 = vmatprep.subr.bf16.mxu0 0
  %226 = vmatpush1.bf16.msra.mxu0 0
  %227 = vmatprep.subr.bf16.mxu0 0
  %228 = vmatpush1.bf16.msra.mxu0 0
  %229 = vmatprep.subr.bf16.mxu0 0
  %230 = vmatpush1.bf16.msra.mxu0 0
  %231 = vmatprep.subr.bf16.mxu0 0
  %232 = vmatpush1.bf16.msra.mxu0 0
  %233 = vmatprep.subr.bf16.mxu0 0
  %234 = vmatpush1.bf16.msra.mxu0 0
  %235 = vmatprep.subr.bf16.mxu0 0
  %236 = vmatpush1.bf16.msra.mxu0 0
  %237 = vmatprep.subr.bf16.mxu0 0
  %238 = vmatpush1.bf16.msra.mxu0 0
  %239 = vmatprep.subr.bf16.mxu0 0
  %240 = vmatpush1.bf16.msra.mxu0 0
  %241 = vmatprep.mubr.bf16.mxu0 0
  %242 = vmatmul.mubr.bf16.gmra.mrb[0].mxu0 %v129
  %v243 = vpop.f32.mrb[0].mxu0
  %v244 = vadd.f32 0.0, %v243
  %v245 = vpop.f32.mrb[0].mxu0
  %v246 = vpop.f32.mrb[0].mxu0
  %v247 = vadd.f32 0.0, %v246
  %v248 = vpop.f32.mrb[0].mxu0
  %249 = vmatprep.mubr.bf16.mxu0 0
  %250 = vmatmul.mubr.bf16.gmra.mrb[0].mxu0 %v130
  %v251 = vpop.f32.mrb[0].mxu0
  %v252 = vadd.f32 0.0, %v251
  %v253 = vpop.f32.mrb[0].mxu0
  %v254 = vpop.f32.mrb[0].mxu0
  %v255 = vadd.f32 0.0, %v254
  %v256 = vpop.f32.mrb[0].mxu0
  %257 = vmatprep.mubr.bf16.mxu0 0
  %258 = vmatmul.mubr.bf16.gmra.mrb[0].mxu0 %v131
  %v259 = vpop.f32.mrb[0].mxu0
  %v260 = vadd.f32 0.0, %v259
  %v261 = vpop.f32.mrb[0].mxu0
  %v262 = vpop.f32.mrb[0].mxu0
  %v263 = vadd.f32 0.0, %v262
  %v264 = vpop.f32.mrb[0].mxu0
  %265 = vmatprep.mubr.bf16.mxu0 0
  %266 = vmatmul.mubr.bf16.gmra.mrb[0].mxu0 %v132
  %v267 = vpop.f32.mrb[0].mxu0
  %v268 = vadd.f32 0.0, %v267
  %v269 = vpop.f32.mrb[0].mxu0
  %v270 = vpop.f32.mrb[0].mxu0
  %v271 = vadd.f32 0.0, %v270
  %v272 = vpop.f32.mrb[0].mxu0
  %273 = vmatprep.mubr.bf16.mxu0 0
  %274 = vmatmul.mubr.bf16.gmra.mrb[0].mxu0 %v133
  %v275 = vpop.f32.mrb[0].mxu0
  %v276 = vadd.f32 0.0, %v275
  %v277 = vpop.f32.mrb[0].mxu0
  %v278 = vpop.f32.mrb[0].mxu0
  %v279 = vadd.f32 0.0, %v278
  %v280 = vpop.f32.mrb[0].mxu0
  %281 = vmatprep.mubr.bf16.mxu0 0
  %282 = vmatmul.mubr.bf16.gmra.mrb[0].mxu0 %v134
  %v283 = vpop.f32.mrb[0].mxu0
  %v284 = vadd.f32 0.0, %v283
  %v285 = vpop.f32.mrb[0].mxu0
  %v286 = vpop.f32.mrb[0].mxu0
  %v287 = vadd.f32 0.0, %v286
  %v288 = vpop.f32.mrb[0].mxu0
  %289 = vmatprep.mubr.bf16.mxu0 0
  %290 = vmatmul.mubr.bf16.gmra.mrb[0].mxu0 %v135
  %v291 = vpop.f32.mrb[0].mxu0
  %v292 = vadd.f32 0.0, %v291
  %v293 = vpop.f32.mrb[0].mxu0
  %v294 = vpop.f32.mrb[0].mxu0
  %v295 = vadd.f32 0.0, %v294
  %v296 = vpop.f32.mrb[0].mxu0
  %297 = vmatprep.mubr.bf16.mxu0 0
  %298 = vmatmul.mubr.bf16.gmra.mrb[0].mxu0 %v136
  %v299 = vpop.f32.mrb[0].mxu0
  %v300 = vadd.f32 0.0, %v299
  %v301 = vpop.f32.mrb[0].mxu0
  %v302 = vpop.f32.mrb[0].mxu0
  %v303 = vadd.f32 0.0, %v302
  %v304 = vpop.f32.mrb[0].mxu0
  %305 = vmatprep.mubr.bf16.mxu0 0
  %306 = vmatmul.mubr.bf16.gmra.mrb[0].mxu0 %v137
  %v307 = vpop.f32.mrb[0].mxu0
  %v308 = vadd.f32 0.0, %v307
  %v309 = vpop.f32.mrb[0].mxu0
  %v310 = vpop.f32.mrb[0].mxu0
  %v311 = vadd.f32 0.0, %v310
  %v312 = vpop.f32.mrb[0].mxu0
  %313 = vmatprep.mubr.bf16.mxu0 0
  %314 = vmatmul.mubr.bf16.gmra.mrb[0].mxu0 %v138
  %v315 = vpop.f32.mrb[0].mxu0
  %v316 = vadd.f32 0.0, %v315
  %v317 = vpop.f32.mrb[0].mxu0
  %v318 = vpop.f32.mrb[0].mxu0
  %v319 = vadd.f32 0.0, %v318
  %v320 = vpop.f32.mrb[0].mxu0
  %321 = vmatprep.mubr.bf16.mxu0 0
  %322 = vmatmul.mubr.bf16.gmra.mrb[0].mxu0 %v139
  %v323 = vpop.f32.mrb[0].mxu0
  %v324 = vadd.f32 0.0, %v323
  %v325 = vpop.f32.mrb[0].mxu0
  %v326 = vpop.f32.mrb[0].mxu0
  %v327 = vadd.f32 0.0, %v326
  %v328 = vpop.f32.mrb[0].mxu0
  %329 = vmatprep.mubr.bf16.mxu0 0
  %330 = vmatmul.mubr.bf16.gmra.mrb[0].mxu0 %v140
  %v331 = vpop.f32.mrb[0].mxu0
  %v332 = vadd.f32 0.0, %v331
  %v333 = vpop.f32.mrb[0].mxu0
  %v334 = vpop.f32.mrb[0].mxu0
  %v335 = vadd.f32 0.0, %v334
  %v336 = vpop.f32.mrb[0].mxu0
  %337 = vmatprep.mubr.bf16.mxu0 0
  %338 = vmatmul.mubr.bf16.gmra.mrb[0].mxu0 %v141
  %v339 = vpop.f32.mrb[0].mxu0
  %v340 = vadd.f32 0.0, %v339
  %v341 = vpop.f32.mrb[0].mxu0
  %v342 = vpop.f32.mrb[0].mxu0
  %v343 = vadd.f32 0.0, %v342
  %v344 = vpop.f32.mrb[0].mxu0
  %345 = vmatprep.mubr.bf16.mxu0 0
  %346 = vmatmul.mubr.bf16.gmra.mrb[0].mxu0 %v142
  %v347 = vpop.f32.mrb[0].mxu0
  %v348 = vadd.f32 0.0, %v347
  %v349 = vpop.f32.mrb[0].mxu0
  %v350 = vpop.f32.mrb[0].mxu0
  %v351 = vadd.f32 0.0, %v350
  %v352 = vpop.f32.mrb[0].mxu0
  %353 = vmatprep.mubr.bf16.mxu0 0
  %354 = vmatmul.mubr.bf16.gmra.mrb[0].mxu0 %v143
  %v355 = vpop.f32.mrb[0].mxu0
  %v356 = vadd.f32 0.0, %v355
  %v357 = vpop.f32.mrb[0].mxu0
  %v358 = vpop.f32.mrb[0].mxu0
  %v359 = vadd.f32 0.0, %v358
  %v360 = vpop.f32.mrb[0].mxu0
  %361 = vmatprep.mubr.bf16.mxu0 0
  %362 = vmatmul.mubr.bf16.gmra.mrb[0].mxu0 %v144
  %v363 = vpop.f32.mrb[0].mxu0
  %v364 = vadd.f32 0.0, %v363
  %v365 = vpop.f32.mrb[0].mxu0
  %v366 = vpop.f32.mrb[0].mxu0
  %v367 = vadd.f32 0.0, %v366
  %v368 = vpop.f32.mrb[0].mxu0
  %369 = vdwg.mxu0
  %v370 = vpack.c.bf16 %v247, %v244
  %v371 = vpack.c.bf16 %v255, %v252
  %v372 = vpack.c.bf16 %v263, %v260
  %v373 = vpack.c.bf16 %v271, %v268
  %v374 = vpack.c.bf16 %v279, %v276
  %v375 = vpack.c.bf16 %v287, %v284
  %v376 = vpack.c.bf16 %v295, %v292
  %v377 = vpack.c.bf16 %v303, %v300
  %v378 = vpack.c.bf16 %v311, %v308
  %v379 = vpack.c.bf16 %v319, %v316
  %v380 = vpack.c.bf16 %v327, %v324
  %v381 = vpack.c.bf16 %v335, %v332
  %v382 = vpack.c.bf16 %v343, %v340
  %v383 = vpack.c.bf16 %v351, %v348
  %v384 = vpack.c.bf16 %v359, %v356
  %v385 = vpack.c.bf16 %v367, %v364
  %v402 = vunpack.c.l.b16 %v370
  %v403 = vunpack.c.h.b16 %v370
  %v404 = vunpack.c.l.b16 %v371
  %v405 = vunpack.c.h.b16 %v371
  %v406 = vunpack.c.l.b16 %v372
  %v407 = vunpack.c.h.b16 %v372
  %v408 = vunpack.c.l.b16 %v373
  %v409 = vunpack.c.h.b16 %v373
  %v410 = vunpack.c.l.b16 %v374
  %v411 = vunpack.c.h.b16 %v374
  %v412 = vunpack.c.l.b16 %v375
  %v413 = vunpack.c.h.b16 %v375
  %v414 = vunpack.c.l.b16 %v376
  %v415 = vunpack.c.h.b16 %v376
  %v416 = vunpack.c.l.b16 %v377
  %v417 = vunpack.c.h.b16 %v377
  %v418 = vunpack.c.l.b16 %v378
  %v419 = vunpack.c.h.b16 %v378
  %v420 = vunpack.c.l.b16 %v379
  %v421 = vunpack.c.h.b16 %v379
  %v422 = vunpack.c.l.b16 %v380
  %v423 = vunpack.c.h.b16 %v380
  %v424 = vunpack.c.l.b16 %v381
  %v425 = vunpack.c.h.b16 %v381
  %v426 = vunpack.c.l.b16 %v382
  %v427 = vunpack.c.h.b16 %v382
  %v428 = vunpack.c.l.b16 %v383
  %v429 = vunpack.c.h.b16 %v383
  %v430 = vunpack.c.l.b16 %v384
  %v431 = vunpack.c.h.b16 %v384
  %v432 = vunpack.c.l.b16 %v385
  %v433 = vunpack.c.h.b16 %v385
  %v434 = vpack.c.b16 %v402, %v402
  %v435 = vpack.c.b16 %v403, %v403
  %v436 = vpack.c.b16 %v404, %v404
  %v437 = vpack.c.b16 %v405, %v405
  %v438 = vpack.c.b16 %v406, %v406
  %v439 = vpack.c.b16 %v407, %v407
  %v440 = vpack.c.b16 %v408, %v408
  %v441 = vpack.c.b16 %v409, %v409
  %v442 = vpack.c.b16 %v410, %v410
  %v443 = vpack.c.b16 %v411, %v411
  %v444 = vpack.c.b16 %v412, %v412
  %v445 = vpack.c.b16 %v413, %v413
  %v446 = vpack.c.b16 %v414, %v414
  %v447 = vpack.c.b16 %v415, %v415
  %v448 = vpack.c.b16 %v416, %v416
  %v449 = vpack.c.b16 %v417, %v417
  %v450 = vpack.c.b16 %v418, %v418
  %v451 = vpack.c.b16 %v419, %v419
  %v452 = vpack.c.b16 %v420, %v420
  %v453 = vpack.c.b16 %v421, %v421
  %v454 = vpack.c.b16 %v422, %v422
  %v455 = vpack.c.b16 %v423, %v423
  %v456 = vpack.c.b16 %v424, %v424
  %v457 = vpack.c.b16 %v425, %v425
  %v458 = vpack.c.b16 %v426, %v426
  %v459 = vpack.c.b16 %v427, %v427
  %v460 = vpack.c.b16 %v428, %v428
  %v461 = vpack.c.b16 %v429, %v429
  %v462 = vpack.c.b16 %v430, %v430
  %v463 = vpack.c.b16 %v431, %v431
  %v464 = vpack.c.b16 %v432, %v432
  %v465 = vpack.c.b16 %v433, %v433
  %498 = vst [vmem:[%s3] sm:$0xf] %v434
  %499 = vst [vmem:[%s3 + $0x4] sm:$0xf] %v435
  %500 = vst [vmem:[%s3 + $0x8] sm:$0xf] %v436
  %501 = vst [vmem:[%s3 + $0xc] sm:$0xf] %v437
  %502 = vst [vmem:[%s3 + $0x10] sm:$0xf] %v438
  %503 = vst [vmem:[%s3 + $0x14] sm:$0xf] %v439
  %504 = vst [vmem:[%s3 + $0x18] sm:$0xf] %v440
  %505 = vst [vmem:[%s3 + $0x1c] sm:$0xf] %v441
  %506 = vst [vmem:[%s3 + $0x20] sm:$0xf] %v442
  %507 = vst [vmem:[%s3 + $0x24] sm:$0xf] %v443
  %508 = vst [vmem:[%s3 + $0x28] sm:$0xf] %v444
  %509 = vst [vmem:[%s3 + $0x2c] sm:$0xf] %v445
  %510 = vst [vmem:[%s3 + $0x30] sm:$0xf] %v446
  %511 = vst [vmem:[%s3 + $0x34] sm:$0xf] %v447
  %512 = vst [vmem:[%s3 + $0x38] sm:$0xf] %v448
  %513 = vst [vmem:[%s3 + $0x3c] sm:$0xf] %v449
  %514 = vst [vmem:[%s3 + $0x40] sm:$0xf] %v450
  %515 = vst [vmem:[%s3 + $0x44] sm:$0xf] %v451
  %516 = vst [vmem:[%s3 + $0x48] sm:$0xf] %v452
  %517 = vst [vmem:[%s3 + $0x4c] sm:$0xf] %v453
  %518 = vst [vmem:[%s3 + $0x50] sm:$0xf] %v454
  %519 = vst [vmem:[%s3 + $0x54] sm:$0xf] %v455
  %520 = vst [vmem:[%s3 + $0x58] sm:$0xf] %v456
  %521 = vst [vmem:[%s3 + $0x5c] sm:$0xf] %v457
  %522 = vst [vmem:[%s3 + $0x60] sm:$0xf] %v458
  %523 = vst [vmem:[%s3 + $0x64] sm:$0xf] %v459
  %524 = vst [vmem:[%s3 + $0x68] sm:$0xf] %v460
  %525 = vst [vmem:[%s3 + $0x6c] sm:$0xf] %v461
  %526 = vst [vmem:[%s3 + $0x70] sm:$0xf] %v462
  %527 = vst [vmem:[%s3 + $0x74] sm:$0xf] %v463
  %528 = vst [vmem:[%s3 + $0x78] sm:$0xf] %v464
  %529 = vst [vmem:[%s3 + $0x7c] sm:$0xf] %v465
  %v530 = vld [vmem:[%s2] sm:$0xf]
  %v531 = vld [vmem:[%s2 + $0x4] sm:$0xf]
  %v532 = vld [vmem:[%s2 + $0x8] sm:$0xf]
  %v533 = vld [vmem:[%s2 + $0xc] sm:$0xf]
  %v534 = vld [vmem:[%s2 + $0x10] sm:$0xf]
  %v535 = vld [vmem:[%s2 + $0x14] sm:$0xf]
  %v536 = vld [vmem:[%s2 + $0x18] sm:$0xf]
  %v537 = vld [vmem:[%s2 + $0x1c] sm:$0xf]
  %v538 = vld [vmem:[%s2 + $0x20] sm:$0xf]
  %v539 = vld [vmem:[%s2 + $0x24] sm:$0xf]
  %v540 = vld [vmem:[%s2 + $0x28] sm:$0xf]
  %v541 = vld [vmem:[%s2 + $0x2c] sm:$0xf]
  %v542 = vld [vmem:[%s2 + $0x30] sm:$0xf]
  %v543 = vld [vmem:[%s2 + $0x34] sm:$0xf]
  %v544 = vld [vmem:[%s2 + $0x38] sm:$0xf]
  %v545 = vld [vmem:[%s2 + $0x3c] sm:$0xf]
  %v562 = vunpack.c.l.b16 %v530
  %v563 = vunpack.c.l.b16 %v531
  %v564 = vunpack.c.l.b16 %v532
  %v565 = vunpack.c.l.b16 %v533
  %v566 = vunpack.c.l.b16 %v534
  %v567 = vunpack.c.l.b16 %v535
  %v568 = vunpack.c.l.b16 %v536
  %v569 = vunpack.c.l.b16 %v537
  %v570 = vunpack.c.l.b16 %v538
  %v571 = vunpack.c.l.b16 %v539
  %v572 = vunpack.c.l.b16 %v540
  %v573 = vunpack.c.l.b16 %v541
  %v574 = vunpack.c.l.b16 %v542
  %v575 = vunpack.c.l.b16 %v543
  %v576 = vunpack.c.l.b16 %v544
  %v577 = vunpack.c.l.b16 %v545
  %v578 = vpack.c.b16 %v563, %v562
  %v579 = vpack.c.b16 %v565, %v564
  %v580 = vpack.c.b16 %v567, %v566
  %v581 = vpack.c.b16 %v569, %v568
  %v582 = vpack.c.b16 %v571, %v570
  %v583 = vpack.c.b16 %v573, %v572
  %v584 = vpack.c.b16 %v575, %v574
  %v585 = vpack.c.b16 %v577, %v576
  %594 = vmatprep.subr.bf16.mxu0 0
  %595 = vmatpush1.bf16.msra.mxu0 %v578
  %596 = vmatprep.subr.bf16.mxu0 0
  %597 = vmatpush1.bf16.msra.mxu0 %v579
  %598 = vmatprep.subr.bf16.mxu0 0
  %599 = vmatpush1.bf16.msra.mxu0 %v580
  %600 = vmatprep.subr.bf16.mxu0 0
  %601 = vmatpush1.bf16.msra.mxu0 %v581
  %602 = vmatprep.subr.bf16.mxu0 0
  %603 = vmatpush1.bf16.msra.mxu0 %v582
  %604 = vmatprep.subr.bf16.mxu0 0
  %605 = vmatpush1.bf16.msra.mxu0 %v583
  %606 = vmatprep.subr.bf16.mxu0 0
  %607 = vmatpush1.bf16.msra.mxu0 %v584
  %608 = vmatprep.subr.bf16.mxu0 0
  %609 = vmatpush1.bf16.msra.mxu0 %v585
  %610 = vmatprep.subr.bf16.mxu0 0
  %611 = vmatpush1.bf16.msra.mxu0 0
  %612 = vmatprep.subr.bf16.mxu0 0
  %613 = vmatpush1.bf16.msra.mxu0 0
  %614 = vmatprep.subr.bf16.mxu0 0
  %615 = vmatpush1.bf16.msra.mxu0 0
  %616 = vmatprep.subr.bf16.mxu0 0
  %617 = vmatpush1.bf16.msra.mxu0 0
  %618 = vmatprep.subr.bf16.mxu0 0
  %619 = vmatpush1.bf16.msra.mxu0 0
  %620 = vmatprep.subr.bf16.mxu0 0
  %621 = vmatpush1.bf16.msra.mxu0 0
  %622 = vmatprep.subr.bf16.mxu0 0
  %623 = vmatpush1.bf16.msra.mxu0 0
  %624 = vmatprep.subr.bf16.mxu0 0
  %625 = vmatpush1.bf16.msra.mxu0 0
  %626 = vmatprep.mubr.bf16.mxu0 0
  %627 = vmatmul.mubr.bf16.gmra.mrb[0].mxu0 %v370
  %v628 = vpop.f32.mrb[0].mxu0
  %v629 = vadd.f32 0.0, %v628
  %v630 = vpop.f32.mrb[0].mxu0
  %v631 = vpop.f32.mrb[0].mxu0
  %v632 = vadd.f32 0.0, %v631
  %v633 = vpop.f32.mrb[0].mxu0
  %634 = vmatprep.mubr.bf16.mxu0 0
  %635 = vmatmul.mubr.bf16.gmra.mrb[0].mxu0 %v371
  %v636 = vpop.f32.mrb[0].mxu0
  %v637 = vadd.f32 0.0, %v636
  %v638 = vpop.f32.mrb[0].mxu0
  %v639 = vpop.f32.mrb[0].mxu0
  %v640 = vadd.f32 0.0, %v639
  %v641 = vpop.f32.mrb[0].mxu0
  %642 = vmatprep.mubr.bf16.mxu0 0
  %643 = vmatmul.mubr.bf16.gmra.mrb[0].mxu0 %v372
  %v644 = vpop.f32.mrb[0].mxu0
  %v645 = vadd.f32 0.0, %v644
  %v646 = vpop.f32.mrb[0].mxu0
  %v647 = vpop.f32.mrb[0].mxu0
  %v648 = vadd.f32 0.0, %v647
  %v649 = vpop.f32.mrb[0].mxu0
  %650 = vmatprep.mubr.bf16.mxu0 0
  %651 = vmatmul.mubr.bf16.gmra.mrb[0].mxu0 %v373
  %v652 = vpop.f32.mrb[0].mxu0
  %v653 = vadd.f32 0.0, %v652
  %v654 = vpop.f32.mrb[0].mxu0
  %v655 = vpop.f32.mrb[0].mxu0
  %v656 = vadd.f32 0.0, %v655
  %v657 = vpop.f32.mrb[0].mxu0
  %658 = vmatprep.mubr.bf16.mxu0 0
  %659 = vmatmul.mubr.bf16.gmra.mrb[0].mxu0 %v374
  %v660 = vpop.f32.mrb[0].mxu0
  %v661 = vadd.f32 0.0, %v660
  %v662 = vpop.f32.mrb[0].mxu0
  %v663 = vpop.f32.mrb[0].mxu0
  %v664 = vadd.f32 0.0, %v663
  %v665 = vpop.f32.mrb[0].mxu0
  %666 = vmatprep.mubr.bf16.mxu0 0
  %667 = vmatmul.mubr.bf16.gmra.mrb[0].mxu0 %v375
  %v668 = vpop.f32.mrb[0].mxu0
  %v669 = vadd.f32 0.0, %v668
  %v670 = vpop.f32.mrb[0].mxu0
  %v671 = vpop.f32.mrb[0].mxu0
  %v672 = vadd.f32 0.0, %v671
  %v673 = vpop.f32.mrb[0].mxu0
  %674 = vmatprep.mubr.bf16.mxu0 0
  %675 = vmatmul.mubr.bf16.gmra.mrb[0].mxu0 %v376
  %v676 = vpop.f32.mrb[0].mxu0
  %v677 = vadd.f32 0.0, %v676
  %v678 = vpop.f32.mrb[0].mxu0
  %v679 = vpop.f32.mrb[0].mxu0
  %v680 = vadd.f32 0.0, %v679
  %v681 = vpop.f32.mrb[0].mxu0
  %682 = vmatprep.mubr.bf16.mxu0 0
  %683 = vmatmul.mubr.bf16.gmra.mrb[0].mxu0 %v377
  %v684 = vpop.f32.mrb[0].mxu0
  %v685 = vadd.f32 0.0, %v684
  %v686 = vpop.f32.mrb[0].mxu0
  %v687 = vpop.f32.mrb[0].mxu0
  %v688 = vadd.f32 0.0, %v687
  %v689 = vpop.f32.mrb[0].mxu0
  %690 = vmatprep.mubr.bf16.mxu0 0
  %691 = vmatmul.mubr.bf16.gmra.mrb[0].mxu0 %v378
  %v692 = vpop.f32.mrb[0].mxu0
  %v693 = vadd.f32 0.0, %v692
  %v694 = vpop.f32.mrb[0].mxu0
  %v695 = vpop.f32.mrb[0].mxu0
  %v696 = vadd.f32 0.0, %v695
  %v697 = vpop.f32.mrb[0].mxu0
  %698 = vmatprep.mubr.bf16.mxu0 0
  %699 = vmatmul.mubr.bf16.gmra.mrb[0].mxu0 %v379
  %v700 = vpop.f32.mrb[0].mxu0
  %v701 = vadd.f32 0.0, %v700
  %v702 = vpop.f32.mrb[0].mxu0
  %v703 = vpop.f32.mrb[0].mxu0
  %v704 = vadd.f32 0.0, %v703
  %v705 = vpop.f32.mrb[0].mxu0
  %706 = vmatprep.mubr.bf16.mxu0 0
  %707 = vmatmul.mubr.bf16.gmra.mrb[0].mxu0 %v380
  %v708 = vpop.f32.mrb[0].mxu0
  %v709 = vadd.f32 0.0, %v708
  %v710 = vpop.f32.mrb[0].mxu0
  %v711 = vpop.f32.mrb[0].mxu0
  %v712 = vadd.f32 0.0, %v711
  %v713 = vpop.f32.mrb[0].mxu0
  %714 = vmatprep.mubr.bf16.mxu0 0
  %715 = vmatmul.mubr.bf16.gmra.mrb[0].mxu0 %v381
  %v716 = vpop.f32.mrb[0].mxu0
  %v717 = vadd.f32 0.0, %v716
  %v718 = vpop.f32.mrb[0].mxu0
  %v719 = vpop.f32.mrb[0].mxu0
  %v720 = vadd.f32 0.0, %v719
  %v721 = vpop.f32.mrb[0].mxu0
  %722 = vmatprep.mubr.bf16.mxu0 0
  %723 = vmatmul.mubr.bf16.gmra.mrb[0].mxu0 %v382
  %v724 = vpop.f32.mrb[0].mxu0
  %v725 = vadd.f32 0.0, %v724
  %v726 = vpop.f32.mrb[0].mxu0
  %v727 = vpop.f32.mrb[0].mxu0
  %v728 = vadd.f32 0.0, %v727
  %v729 = vpop.f32.mrb[0].mxu0
  %730 = vmatprep.mubr.bf16.mxu0 0
  %731 = vmatmul.mubr.bf16.gmra.mrb[0].mxu0 %v383
  %v732 = vpop.f32.mrb[0].mxu0
  %v733 = vadd.f32 0.0, %v732
  %v734 = vpop.f32.mrb[0].mxu0
  %v735 = vpop.f32.mrb[0].mxu0
  %v736 = vadd.f32 0.0, %v735
  %v737 = vpop.f32.mrb[0].mxu0
  %738 = vmatprep.mubr.bf16.mxu0 0
  %739 = vmatmul.mubr.bf16.gmra.mrb[0].mxu0 %v384
  %v740 = vpop.f32.mrb[0].mxu0
  %v741 = vadd.f32 0.0, %v740
  %v742 = vpop.f32.mrb[0].mxu0
  %v743 = vpop.f32.mrb[0].mxu0
  %v744 = vadd.f32 0.0, %v743
  %v745 = vpop.f32.mrb[0].mxu0
  %746 = vmatprep.mubr.bf16.mxu0 0
  %747 = vmatmul.mubr.bf16.gmra.mrb[0].mxu0 %v385
  %v748 = vpop.f32.mrb[0].mxu0
  %v749 = vadd.f32 0.0, %v748
  %v750 = vpop.f32.mrb[0].mxu0
  %v751 = vpop.f32.mrb[0].mxu0
  %v752 = vadd.f32 0.0, %v751
  %v753 = vpop.f32.mrb[0].mxu0
  %754 = vdwg.mxu0
  %vm755 = vcmask 64512
  %756 = vst.msk [vmem:[%s4] sm:$0xff] %vm755, %v629
  %757 = vst.msk [vmem:[%s4 + $0x8] sm:$0xff] %vm755, %v632
  %758 = vst.msk [vmem:[%s4 + $0x10] sm:$0xff] %vm755, %v637
  %759 = vst.msk [vmem:[%s4 + $0x18] sm:$0xff] %vm755, %v640
  %760 = vst.msk [vmem:[%s4 + $0x20] sm:$0xff] %vm755, %v645
  %761 = vst.msk [vmem:[%s4 + $0x28] sm:$0xff] %vm755, %v648
  %762 = vst.msk [vmem:[%s4 + $0x30] sm:$0xff] %vm755, %v653
  %763 = vst.msk [vmem:[%s4 + $0x38] sm:$0xff] %vm755, %v656
  %764 = vst.msk [vmem:[%s4 + $0x40] sm:$0xff] %vm755, %v661
  %765 = vst.msk [vmem:[%s4 + $0x48] sm:$0xff] %vm755, %v664
  %766 = vst.msk [vmem:[%s4 + $0x50] sm:$0xff] %vm755, %v669
  %767 = vst.msk [vmem:[%s4 + $0x58] sm:$0xff] %vm755, %v672
  %768 = vst.msk [vmem:[%s4 + $0x60] sm:$0xff] %vm755, %v677
  %769 = vst.msk [vmem:[%s4 + $0x68] sm:$0xff] %vm755, %v680
  %770 = vst.msk [vmem:[%s4 + $0x70] sm:$0xff] %vm755, %v685
  %771 = vst.msk [vmem:[%s4 + $0x78] sm:$0xff] %vm755, %v688
  %772 = vst.msk [vmem:[%s4 + $0x80] sm:$0xff] %vm755, %v693
  %773 = vst.msk [vmem:[%s4 + $0x88] sm:$0xff] %vm755, %v696
  %774 = vst.msk [vmem:[%s4 + $0x90] sm:$0xff] %vm755, %v701
  %775 = vst.msk [vmem:[%s4 + $0x98] sm:$0xff] %vm755, %v704
  %776 = vst.msk [vmem:[%s4 + $0xa0] sm:$0xff] %vm755, %v709
  %777 = vst.msk [vmem:[%s4 + $0xa8] sm:$0xff] %vm755, %v712
  %778 = vst.msk [vmem:[%s4 + $0xb0] sm:$0xff] %vm755, %v717
  %779 = vst.msk [vmem:[%s4 + $0xb8] sm:$0xff] %vm755, %v720
  %780 = vst.msk [vmem:[%s4 + $0xc0] sm:$0xff] %vm755, %v725
  %781 = vst.msk [vmem:[%s4 + $0xc8] sm:$0xff] %vm755, %v728
  %782 = vst.msk [vmem:[%s4 + $0xd0] sm:$0xff] %vm755, %v733
  %783 = vst.msk [vmem:[%s4 + $0xd8] sm:$0xff] %vm755, %v736
  %784 = vst.msk [vmem:[%s4 + $0xe0] sm:$0xff] %vm755, %v741
  %785 = vst.msk [vmem:[%s4 + $0xe8] sm:$0xff] %vm755, %v744
  %786 = vst.msk [vmem:[%s4 + $0xf0] sm:$0xff] %vm755, %v749
  %787 = vst.msk [vmem:[%s4 + $0xf8] sm:$0xff] %vm755, %v752
  // Predicated region
  $region14: #{guide_encoder_body_forward.6} parent=0 // pred_check
    _
  $region15: #{guide_encoder_body_forward.6} parent=0 // pred_check_branch
    %789 = sbr.rel (0) target = $region17
  $region16: #{guide_encoder_body_forward.6} parent=0 // pred_region
    _
  $region17: #{guide_encoder_body_forward.6} parent=0 // pred_fallthru
    _
  // Predicated region
  $region18: #{guide_encoder_body_forward.6} parent=0 // pred_check
    _
  $region19: #{guide_encoder_body_forward.6} parent=0 // pred_check_branch
    %791 = sbr.rel (0) target = $region21
  $region20: #{guide_encoder_body_forward.6} parent=0 // pred_region
    _
  $region21: #{guide_encoder_body_forward.6} parent=0 // pred_fallthru
    _
  // Predicated region
  $region22: #{guide_encoder_body_forward.6} parent=0 // pred_check
    _
  $region23: #{guide_encoder_body_forward.6} parent=0 // pred_check_branch
    %793 = sbr.rel (0) target = $region25
  $region24: #{guide_encoder_body_forward.6} parent=0 // pred_region
    _
  $region25: #{guide_encoder_body_forward.6} parent=0 // pred_fallthru
    _
  // Predicated region
  $region26: #{guide_encoder_body_forward.6} parent=0 // pred_check
    _
  $region27: #{guide_encoder_body_forward.6} parent=0 // pred_check_branch
    %795 = sbr.rel (0) target = $region29
  $region28: #{guide_encoder_body_forward.6} parent=0 // pred_region
    _
  $region29: #{guide_encoder_body_forward.6} parent=0 // pred_fallthru
    _

// kernel: guide_encoder_body_forward.5
$region0: #{guide_encoder_body_forward.5}
  #allocation0 [shape = 'u32[]', space=smem, size = 0x4, offset = 0x4, fixed_abs, tag = 'smem constant byte address 0x4 - core index']
  #allocation1 [shape = 'u32[144,128]{1,0:T(1,128)}', space=vmem, size = 0x12000, scoped, tag = 'internal scratch']
  #allocation2 [shape = 'f32[256,4]{1,0:T(8,128)}', space=vmem, size = 0x20000, scoped, tag = 'scratch operand']
  #allocation3 [shape = 'f32[256,4]{1,0:T(8,128)}', space=vmem, size = 0x20000, scoped, tag = 'scratch operand']
  #allocation4 [shape = 'f32[256,128]{1,0:T(8,128)}', space=vmem, size = 0x20000, scoped, tag = 'scratch operand']
  %s0 = inlined_call_operand.vmem [shape: bf16[256,256], index: 0, kind: input, shape index: {}]
  %s1 = inlined_call_operand.vmem [shape: s8[256,256], index: 1, kind: input, shape index: {}]
  %s2 = inlined_call_operand.vmem [shape: f32[4,256], index: 2, kind: input, shape index: {}]
  %s3 = inlined_call_operand.vmem [shape: f32[256,4], index: 3, kind: input, shape index: {}]
  %s4 = inlined_call_operand.vmem [shape: bf16[256,128], index: 4, kind: input, shape index: {}]
  %s5 = inlined_call_operand.vmem [shape: f32[4,128], index: 5, kind: input, shape index: {}]
  %s6 = inlined_call_operand.vmem [shape: f32[1,128], index: 6, kind: input, shape index: {}]
  %s7 = inlined_call_operand.vmem [shape: f32[256,128], index: 7, kind: output, shape index: {}]
  %s8 = sld [smem:[#allocation0]]
  $region46: #{guide_encoder_body_forward.5} parent=0
    _
  %s10 = ssub.s32 1, %s8
  %s11 = scalar_select 0, %s10, %s8
  // Predicated region
  $region2: #{guide_encoder_body_forward.5} parent=0 // pred_check
    _
  $region3: #{guide_encoder_body_forward.5} parent=0 // pred_check_branch
    %13 = sbr.rel (0) target = $region5
  $region4: #{guide_encoder_body_forward.5} parent=0 // pred_region
    _
  $region5: #{guide_encoder_body_forward.5} parent=0 // pred_fallthru
    _
  // Predicated region
  $region6: #{guide_encoder_body_forward.5} parent=0 // pred_check
    _
  $region7: #{guide_encoder_body_forward.5} parent=0 // pred_check_branch
    %15 = sbr.rel (0) target = $region9
  $region8: #{guide_encoder_body_forward.5} parent=0 // pred_region
    _
  $region9: #{guide_encoder_body_forward.5} parent=0 // pred_fallthru
    _
  // Predicated region
  $region10: #{guide_encoder_body_forward.5} parent=0 // pred_check
    _
  $region11: #{guide_encoder_body_forward.5} parent=0 // pred_check_branch
    %17 = sbr.rel (0) target = $region13
  $region12: #{guide_encoder_body_forward.5} parent=0 // pred_region
    _
  $region13: #{guide_encoder_body_forward.5} parent=0 // pred_fallthru
    _
  // Predicated region
  $region14: #{guide_encoder_body_forward.5} parent=0 // pred_check
    _
  $region15: #{guide_encoder_body_forward.5} parent=0 // pred_check_branch
    %19 = sbr.rel (0) target = $region17
  $region16: #{guide_encoder_body_forward.5} parent=0 // pred_region
    _
  $region17: #{guide_encoder_body_forward.5} parent=0 // pred_fallthru
    _
  // Predicated region
  $region18: #{guide_encoder_body_forward.5} parent=0 // pred_check
    _
  $region19: #{guide_encoder_body_forward.5} parent=0 // pred_check_branch
    %21 = sbr.rel (0) target = $region21
  $region20: #{guide_encoder_body_forward.5} parent=0 // pred_region
    _
  $region21: #{guide_encoder_body_forward.5} parent=0 // pred_fallthru
    _
  // Predicated region
  $region22: #{guide_encoder_body_forward.5} parent=0 // pred_check
    _
  $region23: #{guide_encoder_body_forward.5} parent=0 // pred_check_branch
    %23 = sbr.rel (0) target = $region25
  $region24: #{guide_encoder_body_forward.5} parent=0 // pred_region
    _
  $region25: #{guide_encoder_body_forward.5} parent=0 // pred_fallthru
    _
  // Predicated region
  $region26: #{guide_encoder_body_forward.5} parent=0 // pred_check
    _
  $region27: #{guide_encoder_body_forward.5} parent=0 // pred_check_branch
    %25 = sbr.rel (0) target = $region29
  $region28: #{guide_encoder_body_forward.5} parent=0 // pred_region
    _
  $region29: #{guide_encoder_body_forward.5} parent=0 // pred_fallthru
    _
  %p27 = scmp.eq.s32.totalorder 0, 0
  // Predicated region
  $region30: #{guide_encoder_body_forward.5} parent=0 // pred_check
    %p28 = pneg %p27
  $region31: #{guide_encoder_body_forward.5} parent=0 // pred_check_branch
    %30 = sbr.rel (%p28) target = $region33
  $region32: #{guide_encoder_body_forward.5} parent=0 // pred_region
    %vm31 = vcmask 31744
    %32 = vst.msk [vmem:[#allocation2] sm:$0xff] %vm31, -1e+30
    %33 = vst.msk [vmem:[#allocation2 + $0x8] sm:$0xff] %vm31, -1e+30
    %34 = vst.msk [vmem:[#allocation2 + $0x10] sm:$0xff] %vm31, -1e+30
    %35 = vst.msk [vmem:[#allocation2 + $0x18] sm:$0xff] %vm31, -1e+30
    %36 = vst.msk [vmem:[#allocation2 + $0x20] sm:$0xff] %vm31, -1e+30
    %37 = vst.msk [vmem:[#allocation2 + $0x28] sm:$0xff] %vm31, -1e+30
    %38 = vst.msk [vmem:[#allocation2 + $0x30] sm:$0xff] %vm31, -1e+30
    %39 = vst.msk [vmem:[#allocation2 + $0x38] sm:$0xff] %vm31, -1e+30
    %40 = vst.msk [vmem:[#allocation2 + $0x40] sm:$0xff] %vm31, -1e+30
    %41 = vst.msk [vmem:[#allocation2 + $0x48] sm:$0xff] %vm31, -1e+30
    %42 = vst.msk [vmem:[#allocation2 + $0x50] sm:$0xff] %vm31, -1e+30
    %43 = vst.msk [vmem:[#allocation2 + $0x58] sm:$0xff] %vm31, -1e+30
    %44 = vst.msk [vmem:[#allocation2 + $0x60] sm:$0xff] %vm31, -1e+30
    %45 = vst.msk [vmem:[#allocation2 + $0x68] sm:$0xff] %vm31, -1e+30
    %46 = vst.msk [vmem:[#allocation2 + $0x70] sm:$0xff] %vm31, -1e+30
    %47 = vst.msk [vmem:[#allocation2 + $0x78] sm:$0xff] %vm31, -1e+30
    %48 = vst.msk [vmem:[#allocation2 + $0x80] sm:$0xff] %vm31, -1e+30
    %49 = vst.msk [vmem:[#allocation2 + $0x88] sm:$0xff] %vm31, -1e+30
    %50 = vst.msk [vmem:[#allocation2 + $0x90] sm:$0xff] %vm31, -1e+30
    %51 = vst.msk [vmem:[#allocation2 + $0x98] sm:$0xff] %vm31, -1e+30
    %52 = vst.msk [vmem:[#allocation2 + $0xa0] sm:$0xff] %vm31, -1e+30
    %53 = vst.msk [vmem:[#allocation2 + $0xa8] sm:$0xff] %vm31, -1e+30
    %54 = vst.msk [vmem:[#allocation2 + $0xb0] sm:$0xff] %vm31, -1e+30
    %55 = vst.msk [vmem:[#allocation2 + $0xb8] sm:$0xff] %vm31, -1e+30
    %56 = vst.msk [vmem:[#allocation2 + $0xc0] sm:$0xff] %vm31, -1e+30
    %57 = vst.msk [vmem:[#allocation2 + $0xc8] sm:$0xff] %vm31, -1e+30
    %58 = vst.msk [vmem:[#allocation2 + $0xd0] sm:$0xff] %vm31, -1e+30
    %59 = vst.msk [vmem:[#allocation2 + $0xd8] sm:$0xff] %vm31, -1e+30
    %60 = vst.msk [vmem:[#allocation2 + $0xe0] sm:$0xff] %vm31, -1e+30
    %61 = vst.msk [vmem:[#allocation2 + $0xe8] sm:$0xff] %vm31, -1e+30
    %62 = vst.msk [vmem:[#allocation2 + $0xf0] sm:$0xff] %vm31, -1e+30
    %63 = vst.msk [vmem:[#allocation2 + $0xf8] sm:$0xff] %vm31, -1e+30
    %64 = vst.msk [vmem:[#allocation3] sm:$0xff] %vm31, 0.0
    %65 = vst.msk [vmem:[#allocation3 + $0x8] sm:$0xff] %vm31, 0.0
    %66 = vst.msk [vmem:[#allocation3 + $0x10] sm:$0xff] %vm31, 0.0
    %67 = vst.msk [vmem:[#allocation3 + $0x18] sm:$0xff] %vm31, 0.0
    %68 = vst.msk [vmem:[#allocation3 + $0x20] sm:$0xff] %vm31, 0.0
    %69 = vst.msk [vmem:[#allocation3 + $0x28] sm:$0xff] %vm31, 0.0
    %70 = vst.msk [vmem:[#allocation3 + $0x30] sm:$0xff] %vm31, 0.0
    %71 = vst.msk [vmem:[#allocation3 + $0x38] sm:$0xff] %vm31, 0.0
    %72 = vst.msk [vmem:[#allocation3 + $0x40] sm:$0xff] %vm31, 0.0
    %73 = vst.msk [vmem:[#allocation3 + $0x48] sm:$0xff] %vm31, 0.0
    %74 = vst.msk [vmem:[#allocation3 + $0x50] sm:$0xff] %vm31, 0.0
    %75 = vst.msk [vmem:[#allocation3 + $0x58] sm:$0xff] %vm31, 0.0
    %76 = vst.msk [vmem:[#allocation3 + $0x60] sm:$0xff] %vm31, 0.0
    %77 = vst.msk [vmem:[#allocation3 + $0x68] sm:$0xff] %vm31, 0.0
    %78 = vst.msk [vmem:[#allocation3 + $0x70] sm:$0xff] %vm31, 0.0
    %79 = vst.msk [vmem:[#allocation3 + $0x78] sm:$0xff] %vm31, 0.0
    %80 = vst.msk [vmem:[#allocation3 + $0x80] sm:$0xff] %vm31, 0.0
    %81 = vst.msk [vmem:[#allocation3 + $0x88] sm:$0xff] %vm31, 0.0
    %82 = vst.msk [vmem:[#allocation3 + $0x90] sm:$0xff] %vm31, 0.0
    %83 = vst.msk [vmem:[#allocation3 + $0x98] sm:$0xff] %vm31, 0.0
    %84 = vst.msk [vmem:[#allocation3 + $0xa0] sm:$0xff] %vm31, 0.0
    %85 = vst.msk [vmem:[#allocation3 + $0xa8] sm:$0xff] %vm31, 0.0
    %86 = vst.msk [vmem:[#allocation3 + $0xb0] sm:$0xff] %vm31, 0.0
    %87 = vst.msk [vmem:[#allocation3 + $0xb8] sm:$0xff] %vm31, 0.0
    %88 = vst.msk [vmem:[#allocation3 + $0xc0] sm:$0xff] %vm31, 0.0
    %89 = vst.msk [vmem:[#allocation3 + $0xc8] sm:$0xff] %vm31, 0.0
    %90 = vst.msk [vmem:[#allocation3 + $0xd0] sm:$0xff] %vm31, 0.0
    %91 = vst.msk [vmem:[#allocation3 + $0xd8] sm:$0xff] %vm31, 0.0
    %92 = vst.msk [vmem:[#allocation3 + $0xe0] sm:$0xff] %vm31, 0.0
    %93 = vst.msk [vmem:[#allocation3 + $0xe8] sm:$0xff] %vm31, 0.0
    %94 = vst.msk [vmem:[#allocation3 + $0xf0] sm:$0xff] %vm31, 0.0
    %95 = vst.msk [vmem:[#allocation3 + $0xf8] sm:$0xff] %vm31, 0.0
    %96 = vst [vmem:[#allocation4] sm:$0xff] 0.0
    %97 = vst [vmem:[#allocation4 + $0x8] sm:$0xff] 0.0
    %98 = vst [vmem:[#allocation4 + $0x10] sm:$0xff] 0.0
    %99 = vst [vmem:[#allocation4 + $0x18] sm:$0xff] 0.0
    %100 = vst [vmem:[#allocation4 + $0x20] sm:$0xff] 0.0
    %101 = vst [vmem:[#allocation4 + $0x28] sm:$0xff] 0.0
    %102 = vst [vmem:[#allocation4 + $0x30] sm:$0xff] 0.0
    %103 = vst [vmem:[#allocation4 + $0x38] sm:$0xff] 0.0
    %104 = vst [vmem:[#allocation4 + $0x40] sm:$0xff] 0.0
    %105 = vst [vmem:[#allocation4 + $0x48] sm:$0xff] 0.0
    %106 = vst [vmem:[#allocation4 + $0x50] sm:$0xff] 0.0
    %107 = vst [vmem:[#allocation4 + $0x58] sm:$0xff] 0.0
    %108 = vst [vmem:[#allocation4 + $0x60] sm:$0xff] 0.0
    %109 = vst [vmem:[#allocation4 + $0x68] sm:$0xff] 0.0
    %110 = vst [vmem:[#allocation4 + $0x70] sm:$0xff] 0.0
    %111 = vst [vmem:[#allocation4 + $0x78] sm:$0xff] 0.0
    %112 = vst [vmem:[#allocation4 + $0x80] sm:$0xff] 0.0
    %113 = vst [vmem:[#allocation4 + $0x88] sm:$0xff] 0.0
    %114 = vst [vmem:[#allocation4 + $0x90] sm:$0xff] 0.0
    %115 = vst [vmem:[#allocation4 + $0x98] sm:$0xff] 0.0
    %116 = vst [vmem:[#allocation4 + $0xa0] sm:$0xff] 0.0
    %117 = vst [vmem:[#allocation4 + $0xa8] sm:$0xff] 0.0
    %118 = vst [vmem:[#allocation4 + $0xb0] sm:$0xff] 0.0
    %119 = vst [vmem:[#allocation4 + $0xb8] sm:$0xff] 0.0
    %120 = vst [vmem:[#allocation4 + $0xc0] sm:$0xff] 0.0
    %121 = vst [vmem:[#allocation4 + $0xc8] sm:$0xff] 0.0
    %122 = vst [vmem:[#allocation4 + $0xd0] sm:$0xff] 0.0
    %123 = vst [vmem:[#allocation4 + $0xd8] sm:$0xff] 0.0
    %124 = vst [vmem:[#allocation4 + $0xe0] sm:$0xff] 0.0
    %125 = vst [vmem:[#allocation4 + $0xe8] sm:$0xff] 0.0
    %126 = vst [vmem:[#allocation4 + $0xf0] sm:$0xff] 0.0
    %127 = vst [vmem:[#allocation4 + $0xf8] sm:$0xff] 0.0
  $region33: #{guide_encoder_body_forward.5} parent=0 // pred_fallthru
    _
  %v128 = vld [vmem:[%s0] sm:$0xff]
  %v129 = vld [vmem:[%s0 + $0x8] sm:$0xff]
  %v130 = vld [vmem:[%s0 + $0x10] sm:$0xff]
  %v131 = vld [vmem:[%s0 + $0x18] sm:$0xff]
  %v132 = vld [vmem:[%s0 + $0x20] sm:$0xff]
  %v133 = vld [vmem:[%s0 + $0x28] sm:$0xff]
  %v134 = vld [vmem:[%s0 + $0x30] sm:$0xff]
  %v135 = vld [vmem:[%s0 + $0x38] sm:$0xff]
  %v136 = vld [vmem:[%s0 + $0x40] sm:$0xff]
  %v137 = vld [vmem:[%s0 + $0x48] sm:$0xff]
  %v138 = vld [vmem:[%s0 + $0x50] sm:$0xff]
  %v139 = vld [vmem:[%s0 + $0x58] sm:$0xff]
  %v140 = vld [vmem:[%s0 + $0x60] sm:$0xff]
  %v141 = vld [vmem:[%s0 + $0x68] sm:$0xff]
  %v142 = vld [vmem:[%s0 + $0x70] sm:$0xff]
  %v143 = vld [vmem:[%s0 + $0x78] sm:$0xff]
  %v144 = vld [vmem:[%s0 + $0x80] sm:$0xff]
  %v145 = vld [vmem:[%s0 + $0x88] sm:$0xff]
  %v146 = vld [vmem:[%s0 + $0x90] sm:$0xff]
  %v147 = vld [vmem:[%s0 + $0x98] sm:$0xff]
  %v148 = vld [vmem:[%s0 + $0xa0] sm:$0xff]
  %v149 = vld [vmem:[%s0 + $0xa8] sm:$0xff]
  %v150 = vld [vmem:[%s0 + $0xb0] sm:$0xff]
  %v151 = vld [vmem:[%s0 + $0xb8] sm:$0xff]
  %v152 = vld [vmem:[%s0 + $0xc0] sm:$0xff]
  %v153 = vld [vmem:[%s0 + $0xc8] sm:$0xff]
  %v154 = vld [vmem:[%s0 + $0xd0] sm:$0xff]
  %v155 = vld [vmem:[%s0 + $0xd8] sm:$0xff]
  %v156 = vld [vmem:[%s0 + $0xe0] sm:$0xff]
  %v157 = vld [vmem:[%s0 + $0xe8] sm:$0xff]
  %v158 = vld [vmem:[%s0 + $0xf0] sm:$0xff]
  %v159 = vld [vmem:[%s0 + $0xf8] sm:$0xff]
  %v160 = vunpack.c.l.bf16 %v128
  %v161 = vunpack.c.h.bf16 %v128
  %v162 = vunpack.c.l.bf16 %v129
  %v163 = vunpack.c.h.bf16 %v129
  %v164 = vunpack.c.l.bf16 %v130
  %v165 = vunpack.c.h.bf16 %v130
  %v166 = vunpack.c.l.bf16 %v131
  %v167 = vunpack.c.h.bf16 %v131
  %v168 = vunpack.c.l.bf16 %v132
  %v169 = vunpack.c.h.bf16 %v132
  %v170 = vunpack.c.l.bf16 %v133
  %v171 = vunpack.c.h.bf16 %v133
  %v172 = vunpack.c.l.bf16 %v134
  %v173 = vunpack.c.h.bf16 %v134
  %v174 = vunpack.c.l.bf16 %v135
  %v175 = vunpack.c.h.bf16 %v135
  %v176 = vunpack.c.l.bf16 %v136
  %v177 = vunpack.c.h.bf16 %v136
  %v178 = vunpack.c.l.bf16 %v137
  %v179 = vunpack.c.h.bf16 %v137
  %v180 = vunpack.c.l.bf16 %v138
  %v181 = vunpack.c.h.bf16 %v138
  %v182 = vunpack.c.l.bf16 %v139
  %v183 = vunpack.c.h.bf16 %v139
  %v184 = vunpack.c.l.bf16 %v140
  %v185 = vunpack.c.h.bf16 %v140
  %v186 = vunpack.c.l.bf16 %v141
  %v187 = vunpack.c.h.bf16 %v141
  %v188 = vunpack.c.l.bf16 %v142
  %v189 = vunpack.c.h.bf16 %v142
  %v190 = vunpack.c.l.bf16 %v143
  %v191 = vunpack.c.h.bf16 %v143
  %v192 = vunpack.c.l.bf16 %v144
  %v193 = vunpack.c.h.bf16 %v144
  %v194 = vunpack.c.l.bf16 %v145
  %v195 = vunpack.c.h.bf16 %v145
  %v196 = vunpack.c.l.bf16 %v146
  %v197 = vunpack.c.h.bf16 %v146
  %v198 = vunpack.c.l.bf16 %v147
  %v199 = vunpack.c.h.bf16 %v147
  %v200 = vunpack.c.l.bf16 %v148
  %v201 = vunpack.c.h.bf16 %v148
  %v202 = vunpack.c.l.bf16 %v149
  %v203 = vunpack.c.h.bf16 %v149
  %v204 = vunpack.c.l.bf16 %v150
  %v205 = vunpack.c.h.bf16 %v150
  %v206 = vunpack.c.l.bf16 %v151
  %v207 = vunpack.c.h.bf16 %v151
  %v208 = vunpack.c.l.bf16 %v152
  %v209 = vunpack.c.h.bf16 %v152
  %v210 = vunpack.c.l.bf16 %v153
  %v211 = vunpack.c.h.bf16 %v153
  %v212 = vunpack.c.l.bf16 %v154
  %v213 = vunpack.c.h.bf16 %v154
  %v214 = vunpack.c.l.bf16 %v155
  %v215 = vunpack.c.h.bf16 %v155
  %v216 = vunpack.c.l.bf16 %v156
  %v217 = vunpack.c.h.bf16 %v156
  %v218 = vunpack.c.l.bf16 %v157
  %v219 = vunpack.c.h.bf16 %v157
  %v220 = vunpack.c.l.bf16 %v158
  %v221 = vunpack.c.h.bf16 %v158
  %v222 = vunpack.c.l.bf16 %v159
  %v223 = vunpack.c.h.bf16 %v159
  %v224 = vld [vmem:[%s1] sm:$0xff]
  %v225 = vld [vmem:[%s1 + $0x8] sm:$0xff]
  %v226 = vld [vmem:[%s1 + $0x10] sm:$0xff]
  %v227 = vld [vmem:[%s1 + $0x18] sm:$0xff]
  %v228 = vld [vmem:[%s1 + $0x20] sm:$0xff]
  %v229 = vld [vmem:[%s1 + $0x28] sm:$0xff]
  %v230 = vld [vmem:[%s1 + $0x30] sm:$0xff]
  %v231 = vld [vmem:[%s1 + $0x38] sm:$0xff]
  %v232 = vld [vmem:[%s1 + $0x40] sm:$0xff]
  %v233 = vld [vmem:[%s1 + $0x48] sm:$0xff]
  %v234 = vld [vmem:[%s1 + $0x50] sm:$0xff]
  %v235 = vld [vmem:[%s1 + $0x58] sm:$0xff]
  %v236 = vld [vmem:[%s1 + $0x60] sm:$0xff]
  %v237 = vld [vmem:[%s1 + $0x68] sm:$0xff]
  %v238 = vld [vmem:[%s1 + $0x70] sm:$0xff]
  %v239 = vld [vmem:[%s1 + $0x78] sm:$0xff]
  %v240 = vunpack.c.0.s8 %v224
  %v241 = vunpack.c.0.s8 %v225
  %v242 = vunpack.c.1.s8 %v224
  %v243 = vunpack.c.1.s8 %v225
  %v244 = vunpack.c.2.s8 %v224
  %v245 = vunpack.c.2.s8 %v225
  %v246 = vunpack.c.3.s8 %v224
  %v247 = vunpack.c.3.s8 %v225
  %v248 = vunpack.c.0.s8 %v226
  %v249 = vunpack.c.0.s8 %v227
  %v250 = vunpack.c.1.s8 %v226
  %v251 = vunpack.c.1.s8 %v227
  %v252 = vunpack.c.2.s8 %v226
  %v253 = vunpack.c.2.s8 %v227
  %v254 = vunpack.c.3.s8 %v226
  %v255 = vunpack.c.3.s8 %v227
  %v256 = vunpack.c.0.s8 %v228
  %v257 = vunpack.c.0.s8 %v229
  %v258 = vunpack.c.1.s8 %v228
  %v259 = vunpack.c.1.s8 %v229
  %v260 = vunpack.c.2.s8 %v228
  %v261 = vunpack.c.2.s8 %v229
  %v262 = vunpack.c.3.s8 %v228
  %v263 = vunpack.c.3.s8 %v229
  %v264 = vunpack.c.0.s8 %v230
  %v265 = vunpack.c.0.s8 %v231
  %v266 = vunpack.c.1.s8 %v230
  %v267 = vunpack.c.1.s8 %v231
  %v268 = vunpack.c.2.s8 %v230
  %v269 = vunpack.c.2.s8 %v231
  %v270 = vunpack.c.3.s8 %v230
  %v271 = vunpack.c.3.s8 %v231
  %v272 = vunpack.c.0.s8 %v232
  %v273 = vunpack.c.0.s8 %v233
  %v274 = vunpack.c.1.s8 %v232
  %v275 = vunpack.c.1.s8 %v233
  %v276 = vunpack.c.2.s8 %v232
  %v277 = vunpack.c.2.s8 %v233
  %v278 = vunpack.c.3.s8 %v232
  %v279 = vunpack.c.3.s8 %v233
  %v280 = vunpack.c.0.s8 %v234
  %v281 = vunpack.c.0.s8 %v235
  %v282 = vunpack.c.1.s8 %v234
  %v283 = vunpack.c.1.s8 %v235
  %v284 = vunpack.c.2.s8 %v234
  %v285 = vunpack.c.2.s8 %v235
  %v286 = vunpack.c.3.s8 %v234
  %v287 = vunpack.c.3.s8 %v235
  %v288 = vunpack.c.0.s8 %v236
  %v289 = vunpack.c.0.s8 %v237
  %v290 = vunpack.c.1.s8 %v236
  %v291 = vunpack.c.1.s8 %v237
  %v292 = vunpack.c.2.s8 %v236
  %v293 = vunpack.c.2.s8 %v237
  %v294 = vunpack.c.3.s8 %v236
  %v295 = vunpack.c.3.s8 %v237
  %v296 = vunpack.c.0.s8 %v238
  %v297 = vunpack.c.0.s8 %v239
  %v298 = vunpack.c.1.s8 %v238
  %v299 = vunpack.c.1.s8 %v239
  %v300 = vunpack.c.2.s8 %v238
  %v301 = vunpack.c.2.s8 %v239
  %v302 = vunpack.c.3.s8 %v238
  %v303 = vunpack.c.3.s8 %v239
  %v304 = vcvt.s32.f32 %v240
  %v305 = vcvt.s32.f32 %v241
  %v306 = vcvt.s32.f32 %v242
  %v307 = vcvt.s32.f32 %v243
  %v308 = vcvt.s32.f32 %v244
  %v309 = vcvt.s32.f32 %v245
  %v310 = vcvt.s32.f32 %v246
  %v311 = vcvt.s32.f32 %v247
  %v312 = vcvt.s32.f32 %v248
  %v313 = vcvt.s32.f32 %v249
  %v314 = vcvt.s32.f32 %v250
  %v315 = vcvt.s32.f32 %v251
  %v316 = vcvt.s32.f32 %v252
  %v317 = vcvt.s32.f32 %v253
  %v318 = vcvt.s32.f32 %v254
  %v319 = vcvt.s32.f32 %v255
  %v320 = vcvt.s32.f32 %v256
  %v321 = vcvt.s32.f32 %v257
  %v322 = vcvt.s32.f32 %v258
  %v323 = vcvt.s32.f32 %v259
  %v324 = vcvt.s32.f32 %v260
  %v325 = vcvt.s32.f32 %v261
  %v326 = vcvt.s32.f32 %v262
  %v327 = vcvt.s32.f32 %v263
  %v328 = vcvt.s32.f32 %v264
  %v329 = vcvt.s32.f32 %v265
  %v330 = vcvt.s32.f32 %v266
  %v331 = vcvt.s32.f32 %v267
  %v332 = vcvt.s32.f32 %v268
  %v333 = vcvt.s32.f32 %v269
  %v334 = vcvt.s32.f32 %v270
  %v335 = vcvt.s32.f32 %v271
  %v336 = vcvt.s32.f32 %v272
  %v337 = vcvt.s32.f32 %v273
  %v338 = vcvt.s32.f32 %v274
  %v339 = vcvt.s32.f32 %v275
  %v340 = vcvt.s32.f32 %v276
  %v341 = vcvt.s32.f32 %v277
  %v342 = vcvt.s32.f32 %v278
  %v343 = vcvt.s32.f32 %v279
  %v344 = vcvt.s32.f32 %v280
  %v345 = vcvt.s32.f32 %v281
  %v346 = vcvt.s32.f32 %v282
  %v347 = vcvt.s32.f32 %v283
  %v348 = vcvt.s32.f32 %v284
  %v349 = vcvt.s32.f32 %v285
  %v350 = vcvt.s32.f32 %v286
  %v351 = vcvt.s32.f32 %v287
  %v352 = vcvt.s32.f32 %v288
  %v353 = vcvt.s32.f32 %v289
  %v354 = vcvt.s32.f32 %v290
  %v355 = vcvt.s32.f32 %v291
  %v356 = vcvt.s32.f32 %v292
  %v357 = vcvt.s32.f32 %v293
  %v358 = vcvt.s32.f32 %v294
  %v359 = vcvt.s32.f32 %v295
  %v360 = vcvt.s32.f32 %v296
  %v361 = vcvt.s32.f32 %v297
  %v362 = vcvt.s32.f32 %v298
  %v363 = vcvt.s32.f32 %v299
  %v364 = vcvt.s32.f32 %v300
  %v365 = vcvt.s32.f32 %v301
  %v366 = vcvt.s32.f32 %v302
  %v367 = vcvt.s32.f32 %v303
  %vm368 = vcmp.gt.f32.partialorder %v304, 0.0
  %vm369 = vcmp.gt.f32.partialorder %v305, 0.0
  %vm370 = vcmp.gt.f32.partialorder %v306, 0.0
  %vm371 = vcmp.gt.f32.partialorder %v307, 0.0
  %vm372 = vcmp.gt.f32.partialorder %v308, 0.0
  %vm373 = vcmp.gt.f32.partialorder %v309, 0.0
  %vm374 = vcmp.gt.f32.partialorder %v310, 0.0
  %vm375 = vcmp.gt.f32.partialorder %v311, 0.0
  %vm376 = vcmp.gt.f32.partialorder %v312, 0.0
  %vm377 = vcmp.gt.f32.partialorder %v313, 0.0
  %vm378 = vcmp.gt.f32.partialorder %v314, 0.0
  %vm379 = vcmp.gt.f32.partialorder %v315, 0.0
  %vm380 = vcmp.gt.f32.partialorder %v316, 0.0
  %vm381 = vcmp.gt.f32.partialorder %v317, 0.0
  %vm382 = vcmp.gt.f32.partialorder %v318, 0.0
  %vm383 = vcmp.gt.f32.partialorder %v319, 0.0
  %vm384 = vcmp.gt.f32.partialorder %v320, 0.0
  %vm385 = vcmp.gt.f32.partialorder %v321, 0.0
  %vm386 = vcmp.gt.f32.partialorder %v322, 0.0
  %vm387 = vcmp.gt.f32.partialorder %v323, 0.0
  %vm388 = vcmp.gt.f32.partialorder %v324, 0.0
  %vm389 = vcmp.gt.f32.partialorder %v325, 0.0
  %vm390 = vcmp.gt.f32.partialorder %v326, 0.0
  %vm391 = vcmp.gt.f32.partialorder %v327, 0.0
  %vm392 = vcmp.gt.f32.partialorder %v328, 0.0
  %vm393 = vcmp.gt.f32.partialorder %v329, 0.0
  %vm394 = vcmp.gt.f32.partialorder %v330, 0.0
  %vm395 = vcmp.gt.f32.partialorder %v331, 0.0
  %vm396 = vcmp.gt.f32.partialorder %v332, 0.0
  %vm397 = vcmp.gt.f32.partialorder %v333, 0.0
  %vm398 = vcmp.gt.f32.partialorder %v334, 0.0
  %vm399 = vcmp.gt.f32.partialorder %v335, 0.0
  %vm400 = vcmp.gt.f32.partialorder %v336, 0.0
  %vm401 = vcmp.gt.f32.partialorder %v337, 0.0
  %vm402 = vcmp.gt.f32.partialorder %v338, 0.0
  %vm403 = vcmp.gt.f32.partialorder %v339, 0.0
  %vm404 = vcmp.gt.f32.partialorder %v340, 0.0
  %vm405 = vcmp.gt.f32.partialorder %v341, 0.0
  %vm406 = vcmp.gt.f32.partialorder %v342, 0.0
  %vm407 = vcmp.gt.f32.partialorder %v343, 0.0
  %vm408 = vcmp.gt.f32.partialorder %v344, 0.0
  %vm409 = vcmp.gt.f32.partialorder %v345, 0.0
  %vm410 = vcmp.gt.f32.partialorder %v346, 0.0
  %vm411 = vcmp.gt.f32.partialorder %v347, 0.0
  %vm412 = vcmp.gt.f32.partialorder %v348, 0.0
  %vm413 = vcmp.gt.f32.partialorder %v349, 0.0
  %vm414 = vcmp.gt.f32.partialorder %v350, 0.0
  %vm415 = vcmp.gt.f32.partialorder %v351, 0.0
  %vm416 = vcmp.gt.f32.partialorder %v352, 0.0
  %vm417 = vcmp.gt.f32.partialorder %v353, 0.0
  %vm418 = vcmp.gt.f32.partialorder %v354, 0.0
  %vm419 = vcmp.gt.f32.partialorder %v355, 0.0
  %vm420 = vcmp.gt.f32.partialorder %v356, 0.0
  %vm421 = vcmp.gt.f32.partialorder %v357, 0.0
  %vm422 = vcmp.gt.f32.partialorder %v358, 0.0
  %vm423 = vcmp.gt.f32.partialorder %v359, 0.0
  %vm424 = vcmp.gt.f32.partialorder %v360, 0.0
  %vm425 = vcmp.gt.f32.partialorder %v361, 0.0
  %vm426 = vcmp.gt.f32.partialorder %v362, 0.0
  %vm427 = vcmp.gt.f32.partialorder %v363, 0.0
  %vm428 = vcmp.gt.f32.partialorder %v364, 0.0
  %vm429 = vcmp.gt.f32.partialorder %v365, 0.0
  %vm430 = vcmp.gt.f32.partialorder %v366, 0.0
  %vm431 = vcmp.gt.f32.partialorder %v367, 0.0
  %v432 = vld [vmem:[#allocation2] sm:$0xff]
  %v433 = vld [vmem:[#allocation2 + $0x8] sm:$0xff]
  %v434 = vld [vmem:[#allocation2 + $0x10] sm:$0xff]
  %v435 = vld [vmem:[#allocation2 + $0x18] sm:$0xff]
  %v436 = vld [vmem:[#allocation2 + $0x20] sm:$0xff]
  %v437 = vld [vmem:[#allocation2 + $0x28] sm:$0xff]
  %v438 = vld [vmem:[#allocation2 + $0x30] sm:$0xff]
  %v439 = vld [vmem:[#allocation2 + $0x38] sm:$0xff]
  %v440 = vld [vmem:[#allocation2 + $0x40] sm:$0xff]
  %v441 = vld [vmem:[#allocation2 + $0x48] sm:$0xff]
  %v442 = vld [vmem:[#allocation2 + $0x50] sm:$0xff]
  %v443 = vld [vmem:[#allocation2 + $0x58] sm:$0xff]
  %v444 = vld [vmem:[#allocation2 + $0x60] sm:$0xff]
  %v445 = vld [vmem:[#allocation2 + $0x68] sm:$0xff]
  %v446 = vld [vmem:[#allocation2 + $0x70] sm:$0xff]
  %v447 = vld [vmem:[#allocation2 + $0x78] sm:$0xff]
  %v448 = vld [vmem:[#allocation2 + $0x80] sm:$0xff]
  %v449 = vld [vmem:[#allocation2 + $0x88] sm:$0xff]
  %v450 = vld [vmem:[#allocation2 + $0x90] sm:$0xff]
  %v451 = vld [vmem:[#allocation2 + $0x98] sm:$0xff]
  %v452 = vld [vmem:[#allocation2 + $0xa0] sm:$0xff]
  %v453 = vld [vmem:[#allocation2 + $0xa8] sm:$0xff]
  %v454 = vld [vmem:[#allocation2 + $0xb0] sm:$0xff]
  %v455 = vld [vmem:[#allocation2 + $0xb8] sm:$0xff]
  %v456 = vld [vmem:[#allocation2 + $0xc0] sm:$0xff]
  %v457 = vld [vmem:[#allocation2 + $0xc8] sm:$0xff]
  %v458 = vld [vmem:[#allocation2 + $0xd0] sm:$0xff]
  %v459 = vld [vmem:[#allocation2 + $0xd8] sm:$0xff]
  %v460 = vld [vmem:[#allocation2 + $0xe0] sm:$0xff]
  %v461 = vld [vmem:[#allocation2 + $0xe8] sm:$0xff]
  %v462 = vld [vmem:[#allocation2 + $0xf0] sm:$0xff]
  %v463 = vld [vmem:[#allocation2 + $0xf8] sm:$0xff]
  %s464 = smul.u32 0, 256
  %v465 = vld [vmem:[%s2] ss:$4 sm:$0x3]
  %v466 = vld [vmem:[%s3] sm:$0xff]
  %v467 = vld [vmem:[%s3 + $0x8] sm:$0xff]
  %v468 = vld [vmem:[%s3 + $0x10] sm:$0xff]
  %v469 = vld [vmem:[%s3 + $0x18] sm:$0xff]
  %v470 = vld [vmem:[%s3 + $0x20] sm:$0xff]
  %v471 = vld [vmem:[%s3 + $0x28] sm:$0xff]
  %v472 = vld [vmem:[%s3 + $0x30] sm:$0xff]
  %v473 = vld [vmem:[%s3 + $0x38] sm:$0xff]
  %v474 = vld [vmem:[%s3 + $0x40] sm:$0xff]
  %v475 = vld [vmem:[%s3 + $0x48] sm:$0xff]
  %v476 = vld [vmem:[%s3 + $0x50] sm:$0xff]
  %v477 = vld [vmem:[%s3 + $0x58] sm:$0xff]
  %v478 = vld [vmem:[%s3 + $0x60] sm:$0xff]
  %v479 = vld [vmem:[%s3 + $0x68] sm:$0xff]
  %v480 = vld [vmem:[%s3 + $0x70] sm:$0xff]
  %v481 = vld [vmem:[%s3 + $0x78] sm:$0xff]
  %v482 = vld [vmem:[%s3 + $0x80] sm:$0xff]
  %v483 = vld [vmem:[%s3 + $0x88] sm:$0xff]
  %v484 = vld [vmem:[%s3 + $0x90] sm:$0xff]
  %v485 = vld [vmem:[%s3 + $0x98] sm:$0xff]
  %v486 = vld [vmem:[%s3 + $0xa0] sm:$0xff]
  %v487 = vld [vmem:[%s3 + $0xa8] sm:$0xff]
  %v488 = vld [vmem:[%s3 + $0xb0] sm:$0xff]
  %v489 = vld [vmem:[%s3 + $0xb8] sm:$0xff]
  %v490 = vld [vmem:[%s3 + $0xc0] sm:$0xff]
  %v491 = vld [vmem:[%s3 + $0xc8] sm:$0xff]
  %v492 = vld [vmem:[%s3 + $0xd0] sm:$0xff]
  %v493 = vld [vmem:[%s3 + $0xd8] sm:$0xff]
  %v494 = vld [vmem:[%s3 + $0xe0] sm:$0xff]
  %v495 = vld [vmem:[%s3 + $0xe8] sm:$0xff]
  %v496 = vld [vmem:[%s3 + $0xf0] sm:$0xff]
  %v497 = vld [vmem:[%s3 + $0xf8] sm:$0xff]
  %499 = vset.pattern.permute.xlu0 0
  %500 = vperm.xlu0 %499, %v466
  %v501 = vpop.permute.xlu0 %500
  %504 = vset.pattern.permute.xlu0 0
  %505 = vperm.xlu0 %504, %v467
  %v506 = vpop.permute.xlu0 %505
  %509 = vset.pattern.permute.xlu0 0
  %510 = vperm.xlu0 %509, %v468
  %v511 = vpop.permute.xlu0 %510
  %514 = vset.pattern.permute.xlu0 0
  %515 = vperm.xlu0 %514, %v469
  %v516 = vpop.permute.xlu0 %515
  %519 = vset.pattern.permute.xlu0 0
  %520 = vperm.xlu0 %519, %v470
  %v521 = vpop.permute.xlu0 %520
  %524 = vset.pattern.permute.xlu0 0
  %525 = vperm.xlu0 %524, %v471
  %v526 = vpop.permute.xlu0 %525
  %529 = vset.pattern.permute.xlu0 0
  %530 = vperm.xlu0 %529, %v472
  %v531 = vpop.permute.xlu0 %530
  %534 = vset.pattern.permute.xlu0 0
  %535 = vperm.xlu0 %534, %v473
  %v536 = vpop.permute.xlu0 %535
  %539 = vset.pattern.permute.xlu0 0
  %540 = vperm.xlu0 %539, %v474
  %v541 = vpop.permute.xlu0 %540
  %544 = vset.pattern.permute.xlu0 0
  %545 = vperm.xlu0 %544, %v475
  %v546 = vpop.permute.xlu0 %545
  %549 = vset.pattern.permute.xlu0 0
  %550 = vperm.xlu0 %549, %v476
  %v551 = vpop.permute.xlu0 %550
  %554 = vset.pattern.permute.xlu0 0
  %555 = vperm.xlu0 %554, %v477
  %v556 = vpop.permute.xlu0 %555
  %559 = vset.pattern.permute.xlu0 0
  %560 = vperm.xlu0 %559, %v478
  %v561 = vpop.permute.xlu0 %560
  %564 = vset.pattern.permute.xlu0 0
  %565 = vperm.xlu0 %564, %v479
  %v566 = vpop.permute.xlu0 %565
  %569 = vset.pattern.permute.xlu0 0
  %570 = vperm.xlu0 %569, %v480
  %v571 = vpop.permute.xlu0 %570
  %574 = vset.pattern.permute.xlu0 0
  %575 = vperm.xlu0 %574, %v481
  %v576 = vpop.permute.xlu0 %575
  %579 = vset.pattern.permute.xlu0 0
  %580 = vperm.xlu0 %579, %v482
  %v581 = vpop.permute.xlu0 %580
  %584 = vset.pattern.permute.xlu0 0
  %585 = vperm.xlu0 %584, %v483
  %v586 = vpop.permute.xlu0 %585
  %589 = vset.pattern.permute.xlu0 0
  %590 = vperm.xlu0 %589, %v484
  %v591 = vpop.permute.xlu0 %590
  %594 = vset.pattern.permute.xlu0 0
  %595 = vperm.xlu0 %594, %v485
  %v596 = vpop.permute.xlu0 %595
  %599 = vset.pattern.permute.xlu0 0
  %600 = vperm.xlu0 %599, %v486
  %v601 = vpop.permute.xlu0 %600
  %604 = vset.pattern.permute.xlu0 0
  %605 = vperm.xlu0 %604, %v487
  %v606 = vpop.permute.xlu0 %605
  %609 = vset.pattern.permute.xlu0 0
  %610 = vperm.xlu0 %609, %v488
  %v611 = vpop.permute.xlu0 %610
  %614 = vset.pattern.permute.xlu0 0
  %615 = vperm.xlu0 %614, %v489
  %v616 = vpop.permute.xlu0 %615
  %619 = vset.pattern.permute.xlu0 0
  %620 = vperm.xlu0 %619, %v490
  %v621 = vpop.permute.xlu0 %620
  %624 = vset.pattern.permute.xlu0 0
  %625 = vperm.xlu0 %624, %v491
  %v626 = vpop.permute.xlu0 %625
  %629 = vset.pattern.permute.xlu0 0
  %630 = vperm.xlu0 %629, %v492
  %v631 = vpop.permute.xlu0 %630
  %634 = vset.pattern.permute.xlu0 0
  %635 = vperm.xlu0 %634, %v493
  %v636 = vpop.permute.xlu0 %635
  %639 = vset.pattern.permute.xlu0 0
  %640 = vperm.xlu0 %639, %v494
  %v641 = vpop.permute.xlu0 %640
  %644 = vset.pattern.permute.xlu0 0
  %645 = vperm.xlu0 %644, %v495
  %v646 = vpop.permute.xlu0 %645
  %649 = vset.pattern.permute.xlu0 0
  %650 = vperm.xlu0 %649, %v496
  %v651 = vpop.permute.xlu0 %650
  %654 = vset.pattern.permute.xlu0 0
  %655 = vperm.xlu0 %654, %v497
  %v656 = vpop.permute.xlu0 %655
  %v659 = vlaneseq
  %v660 = vshrl.u32 %v659, 7
  %v661 = vsub.s32 0, %v660
  %v662 = vrot.slane %v465, %v661
  %v663 = vlaneseq
  %v664 = vshrl.u32 %v663, 7
  %v665 = vsub.s32 1, %v664
  %v666 = vrot.slane %v465, %v665
  %v669 = vadd.f32 %v501, %v662
  %v670 = vadd.f32 %v501, %v666
  %v671 = vadd.f32 %v506, %v662
  %v672 = vadd.f32 %v506, %v666
  %v673 = vadd.f32 %v511, %v662
  %v674 = vadd.f32 %v511, %v666
  %v675 = vadd.f32 %v516, %v662
  %v676 = vadd.f32 %v516, %v666
  %v677 = vadd.f32 %v521, %v662
  %v678 = vadd.f32 %v521, %v666
  %v679 = vadd.f32 %v526, %v662
  %v680 = vadd.f32 %v526, %v666
  %v681 = vadd.f32 %v531, %v662
  %v682 = vadd.f32 %v531, %v666
  %v683 = vadd.f32 %v536, %v662
  %v684 = vadd.f32 %v536, %v666
  %v685 = vadd.f32 %v541, %v662
  %v686 = vadd.f32 %v541, %v666
  %v687 = vadd.f32 %v546, %v662
  %v688 = vadd.f32 %v546, %v666
  %v689 = vadd.f32 %v551, %v662
  %v690 = vadd.f32 %v551, %v666
  %v691 = vadd.f32 %v556, %v662
  %v692 = vadd.f32 %v556, %v666
  %v693 = vadd.f32 %v561, %v662
  %v694 = vadd.f32 %v561, %v666
  %v695 = vadd.f32 %v566, %v662
  %v696 = vadd.f32 %v566, %v666
  %v697 = vadd.f32 %v571, %v662
  %v698 = vadd.f32 %v571, %v666
  %v699 = vadd.f32 %v576, %v662
  %v700 = vadd.f32 %v576, %v666
  %v701 = vadd.f32 %v581, %v662
  %v702 = vadd.f32 %v581, %v666
  %v703 = vadd.f32 %v586, %v662
  %v704 = vadd.f32 %v586, %v666
  %v705 = vadd.f32 %v591, %v662
  %v706 = vadd.f32 %v591, %v666
  %v707 = vadd.f32 %v596, %v662
  %v708 = vadd.f32 %v596, %v666
  %v709 = vadd.f32 %v601, %v662
  %v710 = vadd.f32 %v601, %v666
  %v711 = vadd.f32 %v606, %v662
  %v712 = vadd.f32 %v606, %v666
  %v713 = vadd.f32 %v611, %v662
  %v714 = vadd.f32 %v611, %v666
  %v715 = vadd.f32 %v616, %v662
  %v716 = vadd.f32 %v616, %v666
  %v717 = vadd.f32 %v621, %v662
  %v718 = vadd.f32 %v621, %v666
  %v719 = vadd.f32 %v626, %v662
  %v720 = vadd.f32 %v626, %v666
  %v721 = vadd.f32 %v631, %v662
  %v722 = vadd.f32 %v631, %v666
  %v723 = vadd.f32 %v636, %v662
  %v724 = vadd.f32 %v636, %v666
  %v725 = vadd.f32 %v641, %v662
  %v726 = vadd.f32 %v641, %v666
  %v727 = vadd.f32 %v646, %v662
  %v728 = vadd.f32 %v646, %v666
  %v729 = vadd.f32 %v651, %v662
  %v730 = vadd.f32 %v651, %v666
  %v731 = vadd.f32 %v656, %v662
  %v732 = vadd.f32 %v656, %v666
  %vm733 = vcmp.ge.f32.partialorder %v669, 0.0
  %vm734 = vcmp.ge.f32.partialorder %v670, 0.0
  %vm735 = vcmp.ge.f32.partialorder %v671, 0.0
  %vm736 = vcmp.ge.f32.partialorder %v672, 0.0
  %vm737 = vcmp.ge.f32.partialorder %v673, 0.0
  %vm738 = vcmp.ge.f32.partialorder %v674, 0.0
  %vm739 = vcmp.ge.f32.partialorder %v675, 0.0
  %vm740 = vcmp.ge.f32.partialorder %v676, 0.0
  %vm741 = vcmp.ge.f32.partialorder %v677, 0.0
  %vm742 = vcmp.ge.f32.partialorder %v678, 0.0
  %vm743 = vcmp.ge.f32.partialorder %v679, 0.0
  %vm744 = vcmp.ge.f32.partialorder %v680, 0.0
  %vm745 = vcmp.ge.f32.partialorder %v681, 0.0
  %vm746 = vcmp.ge.f32.partialorder %v682, 0.0
  %vm747 = vcmp.ge.f32.partialorder %v683, 0.0
  %vm748 = vcmp.ge.f32.partialorder %v684, 0.0
  %vm749 = vcmp.ge.f32.partialorder %v685, 0.0
  %vm750 = vcmp.ge.f32.partialorder %v686, 0.0
  %vm751 = vcmp.ge.f32.partialorder %v687, 0.0
  %vm752 = vcmp.ge.f32.partialorder %v688, 0.0
  %vm753 = vcmp.ge.f32.partialorder %v689, 0.0
  %vm754 = vcmp.ge.f32.partialorder %v690, 0.0
  %vm755 = vcmp.ge.f32.partialorder %v691, 0.0
  %vm756 = vcmp.ge.f32.partialorder %v692, 0.0
  %vm757 = vcmp.ge.f32.partialorder %v693, 0.0
  %vm758 = vcmp.ge.f32.partialorder %v694, 0.0
  %vm759 = vcmp.ge.f32.partialorder %v695, 0.0
  %vm760 = vcmp.ge.f32.partialorder %v696, 0.0
  %vm761 = vcmp.ge.f32.partialorder %v697, 0.0
  %vm762 = vcmp.ge.f32.partialorder %v698, 0.0
  %vm763 = vcmp.ge.f32.partialorder %v699, 0.0
  %vm764 = vcmp.ge.f32.partialorder %v700, 0.0
  %vm765 = vcmp.ge.f32.partialorder %v701, 0.0
  %vm766 = vcmp.ge.f32.partialorder %v702, 0.0
  %vm767 = vcmp.ge.f32.partialorder %v703, 0.0
  %vm768 = vcmp.ge.f32.partialorder %v704, 0.0
  %vm769 = vcmp.ge.f32.partialorder %v705, 0.0
  %vm770 = vcmp.ge.f32.partialorder %v706, 0.0
  %vm771 = vcmp.ge.f32.partialorder %v707, 0.0
  %vm772 = vcmp.ge.f32.partialorder %v708, 0.0
  %vm773 = vcmp.ge.f32.partialorder %v709, 0.0
  %vm774 = vcmp.ge.f32.partialorder %v710, 0.0
  %vm775 = vcmp.ge.f32.partialorder %v711, 0.0
  %vm776 = vcmp.ge.f32.partialorder %v712, 0.0
  %vm777 = vcmp.ge.f32.partialorder %v713, 0.0
  %vm778 = vcmp.ge.f32.partialorder %v714, 0.0
  %vm779 = vcmp.ge.f32.partialorder %v715, 0.0
  %vm780 = vcmp.ge.f32.partialorder %v716, 0.0
  %vm781 = vcmp.ge.f32.partialorder %v717, 0.0
  %vm782 = vcmp.ge.f32.partialorder %v718, 0.0
  %vm783 = vcmp.ge.f32.partialorder %v719, 0.0
  %vm784 = vcmp.ge.f32.partialorder %v720, 0.0
  %vm785 = vcmp.ge.f32.partialorder %v721, 0.0
  %vm786 = vcmp.ge.f32.partialorder %v722, 0.0
  %vm787 = vcmp.ge.f32.partialorder %v723, 0.0
  %vm788 = vcmp.ge.f32.partialorder %v724, 0.0
  %vm789 = vcmp.ge.f32.partialorder %v725, 0.0
  %vm790 = vcmp.ge.f32.partialorder %v726, 0.0
  %vm791 = vcmp.ge.f32.partialorder %v727, 0.0
  %vm792 = vcmp.ge.f32.partialorder %v728, 0.0
  %vm793 = vcmp.ge.f32.partialorder %v729, 0.0
  %vm794 = vcmp.ge.f32.partialorder %v730, 0.0
  %vm795 = vcmp.ge.f32.partialorder %v731, 0.0
  %vm796 = vcmp.ge.f32.partialorder %v732, 0.0
  %v797 = vmul.f32 %v669, 0.2
  %v798 = vmul.f32 %v670, 0.2
  %v799 = vmul.f32 %v671, 0.2
  %v800 = vmul.f32 %v672, 0.2
  %v801 = vmul.f32 %v673, 0.2
  %v802 = vmul.f32 %v674, 0.2
  %v803 = vmul.f32 %v675, 0.2
  %v804 = vmul.f32 %v676, 0.2
  %v805 = vmul.f32 %v677, 0.2
  %v806 = vmul.f32 %v678, 0.2
  %v807 = vmul.f32 %v679, 0.2
  %v808 = vmul.f32 %v680, 0.2
  %v809 = vmul.f32 %v681, 0.2
  %v810 = vmul.f32 %v682, 0.2
  %v811 = vmul.f32 %v683, 0.2
  %v812 = vmul.f32 %v684, 0.2
  %v813 = vmul.f32 %v685, 0.2
  %v814 = vmul.f32 %v686, 0.2
  %v815 = vmul.f32 %v687, 0.2
  %v816 = vmul.f32 %v688, 0.2
  %v817 = vmul.f32 %v689, 0.2
  %v818 = vmul.f32 %v690, 0.2
  %v819 = vmul.f32 %v691, 0.2
  %v820 = vmul.f32 %v692, 0.2
  %v821 = vmul.f32 %v693, 0.2
  %v822 = vmul.f32 %v694, 0.2
  %v823 = vmul.f32 %v695, 0.2
  %v824 = vmul.f32 %v696, 0.2
  %v825 = vmul.f32 %v697, 0.2
  %v826 = vmul.f32 %v698, 0.2
  %v827 = vmul.f32 %v699, 0.2
  %v828 = vmul.f32 %v700, 0.2
  %v829 = vmul.f32 %v701, 0.2
  %v830 = vmul.f32 %v702, 0.2
  %v831 = vmul.f32 %v703, 0.2
  %v832 = vmul.f32 %v704, 0.2
  %v833 = vmul.f32 %v705, 0.2
  %v834 = vmul.f32 %v706, 0.2
  %v835 = vmul.f32 %v707, 0.2
  %v836 = vmul.f32 %v708, 0.2
  %v837 = vmul.f32 %v709, 0.2
  %v838 = vmul.f32 %v710, 0.2
  %v839 = vmul.f32 %v711, 0.2
  %v840 = vmul.f32 %v712, 0.2
  %v841 = vmul.f32 %v713, 0.2
  %v842 = vmul.f32 %v714, 0.2
  %v843 = vmul.f32 %v715, 0.2
  %v844 = vmul.f32 %v716, 0.2
  %v845 = vmul.f32 %v717, 0.2
  %v846 = vmul.f32 %v718, 0.2
  %v847 = vmul.f32 %v719, 0.2
  %v848 = vmul.f32 %v720, 0.2
  %v849 = vmul.f32 %v721, 0.2
  %v850 = vmul.f32 %v722, 0.2
  %v851 = vmul.f32 %v723, 0.2
  %v852 = vmul.f32 %v724, 0.2
  %v853 = vmul.f32 %v725, 0.2
  %v854 = vmul.f32 %v726, 0.2
  %v855 = vmul.f32 %v727, 0.2
  %v856 = vmul.f32 %v728, 0.2
  %v857 = vmul.f32 %v729, 0.2
  %v858 = vmul.f32 %v730, 0.2
  %v859 = vmul.f32 %v731, 0.2
  %v860 = vmul.f32 %v732, 0.2
  %v861 = vsel %vm733, %v669, %v797
  %v862 = vsel %vm734, %v670, %v798
  %v863 = vsel %vm735, %v671, %v799
  %v864 = vsel %vm736, %v672, %v800
  %v865 = vsel %vm737, %v673, %v801
  %v866 = vsel %vm738, %v674, %v802
  %v867 = vsel %vm739, %v675, %v803
  %v868 = vsel %vm740, %v676, %v804
  %v869 = vsel %vm741, %v677, %v805
  %v870 = vsel %vm742, %v678, %v806
  %v871 = vsel %vm743, %v679, %v807
  %v872 = vsel %vm744, %v680, %v808
  %v873 = vsel %vm745, %v681, %v809
  %v874 = vsel %vm746, %v682, %v810
  %v875 = vsel %vm747, %v683, %v811
  %v876 = vsel %vm748, %v684, %v812
  %v877 = vsel %vm749, %v685, %v813
  %v878 = vsel %vm750, %v686, %v814
  %v879 = vsel %vm751, %v687, %v815
  %v880 = vsel %vm752, %v688, %v816
  %v881 = vsel %vm753, %v689, %v817
  %v882 = vsel %vm754, %v690, %v818
  %v883 = vsel %vm755, %v691, %v819
  %v884 = vsel %vm756, %v692, %v820
  %v885 = vsel %vm757, %v693, %v821
  %v886 = vsel %vm758, %v694, %v822
  %v887 = vsel %vm759, %v695, %v823
  %v888 = vsel %vm760, %v696, %v824
  %v889 = vsel %vm761, %v697, %v825
  %v890 = vsel %vm762, %v698, %v826
  %v891 = vsel %vm763, %v699, %v827
  %v892 = vsel %vm764, %v700, %v828
  %v893 = vsel %vm765, %v701, %v829
  %v894 = vsel %vm766, %v702, %v830
  %v895 = vsel %vm767, %v703, %v831
  %v896 = vsel %vm768, %v704, %v832
  %v897 = vsel %vm769, %v705, %v833
  %v898 = vsel %vm770, %v706, %v834
  %v899 = vsel %vm771, %v707, %v835
  %v900 = vsel %vm772, %v708, %v836
  %v901 = vsel %vm773, %v709, %v837
  %v902 = vsel %vm774, %v710, %v838
  %v903 = vsel %vm775, %v711, %v839
  %v904 = vsel %vm776, %v712, %v840
  %v905 = vsel %vm777, %v713, %v841
  %v906 = vsel %vm778, %v714, %v842
  %v907 = vsel %vm779, %v715, %v843
  %v908 = vsel %vm780, %v716, %v844
  %v909 = vsel %vm781, %v717, %v845
  %v910 = vsel %vm782, %v718, %v846
  %v911 = vsel %vm783, %v719, %v847
  %v912 = vsel %vm784, %v720, %v848
  %v913 = vsel %vm785, %v721, %v849
  %v914 = vsel %vm786, %v722, %v850
  %v915 = vsel %vm787, %v723, %v851
  %v916 = vsel %vm788, %v724, %v852
  %v917 = vsel %vm789, %v725, %v853
  %v918 = vsel %vm790, %v726, %v854
  %v919 = vsel %vm791, %v727, %v855
  %v920 = vsel %vm792, %v728, %v856
  %v921 = vsel %vm793, %v729, %v857
  %v922 = vsel %vm794, %v730, %v858
  %v923 = vsel %vm795, %v731, %v859
  %v924 = vsel %vm796, %v732, %v860
  %v925 = vmul.f32 %v861, %v160
  %v926 = vmul.f32 %v862, %v161
  %v927 = vmul.f32 %v863, %v162
  %v928 = vmul.f32 %v864, %v163
  %v929 = vmul.f32 %v865, %v164
  %v930 = vmul.f32 %v866, %v165
  %v931 = vmul.f32 %v867, %v166
  %v932 = vmul.f32 %v868, %v167
  %v933 = vmul.f32 %v869, %v168
  %v934 = vmul.f32 %v870, %v169
  %v935 = vmul.f32 %v871, %v170
  %v936 = vmul.f32 %v872, %v171
  %v937 = vmul.f32 %v873, %v172
  %v938 = vmul.f32 %v874, %v173
  %v939 = vmul.f32 %v875, %v174
  %v940 = vmul.f32 %v876, %v175
  %v941 = vmul.f32 %v877, %v176
  %v942 = vmul.f32 %v878, %v177
  %v943 = vmul.f32 %v879, %v178
  %v944 = vmul.f32 %v880, %v179
  %v945 = vmul.f32 %v881, %v180
  %v946 = vmul.f32 %v882, %v181
  %v947 = vmul.f32 %v883, %v182
  %v948 = vmul.f32 %v884, %v183
  %v949 = vmul.f32 %v885, %v184
  %v950 = vmul.f32 %v886, %v185
  %v951 = vmul.f32 %v887, %v186
  %v952 = vmul.f32 %v888, %v187
  %v953 = vmul.f32 %v889, %v188
  %v954 = vmul.f32 %v890, %v189
  %v955 = vmul.f32 %v891, %v190
  %v956 = vmul.f32 %v892, %v191
  %v957 = vmul.f32 %v893, %v192
  %v958 = vmul.f32 %v894, %v193
  %v959 = vmul.f32 %v895, %v194
  %v960 = vmul.f32 %v896, %v195
  %v961 = vmul.f32 %v897, %v196
  %v962 = vmul.f32 %v898, %v197
  %v963 = vmul.f32 %v899, %v198
  %v964 = vmul.f32 %v900, %v199
  %v965 = vmul.f32 %v901, %v200
  %v966 = vmul.f32 %v902, %v201
  %v967 = vmul.f32 %v903, %v202
  %v968 = vmul.f32 %v904, %v203
  %v969 = vmul.f32 %v905, %v204
  %v970 = vmul.f32 %v906, %v205
  %v971 = vmul.f32 %v907, %v206
  %v972 = vmul.f32 %v908, %v207
  %v973 = vmul.f32 %v909, %v208
  %v974 = vmul.f32 %v910, %v209
  %v975 = vmul.f32 %v911, %v210
  %v976 = vmul.f32 %v912, %v211
  %v977 = vmul.f32 %v913, %v212
  %v978 = vmul.f32 %v914, %v213
  %v979 = vmul.f32 %v915, %v214
  %v980 = vmul.f32 %v916, %v215
  %v981 = vmul.f32 %v917, %v216
  %v982 = vmul.f32 %v918, %v217
  %v983 = vmul.f32 %v919, %v218
  %v984 = vmul.f32 %v920, %v219
  %v985 = vmul.f32 %v921, %v220
  %v986 = vmul.f32 %v922, %v221
  %v987 = vmul.f32 %v923, %v222
  %v988 = vmul.f32 %v924, %v223
  %v989 = vsel %vm368, %v925, -1e+30
  %v990 = vsel %vm369, %v926, -1e+30
  %v991 = vsel %vm370, %v927, -1e+30
  %v992 = vsel %vm371, %v928, -1e+30
  %v993 = vsel %vm372, %v929, -1e+30
  %v994 = vsel %vm373, %v930, -1e+30
  %v995 = vsel %vm374, %v931, -1e+30
  %v996 = vsel %vm375, %v932, -1e+30
  %v997 = vsel %vm376, %v933, -1e+30
  %v998 = vsel %vm377, %v934, -1e+30
  %v999 = vsel %vm378, %v935, -1e+30
  %v1000 = vsel %vm379, %v936, -1e+30
  %v1001 = vsel %vm380, %v937, -1e+30
  %v1002 = vsel %vm381, %v938, -1e+30
  %v1003 = vsel %vm382, %v939, -1e+30
  %v1004 = vsel %vm383, %v940, -1e+30
  %v1005 = vsel %vm384, %v941, -1e+30
  %v1006 = vsel %vm385, %v942, -1e+30
  %v1007 = vsel %vm386, %v943, -1e+30
  %v1008 = vsel %vm387, %v944, -1e+30
  %v1009 = vsel %vm388, %v945, -1e+30
  %v1010 = vsel %vm389, %v946, -1e+30
  %v1011 = vsel %vm390, %v947, -1e+30
  %v1012 = vsel %vm391, %v948, -1e+30
  %v1013 = vsel %vm392, %v949, -1e+30
  %v1014 = vsel %vm393, %v950, -1e+30
  %v1015 = vsel %vm394, %v951, -1e+30
  %v1016 = vsel %vm395, %v952, -1e+30
  %v1017 = vsel %vm396, %v953, -1e+30
  %v1018 = vsel %vm397, %v954, -1e+30
  %v1019 = vsel %vm398, %v955, -1e+30
  %v1020 = vsel %vm399, %v956, -1e+30
  %v1021 = vsel %vm400, %v957, -1e+30
  %v1022 = vsel %vm401, %v958, -1e+30
  %v1023 = vsel %vm402, %v959, -1e+30
  %v1024 = vsel %vm403, %v960, -1e+30
  %v1025 = vsel %vm404, %v961, -1e+30
  %v1026 = vsel %vm405, %v962, -1e+30
  %v1027 = vsel %vm406, %v963, -1e+30
  %v1028 = vsel %vm407, %v964, -1e+30
  %v1029 = vsel %vm408, %v965, -1e+30
  %v1030 = vsel %vm409, %v966, -1e+30
  %v1031 = vsel %vm410, %v967, -1e+30
  %v1032 = vsel %vm411, %v968, -1e+30
  %v1033 = vsel %vm412, %v969, -1e+30
  %v1034 = vsel %vm413, %v970, -1e+30
  %v1035 = vsel %vm414, %v971, -1e+30
  %v1036 = vsel %vm415, %v972, -1e+30
  %v1037 = vsel %vm416, %v973, -1e+30
  %v1038 = vsel %vm417, %v974, -1e+30
  %v1039 = vsel %vm418, %v975, -1e+30
  %v1040 = vsel %vm419, %v976, -1e+30
  %v1041 = vsel %vm420, %v977, -1e+30
  %v1042 = vsel %vm421, %v978, -1e+30
  %v1043 = vsel %vm422, %v979, -1e+30
  %v1044 = vsel %vm423, %v980, -1e+30
  %v1045 = vsel %vm424, %v981, -1e+30
  %v1046 = vsel %vm425, %v982, -1e+30
  %v1047 = vsel %vm426, %v983, -1e+30
  %v1048 = vsel %vm427, %v984, -1e+30
  %v1049 = vsel %vm428, %v985, -1e+30
  %v1050 = vsel %vm429, %v986, -1e+30
  %v1051 = vsel %vm430, %v987, -1e+30
  %v1052 = vsel %vm431, %v988, -1e+30
  %v1053 = vmax.f32 %v989, %v990
  %1054 = vmax.xlane.f32.xlu0 %v1053
  %v1055 = vpop.xlane.xlu0 %1054
  %v1056 = vmax.f32 %v991, %v992
  %1057 = vmax.xlane.f32.xlu0 %v1056
  %v1058 = vpop.xlane.xlu0 %1057
  %v1059 = vmax.f32 %v993, %v994
  %1060 = vmax.xlane.f32.xlu0 %v1059
  %v1061 = vpop.xlane.xlu0 %1060
  %v1062 = vmax.f32 %v995, %v996
  %1063 = vmax.xlane.f32.xlu0 %v1062
  %v1064 = vpop.xlane.xlu0 %1063
  %v1065 = vmax.f32 %v997, %v998
  %1066 = vmax.xlane.f32.xlu0 %v1065
  %v1067 = vpop.xlane.xlu0 %1066
  %v1068 = vmax.f32 %v999, %v1000
  %1069 = vmax.xlane.f32.xlu0 %v1068
  %v1070 = vpop.xlane.xlu0 %1069
  %v1071 = vmax.f32 %v1001, %v1002
  %1072 = vmax.xlane.f32.xlu0 %v1071
  %v1073 = vpop.xlane.xlu0 %1072
  %v1074 = vmax.f32 %v1003, %v1004
  %1075 = vmax.xlane.f32.xlu0 %v1074
  %v1076 = vpop.xlane.xlu0 %1075
  %v1077 = vmax.f32 %v1005, %v1006
  %1078 = vmax.xlane.f32.xlu0 %v1077
  %v1079 = vpop.xlane.xlu0 %1078
  %v1080 = vmax.f32 %v1007, %v1008
  %1081 = vmax.xlane.f32.xlu0 %v1080
  %v1082 = vpop.xlane.xlu0 %1081
  %v1083 = vmax.f32 %v1009, %v1010
  %1084 = vmax.xlane.f32.xlu0 %v1083
  %v1085 = vpop.xlane.xlu0 %1084
  %v1086 = vmax.f32 %v1011, %v1012
  %1087 = vmax.xlane.f32.xlu0 %v1086
  %v1088 = vpop.xlane.xlu0 %1087
  %v1089 = vmax.f32 %v1013, %v1014
  %1090 = vmax.xlane.f32.xlu0 %v1089
  %v1091 = vpop.xlane.xlu0 %1090
  %v1092 = vmax.f32 %v1015, %v1016
  %1093 = vmax.xlane.f32.xlu0 %v1092
  %v1094 = vpop.xlane.xlu0 %1093
  %v1095 = vmax.f32 %v1017, %v1018
  %1096 = vmax.xlane.f32.xlu0 %v1095
  %v1097 = vpop.xlane.xlu0 %1096
  %v1098 = vmax.f32 %v1019, %v1020
  %1099 = vmax.xlane.f32.xlu0 %v1098
  %v1100 = vpop.xlane.xlu0 %1099
  %v1101 = vmax.f32 %v1021, %v1022
  %1102 = vmax.xlane.f32.xlu0 %v1101
  %v1103 = vpop.xlane.xlu0 %1102
  %v1104 = vmax.f32 %v1023, %v1024
  %1105 = vmax.xlane.f32.xlu0 %v1104
  %v1106 = vpop.xlane.xlu0 %1105
  %v1107 = vmax.f32 %v1025, %v1026
  %1108 = vmax.xlane.f32.xlu0 %v1107
  %v1109 = vpop.xlane.xlu0 %1108
  %v1110 = vmax.f32 %v1027, %v1028
  %1111 = vmax.xlane.f32.xlu0 %v1110
  %v1112 = vpop.xlane.xlu0 %1111
  %v1113 = vmax.f32 %v1029, %v1030
  %1114 = vmax.xlane.f32.xlu0 %v1113
  %v1115 = vpop.xlane.xlu0 %1114
  %v1116 = vmax.f32 %v1031, %v1032
  %1117 = vmax.xlane.f32.xlu0 %v1116
  %v1118 = vpop.xlane.xlu0 %1117
  %v1119 = vmax.f32 %v1033, %v1034
  %1120 = vmax.xlane.f32.xlu0 %v1119
  %v1121 = vpop.xlane.xlu0 %1120
  %v1122 = vmax.f32 %v1035, %v1036
  %1123 = vmax.xlane.f32.xlu0 %v1122
  %v1124 = vpop.xlane.xlu0 %1123
  %v1125 = vmax.f32 %v1037, %v1038
  %1126 = vmax.xlane.f32.xlu0 %v1125
  %v1127 = vpop.xlane.xlu0 %1126
  %v1128 = vmax.f32 %v1039, %v1040
  %1129 = vmax.xlane.f32.xlu0 %v1128
  %v1130 = vpop.xlane.xlu0 %1129
  %v1131 = vmax.f32 %v1041, %v1042
  %1132 = vmax.xlane.f32.xlu0 %v1131
  %v1133 = vpop.xlane.xlu0 %1132
  %v1134 = vmax.f32 %v1043, %v1044
  %1135 = vmax.xlane.f32.xlu0 %v1134
  %v1136 = vpop.xlane.xlu0 %1135
  %v1137 = vmax.f32 %v1045, %v1046
  %1138 = vmax.xlane.f32.xlu0 %v1137
  %v1139 = vpop.xlane.xlu0 %1138
  %v1140 = vmax.f32 %v1047, %v1048
  %1141 = vmax.xlane.f32.xlu0 %v1140
  %v1142 = vpop.xlane.xlu0 %1141
  %v1143 = vmax.f32 %v1049, %v1050
  %1144 = vmax.xlane.f32.xlu0 %v1143
  %v1145 = vpop.xlane.xlu0 %1144
  %v1146 = vmax.f32 %v1051, %v1052
  %1147 = vmax.xlane.f32.xlu0 %v1146
  %v1148 = vpop.xlane.xlu0 %1147
  %v1149 = vmax.f32 %v432, %v1055
  %v1150 = vmax.f32 %v433, %v1058
  %v1151 = vmax.f32 %v434, %v1061
  %v1152 = vmax.f32 %v435, %v1064
  %v1153 = vmax.f32 %v436, %v1067
  %v1154 = vmax.f32 %v437, %v1070
  %v1155 = vmax.f32 %v438, %v1073
  %v1156 = vmax.f32 %v439, %v1076
  %v1157 = vmax.f32 %v440, %v1079
  %v1158 = vmax.f32 %v441, %v1082
  %v1159 = vmax.f32 %v442, %v1085
  %v1160 = vmax.f32 %v443, %v1088
  %v1161 = vmax.f32 %v444, %v1091
  %v1162 = vmax.f32 %v445, %v1094
  %v1163 = vmax.f32 %v446, %v1097
  %v1164 = vmax.f32 %v447, %v1100
  %v1165 = vmax.f32 %v448, %v1103
  %v1166 = vmax.f32 %v449, %v1106
  %v1167 = vmax.f32 %v450, %v1109
  %v1168 = vmax.f32 %v451, %v1112
  %v1169 = vmax.f32 %v452, %v1115
  %v1170 = vmax.f32 %v453, %v1118
  %v1171 = vmax.f32 %v454, %v1121
  %v1172 = vmax.f32 %v455, %v1124
  %v1173 = vmax.f32 %v456, %v1127
  %v1174 = vmax.f32 %v457, %v1130
  %v1175 = vmax.f32 %v458, %v1133
  %v1176 = vmax.f32 %v459, %v1136
  %v1177 = vmax.f32 %v460, %v1139
  %v1178 = vmax.f32 %v461, %v1142
  %v1179 = vmax.f32 %v462, %v1145
  %v1180 = vmax.f32 %v463, %v1148
  %1182 = vset.pattern.permute.xlu0 0
  %1183 = vperm.xlu0 %1182, %v1149
  %v1184 = vpop.permute.xlu0 %1183
  %1187 = vset.pattern.permute.xlu0 0
  %1188 = vperm.xlu0 %1187, %v1150
  %v1189 = vpop.permute.xlu0 %1188
  %1192 = vset.pattern.permute.xlu0 0
  %1193 = vperm.xlu0 %1192, %v1151
  %v1194 = vpop.permute.xlu0 %1193
  %1197 = vset.pattern.permute.xlu0 0
  %1198 = vperm.xlu0 %1197, %v1152
  %v1199 = vpop.permute.xlu0 %1198
  %1202 = vset.pattern.permute.xlu0 0
  %1203 = vperm.xlu0 %1202, %v1153
  %v1204 = vpop.permute.xlu0 %1203
  %1207 = vset.pattern.permute.xlu0 0
  %1208 = vperm.xlu0 %1207, %v1154
  %v1209 = vpop.permute.xlu0 %1208
  %1212 = vset.pattern.permute.xlu0 0
  %1213 = vperm.xlu0 %1212, %v1155
  %v1214 = vpop.permute.xlu0 %1213
  %1217 = vset.pattern.permute.xlu0 0
  %1218 = vperm.xlu0 %1217, %v1156
  %v1219 = vpop.permute.xlu0 %1218
  %1222 = vset.pattern.permute.xlu0 0
  %1223 = vperm.xlu0 %1222, %v1157
  %v1224 = vpop.permute.xlu0 %1223
  %1227 = vset.pattern.permute.xlu0 0
  %1228 = vperm.xlu0 %1227, %v1158
  %v1229 = vpop.permute.xlu0 %1228
  %1232 = vset.pattern.permute.xlu0 0
  %1233 = vperm.xlu0 %1232, %v1159
  %v1234 = vpop.permute.xlu0 %1233
  %1237 = vset.pattern.permute.xlu0 0
  %1238 = vperm.xlu0 %1237, %v1160
  %v1239 = vpop.permute.xlu0 %1238
  %1242 = vset.pattern.permute.xlu0 0
  %1243 = vperm.xlu0 %1242, %v1161
  %v1244 = vpop.permute.xlu0 %1243
  %1247 = vset.pattern.permute.xlu0 0
  %1248 = vperm.xlu0 %1247, %v1162
  %v1249 = vpop.permute.xlu0 %1248
  %1252 = vset.pattern.permute.xlu0 0
  %1253 = vperm.xlu0 %1252, %v1163
  %v1254 = vpop.permute.xlu0 %1253
  %1257 = vset.pattern.permute.xlu0 0
  %1258 = vperm.xlu0 %1257, %v1164
  %v1259 = vpop.permute.xlu0 %1258
  %1262 = vset.pattern.permute.xlu0 0
  %1263 = vperm.xlu0 %1262, %v1165
  %v1264 = vpop.permute.xlu0 %1263
  %1267 = vset.pattern.permute.xlu0 0
  %1268 = vperm.xlu0 %1267, %v1166
  %v1269 = vpop.permute.xlu0 %1268
  %1272 = vset.pattern.permute.xlu0 0
  %1273 = vperm.xlu0 %1272, %v1167
  %v1274 = vpop.permute.xlu0 %1273
  %1277 = vset.pattern.permute.xlu0 0
  %1278 = vperm.xlu0 %1277, %v1168
  %v1279 = vpop.permute.xlu0 %1278
  %1282 = vset.pattern.permute.xlu0 0
  %1283 = vperm.xlu0 %1282, %v1169
  %v1284 = vpop.permute.xlu0 %1283
  %1287 = vset.pattern.permute.xlu0 0
  %1288 = vperm.xlu0 %1287, %v1170
  %v1289 = vpop.permute.xlu0 %1288
  %1292 = vset.pattern.permute.xlu0 0
  %1293 = vperm.xlu0 %1292, %v1171
  %v1294 = vpop.permute.xlu0 %1293
  %1297 = vset.pattern.permute.xlu0 0
  %1298 = vperm.xlu0 %1297, %v1172
  %v1299 = vpop.permute.xlu0 %1298
  %1302 = vset.pattern.permute.xlu0 0
  %1303 = vperm.xlu0 %1302, %v1173
  %v1304 = vpop.permute.xlu0 %1303
  %1307 = vset.pattern.permute.xlu0 0
  %1308 = vperm.xlu0 %1307, %v1174
  %v1309 = vpop.permute.xlu0 %1308
  %1312 = vset.pattern.permute.xlu0 0
  %1313 = vperm.xlu0 %1312, %v1175
  %v1314 = vpop.permute.xlu0 %1313
  %1317 = vset.pattern.permute.xlu0 0
  %1318 = vperm.xlu0 %1317, %v1176
  %v1319 = vpop.permute.xlu0 %1318
  %1322 = vset.pattern.permute.xlu0 0
  %1323 = vperm.xlu0 %1322, %v1177
  %v1324 = vpop.permute.xlu0 %1323
  %1327 = vset.pattern.permute.xlu0 0
  %1328 = vperm.xlu0 %1327, %v1178
  %v1329 = vpop.permute.xlu0 %1328
  %1332 = vset.pattern.permute.xlu0 0
  %1333 = vperm.xlu0 %1332, %v1179
  %v1334 = vpop.permute.xlu0 %1333
  %1337 = vset.pattern.permute.xlu0 0
  %1338 = vperm.xlu0 %1337, %v1180
  %v1339 = vpop.permute.xlu0 %1338
  %v1341 = vsub.f32 %v989, %v1184
  %v1342 = vsub.f32 %v990, %v1184
  %v1343 = vsub.f32 %v991, %v1189
  %v1344 = vsub.f32 %v992, %v1189
  %v1345 = vsub.f32 %v993, %v1194
  %v1346 = vsub.f32 %v994, %v1194
  %v1347 = vsub.f32 %v995, %v1199
  %v1348 = vsub.f32 %v996, %v1199
  %v1349 = vsub.f32 %v997, %v1204
  %v1350 = vsub.f32 %v998, %v1204
  %v1351 = vsub.f32 %v999, %v1209
  %v1352 = vsub.f32 %v1000, %v1209
  %v1353 = vsub.f32 %v1001, %v1214
  %v1354 = vsub.f32 %v1002, %v1214
  %v1355 = vsub.f32 %v1003, %v1219
  %v1356 = vsub.f32 %v1004, %v1219
  %v1357 = vsub.f32 %v1005, %v1224
  %v1358 = vsub.f32 %v1006, %v1224
  %v1359 = vsub.f32 %v1007, %v1229
  %v1360 = vsub.f32 %v1008, %v1229
  %v1361 = vsub.f32 %v1009, %v1234
  %v1362 = vsub.f32 %v1010, %v1234
  %v1363 = vsub.f32 %v1011, %v1239
  %v1364 = vsub.f32 %v1012, %v1239
  %v1365 = vsub.f32 %v1013, %v1244
  %v1366 = vsub.f32 %v1014, %v1244
  %v1367 = vsub.f32 %v1015, %v1249
  %v1368 = vsub.f32 %v1016, %v1249
  %v1369 = vsub.f32 %v1017, %v1254
  %v1370 = vsub.f32 %v1018, %v1254
  %v1371 = vsub.f32 %v1019, %v1259
  %v1372 = vsub.f32 %v1020, %v1259
  %v1373 = vsub.f32 %v1021, %v1264
  %v1374 = vsub.f32 %v1022, %v1264
  %v1375 = vsub.f32 %v1023, %v1269
  %v1376 = vsub.f32 %v1024, %v1269
  %v1377 = vsub.f32 %v1025, %v1274
  %v1378 = vsub.f32 %v1026, %v1274
  %v1379 = vsub.f32 %v1027, %v1279
  %v1380 = vsub.f32 %v1028, %v1279
  %v1381 = vsub.f32 %v1029, %v1284
  %v1382 = vsub.f32 %v1030, %v1284
  %v1383 = vsub.f32 %v1031, %v1289
  %v1384 = vsub.f32 %v1032, %v1289
  %v1385 = vsub.f32 %v1033, %v1294
  %v1386 = vsub.f32 %v1034, %v1294
  %v1387 = vsub.f32 %v1035, %v1299
  %v1388 = vsub.f32 %v1036, %v1299
  %v1389 = vsub.f32 %v1037, %v1304
  %v1390 = vsub.f32 %v1038, %v1304
  %v1391 = vsub.f32 %v1039, %v1309
  %v1392 = vsub.f32 %v1040, %v1309
  %v1393 = vsub.f32 %v1041, %v1314
  %v1394 = vsub.f32 %v1042, %v1314
  %v1395 = vsub.f32 %v1043, %v1319
  %v1396 = vsub.f32 %v1044, %v1319
  %v1397 = vsub.f32 %v1045, %v1324
  %v1398 = vsub.f32 %v1046, %v1324
  %v1399 = vsub.f32 %v1047, %v1329
  %v1400 = vsub.f32 %v1048, %v1329
  %v1401 = vsub.f32 %v1049, %v1334
  %v1402 = vsub.f32 %v1050, %v1334
  %v1403 = vsub.f32 %v1051, %v1339
  %v1404 = vsub.f32 %v1052, %v1339
  %v1405 = vmul.f32 %v1341, 1.442695
  %v1406 = vpow.pop %v1405
  %v1407 = vmul.f32 %v1342, 1.442695
  %v1408 = vpow.pop %v1407
  %v1409 = vmul.f32 %v1343, 1.442695
  %v1410 = vpow.pop %v1409
  %v1411 = vmul.f32 %v1344, 1.442695
  %v1412 = vpow.pop %v1411
  %v1413 = vmul.f32 %v1345, 1.442695
  %v1414 = vpow.pop %v1413
  %v1415 = vmul.f32 %v1346, 1.442695
  %v1416 = vpow.pop %v1415
  %v1417 = vmul.f32 %v1347, 1.442695
  %v1418 = vpow.pop %v1417
  %v1419 = vmul.f32 %v1348, 1.442695
  %v1420 = vpow.pop %v1419
  %v1421 = vmul.f32 %v1349, 1.442695
  %v1422 = vpow.pop %v1421
  %v1423 = vmul.f32 %v1350, 1.442695
  %v1424 = vpow.pop %v1423
  %v1425 = vmul.f32 %v1351, 1.442695
  %v1426 = vpow.pop %v1425
  %v1427 = vmul.f32 %v1352, 1.442695
  %v1428 = vpow.pop %v1427
  %v1429 = vmul.f32 %v1353, 1.442695
  %v1430 = vpow.pop %v1429
  %v1431 = vmul.f32 %v1354, 1.442695
  %v1432 = vpow.pop %v1431
  %v1433 = vmul.f32 %v1355, 1.442695
  %v1434 = vpow.pop %v1433
  %v1435 = vmul.f32 %v1356, 1.442695
  %v1436 = vpow.pop %v1435
  %v1437 = vmul.f32 %v1357, 1.442695
  %v1438 = vpow.pop %v1437
  %v1439 = vmul.f32 %v1358, 1.442695
  %v1440 = vpow.pop %v1439
  %v1441 = vmul.f32 %v1359, 1.442695
  %v1442 = vpow.pop %v1441
  %v1443 = vmul.f32 %v1360, 1.442695
  %v1444 = vpow.pop %v1443
  %v1445 = vmul.f32 %v1361, 1.442695
  %v1446 = vpow.pop %v1445
  %v1447 = vmul.f32 %v1362, 1.442695
  %v1448 = vpow.pop %v1447
  %v1449 = vmul.f32 %v1363, 1.442695
  %v1450 = vpow.pop %v1449
  %v1451 = vmul.f32 %v1364, 1.442695
  %v1452 = vpow.pop %v1451
  %v1453 = vmul.f32 %v1365, 1.442695
  %v1454 = vpow.pop %v1453
  %v1455 = vmul.f32 %v1366, 1.442695
  %v1456 = vpow.pop %v1455
  %v1457 = vmul.f32 %v1367, 1.442695
  %v1458 = vpow.pop %v1457
  %v1459 = vmul.f32 %v1368, 1.442695
  %v1460 = vpow.pop %v1459
  %v1461 = vmul.f32 %v1369, 1.442695
  %v1462 = vpow.pop %v1461
  %v1463 = vmul.f32 %v1370, 1.442695
  %v1464 = vpow.pop %v1463
  %v1465 = vmul.f32 %v1371, 1.442695
  %v1466 = vpow.pop %v1465
  %v1467 = vmul.f32 %v1372, 1.442695
  %v1468 = vpow.pop %v1467
  %v1469 = vmul.f32 %v1373, 1.442695
  %v1470 = vpow.pop %v1469
  %v1471 = vmul.f32 %v1374, 1.442695
  %v1472 = vpow.pop %v1471
  %v1473 = vmul.f32 %v1375, 1.442695
  %v1474 = vpow.pop %v1473
  %v1475 = vmul.f32 %v1376, 1.442695
  %v1476 = vpow.pop %v1475
  %v1477 = vmul.f32 %v1377, 1.442695
  %v1478 = vpow.pop %v1477
  %v1479 = vmul.f32 %v1378, 1.442695
  %v1480 = vpow.pop %v1479
  %v1481 = vmul.f32 %v1379, 1.442695
  %v1482 = vpow.pop %v1481
  %v1483 = vmul.f32 %v1380, 1.442695
  %v1484 = vpow.pop %v1483
  %v1485 = vmul.f32 %v1381, 1.442695
  %v1486 = vpow.pop %v1485
  %v1487 = vmul.f32 %v1382, 1.442695
  %v1488 = vpow.pop %v1487
  %v1489 = vmul.f32 %v1383, 1.442695
  %v1490 = vpow.pop %v1489
  %v1491 = vmul.f32 %v1384, 1.442695
  %v1492 = vpow.pop %v1491
  %v1493 = vmul.f32 %v1385, 1.442695
  %v1494 = vpow.pop %v1493
  %v1495 = vmul.f32 %v1386, 1.442695
  %v1496 = vpow.pop %v1495
  %v1497 = vmul.f32 %v1387, 1.442695
  %v1498 = vpow.pop %v1497
  %v1499 = vmul.f32 %v1388, 1.442695
  %v1500 = vpow.pop %v1499
  %v1501 = vmul.f32 %v1389, 1.442695
  %v1502 = vpow.pop %v1501
  %v1503 = vmul.f32 %v1390, 1.442695
  %v1504 = vpow.pop %v1503
  %v1505 = vmul.f32 %v1391, 1.442695
  %v1506 = vpow.pop %v1505
  %v1507 = vmul.f32 %v1392, 1.442695
  %v1508 = vpow.pop %v1507
  %v1509 = vmul.f32 %v1393, 1.442695
  %v1510 = vpow.pop %v1509
  %v1511 = vmul.f32 %v1394, 1.442695
  %v1512 = vpow.pop %v1511
  %v1513 = vmul.f32 %v1395, 1.442695
  %v1514 = vpow.pop %v1513
  %v1515 = vmul.f32 %v1396, 1.442695
  %v1516 = vpow.pop %v1515
  %v1517 = vmul.f32 %v1397, 1.442695
  %v1518 = vpow.pop %v1517
  %v1519 = vmul.f32 %v1398, 1.442695
  %v1520 = vpow.pop %v1519
  %v1521 = vmul.f32 %v1399, 1.442695
  %v1522 = vpow.pop %v1521
  %v1523 = vmul.f32 %v1400, 1.442695
  %v1524 = vpow.pop %v1523
  %v1525 = vmul.f32 %v1401, 1.442695
  %v1526 = vpow.pop %v1525
  %v1527 = vmul.f32 %v1402, 1.442695
  %v1528 = vpow.pop %v1527
  %v1529 = vmul.f32 %v1403, 1.442695
  %v1530 = vpow.pop %v1529
  %v1531 = vmul.f32 %v1404, 1.442695
  %v1532 = vpow.pop %v1531
  %v1533 = vmul.f32 %v1406, %v304
  %v1534 = vmul.f32 %v1408, %v305
  %v1535 = vmul.f32 %v1410, %v306
  %v1536 = vmul.f32 %v1412, %v307
  %v1537 = vmul.f32 %v1414, %v308
  %v1538 = vmul.f32 %v1416, %v309
  %v1539 = vmul.f32 %v1418, %v310
  %v1540 = vmul.f32 %v1420, %v311
  %v1541 = vmul.f32 %v1422, %v312
  %v1542 = vmul.f32 %v1424, %v313
  %v1543 = vmul.f32 %v1426, %v314
  %v1544 = vmul.f32 %v1428, %v315
  %v1545 = vmul.f32 %v1430, %v316
  %v1546 = vmul.f32 %v1432, %v317
  %v1547 = vmul.f32 %v1434, %v318
  %v1548 = vmul.f32 %v1436, %v319
  %v1549 = vmul.f32 %v1438, %v320
  %v1550 = vmul.f32 %v1440, %v321
  %v1551 = vmul.f32 %v1442, %v322
  %v1552 = vmul.f32 %v1444, %v323
  %v1553 = vmul.f32 %v1446, %v324
  %v1554 = vmul.f32 %v1448, %v325
  %v1555 = vmul.f32 %v1450, %v326
  %v1556 = vmul.f32 %v1452, %v327
  %v1557 = vmul.f32 %v1454, %v328
  %v1558 = vmul.f32 %v1456, %v329
  %v1559 = vmul.f32 %v1458, %v330
  %v1560 = vmul.f32 %v1460, %v331
  %v1561 = vmul.f32 %v1462, %v332
  %v1562 = vmul.f32 %v1464, %v333
  %v1563 = vmul.f32 %v1466, %v334
  %v1564 = vmul.f32 %v1468, %v335
  %v1565 = vmul.f32 %v1470, %v336
  %v1566 = vmul.f32 %v1472, %v337
  %v1567 = vmul.f32 %v1474, %v338
  %v1568 = vmul.f32 %v1476, %v339
  %v1569 = vmul.f32 %v1478, %v340
  %v1570 = vmul.f32 %v1480, %v341
  %v1571 = vmul.f32 %v1482, %v342
  %v1572 = vmul.f32 %v1484, %v343
  %v1573 = vmul.f32 %v1486, %v344
  %v1574 = vmul.f32 %v1488, %v345
  %v1575 = vmul.f32 %v1490, %v346
  %v1576 = vmul.f32 %v1492, %v347
  %v1577 = vmul.f32 %v1494, %v348
  %v1578 = vmul.f32 %v1496, %v349
  %v1579 = vmul.f32 %v1498, %v350
  %v1580 = vmul.f32 %v1500, %v351
  %v1581 = vmul.f32 %v1502, %v352
  %v1582 = vmul.f32 %v1504, %v353
  %v1583 = vmul.f32 %v1506, %v354
  %v1584 = vmul.f32 %v1508, %v355
  %v1585 = vmul.f32 %v1510, %v356
  %v1586 = vmul.f32 %v1512, %v357
  %v1587 = vmul.f32 %v1514, %v358
  %v1588 = vmul.f32 %v1516, %v359
  %v1589 = vmul.f32 %v1518, %v360
  %v1590 = vmul.f32 %v1520, %v361
  %v1591 = vmul.f32 %v1522, %v362
  %v1592 = vmul.f32 %v1524, %v363
  %v1593 = vmul.f32 %v1526, %v364
  %v1594 = vmul.f32 %v1528, %v365
  %v1595 = vmul.f32 %v1530, %v366
  %v1596 = vmul.f32 %v1532, %v367
  %v1597 = vadd.f32 %v1533, %v1534
  %1598 = vadd.xlane.f32.xlu0 %v1597
  %v1599 = vpop.xlane.xlu0 %1598
  %v1600 = vadd.f32 %v1535, %v1536
  %1601 = vadd.xlane.f32.xlu0 %v1600
  %v1602 = vpop.xlane.xlu0 %1601
  %v1603 = vadd.f32 %v1537, %v1538
  %1604 = vadd.xlane.f32.xlu0 %v1603
  %v1605 = vpop.xlane.xlu0 %1604
  %v1606 = vadd.f32 %v1539, %v1540
  %1607 = vadd.xlane.f32.xlu0 %v1606
  %v1608 = vpop.xlane.xlu0 %1607
  %v1609 = vadd.f32 %v1541, %v1542
  %1610 = vadd.xlane.f32.xlu0 %v1609
  %v1611 = vpop.xlane.xlu0 %1610
  %v1612 = vadd.f32 %v1543, %v1544
  %1613 = vadd.xlane.f32.xlu0 %v1612
  %v1614 = vpop.xlane.xlu0 %1613
  %v1615 = vadd.f32 %v1545, %v1546
  %1616 = vadd.xlane.f32.xlu0 %v1615
  %v1617 = vpop.xlane.xlu0 %1616
  %v1618 = vadd.f32 %v1547, %v1548
  %1619 = vadd.xlane.f32.xlu0 %v1618
  %v1620 = vpop.xlane.xlu0 %1619
  %v1621 = vadd.f32 %v1549, %v1550
  %1622 = vadd.xlane.f32.xlu0 %v1621
  %v1623 = vpop.xlane.xlu0 %1622
  %v1624 = vadd.f32 %v1551, %v1552
  %1625 = vadd.xlane.f32.xlu0 %v1624
  %v1626 = vpop.xlane.xlu0 %1625
  %v1627 = vadd.f32 %v1553, %v1554
  %1628 = vadd.xlane.f32.xlu0 %v1627
  %v1629 = vpop.xlane.xlu0 %1628
  %v1630 = vadd.f32 %v1555, %v1556
  %1631 = vadd.xlane.f32.xlu0 %v1630
  %v1632 = vpop.xlane.xlu0 %1631
  %v1633 = vadd.f32 %v1557, %v1558
  %1634 = vadd.xlane.f32.xlu0 %v1633
  %v1635 = vpop.xlane.xlu0 %1634
  %v1636 = vadd.f32 %v1559, %v1560
  %1637 = vadd.xlane.f32.xlu0 %v1636
  %v1638 = vpop.xlane.xlu0 %1637
  %v1639 = vadd.f32 %v1561, %v1562
  %1640 = vadd.xlane.f32.xlu0 %v1639
  %v1641 = vpop.xlane.xlu0 %1640
  %v1642 = vadd.f32 %v1563, %v1564
  %1643 = vadd.xlane.f32.xlu0 %v1642
  %v1644 = vpop.xlane.xlu0 %1643
  %v1645 = vadd.f32 %v1565, %v1566
  %1646 = vadd.xlane.f32.xlu0 %v1645
  %v1647 = vpop.xlane.xlu0 %1646
  %v1648 = vadd.f32 %v1567, %v1568
  %1649 = vadd.xlane.f32.xlu0 %v1648
  %v1650 = vpop.xlane.xlu0 %1649
  %v1651 = vadd.f32 %v1569, %v1570
  %1652 = vadd.xlane.f32.xlu0 %v1651
  %v1653 = vpop.xlane.xlu0 %1652
  %v1654 = vadd.f32 %v1571, %v1572
  %1655 = vadd.xlane.f32.xlu0 %v1654
  %v1656 = vpop.xlane.xlu0 %1655
  %v1657 = vadd.f32 %v1573, %v1574
  %1658 = vadd.xlane.f32.xlu0 %v1657
  %v1659 = vpop.xlane.xlu0 %1658
  %v1660 = vadd.f32 %v1575, %v1576
  %1661 = vadd.xlane.f32.xlu0 %v1660
  %v1662 = vpop.xlane.xlu0 %1661
  %v1663 = vadd.f32 %v1577, %v1578
  %1664 = vadd.xlane.f32.xlu0 %v1663
  %v1665 = vpop.xlane.xlu0 %1664
  %v1666 = vadd.f32 %v1579, %v1580
  %1667 = vadd.xlane.f32.xlu0 %v1666
  %v1668 = vpop.xlane.xlu0 %1667
  %v1669 = vadd.f32 %v1581, %v1582
  %1670 = vadd.xlane.f32.xlu0 %v1669
  %v1671 = vpop.xlane.xlu0 %1670
  %v1672 = vadd.f32 %v1583, %v1584
  %1673 = vadd.xlane.f32.xlu0 %v1672
  %v1674 = vpop.xlane.xlu0 %1673
  %v1675 = vadd.f32 %v1585, %v1586
  %1676 = vadd.xlane.f32.xlu0 %v1675
  %v1677 = vpop.xlane.xlu0 %1676
  %v1678 = vadd.f32 %v1587, %v1588
  %1679 = vadd.xlane.f32.xlu0 %v1678
  %v1680 = vpop.xlane.xlu0 %1679
  %v1681 = vadd.f32 %v1589, %v1590
  %1682 = vadd.xlane.f32.xlu0 %v1681
  %v1683 = vpop.xlane.xlu0 %1682
  %v1684 = vadd.f32 %v1591, %v1592
  %1685 = vadd.xlane.f32.xlu0 %v1684
  %v1686 = vpop.xlane.xlu0 %1685
  %v1687 = vadd.f32 %v1593, %v1594
  %1688 = vadd.xlane.f32.xlu0 %v1687
  %v1689 = vpop.xlane.xlu0 %1688
  %v1690 = vadd.f32 %v1595, %v1596
  %1691 = vadd.xlane.f32.xlu0 %v1690
  %v1692 = vpop.xlane.xlu0 %1691
  %s1693 = sshra.s32 %s464, 3
  %s1694 = sand.u32 %s464, 7
  %s1695 = smul.addr %s1693, 4
  %s1696 = scalar_lea.vmem %s4, %s1695
  %v1697 = vld [vmem:[%s1696] sm:$0xf]
  %v1698 = vld [vmem:[%s1696 + $0x4] sm:$0xf]
  %v1699 = vld [vmem:[%s1696 + $0x8] sm:$0xf]
  %v1700 = vld [vmem:[%s1696 + $0xc] sm:$0xf]
  %v1701 = vld [vmem:[%s1696 + $0x10] sm:$0xf]
  %v1702 = vld [vmem:[%s1696 + $0x14] sm:$0xf]
  %v1703 = vld [vmem:[%s1696 + $0x18] sm:$0xf]
  %v1704 = vld [vmem:[%s1696 + $0x1c] sm:$0xf]
  %v1705 = vld [vmem:[%s1696 + $0x20] sm:$0xf]
  %v1706 = vld [vmem:[%s1696 + $0x24] sm:$0xf]
  %v1707 = vld [vmem:[%s1696 + $0x28] sm:$0xf]
  %v1708 = vld [vmem:[%s1696 + $0x2c] sm:$0xf]
  %v1709 = vld [vmem:[%s1696 + $0x30] sm:$0xf]
  %v1710 = vld [vmem:[%s1696 + $0x34] sm:$0xf]
  %v1711 = vld [vmem:[%s1696 + $0x38] sm:$0xf]
  %v1712 = vld [vmem:[%s1696 + $0x3c] sm:$0xf]
  %v1713 = vld [vmem:[%s1696 + $0x40] sm:$0xf]
  %v1714 = vld [vmem:[%s1696 + $0x44] sm:$0xf]
  %v1715 = vld [vmem:[%s1696 + $0x48] sm:$0xf]
  %v1716 = vld [vmem:[%s1696 + $0x4c] sm:$0xf]
  %v1717 = vld [vmem:[%s1696 + $0x50] sm:$0xf]
  %v1718 = vld [vmem:[%s1696 + $0x54] sm:$0xf]
  %v1719 = vld [vmem:[%s1696 + $0x58] sm:$0xf]
  %v1720 = vld [vmem:[%s1696 + $0x5c] sm:$0xf]
  %v1721 = vld [vmem:[%s1696 + $0x60] sm:$0xf]
  %v1722 = vld [vmem:[%s1696 + $0x64] sm:$0xf]
  %v1723 = vld [vmem:[%s1696 + $0x68] sm:$0xf]
  %v1724 = vld [vmem:[%s1696 + $0x6c] sm:$0xf]
  %v1725 = vld [vmem:[%s1696 + $0x70] sm:$0xf]
  %v1726 = vld [vmem:[%s1696 + $0x74] sm:$0xf]
  %v1727 = vld [vmem:[%s1696 + $0x78] sm:$0xf]
  %v1728 = vld [vmem:[%s1696 + $0x7c] sm:$0xf]
  %v1729 = vpack.c.bf16 %v1535, %v1533
  %v1730 = vpack.c.bf16 %v1536, %v1534
  %v1731 = vpack.c.bf16 %v1539, %v1537
  %v1732 = vpack.c.bf16 %v1540, %v1538
  %v1733 = vpack.c.bf16 %v1543, %v1541
  %v1734 = vpack.c.bf16 %v1544, %v1542
  %v1735 = vpack.c.bf16 %v1547, %v1545
  %v1736 = vpack.c.bf16 %v1548, %v1546
  %v1737 = vpack.c.bf16 %v1551, %v1549
  %v1738 = vpack.c.bf16 %v1552, %v1550
  %v1739 = vpack.c.bf16 %v1555, %v1553
  %v1740 = vpack.c.bf16 %v1556, %v1554
  %v1741 = vpack.c.bf16 %v1559, %v1557
  %v1742 = vpack.c.bf16 %v1560, %v1558
  %v1743 = vpack.c.bf16 %v1563, %v1561
  %v1744 = vpack.c.bf16 %v1564, %v1562
  %v1745 = vpack.c.bf16 %v1567, %v1565
  %v1746 = vpack.c.bf16 %v1568, %v1566
  %v1747 = vpack.c.bf16 %v1571, %v1569
  %v1748 = vpack.c.bf16 %v1572, %v1570
  %v1749 = vpack.c.bf16 %v1575, %v1573
  %v1750 = vpack.c.bf16 %v1576, %v1574
  %v1751 = vpack.c.bf16 %v1579, %v1577
  %v1752 = vpack.c.bf16 %v1580, %v1578
  %v1753 = vpack.c.bf16 %v1583, %v1581
  %v1754 = vpack.c.bf16 %v1584, %v1582
  %v1755 = vpack.c.bf16 %v1587, %v1585
  %v1756 = vpack.c.bf16 %v1588, %v1586
  %v1757 = vpack.c.bf16 %v1591, %v1589
  %v1758 = vpack.c.bf16 %v1592, %v1590
  %v1759 = vpack.c.bf16 %v1595, %v1593
  %v1760 = vpack.c.bf16 %v1596, %v1594
  %v1793 = vunpack.c.l.b16 %v1697
  %v1794 = vunpack.c.l.b16 %v1698
  %v1795 = vunpack.c.l.b16 %v1699
  %v1796 = vunpack.c.l.b16 %v1700
  %v1797 = vunpack.c.l.b16 %v1701
  %v1798 = vunpack.c.l.b16 %v1702
  %v1799 = vunpack.c.l.b16 %v1703
  %v1800 = vunpack.c.l.b16 %v1704
  %v1801 = vunpack.c.l.b16 %v1705
  %v1802 = vunpack.c.l.b16 %v1706
  %v1803 = vunpack.c.l.b16 %v1707
  %v1804 = vunpack.c.l.b16 %v1708
  %v1805 = vunpack.c.l.b16 %v1709
  %v1806 = vunpack.c.l.b16 %v1710
  %v1807 = vunpack.c.l.b16 %v1711
  %v1808 = vunpack.c.l.b16 %v1712
  %v1809 = vunpack.c.l.b16 %v1713
  %v1810 = vunpack.c.l.b16 %v1714
  %v1811 = vunpack.c.l.b16 %v1715
  %v1812 = vunpack.c.l.b16 %v1716
  %v1813 = vunpack.c.l.b16 %v1717
  %v1814 = vunpack.c.l.b16 %v1718
  %v1815 = vunpack.c.l.b16 %v1719
  %v1816 = vunpack.c.l.b16 %v1720
  %v1817 = vunpack.c.l.b16 %v1721
  %v1818 = vunpack.c.l.b16 %v1722
  %v1819 = vunpack.c.l.b16 %v1723
  %v1820 = vunpack.c.l.b16 %v1724
  %v1821 = vunpack.c.l.b16 %v1725
  %v1822 = vunpack.c.l.b16 %v1726
  %v1823 = vunpack.c.l.b16 %v1727
  %v1824 = vunpack.c.l.b16 %v1728
  %v1825 = vpack.c.b16 %v1794, %v1793
  %v1826 = vpack.c.b16 %v1796, %v1795
  %v1827 = vpack.c.b16 %v1798, %v1797
  %v1828 = vpack.c.b16 %v1800, %v1799
  %v1829 = vpack.c.b16 %v1802, %v1801
  %v1830 = vpack.c.b16 %v1804, %v1803
  %v1831 = vpack.c.b16 %v1806, %v1805
  %v1832 = vpack.c.b16 %v1808, %v1807
  %v1833 = vpack.c.b16 %v1810, %v1809
  %v1834 = vpack.c.b16 %v1812, %v1811
  %v1835 = vpack.c.b16 %v1814, %v1813
  %v1836 = vpack.c.b16 %v1816, %v1815
  %v1837 = vpack.c.b16 %v1818, %v1817
  %v1838 = vpack.c.b16 %v1820, %v1819
  %v1839 = vpack.c.b16 %v1822, %v1821
  %v1840 = vpack.c.b16 %v1824, %v1823
  %1857 = vmatprep.subr.bf16.mxu0 0
  %1858 = vmatpush1.bf16.msra.mxu0 %v1825
  %1859 = vmatprep.subr.bf16.mxu0 0
  %1860 = vmatpush1.bf16.msra.mxu0 %v1826
  %1861 = vmatprep.subr.bf16.mxu0 0
  %1862 = vmatpush1.bf16.msra.mxu0 %v1827
  %1863 = vmatprep.subr.bf16.mxu0 0
  %1864 = vmatpush1.bf16.msra.mxu0 %v1828
  %1865 = vmatprep.subr.bf16.mxu0 0
  %1866 = vmatpush1.bf16.msra.mxu0 %v1829
  %1867 = vmatprep.subr.bf16.mxu0 0
  %1868 = vmatpush1.bf16.msra.mxu0 %v1830
  %1869 = vmatprep.subr.bf16.mxu0 0
  %1870 = vmatpush1.bf16.msra.mxu0 %v1831
  %1871 = vmatprep.subr.bf16.mxu0 0
  %1872 = vmatpush1.bf16.msra.mxu0 %v1832
  %1873 = vmatprep.subr.bf16.mxu0 0
  %1874 = vmatpush1.bf16.msra.mxu0 %v1833
  %1875 = vmatprep.subr.bf16.mxu0 0
  %1876 = vmatpush1.bf16.msra.mxu0 %v1834
  %1877 = vmatprep.subr.bf16.mxu0 0
  %1878 = vmatpush1.bf16.msra.mxu0 %v1835
  %1879 = vmatprep.subr.bf16.mxu0 0
  %1880 = vmatpush1.bf16.msra.mxu0 %v1836
  %1881 = vmatprep.subr.bf16.mxu0 0
  %1882 = vmatpush1.bf16.msra.mxu0 %v1837
  %1883 = vmatprep.subr.bf16.mxu0 0
  %1884 = vmatpush1.bf16.msra.mxu0 %v1838
  %1885 = vmatprep.subr.bf16.mxu0 0
  %1886 = vmatpush1.bf16.msra.mxu0 %v1839
  %1887 = vmatprep.subr.bf16.mxu0 0
  %1888 = vmatpush1.bf16.msra.mxu0 %v1840
  %1889 = vmatprep.mubr.bf16.mxu0 %v1730
  %1890 = vmatmul.mubr.bf16.gmra.mrb[0].mxu0 %v1729
  %v1891 = vpop.f32.mrb[0].mxu0
  %v1892 = vadd.f32 0.0, %v1891
  %v1893 = vpop.f32.mrb[0].mxu0
  %v1894 = vpop.f32.mrb[0].mxu0
  %v1895 = vadd.f32 0.0, %v1894
  %v1896 = vpop.f32.mrb[0].mxu0
  %1897 = vmatprep.mubr.bf16.mxu0 %v1732
  %1898 = vmatmul.mubr.bf16.gmra.mrb[0].mxu0 %v1731
  %v1899 = vpop.f32.mrb[0].mxu0
  %v1900 = vadd.f32 0.0, %v1899
  %v1901 = vpop.f32.mrb[0].mxu0
  %v1902 = vpop.f32.mrb[0].mxu0
  %v1903 = vadd.f32 0.0, %v1902
  %v1904 = vpop.f32.mrb[0].mxu0
  %1905 = vmatprep.mubr.bf16.mxu0 %v1734
  %1906 = vmatmul.mubr.bf16.gmra.mrb[0].mxu0 %v1733
  %v1907 = vpop.f32.mrb[0].mxu0
  %v1908 = vadd.f32 0.0, %v1907
  %v1909 = vpop.f32.mrb[0].mxu0
  %v1910 = vpop.f32.mrb[0].mxu0
  %v1911 = vadd.f32 0.0, %v1910
  %v1912 = vpop.f32.mrb[0].mxu0
  %1913 = vmatprep.mubr.bf16.mxu0 %v1736
  %1914 = vmatmul.mubr.bf16.gmra.mrb[0].mxu0 %v1735
  %v1915 = vpop.f32.mrb[0].mxu0
  %v1916 = vadd.f32 0.0, %v1915
  %v1917 = vpop.f32.mrb[0].mxu0
  %v1918 = vpop.f32.mrb[0].mxu0
  %v1919 = vadd.f32 0.0, %v1918
  %v1920 = vpop.f32.mrb[0].mxu0
  %1921 = vmatprep.mubr.bf16.mxu0 %v1738
  %1922 = vmatmul.mubr.bf16.gmra.mrb[0].mxu0 %v1737
  %v1923 = vpop.f32.mrb[0].mxu0
  %v1924 = vadd.f32 0.0, %v1923
  %v1925 = vpop.f32.mrb[0].mxu0
  %v1926 = vpop.f32.mrb[0].mxu0
  %v1927 = vadd.f32 0.0, %v1926
  %v1928 = vpop.f32.mrb[0].mxu0
  %1929 = vmatprep.mubr.bf16.mxu0 %v1740
  %1930 = vmatmul.mubr.bf16.gmra.mrb[0].mxu0 %v1739
  %v1931 = vpop.f32.mrb[0].mxu0
  %v1932 = vadd.f32 0.0, %v1931
  %v1933 = vpop.f32.mrb[0].mxu0
  %v1934 = vpop.f32.mrb[0].mxu0
  %v1935 = vadd.f32 0.0, %v1934
  %v1936 = vpop.f32.mrb[0].mxu0
  %1937 = vmatprep.mubr.bf16.mxu0 %v1742
  %1938 = vmatmul.mubr.bf16.gmra.mrb[0].mxu0 %v1741
  %v1939 = vpop.f32.mrb[0].mxu0
  %v1940 = vadd.f32 0.0, %v1939
  %v1941 = vpop.f32.mrb[0].mxu0
  %v1942 = vpop.f32.mrb[0].mxu0
  %v1943 = vadd.f32 0.0, %v1942
  %v1944 = vpop.f32.mrb[0].mxu0
  %1945 = vmatprep.mubr.bf16.mxu0 %v1744
  %1946 = vmatmul.mubr.bf16.gmra.mrb[0].mxu0 %v1743
  %v1947 = vpop.f32.mrb[0].mxu0
  %v1948 = vadd.f32 0.0, %v1947
  %v1949 = vpop.f32.mrb[0].mxu0
  %v1950 = vpop.f32.mrb[0].mxu0
  %v1951 = vadd.f32 0.0, %v1950
  %v1952 = vpop.f32.mrb[0].mxu0
  %1953 = vmatprep.mubr.bf16.mxu0 %v1746
  %1954 = vmatmul.mubr.bf16.gmra.mrb[0].mxu0 %v1745
  %v1955 = vpop.f32.mrb[0].mxu0
  %v1956 = vadd.f32 0.0, %v1955
  %v1957 = vpop.f32.mrb[0].mxu0
  %v1958 = vpop.f32.mrb[0].mxu0
  %v1959 = vadd.f32 0.0, %v1958
  %v1960 = vpop.f32.mrb[0].mxu0
  %1961 = vmatprep.mubr.bf16.mxu0 %v1748
  %1962 = vmatmul.mubr.bf16.gmra.mrb[0].mxu0 %v1747
  %v1963 = vpop.f32.mrb[0].mxu0
  %v1964 = vadd.f32 0.0, %v1963
  %v1965 = vpop.f32.mrb[0].mxu0
  %v1966 = vpop.f32.mrb[0].mxu0
  %v1967 = vadd.f32 0.0, %v1966
  %v1968 = vpop.f32.mrb[0].mxu0
  %1969 = vmatprep.mubr.bf16.mxu0 %v1750
  %1970 = vmatmul.mubr.bf16.gmra.mrb[0].mxu0 %v1749
  %v1971 = vpop.f32.mrb[0].mxu0
  %v1972 = vadd.f32 0.0, %v1971
  %v1973 = vpop.f32.mrb[0].mxu0
  %v1974 = vpop.f32.mrb[0].mxu0
  %v1975 = vadd.f32 0.0, %v1974
  %v1976 = vpop.f32.mrb[0].mxu0
  %1977 = vmatprep.mubr.bf16.mxu0 %v1752
  %1978 = vmatmul.mubr.bf16.gmra.mrb[0].mxu0 %v1751
  %v1979 = vpop.f32.mrb[0].mxu0
  %v1980 = vadd.f32 0.0, %v1979
  %v1981 = vpop.f32.mrb[0].mxu0
  %v1982 = vpop.f32.mrb[0].mxu0
  %v1983 = vadd.f32 0.0, %v1982
  %v1984 = vpop.f32.mrb[0].mxu0
  %1985 = vmatprep.mubr.bf16.mxu0 %v1754
  %1986 = vmatmul.mubr.bf16.gmra.mrb[0].mxu0 %v1753
  %v1987 = vpop.f32.mrb[0].mxu0
  %v1988 = vadd.f32 0.0, %v1987
  %v1989 = vpop.f32.mrb[0].mxu0
  %v1990 = vpop.f32.mrb[0].mxu0
  %v1991 = vadd.f32 0.0, %v1990
  %v1992 = vpop.f32.mrb[0].mxu0
  %1993 = vmatprep.mubr.bf16.mxu0 %v1756
  %1994 = vmatmul.mubr.bf16.gmra.mrb[0].mxu0 %v1755
  %v1995 = vpop.f32.mrb[0].mxu0
  %v1996 = vadd.f32 0.0, %v1995
  %v1997 = vpop.f32.mrb[0].mxu0
  %v1998 = vpop.f32.mrb[0].mxu0
  %v1999 = vadd.f32 0.0, %v1998
  %v2000 = vpop.f32.mrb[0].mxu0
  %2001 = vmatprep.mubr.bf16.mxu0 %v1758
  %2002 = vmatmul.mubr.bf16.gmra.mrb[0].mxu0 %v1757
  %v2003 = vpop.f32.mrb[0].mxu0
  %v2004 = vadd.f32 0.0, %v2003
  %v2005 = vpop.f32.mrb[0].mxu0
  %v2006 = vpop.f32.mrb[0].mxu0
  %v2007 = vadd.f32 0.0, %v2006
  %v2008 = vpop.f32.mrb[0].mxu0
  %2009 = vmatprep.mubr.bf16.mxu0 %v1760
  %2010 = vmatmul.mubr.bf16.gmra.mrb[0].mxu0 %v1759
  %v2011 = vpop.f32.mrb[0].mxu0
  %v2012 = vadd.f32 0.0, %v2011
  %v2013 = vpop.f32.mrb[0].mxu0
  %v2014 = vpop.f32.mrb[0].mxu0
  %v2015 = vadd.f32 0.0, %v2014
  %v2016 = vpop.f32.mrb[0].mxu0
  %2017 = vdwg.mxu0
  %s2018 = scalar_lea.vmem %s2, 1
  %v2019 = vld [vmem:[%s2018] ss:$4 sm:$0x3]
  %2020 = vset.pattern.permute.xlu0 1
  %2021 = vperm.xlu0 %2020, %v466
  %v2022 = vpop.permute.xlu0 %2021
  %2024 = vset.pattern.permute.xlu0 1
  %2025 = vperm.xlu0 %2024, %v467
  %v2026 = vpop.permute.xlu0 %2025
  %2028 = vset.pattern.permute.xlu0 1
  %2029 = vperm.xlu0 %2028, %v468
  %v2030 = vpop.permute.xlu0 %2029
  %2032 = vset.pattern.permute.xlu0 1
  %2033 = vperm.xlu0 %2032, %v469
  %v2034 = vpop.permute.xlu0 %2033
  %2036 = vset.pattern.permute.xlu0 1
  %2037 = vperm.xlu0 %2036, %v470
  %v2038 = vpop.permute.xlu0 %2037
  %2040 = vset.pattern.permute.xlu0 1
  %2041 = vperm.xlu0 %2040, %v471
  %v2042 = vpop.permute.xlu0 %2041
  %2044 = vset.pattern.permute.xlu0 1
  %2045 = vperm.xlu0 %2044, %v472
  %v2046 = vpop.permute.xlu0 %2045
  %2048 = vset.pattern.permute.xlu0 1
  %2049 = vperm.xlu0 %2048, %v473
  %v2050 = vpop.permute.xlu0 %2049
  %2052 = vset.pattern.permute.xlu0 1
  %2053 = vperm.xlu0 %2052, %v474
  %v2054 = vpop.permute.xlu0 %2053
  %2056 = vset.pattern.permute.xlu0 1
  %2057 = vperm.xlu0 %2056, %v475
  %v2058 = vpop.permute.xlu0 %2057
  %2060 = vset.pattern.permute.xlu0 1
  %2061 = vperm.xlu0 %2060, %v476
  %v2062 = vpop.permute.xlu0 %2061
  %2064 = vset.pattern.permute.xlu0 1
  %2065 = vperm.xlu0 %2064, %v477
  %v2066 = vpop.permute.xlu0 %2065
  %2068 = vset.pattern.permute.xlu0 1
  %2069 = vperm.xlu0 %2068, %v478
  %v2070 = vpop.permute.xlu0 %2069
  %2072 = vset.pattern.permute.xlu0 1
  %2073 = vperm.xlu0 %2072, %v479
  %v2074 = vpop.permute.xlu0 %2073
  %2076 = vset.pattern.permute.xlu0 1
  %2077 = vperm.xlu0 %2076, %v480
  %v2078 = vpop.permute.xlu0 %2077
  %2080 = vset.pattern.permute.xlu0 1
  %2081 = vperm.xlu0 %2080, %v481
  %v2082 = vpop.permute.xlu0 %2081
  %2084 = vset.pattern.permute.xlu0 1
  %2085 = vperm.xlu0 %2084, %v482
  %v2086 = vpop.permute.xlu0 %2085
  %2088 = vset.pattern.permute.xlu0 1
  %2089 = vperm.xlu0 %2088, %v483
  %v2090 = vpop.permute.xlu0 %2089
  %2092 = vset.pattern.permute.xlu0 1
  %2093 = vperm.xlu0 %2092, %v484
  %v2094 = vpop.permute.xlu0 %2093
  %2096 = vset.pattern.permute.xlu0 1
  %2097 = vperm.xlu0 %2096, %v485
  %v2098 = vpop.permute.xlu0 %2097
  %2100 = vset.pattern.permute.xlu0 1
  %2101 = vperm.xlu0 %2100, %v486
  %v2102 = vpop.permute.xlu0 %2101
  %2104 = vset.pattern.permute.xlu0 1
  %2105 = vperm.xlu0 %2104, %v487
  %v2106 = vpop.permute.xlu0 %2105
  %2108 = vset.pattern.permute.xlu0 1
  %2109 = vperm.xlu0 %2108, %v488
  %v2110 = vpop.permute.xlu0 %2109
  %2112 = vset.pattern.permute.xlu0 1
  %2113 = vperm.xlu0 %2112, %v489
  %v2114 = vpop.permute.xlu0 %2113
  %2116 = vset.pattern.permute.xlu0 1
  %2117 = vperm.xlu0 %2116, %v490
  %v2118 = vpop.permute.xlu0 %2117
  %2120 = vset.pattern.permute.xlu0 1
  %2121 = vperm.xlu0 %2120, %v491
  %v2122 = vpop.permute.xlu0 %2121
  %2124 = vset.pattern.permute.xlu0 1
  %2125 = vperm.xlu0 %2124, %v492
  %v2126 = vpop.permute.xlu0 %2125
  %2128 = vset.pattern.permute.xlu0 1
  %2129 = vperm.xlu0 %2128, %v493
  %v2130 = vpop.permute.xlu0 %2129
  %2132 = vset.pattern.permute.xlu0 1
  %2133 = vperm.xlu0 %2132, %v494
  %v2134 = vpop.permute.xlu0 %2133
  %2136 = vset.pattern.permute.xlu0 1
  %2137 = vperm.xlu0 %2136, %v495
  %v2138 = vpop.permute.xlu0 %2137
  %2140 = vset.pattern.permute.xlu0 1
  %2141 = vperm.xlu0 %2140, %v496
  %v2142 = vpop.permute.xlu0 %2141
  %2144 = vset.pattern.permute.xlu0 1
  %2145 = vperm.xlu0 %2144, %v497
  %v2146 = vpop.permute.xlu0 %2145
  %v2149 = vlaneseq
  %v2150 = vshrl.u32 %v2149, 7
  %v2151 = vsub.s32 0, %v2150
  %v2152 = vrot.slane %v2019, %v2151
  %v2153 = vlaneseq
  %v2154 = vshrl.u32 %v2153, 7
  %v2155 = vsub.s32 1, %v2154
  %v2156 = vrot.slane %v2019, %v2155
  %v2159 = vadd.f32 %v2022, %v2152
  %v2160 = vadd.f32 %v2022, %v2156
  %v2161 = vadd.f32 %v2026, %v2152
  %v2162 = vadd.f32 %v2026, %v2156
  %v2163 = vadd.f32 %v2030, %v2152
  %v2164 = vadd.f32 %v2030, %v2156
  %v2165 = vadd.f32 %v2034, %v2152
  %v2166 = vadd.f32 %v2034, %v2156
  %v2167 = vadd.f32 %v2038, %v2152
  %v2168 = vadd.f32 %v2038, %v2156
  %v2169 = vadd.f32 %v2042, %v2152
  %v2170 = vadd.f32 %v2042, %v2156
  %v2171 = vadd.f32 %v2046, %v2152
  %v2172 = vadd.f32 %v2046, %v2156
  %v2173 = vadd.f32 %v2050, %v2152
  %v2174 = vadd.f32 %v2050, %v2156
  %v2175 = vadd.f32 %v2054, %v2152
  %v2176 = vadd.f32 %v2054, %v2156
  %v2177 = vadd.f32 %v2058, %v2152
  %v2178 = vadd.f32 %v2058, %v2156
  %v2179 = vadd.f32 %v2062, %v2152
  %v2180 = vadd.f32 %v2062, %v2156
  %v2181 = vadd.f32 %v2066, %v2152
  %v2182 = vadd.f32 %v2066, %v2156
  %v2183 = vadd.f32 %v2070, %v2152
  %v2184 = vadd.f32 %v2070, %v2156
  %v2185 = vadd.f32 %v2074, %v2152
  %v2186 = vadd.f32 %v2074, %v2156
  %v2187 = vadd.f32 %v2078, %v2152
  %v2188 = vadd.f32 %v2078, %v2156
  %v2189 = vadd.f32 %v2082, %v2152
  %v2190 = vadd.f32 %v2082, %v2156
  %v2191 = vadd.f32 %v2086, %v2152
  %v2192 = vadd.f32 %v2086, %v2156
  %v2193 = vadd.f32 %v2090, %v2152
  %v2194 = vadd.f32 %v2090, %v2156
  %v2195 = vadd.f32 %v2094, %v2152
  %v2196 = vadd.f32 %v2094, %v2156
  %v2197 = vadd.f32 %v2098, %v2152
  %v2198 = vadd.f32 %v2098, %v2156
  %v2199 = vadd.f32 %v2102, %v2152
  %v2200 = vadd.f32 %v2102, %v2156
  %v2201 = vadd.f32 %v2106, %v2152
  %v2202 = vadd.f32 %v2106, %v2156
  %v2203 = vadd.f32 %v2110, %v2152
  %v2204 = vadd.f32 %v2110, %v2156
  %v2205 = vadd.f32 %v2114, %v2152
  %v2206 = vadd.f32 %v2114, %v2156
  %v2207 = vadd.f32 %v2118, %v2152
  %v2208 = vadd.f32 %v2118, %v2156
  %v2209 = vadd.f32 %v2122, %v2152
  %v2210 = vadd.f32 %v2122, %v2156
  %v2211 = vadd.f32 %v2126, %v2152
  %v2212 = vadd.f32 %v2126, %v2156
  %v2213 = vadd.f32 %v2130, %v2152
  %v2214 = vadd.f32 %v2130, %v2156
  %v2215 = vadd.f32 %v2134, %v2152
  %v2216 = vadd.f32 %v2134, %v2156
  %v2217 = vadd.f32 %v2138, %v2152
  %v2218 = vadd.f32 %v2138, %v2156
  %v2219 = vadd.f32 %v2142, %v2152
  %v2220 = vadd.f32 %v2142, %v2156
  %v2221 = vadd.f32 %v2146, %v2152
  %v2222 = vadd.f32 %v2146, %v2156
  %vm2223 = vcmp.ge.f32.partialorder %v2159, 0.0
  %vm2224 = vcmp.ge.f32.partialorder %v2160, 0.0
  %vm2225 = vcmp.ge.f32.partialorder %v2161, 0.0
  %vm2226 = vcmp.ge.f32.partialorder %v2162, 0.0
  %vm2227 = vcmp.ge.f32.partialorder %v2163, 0.0
  %vm2228 = vcmp.ge.f32.partialorder %v2164, 0.0
  %vm2229 = vcmp.ge.f32.partialorder %v2165, 0.0
  %vm2230 = vcmp.ge.f32.partialorder %v2166, 0.0
  %vm2231 = vcmp.ge.f32.partialorder %v2167, 0.0
  %vm2232 = vcmp.ge.f32.partialorder %v2168, 0.0
  %vm2233 = vcmp.ge.f32.partialorder %v2169, 0.0
  %vm2234 = vcmp.ge.f32.partialorder %v2170, 0.0
  %vm2235 = vcmp.ge.f32.partialorder %v2171, 0.0
  %vm2236 = vcmp.ge.f32.partialorder %v2172, 0.0
  %vm2237 = vcmp.ge.f32.partialorder %v2173, 0.0
  %vm2238 = vcmp.ge.f32.partialorder %v2174, 0.0
  %vm2239 = vcmp.ge.f32.partialorder %v2175, 0.0
  %vm2240 = vcmp.ge.f32.partialorder %v2176, 0.0
  %vm2241 = vcmp.ge.f32.partialorder %v2177, 0.0
  %vm2242 = vcmp.ge.f32.partialorder %v2178, 0.0
  %vm2243 = vcmp.ge.f32.partialorder %v2179, 0.0
  %vm2244 = vcmp.ge.f32.partialorder %v2180, 0.0
  %vm2245 = vcmp.ge.f32.partialorder %v2181, 0.0
  %vm2246 = vcmp.ge.f32.partialorder %v2182, 0.0
  %vm2247 = vcmp.ge.f32.partialorder %v2183, 0.0
  %vm2248 = vcmp.ge.f32.partialorder %v2184, 0.0
  %vm2249 = vcmp.ge.f32.partialorder %v2185, 0.0
  %vm2250 = vcmp.ge.f32.partialorder %v2186, 0.0
  %vm2251 = vcmp.ge.f32.partialorder %v2187, 0.0
  %vm2252 = vcmp.ge.f32.partialorder %v2188, 0.0
  %vm2253 = vcmp.ge.f32.partialorder %v2189, 0.0
  %vm2254 = vcmp.ge.f32.partialorder %v2190, 0.0
  %vm2255 = vcmp.ge.f32.partialorder %v2191, 0.0
  %vm2256 = vcmp.ge.f32.partialorder %v2192, 0.0
  %vm2257 = vcmp.ge.f32.partialorder %v2193, 0.0
  %vm2258 = vcmp.ge.f32.partialorder %v2194, 0.0
  %vm2259 = vcmp.ge.f32.partialorder %v2195, 0.0
  %vm2260 = vcmp.ge.f32.partialorder %v2196, 0.0
  %vm2261 = vcmp.ge.f32.partialorder %v2197, 0.0
  %vm2262 = vcmp.ge.f32.partialorder %v2198, 0.0
  %vm2263 = vcmp.ge.f32.partialorder %v2199, 0.0
  %vm2264 = vcmp.ge.f32.partialorder %v2200, 0.0
  %vm2265 = vcmp.ge.f32.partialorder %v2201, 0.0
  %vm2266 = vcmp.ge.f32.partialorder %v2202, 0.0
  %vm2267 = vcmp.ge.f32.partialorder %v2203, 0.0
  %vm2268 = vcmp.ge.f32.partialorder %v2204, 0.0
  %vm2269 = vcmp.ge.f32.partialorder %v2205, 0.0
  %vm2270 = vcmp.ge.f32.partialorder %v2206, 0.0
  %vm2271 = vcmp.ge.f32.partialorder %v2207, 0.0
  %vm2272 = vcmp.ge.f32.partialorder %v2208, 0.0
  %vm2273 = vcmp.ge.f32.partialorder %v2209, 0.0
  %vm2274 = vcmp.ge.f32.partialorder %v2210, 0.0
  %vm2275 = vcmp.ge.f32.partialorder %v2211, 0.0
  %vm2276 = vcmp.ge.f32.partialorder %v2212, 0.0
  %vm2277 = vcmp.ge.f32.partialorder %v2213, 0.0
  %vm2278 = vcmp.ge.f32.partialorder %v2214, 0.0
  %vm2279 = vcmp.ge.f32.partialorder %v2215, 0.0
  %vm2280 = vcmp.ge.f32.partialorder %v2216, 0.0
  %vm2281 = vcmp.ge.f32.partialorder %v2217, 0.0
  %vm2282 = vcmp.ge.f32.partialorder %v2218, 0.0
  %vm2283 = vcmp.ge.f32.partialorder %v2219, 0.0
  %vm2284 = vcmp.ge.f32.partialorder %v2220, 0.0
  %vm2285 = vcmp.ge.f32.partialorder %v2221, 0.0
  %vm2286 = vcmp.ge.f32.partialorder %v2222, 0.0
  %v2287 = vmul.f32 %v2159, 0.2
  %v2288 = vmul.f32 %v2160, 0.2
  %v2289 = vmul.f32 %v2161, 0.2
  %v2290 = vmul.f32 %v2162, 0.2
  %v2291 = vmul.f32 %v2163, 0.2
  %v2292 = vmul.f32 %v2164, 0.2
  %v2293 = vmul.f32 %v2165, 0.2
  %v2294 = vmul.f32 %v2166, 0.2
  %v2295 = vmul.f32 %v2167, 0.2
  %v2296 = vmul.f32 %v2168, 0.2
  %v2297 = vmul.f32 %v2169, 0.2
  %v2298 = vmul.f32 %v2170, 0.2
  %v2299 = vmul.f32 %v2171, 0.2
  %v2300 = vmul.f32 %v2172, 0.2
  %v2301 = vmul.f32 %v2173, 0.2
  %v2302 = vmul.f32 %v2174, 0.2
  %v2303 = vmul.f32 %v2175, 0.2
  %v2304 = vmul.f32 %v2176, 0.2
  %v2305 = vmul.f32 %v2177, 0.2
  %v2306 = vmul.f32 %v2178, 0.2
  %v2307 = vmul.f32 %v2179, 0.2
  %v2308 = vmul.f32 %v2180, 0.2
  %v2309 = vmul.f32 %v2181, 0.2
  %v2310 = vmul.f32 %v2182, 0.2
  %v2311 = vmul.f32 %v2183, 0.2
  %v2312 = vmul.f32 %v2184, 0.2
  %v2313 = vmul.f32 %v2185, 0.2
  %v2314 = vmul.f32 %v2186, 0.2
  %v2315 = vmul.f32 %v2187, 0.2
  %v2316 = vmul.f32 %v2188, 0.2
  %v2317 = vmul.f32 %v2189, 0.2
  %v2318 = vmul.f32 %v2190, 0.2
  %v2319 = vmul.f32 %v2191, 0.2
  %v2320 = vmul.f32 %v2192, 0.2
  %v2321 = vmul.f32 %v2193, 0.2
  %v2322 = vmul.f32 %v2194, 0.2
  %v2323 = vmul.f32 %v2195, 0.2
  %v2324 = vmul.f32 %v2196, 0.2
  %v2325 = vmul.f32 %v2197, 0.2
  %v2326 = vmul.f32 %v2198, 0.2
  %v2327 = vmul.f32 %v2199, 0.2
  %v2328 = vmul.f32 %v2200, 0.2
  %v2329 = vmul.f32 %v2201, 0.2
  %v2330 = vmul.f32 %v2202, 0.2
  %v2331 = vmul.f32 %v2203, 0.2
  %v2332 = vmul.f32 %v2204, 0.2
  %v2333 = vmul.f32 %v2205, 0.2
  %v2334 = vmul.f32 %v2206, 0.2
  %v2335 = vmul.f32 %v2207, 0.2
  %v2336 = vmul.f32 %v2208, 0.2
  %v2337 = vmul.f32 %v2209, 0.2
  %v2338 = vmul.f32 %v2210, 0.2
  %v2339 = vmul.f32 %v2211, 0.2
  %v2340 = vmul.f32 %v2212, 0.2
  %v2341 = vmul.f32 %v2213, 0.2
  %v2342 = vmul.f32 %v2214, 0.2
  %v2343 = vmul.f32 %v2215, 0.2
  %v2344 = vmul.f32 %v2216, 0.2
  %v2345 = vmul.f32 %v2217, 0.2
  %v2346 = vmul.f32 %v2218, 0.2
  %v2347 = vmul.f32 %v2219, 0.2
  %v2348 = vmul.f32 %v2220, 0.2
  %v2349 = vmul.f32 %v2221, 0.2
  %v2350 = vmul.f32 %v2222, 0.2
  %v2351 = vsel %vm2223, %v2159, %v2287
  %v2352 = vsel %vm2224, %v2160, %v2288
  %v2353 = vsel %vm2225, %v2161, %v2289
  %v2354 = vsel %vm2226, %v2162, %v2290
  %v2355 = vsel %vm2227, %v2163, %v2291
  %v2356 = vsel %vm2228, %v2164, %v2292
  %v2357 = vsel %vm2229, %v2165, %v2293
  %v2358 = vsel %vm2230, %v2166, %v2294
  %v2359 = vsel %vm2231, %v2167, %v2295
  %v2360 = vsel %vm2232, %v2168, %v2296
  %v2361 = vsel %vm2233, %v2169, %v2297
  %v2362 = vsel %vm2234, %v2170, %v2298
  %v2363 = vsel %vm2235, %v2171, %v2299
  %v2364 = vsel %vm2236, %v2172, %v2300
  %v2365 = vsel %vm2237, %v2173, %v2301
  %v2366 = vsel %vm2238, %v2174, %v2302
  %v2367 = vsel %vm2239, %v2175, %v2303
  %v2368 = vsel %vm2240, %v2176, %v2304
  %v2369 = vsel %vm2241, %v2177, %v2305
  %v2370 = vsel %vm2242, %v2178, %v2306
  %v2371 = vsel %vm2243, %v2179, %v2307
  %v2372 = vsel %vm2244, %v2180, %v2308
  %v2373 = vsel %vm2245, %v2181, %v2309
  %v2374 = vsel %vm2246, %v2182, %v2310
  %v2375 = vsel %vm2247, %v2183, %v2311
  %v2376 = vsel %vm2248, %v2184, %v2312
  %v2377 = vsel %vm2249, %v2185, %v2313
  %v2378 = vsel %vm2250, %v2186, %v2314
  %v2379 = vsel %vm2251, %v2187, %v2315
  %v2380 = vsel %vm2252, %v2188, %v2316
  %v2381 = vsel %vm2253, %v2189, %v2317
  %v2382 = vsel %vm2254, %v2190, %v2318
  %v2383 = vsel %vm2255, %v2191, %v2319
  %v2384 = vsel %vm2256, %v2192, %v2320
  %v2385 = vsel %vm2257, %v2193, %v2321
  %v2386 = vsel %vm2258, %v2194, %v2322
  %v2387 = vsel %vm2259, %v2195, %v2323
  %v2388 = vsel %vm2260, %v2196, %v2324
  %v2389 = vsel %vm2261, %v2197, %v2325
  %v2390 = vsel %vm2262, %v2198, %v2326
  %v2391 = vsel %vm2263, %v2199, %v2327
  %v2392 = vsel %vm2264, %v2200, %v2328
  %v2393 = vsel %vm2265, %v2201, %v2329
  %v2394 = vsel %vm2266, %v2202, %v2330
  %v2395 = vsel %vm2267, %v2203, %v2331
  %v2396 = vsel %vm2268, %v2204, %v2332
  %v2397 = vsel %vm2269, %v2205, %v2333
  %v2398 = vsel %vm2270, %v2206, %v2334
  %v2399 = vsel %vm2271, %v2207, %v2335
  %v2400 = vsel %vm2272, %v2208, %v2336
  %v2401 = vsel %vm2273, %v2209, %v2337
  %v2402 = vsel %vm2274, %v2210, %v2338
  %v2403 = vsel %vm2275, %v2211, %v2339
  %v2404 = vsel %vm2276, %v2212, %v2340
  %v2405 = vsel %vm2277, %v2213, %v2341
  %v2406 = vsel %vm2278, %v2214, %v2342
  %v2407 = vsel %vm2279, %v2215, %v2343
  %v2408 = vsel %vm2280, %v2216, %v2344
  %v2409 = vsel %vm2281, %v2217, %v2345
  %v2410 = vsel %vm2282, %v2218, %v2346
  %v2411 = vsel %vm2283, %v2219, %v2347
  %v2412 = vsel %vm2284, %v2220, %v2348
  %v2413 = vsel %vm2285, %v2221, %v2349
  %v2414 = vsel %vm2286, %v2222, %v2350
  %v2415 = vmul.f32 %v2351, %v160
  %v2416 = vmul.f32 %v2352, %v161
  %v2417 = vmul.f32 %v2353, %v162
  %v2418 = vmul.f32 %v2354, %v163
  %v2419 = vmul.f32 %v2355, %v164
  %v2420 = vmul.f32 %v2356, %v165
  %v2421 = vmul.f32 %v2357, %v166
  %v2422 = vmul.f32 %v2358, %v167
  %v2423 = vmul.f32 %v2359, %v168
  %v2424 = vmul.f32 %v2360, %v169
  %v2425 = vmul.f32 %v2361, %v170
  %v2426 = vmul.f32 %v2362, %v171
  %v2427 = vmul.f32 %v2363, %v172
  %v2428 = vmul.f32 %v2364, %v173
  %v2429 = vmul.f32 %v2365, %v174
  %v2430 = vmul.f32 %v2366, %v175
  %v2431 = vmul.f32 %v2367, %v176
  %v2432 = vmul.f32 %v2368, %v177
  %v2433 = vmul.f32 %v2369, %v178
  %v2434 = vmul.f32 %v2370, %v179
  %v2435 = vmul.f32 %v2371, %v180
  %v2436 = vmul.f32 %v2372, %v181
  %v2437 = vmul.f32 %v2373, %v182
  %v2438 = vmul.f32 %v2374, %v183
  %v2439 = vmul.f32 %v2375, %v184
  %v2440 = vmul.f32 %v2376, %v185
  %v2441 = vmul.f32 %v2377, %v186
  %v2442 = vmul.f32 %v2378, %v187
  %v2443 = vmul.f32 %v2379, %v188
  %v2444 = vmul.f32 %v2380, %v189
  %v2445 = vmul.f32 %v2381, %v190
  %v2446 = vmul.f32 %v2382, %v191
  %v2447 = vmul.f32 %v2383, %v192
  %v2448 = vmul.f32 %v2384, %v193
  %v2449 = vmul.f32 %v2385, %v194
  %v2450 = vmul.f32 %v2386, %v195
  %v2451 = vmul.f32 %v2387, %v196
  %v2452 = vmul.f32 %v2388, %v197
  %v2453 = vmul.f32 %v2389, %v198
  %v2454 = vmul.f32 %v2390, %v199
  %v2455 = vmul.f32 %v2391, %v200
  %v2456 = vmul.f32 %v2392, %v201
  %v2457 = vmul.f32 %v2393, %v202
  %v2458 = vmul.f32 %v2394, %v203
  %v2459 = vmul.f32 %v2395, %v204
  %v2460 = vmul.f32 %v2396, %v205
  %v2461 = vmul.f32 %v2397, %v206
  %v2462 = vmul.f32 %v2398, %v207
  %v2463 = vmul.f32 %v2399, %v208
  %v2464 = vmul.f32 %v2400, %v209
  %v2465 = vmul.f32 %v2401, %v210
  %v2466 = vmul.f32 %v2402, %v211
  %v2467 = vmul.f32 %v2403, %v212
  %v2468 = vmul.f32 %v2404, %v213
  %v2469 = vmul.f32 %v2405, %v214
  %v2470 = vmul.f32 %v2406, %v215
  %v2471 = vmul.f32 %v2407, %v216
  %v2472 = vmul.f32 %v2408, %v217
  %v2473 = vmul.f32 %v2409, %v218
  %v2474 = vmul.f32 %v2410, %v219
  %v2475 = vmul.f32 %v2411, %v220
  %v2476 = vmul.f32 %v2412, %v221
  %v2477 = vmul.f32 %v2413, %v222
  %v2478 = vmul.f32 %v2414, %v223
  %v2479 = vsel %vm368, %v2415, -1e+30
  %v2480 = vsel %vm369, %v2416, -1e+30
  %v2481 = vsel %vm370, %v2417, -1e+30
  %v2482 = vsel %vm371, %v2418, -1e+30
  %v2483 = vsel %vm372, %v2419, -1e+30
  %v2484 = vsel %vm373, %v2420, -1e+30
  %v2485 = vsel %vm374, %v2421, -1e+30
  %v2486 = vsel %vm375, %v2422, -1e+30
  %v2487 = vsel %vm376, %v2423, -1e+30
  %v2488 = vsel %vm377, %v2424, -1e+30
  %v2489 = vsel %vm378, %v2425, -1e+30
  %v2490 = vsel %vm379, %v2426, -1e+30
  %v2491 = vsel %vm380, %v2427, -1e+30
  %v2492 = vsel %vm381, %v2428, -1e+30
  %v2493 = vsel %vm382, %v2429, -1e+30
  %v2494 = vsel %vm383, %v2430, -1e+30
  %v2495 = vsel %vm384, %v2431, -1e+30
  %v2496 = vsel %vm385, %v2432, -1e+30
  %v2497 = vsel %vm386, %v2433, -1e+30
  %v2498 = vsel %vm387, %v2434, -1e+30
  %v2499 = vsel %vm388, %v2435, -1e+30
  %v2500 = vsel %vm389, %v2436, -1e+30
  %v2501 = vsel %vm390, %v2437, -1e+30
  %v2502 = vsel %vm391, %v2438, -1e+30
  %v2503 = vsel %vm392, %v2439, -1e+30
  %v2504 = vsel %vm393, %v2440, -1e+30
  %v2505 = vsel %vm394, %v2441, -1e+30
  %v2506 = vsel %vm395, %v2442, -1e+30
  %v2507 = vsel %vm396, %v2443, -1e+30
  %v2508 = vsel %vm397, %v2444, -1e+30
  %v2509 = vsel %vm398, %v2445, -1e+30
  %v2510 = vsel %vm399, %v2446, -1e+30
  %v2511 = vsel %vm400, %v2447, -1e+30
  %v2512 = vsel %vm401, %v2448, -1e+30
  %v2513 = vsel %vm402, %v2449, -1e+30
  %v2514 = vsel %vm403, %v2450, -1e+30
  %v2515 = vsel %vm404, %v2451, -1e+30
  %v2516 = vsel %vm405, %v2452, -1e+30
  %v2517 = vsel %vm406, %v2453, -1e+30
  %v2518 = vsel %vm407, %v2454, -1e+30
  %v2519 = vsel %vm408, %v2455, -1e+30
  %v2520 = vsel %vm409, %v2456, -1e+30
  %v2521 = vsel %vm410, %v2457, -1e+30
  %v2522 = vsel %vm411, %v2458, -1e+30
  %v2523 = vsel %vm412, %v2459, -1e+30
  %v2524 = vsel %vm413, %v2460, -1e+30
  %v2525 = vsel %vm414, %v2461, -1e+30
  %v2526 = vsel %vm415, %v2462, -1e+30
  %v2527 = vsel %vm416, %v2463, -1e+30
  %v2528 = vsel %vm417, %v2464, -1e+30
  %v2529 = vsel %vm418, %v2465, -1e+30
  %v2530 = vsel %vm419, %v2466, -1e+30
  %v2531 = vsel %vm420, %v2467, -1e+30
  %v2532 = vsel %vm421, %v2468, -1e+30
  %v2533 = vsel %vm422, %v2469, -1e+30
  %v2534 = vsel %vm423, %v2470, -1e+30
  %v2535 = vsel %vm424, %v2471, -1e+30
  %v2536 = vsel %vm425, %v2472, -1e+30
  %v2537 = vsel %vm426, %v2473, -1e+30
  %v2538 = vsel %vm427, %v2474, -1e+30
  %v2539 = vsel %vm428, %v2475, -1e+30
  %v2540 = vsel %vm429, %v2476, -1e+30
  %v2541 = vsel %vm430, %v2477, -1e+30
  %v2542 = vsel %vm431, %v2478, -1e+30
  %v2543 = vmax.f32 %v2479, %v2480
  %2544 = vmax.xlane.f32.xlu0 %v2543
  %v2545 = vpop.xlane.xlu0 %2544
  %v2546 = vmax.f32 %v2481, %v2482
  %2547 = vmax.xlane.f32.xlu0 %v2546
  %v2548 = vpop.xlane.xlu0 %2547
  %v2549 = vmax.f32 %v2483, %v2484
  %2550 = vmax.xlane.f32.xlu0 %v2549
  %v2551 = vpop.xlane.xlu0 %2550
  %v2552 = vmax.f32 %v2485, %v2486
  %2553 = vmax.xlane.f32.xlu0 %v2552
  %v2554 = vpop.xlane.xlu0 %2553
  %v2555 = vmax.f32 %v2487, %v2488
  %2556 = vmax.xlane.f32.xlu0 %v2555
  %v2557 = vpop.xlane.xlu0 %2556
  %v2558 = vmax.f32 %v2489, %v2490
  %2559 = vmax.xlane.f32.xlu0 %v2558
  %v2560 = vpop.xlane.xlu0 %2559
  %v2561 = vmax.f32 %v2491, %v2492
  %2562 = vmax.xlane.f32.xlu0 %v2561
  %v2563 = vpop.xlane.xlu0 %2562
  %v2564 = vmax.f32 %v2493, %v2494
  %2565 = vmax.xlane.f32.xlu0 %v2564
  %v2566 = vpop.xlane.xlu0 %2565
  %v2567 = vmax.f32 %v2495, %v2496
  %2568 = vmax.xlane.f32.xlu0 %v2567
  %v2569 = vpop.xlane.xlu0 %2568
  %v2570 = vmax.f32 %v2497, %v2498
  %2571 = vmax.xlane.f32.xlu0 %v2570
  %v2572 = vpop.xlane.xlu0 %2571
  %v2573 = vmax.f32 %v2499, %v2500
  %2574 = vmax.xlane.f32.xlu0 %v2573
  %v2575 = vpop.xlane.xlu0 %2574
  %v2576 = vmax.f32 %v2501, %v2502
  %2577 = vmax.xlane.f32.xlu0 %v2576
  %v2578 = vpop.xlane.xlu0 %2577
  %v2579 = vmax.f32 %v2503, %v2504
  %2580 = vmax.xlane.f32.xlu0 %v2579
  %v2581 = vpop.xlane.xlu0 %2580
  %v2582 = vmax.f32 %v2505, %v2506
  %2583 = vmax.xlane.f32.xlu0 %v2582
  %v2584 = vpop.xlane.xlu0 %2583
  %v2585 = vmax.f32 %v2507, %v2508
  %2586 = vmax.xlane.f32.xlu0 %v2585
  %v2587 = vpop.xlane.xlu0 %2586
  %v2588 = vmax.f32 %v2509, %v2510
  %2589 = vmax.xlane.f32.xlu0 %v2588
  %v2590 = vpop.xlane.xlu0 %2589
  %v2591 = vmax.f32 %v2511, %v2512
  %2592 = vmax.xlane.f32.xlu0 %v2591
  %v2593 = vpop.xlane.xlu0 %2592
  %v2594 = vmax.f32 %v2513, %v2514
  %2595 = vmax.xlane.f32.xlu0 %v2594
  %v2596 = vpop.xlane.xlu0 %2595
  %v2597 = vmax.f32 %v2515, %v2516
  %2598 = vmax.xlane.f32.xlu0 %v2597
  %v2599 = vpop.xlane.xlu0 %2598
  %v2600 = vmax.f32 %v2517, %v2518
  %2601 = vmax.xlane.f32.xlu0 %v2600
  %v2602 = vpop.xlane.xlu0 %2601
  %v2603 = vmax.f32 %v2519, %v2520
  %2604 = vmax.xlane.f32.xlu0 %v2603
  %v2605 = vpop.xlane.xlu0 %2604
  %v2606 = vmax.f32 %v2521, %v2522
  %2607 = vmax.xlane.f32.xlu0 %v2606
  %v2608 = vpop.xlane.xlu0 %2607
  %v2609 = vmax.f32 %v2523, %v2524
  %2610 = vmax.xlane.f32.xlu0 %v2609
  %v2611 = vpop.xlane.xlu0 %2610
  %v2612 = vmax.f32 %v2525, %v2526
  %2613 = vmax.xlane.f32.xlu0 %v2612
  %v2614 = vpop.xlane.xlu0 %2613
  %v2615 = vmax.f32 %v2527, %v2528
  %2616 = vmax.xlane.f32.xlu0 %v2615
  %v2617 = vpop.xlane.xlu0 %2616
  %v2618 = vmax.f32 %v2529, %v2530
  %2619 = vmax.xlane.f32.xlu0 %v2618
  %v2620 = vpop.xlane.xlu0 %2619
  %v2621 = vmax.f32 %v2531, %v2532
  %2622 = vmax.xlane.f32.xlu0 %v2621
  %v2623 = vpop.xlane.xlu0 %2622
  %v2624 = vmax.f32 %v2533, %v2534
  %2625 = vmax.xlane.f32.xlu0 %v2624
  %v2626 = vpop.xlane.xlu0 %2625
  %v2627 = vmax.f32 %v2535, %v2536
  %2628 = vmax.xlane.f32.xlu0 %v2627
  %v2629 = vpop.xlane.xlu0 %2628
  %v2630 = vmax.f32 %v2537, %v2538
  %2631 = vmax.xlane.f32.xlu0 %v2630
  %v2632 = vpop.xlane.xlu0 %2631
  %v2633 = vmax.f32 %v2539, %v2540
  %2634 = vmax.xlane.f32.xlu0 %v2633
  %v2635 = vpop.xlane.xlu0 %2634
  %v2636 = vmax.f32 %v2541, %v2542
  %2637 = vmax.xlane.f32.xlu0 %v2636
  %v2638 = vpop.xlane.xlu0 %2637
  %v2639 = vmax.f32 %v432, %v2545
  %v2640 = vmax.f32 %v433, %v2548
  %v2641 = vmax.f32 %v434, %v2551
  %v2642 = vmax.f32 %v435, %v2554
  %v2643 = vmax.f32 %v436, %v2557
  %v2644 = vmax.f32 %v437, %v2560
  %v2645 = vmax.f32 %v438, %v2563
  %v2646 = vmax.f32 %v439, %v2566
  %v2647 = vmax.f32 %v440, %v2569
  %v2648 = vmax.f32 %v441, %v2572
  %v2649 = vmax.f32 %v442, %v2575
  %v2650 = vmax.f32 %v443, %v2578
  %v2651 = vmax.f32 %v444, %v2581
  %v2652 = vmax.f32 %v445, %v2584
  %v2653 = vmax.f32 %v446, %v2587
  %v2654 = vmax.f32 %v447, %v2590
  %v2655 = vmax.f32 %v448, %v2593
  %v2656 = vmax.f32 %v449, %v2596
  %v2657 = vmax.f32 %v450, %v2599
  %v2658 = vmax.f32 %v451, %v2602
  %v2659 = vmax.f32 %v452, %v2605
  %v2660 = vmax.f32 %v453, %v2608
  %v2661 = vmax.f32 %v454, %v2611
  %v2662 = vmax.f32 %v455, %v2614
  %v2663 = vmax.f32 %v456, %v2617
  %v2664 = vmax.f32 %v457, %v2620
  %v2665 = vmax.f32 %v458, %v2623
  %v2666 = vmax.f32 %v459, %v2626
  %v2667 = vmax.f32 %v460, %v2629
  %v2668 = vmax.f32 %v461, %v2632
  %v2669 = vmax.f32 %v462, %v2635
  %v2670 = vmax.f32 %v463, %v2638
  %2672 = vset.pattern.permute.xlu0 1
  %2673 = vperm.xlu0 %2672, %v2639
  %v2674 = vpop.permute.xlu0 %2673
  %2677 = vset.pattern.permute.xlu0 1
  %2678 = vperm.xlu0 %2677, %v2640
  %v2679 = vpop.permute.xlu0 %2678
  %2682 = vset.pattern.permute.xlu0 1
  %2683 = vperm.xlu0 %2682, %v2641
  %v2684 = vpop.permute.xlu0 %2683
  %2687 = vset.pattern.permute.xlu0 1
  %2688 = vperm.xlu0 %2687, %v2642
  %v2689 = vpop.permute.xlu0 %2688
  %2692 = vset.pattern.permute.xlu0 1
  %2693 = vperm.xlu0 %2692, %v2643
  %v2694 = vpop.permute.xlu0 %2693
  %2697 = vset.pattern.permute.xlu0 1
  %2698 = vperm.xlu0 %2697, %v2644
  %v2699 = vpop.permute.xlu0 %2698
  %2702 = vset.pattern.permute.xlu0 1
  %2703 = vperm.xlu0 %2702, %v2645
  %v2704 = vpop.permute.xlu0 %2703
  %2707 = vset.pattern.permute.xlu0 1
  %2708 = vperm.xlu0 %2707, %v2646
  %v2709 = vpop.permute.xlu0 %2708
  %2712 = vset.pattern.permute.xlu0 1
  %2713 = vperm.xlu0 %2712, %v2647
  %v2714 = vpop.permute.xlu0 %2713
  %2717 = vset.pattern.permute.xlu0 1
  %2718 = vperm.xlu0 %2717, %v2648
  %v2719 = vpop.permute.xlu0 %2718
  %2722 = vset.pattern.permute.xlu0 1
  %2723 = vperm.xlu0 %2722, %v2649
  %v2724 = vpop.permute.xlu0 %2723
  %2727 = vset.pattern.permute.xlu0 1
  %2728 = vperm.xlu0 %2727, %v2650
  %v2729 = vpop.permute.xlu0 %2728
  %2732 = vset.pattern.permute.xlu0 1
  %2733 = vperm.xlu0 %2732, %v2651
  %v2734 = vpop.permute.xlu0 %2733
  %2737 = vset.pattern.permute.xlu0 1
  %2738 = vperm.xlu0 %2737, %v2652
  %v2739 = vpop.permute.xlu0 %2738
  %2742 = vset.pattern.permute.xlu0 1
  %2743 = vperm.xlu0 %2742, %v2653
  %v2744 = vpop.permute.xlu0 %2743
  %2747 = vset.pattern.permute.xlu0 1
  %2748 = vperm.xlu0 %2747, %v2654
  %v2749 = vpop.permute.xlu0 %2748
  %2752 = vset.pattern.permute.xlu0 1
  %2753 = vperm.xlu0 %2752, %v2655
  %v2754 = vpop.permute.xlu0 %2753
  %2757 = vset.pattern.permute.xlu0 1
  %2758 = vperm.xlu0 %2757, %v2656
  %v2759 = vpop.permute.xlu0 %2758
  %2762 = vset.pattern.permute.xlu0 1
  %2763 = vperm.xlu0 %2762, %v2657
  %v2764 = vpop.permute.xlu0 %2763
  %2767 = vset.pattern.permute.xlu0 1
  %2768 = vperm.xlu0 %2767, %v2658
  %v2769 = vpop.permute.xlu0 %2768
  %2772 = vset.pattern.permute.xlu0 1
  %2773 = vperm.xlu0 %2772, %v2659
  %v2774 = vpop.permute.xlu0 %2773
  %2777 = vset.pattern.permute.xlu0 1
  %2778 = vperm.xlu0 %2777, %v2660
  %v2779 = vpop.permute.xlu0 %2778
  %2782 = vset.pattern.permute.xlu0 1
  %2783 = vperm.xlu0 %2782, %v2661
  %v2784 = vpop.permute.xlu0 %2783
  %2787 = vset.pattern.permute.xlu0 1
  %2788 = vperm.xlu0 %2787, %v2662
  %v2789 = vpop.permute.xlu0 %2788
  %2792 = vset.pattern.permute.xlu0 1
  %2793 = vperm.xlu0 %2792, %v2663
  %v2794 = vpop.permute.xlu0 %2793
  %2797 = vset.pattern.permute.xlu0 1
  %2798 = vperm.xlu0 %2797, %v2664
  %v2799 = vpop.permute.xlu0 %2798
  %2802 = vset.pattern.permute.xlu0 1
  %2803 = vperm.xlu0 %2802, %v2665
  %v2804 = vpop.permute.xlu0 %2803
  %2807 = vset.pattern.permute.xlu0 1
  %2808 = vperm.xlu0 %2807, %v2666
  %v2809 = vpop.permute.xlu0 %2808
  %2812 = vset.pattern.permute.xlu0 1
  %2813 = vperm.xlu0 %2812, %v2667
  %v2814 = vpop.permute.xlu0 %2813
  %2817 = vset.pattern.permute.xlu0 1
  %2818 = vperm.xlu0 %2817, %v2668
  %v2819 = vpop.permute.xlu0 %2818
  %2822 = vset.pattern.permute.xlu0 1
  %2823 = vperm.xlu0 %2822, %v2669
  %v2824 = vpop.permute.xlu0 %2823
  %2827 = vset.pattern.permute.xlu0 1
  %2828 = vperm.xlu0 %2827, %v2670
  %v2829 = vpop.permute.xlu0 %2828
  %v2831 = vsub.f32 %v2479, %v2674
  %v2832 = vsub.f32 %v2480, %v2674
  %v2833 = vsub.f32 %v2481, %v2679
  %v2834 = vsub.f32 %v2482, %v2679
  %v2835 = vsub.f32 %v2483, %v2684
  %v2836 = vsub.f32 %v2484, %v2684
  %v2837 = vsub.f32 %v2485, %v2689
  %v2838 = vsub.f32 %v2486, %v2689
  %v2839 = vsub.f32 %v2487, %v2694
  %v2840 = vsub.f32 %v2488, %v2694
  %v2841 = vsub.f32 %v2489, %v2699
  %v2842 = vsub.f32 %v2490, %v2699
  %v2843 = vsub.f32 %v2491, %v2704
  %v2844 = vsub.f32 %v2492, %v2704
  %v2845 = vsub.f32 %v2493, %v2709
  %v2846 = vsub.f32 %v2494, %v2709
  %v2847 = vsub.f32 %v2495, %v2714
  %v2848 = vsub.f32 %v2496, %v2714
  %v2849 = vsub.f32 %v2497, %v2719
  %v2850 = vsub.f32 %v2498, %v2719
  %v2851 = vsub.f32 %v2499, %v2724
  %v2852 = vsub.f32 %v2500, %v2724
  %v2853 = vsub.f32 %v2501, %v2729
  %v2854 = vsub.f32 %v2502, %v2729
  %v2855 = vsub.f32 %v2503, %v2734
  %v2856 = vsub.f32 %v2504, %v2734
  %v2857 = vsub.f32 %v2505, %v2739
  %v2858 = vsub.f32 %v2506, %v2739
  %v2859 = vsub.f32 %v2507, %v2744
  %v2860 = vsub.f32 %v2508, %v2744
  %v2861 = vsub.f32 %v2509, %v2749
  %v2862 = vsub.f32 %v2510, %v2749
  %v2863 = vsub.f32 %v2511, %v2754
  %v2864 = vsub.f32 %v2512, %v2754
  %v2865 = vsub.f32 %v2513, %v2759
  %v2866 = vsub.f32 %v2514, %v2759
  %v2867 = vsub.f32 %v2515, %v2764
  %v2868 = vsub.f32 %v2516, %v2764
  %v2869 = vsub.f32 %v2517, %v2769
  %v2870 = vsub.f32 %v2518, %v2769
  %v2871 = vsub.f32 %v2519, %v2774
  %v2872 = vsub.f32 %v2520, %v2774
  %v2873 = vsub.f32 %v2521, %v2779
  %v2874 = vsub.f32 %v2522, %v2779
  %v2875 = vsub.f32 %v2523, %v2784
  %v2876 = vsub.f32 %v2524, %v2784
  %v2877 = vsub.f32 %v2525, %v2789
  %v2878 = vsub.f32 %v2526, %v2789
  %v2879 = vsub.f32 %v2527, %v2794
  %v2880 = vsub.f32 %v2528, %v2794
  %v2881 = vsub.f32 %v2529, %v2799
  %v2882 = vsub.f32 %v2530, %v2799
  %v2883 = vsub.f32 %v2531, %v2804
  %v2884 = vsub.f32 %v2532, %v2804
  %v2885 = vsub.f32 %v2533, %v2809
  %v2886 = vsub.f32 %v2534, %v2809
  %v2887 = vsub.f32 %v2535, %v2814
  %v2888 = vsub.f32 %v2536, %v2814
  %v2889 = vsub.f32 %v2537, %v2819
  %v2890 = vsub.f32 %v2538, %v2819
  %v2891 = vsub.f32 %v2539, %v2824
  %v2892 = vsub.f32 %v2540, %v2824
  %v2893 = vsub.f32 %v2541, %v2829
  %v2894 = vsub.f32 %v2542, %v2829
  %v2895 = vmul.f32 %v2831, 1.442695
  %v2896 = vpow.pop %v2895
  %v2897 = vmul.f32 %v2832, 1.442695
  %v2898 = vpow.pop %v2897
  %v2899 = vmul.f32 %v2833, 1.442695
  %v2900 = vpow.pop %v2899
  %v2901 = vmul.f32 %v2834, 1.442695
  %v2902 = vpow.pop %v2901
  %v2903 = vmul.f32 %v2835, 1.442695
  %v2904 = vpow.pop %v2903
  %v2905 = vmul.f32 %v2836, 1.442695
  %v2906 = vpow.pop %v2905
  %v2907 = vmul.f32 %v2837, 1.442695
  %v2908 = vpow.pop %v2907
  %v2909 = vmul.f32 %v2838, 1.442695
  %v2910 = vpow.pop %v2909
  %v2911 = vmul.f32 %v2839, 1.442695
  %v2912 = vpow.pop %v2911
  %v2913 = vmul.f32 %v2840, 1.442695
  %v2914 = vpow.pop %v2913
  %v2915 = vmul.f32 %v2841, 1.442695
  %v2916 = vpow.pop %v2915
  %v2917 = vmul.f32 %v2842, 1.442695
  %v2918 = vpow.pop %v2917
  %v2919 = vmul.f32 %v2843, 1.442695
  %v2920 = vpow.pop %v2919
  %v2921 = vmul.f32 %v2844, 1.442695
  %v2922 = vpow.pop %v2921
  %v2923 = vmul.f32 %v2845, 1.442695
  %v2924 = vpow.pop %v2923
  %v2925 = vmul.f32 %v2846, 1.442695
  %v2926 = vpow.pop %v2925
  %v2927 = vmul.f32 %v2847, 1.442695
  %v2928 = vpow.pop %v2927
  %v2929 = vmul.f32 %v2848, 1.442695
  %v2930 = vpow.pop %v2929
  %v2931 = vmul.f32 %v2849, 1.442695
  %v2932 = vpow.pop %v2931
  %v2933 = vmul.f32 %v2850, 1.442695
  %v2934 = vpow.pop %v2933
  %v2935 = vmul.f32 %v2851, 1.442695
  %v2936 = vpow.pop %v2935
  %v2937 = vmul.f32 %v2852, 1.442695
  %v2938 = vpow.pop %v2937
  %v2939 = vmul.f32 %v2853, 1.442695
  %v2940 = vpow.pop %v2939
  %v2941 = vmul.f32 %v2854, 1.442695
  %v2942 = vpow.pop %v2941
  %v2943 = vmul.f32 %v2855, 1.442695
  %v2944 = vpow.pop %v2943
  %v2945 = vmul.f32 %v2856, 1.442695
  %v2946 = vpow.pop %v2945
  %v2947 = vmul.f32 %v2857, 1.442695
  %v2948 = vpow.pop %v2947
  %v2949 = vmul.f32 %v2858, 1.442695
  %v2950 = vpow.pop %v2949
  %v2951 = vmul.f32 %v2859, 1.442695
  %v2952 = vpow.pop %v2951
  %v2953 = vmul.f32 %v2860, 1.442695
  %v2954 = vpow.pop %v2953
  %v2955 = vmul.f32 %v2861, 1.442695
  %v2956 = vpow.pop %v2955
  %v2957 = vmul.f32 %v2862, 1.442695
  %v2958 = vpow.pop %v2957
  %v2959 = vmul.f32 %v2863, 1.442695
  %v2960 = vpow.pop %v2959
  %v2961 = vmul.f32 %v2864, 1.442695
  %v2962 = vpow.pop %v2961
  %v2963 = vmul.f32 %v2865, 1.442695
  %v2964 = vpow.pop %v2963
  %v2965 = vmul.f32 %v2866, 1.442695
  %v2966 = vpow.pop %v2965
  %v2967 = vmul.f32 %v2867, 1.442695
  %v2968 = vpow.pop %v2967
  %v2969 = vmul.f32 %v2868, 1.442695
  %v2970 = vpow.pop %v2969
  %v2971 = vmul.f32 %v2869, 1.442695
  %v2972 = vpow.pop %v2971
  %v2973 = vmul.f32 %v2870, 1.442695
  %v2974 = vpow.pop %v2973
  %v2975 = vmul.f32 %v2871, 1.442695
  %v2976 = vpow.pop %v2975
  %v2977 = vmul.f32 %v2872, 1.442695
  %v2978 = vpow.pop %v2977
  %v2979 = vmul.f32 %v2873, 1.442695
  %v2980 = vpow.pop %v2979
  %v2981 = vmul.f32 %v2874, 1.442695
  %v2982 = vpow.pop %v2981
  %v2983 = vmul.f32 %v2875, 1.442695
  %v2984 = vpow.pop %v2983
  %v2985 = vmul.f32 %v2876, 1.442695
  %v2986 = vpow.pop %v2985
  %v2987 = vmul.f32 %v2877, 1.442695
  %v2988 = vpow.pop %v2987
  %v2989 = vmul.f32 %v2878, 1.442695
  %v2990 = vpow.pop %v2989
  %v2991 = vmul.f32 %v2879, 1.442695
  %v2992 = vpow.pop %v2991
  %v2993 = vmul.f32 %v2880, 1.442695
  %v2994 = vpow.pop %v2993
  %v2995 = vmul.f32 %v2881, 1.442695
  %v2996 = vpow.pop %v2995
  %v2997 = vmul.f32 %v2882, 1.442695
  %v2998 = vpow.pop %v2997
  %v2999 = vmul.f32 %v2883, 1.442695
  %v3000 = vpow.pop %v2999
  %v3001 = vmul.f32 %v2884, 1.442695
  %v3002 = vpow.pop %v3001
  %v3003 = vmul.f32 %v2885, 1.442695
  %v3004 = vpow.pop %v3003
  %v3005 = vmul.f32 %v2886, 1.442695
  %v3006 = vpow.pop %v3005
  %v3007 = vmul.f32 %v2887, 1.442695
  %v3008 = vpow.pop %v3007
  %v3009 = vmul.f32 %v2888, 1.442695
  %v3010 = vpow.pop %v3009
  %v3011 = vmul.f32 %v2889, 1.442695
  %v3012 = vpow.pop %v3011
  %v3013 = vmul.f32 %v2890, 1.442695
  %v3014 = vpow.pop %v3013
  %v3015 = vmul.f32 %v2891, 1.442695
  %v3016 = vpow.pop %v3015
  %v3017 = vmul.f32 %v2892, 1.442695
  %v3018 = vpow.pop %v3017
  %v3019 = vmul.f32 %v2893, 1.442695
  %v3020 = vpow.pop %v3019
  %v3021 = vmul.f32 %v2894, 1.442695
  %v3022 = vpow.pop %v3021
  %v3023 = vmul.f32 %v2896, %v304
  %v3024 = vmul.f32 %v2898, %v305
  %v3025 = vmul.f32 %v2900, %v306
  %v3026 = vmul.f32 %v2902, %v307
  %v3027 = vmul.f32 %v2904, %v308
  %v3028 = vmul.f32 %v2906, %v309
  %v3029 = vmul.f32 %v2908, %v310
  %v3030 = vmul.f32 %v2910, %v311
  %v3031 = vmul.f32 %v2912, %v312
  %v3032 = vmul.f32 %v2914, %v313
  %v3033 = vmul.f32 %v2916, %v314
  %v3034 = vmul.f32 %v2918, %v315
  %v3035 = vmul.f32 %v2920, %v316
  %v3036 = vmul.f32 %v2922, %v317
  %v3037 = vmul.f32 %v2924, %v318
  %v3038 = vmul.f32 %v2926, %v319
  %v3039 = vmul.f32 %v2928, %v320
  %v3040 = vmul.f32 %v2930, %v321
  %v3041 = vmul.f32 %v2932, %v322
  %v3042 = vmul.f32 %v2934, %v323
  %v3043 = vmul.f32 %v2936, %v324
  %v3044 = vmul.f32 %v2938, %v325
  %v3045 = vmul.f32 %v2940, %v326
  %v3046 = vmul.f32 %v2942, %v327
  %v3047 = vmul.f32 %v2944, %v328
  %v3048 = vmul.f32 %v2946, %v329
  %v3049 = vmul.f32 %v2948, %v330
  %v3050 = vmul.f32 %v2950, %v331
  %v3051 = vmul.f32 %v2952, %v332
  %v3052 = vmul.f32 %v2954, %v333
  %v3053 = vmul.f32 %v2956, %v334
  %v3054 = vmul.f32 %v2958, %v335
  %v3055 = vmul.f32 %v2960, %v336
  %v3056 = vmul.f32 %v2962, %v337
  %v3057 = vmul.f32 %v2964, %v338
  %v3058 = vmul.f32 %v2966, %v339
  %v3059 = vmul.f32 %v2968, %v340
  %v3060 = vmul.f32 %v2970, %v341
  %v3061 = vmul.f32 %v2972, %v342
  %v3062 = vmul.f32 %v2974, %v343
  %v3063 = vmul.f32 %v2976, %v344
  %v3064 = vmul.f32 %v2978, %v345
  %v3065 = vmul.f32 %v2980, %v346
  %v3066 = vmul.f32 %v2982, %v347
  %v3067 = vmul.f32 %v2984, %v348
  %v3068 = vmul.f32 %v2986, %v349
  %v3069 = vmul.f32 %v2988, %v350
  %v3070 = vmul.f32 %v2990, %v351
  %v3071 = vmul.f32 %v2992, %v352
  %v3072 = vmul.f32 %v2994, %v353
  %v3073 = vmul.f32 %v2996, %v354
  %v3074 = vmul.f32 %v2998, %v355
  %v3075 = vmul.f32 %v3000, %v356
  %v3076 = vmul.f32 %v3002, %v357
  %v3077 = vmul.f32 %v3004, %v358
  %v3078 = vmul.f32 %v3006, %v359
  %v3079 = vmul.f32 %v3008, %v360
  %v3080 = vmul.f32 %v3010, %v361
  %v3081 = vmul.f32 %v3012, %v362
  %v3082 = vmul.f32 %v3014, %v363
  %v3083 = vmul.f32 %v3016, %v364
  %v3084 = vmul.f32 %v3018, %v365
  %v3085 = vmul.f32 %v3020, %v366
  %v3086 = vmul.f32 %v3022, %v367
  %v3087 = vadd.f32 %v3023, %v3024
  %3088 = vadd.xlane.f32.xlu0 %v3087
  %v3089 = vpop.xlane.xlu0 %3088
  %v3090 = vadd.f32 %v3025, %v3026
  %3091 = vadd.xlane.f32.xlu0 %v3090
  %v3092 = vpop.xlane.xlu0 %3091
  %v3093 = vadd.f32 %v3027, %v3028
  %3094 = vadd.xlane.f32.xlu0 %v3093
  %v3095 = vpop.xlane.xlu0 %3094
  %v3096 = vadd.f32 %v3029, %v3030
  %3097 = vadd.xlane.f32.xlu0 %v3096
  %v3098 = vpop.xlane.xlu0 %3097
  %v3099 = vadd.f32 %v3031, %v3032
  %3100 = vadd.xlane.f32.xlu0 %v3099
  %v3101 = vpop.xlane.xlu0 %3100
  %v3102 = vadd.f32 %v3033, %v3034
  %3103 = vadd.xlane.f32.xlu0 %v3102
  %v3104 = vpop.xlane.xlu0 %3103
  %v3105 = vadd.f32 %v3035, %v3036
  %3106 = vadd.xlane.f32.xlu0 %v3105
  %v3107 = vpop.xlane.xlu0 %3106
  %v3108 = vadd.f32 %v3037, %v3038
  %3109 = vadd.xlane.f32.xlu0 %v3108
  %v3110 = vpop.xlane.xlu0 %3109
  %v3111 = vadd.f32 %v3039, %v3040
  %3112 = vadd.xlane.f32.xlu0 %v3111
  %v3113 = vpop.xlane.xlu0 %3112
  %v3114 = vadd.f32 %v3041, %v3042
  %3115 = vadd.xlane.f32.xlu0 %v3114
  %v3116 = vpop.xlane.xlu0 %3115
  %v3117 = vadd.f32 %v3043, %v3044
  %3118 = vadd.xlane.f32.xlu0 %v3117
  %v3119 = vpop.xlane.xlu0 %3118
  %v3120 = vadd.f32 %v3045, %v3046
  %3121 = vadd.xlane.f32.xlu0 %v3120
  %v3122 = vpop.xlane.xlu0 %3121
  %v3123 = vadd.f32 %v3047, %v3048
  %3124 = vadd.xlane.f32.xlu0 %v3123
  %v3125 = vpop.xlane.xlu0 %3124
  %v3126 = vadd.f32 %v3049, %v3050
  %3127 = vadd.xlane.f32.xlu0 %v3126
  %v3128 = vpop.xlane.xlu0 %3127
  %v3129 = vadd.f32 %v3051, %v3052
  %3130 = vadd.xlane.f32.xlu0 %v3129
  %v3131 = vpop.xlane.xlu0 %3130
  %v3132 = vadd.f32 %v3053, %v3054
  %3133 = vadd.xlane.f32.xlu0 %v3132
  %v3134 = vpop.xlane.xlu0 %3133
  %v3135 = vadd.f32 %v3055, %v3056
  %3136 = vadd.xlane.f32.xlu0 %v3135
  %v3137 = vpop.xlane.xlu0 %3136
  %v3138 = vadd.f32 %v3057, %v3058
  %3139 = vadd.xlane.f32.xlu0 %v3138
  %v3140 = vpop.xlane.xlu0 %3139
  %v3141 = vadd.f32 %v3059, %v3060
  %3142 = vadd.xlane.f32.xlu0 %v3141
  %v3143 = vpop.xlane.xlu0 %3142
  %v3144 = vadd.f32 %v3061, %v3062
  %3145 = vadd.xlane.f32.xlu0 %v3144
  %v3146 = vpop.xlane.xlu0 %3145
  %v3147 = vadd.f32 %v3063, %v3064
  %3148 = vadd.xlane.f32.xlu0 %v3147
  %v3149 = vpop.xlane.xlu0 %3148
  %v3150 = vadd.f32 %v3065, %v3066
  %3151 = vadd.xlane.f32.xlu0 %v3150
  %v3152 = vpop.xlane.xlu0 %3151
  %v3153 = vadd.f32 %v3067, %v3068
  %3154 = vadd.xlane.f32.xlu0 %v3153
  %v3155 = vpop.xlane.xlu0 %3154
  %v3156 = vadd.f32 %v3069, %v3070
  %3157 = vadd.xlane.f32.xlu0 %v3156
  %v3158 = vpop.xlane.xlu0 %3157
  %v3159 = vadd.f32 %v3071, %v3072
  %3160 = vadd.xlane.f32.xlu0 %v3159
  %v3161 = vpop.xlane.xlu0 %3160
  %v3162 = vadd.f32 %v3073, %v3074
  %3163 = vadd.xlane.f32.xlu0 %v3162
  %v3164 = vpop.xlane.xlu0 %3163
  %v3165 = vadd.f32 %v3075, %v3076
  %3166 = vadd.xlane.f32.xlu0 %v3165
  %v3167 = vpop.xlane.xlu0 %3166
  %v3168 = vadd.f32 %v3077, %v3078
  %3169 = vadd.xlane.f32.xlu0 %v3168
  %v3170 = vpop.xlane.xlu0 %3169
  %v3171 = vadd.f32 %v3079, %v3080
  %3172 = vadd.xlane.f32.xlu0 %v3171
  %v3173 = vpop.xlane.xlu0 %3172
  %v3174 = vadd.f32 %v3081, %v3082
  %3175 = vadd.xlane.f32.xlu0 %v3174
  %v3176 = vpop.xlane.xlu0 %3175
  %v3177 = vadd.f32 %v3083, %v3084
  %3178 = vadd.xlane.f32.xlu0 %v3177
  %v3179 = vpop.xlane.xlu0 %3178
  %v3180 = vadd.f32 %v3085, %v3086
  %3181 = vadd.xlane.f32.xlu0 %v3180
  %v3182 = vpop.xlane.xlu0 %3181
  %v3183 = vpack.c.bf16 %v3025, %v3023
  %v3184 = vpack.c.bf16 %v3026, %v3024
  %v3185 = vpack.c.bf16 %v3029, %v3027
  %v3186 = vpack.c.bf16 %v3030, %v3028
  %v3187 = vpack.c.bf16 %v3033, %v3031
  %v3188 = vpack.c.bf16 %v3034, %v3032
  %v3189 = vpack.c.bf16 %v3037, %v3035
  %v3190 = vpack.c.bf16 %v3038, %v3036
  %v3191 = vpack.c.bf16 %v3041, %v3039
  %v3192 = vpack.c.bf16 %v3042, %v3040
  %v3193 = vpack.c.bf16 %v3045, %v3043
  %v3194 = vpack.c.bf16 %v3046, %v3044
  %v3195 = vpack.c.bf16 %v3049, %v3047
  %v3196 = vpack.c.bf16 %v3050, %v3048
  %v3197 = vpack.c.bf16 %v3053, %v3051
  %v3198 = vpack.c.bf16 %v3054, %v3052
  %v3199 = vpack.c.bf16 %v3057, %v3055
  %v3200 = vpack.c.bf16 %v3058, %v3056
  %v3201 = vpack.c.bf16 %v3061, %v3059
  %v3202 = vpack.c.bf16 %v3062, %v3060
  %v3203 = vpack.c.bf16 %v3065, %v3063
  %v3204 = vpack.c.bf16 %v3066, %v3064
  %v3205 = vpack.c.bf16 %v3069, %v3067
  %v3206 = vpack.c.bf16 %v3070, %v3068
  %v3207 = vpack.c.bf16 %v3073, %v3071
  %v3208 = vpack.c.bf16 %v3074, %v3072
  %v3209 = vpack.c.bf16 %v3077, %v3075
  %v3210 = vpack.c.bf16 %v3078, %v3076
  %v3211 = vpack.c.bf16 %v3081, %v3079
  %v3212 = vpack.c.bf16 %v3082, %v3080
  %v3213 = vpack.c.bf16 %v3085, %v3083
  %v3214 = vpack.c.bf16 %v3086, %v3084
  %3215 = vrot.lane.b32.xlu0 %v1825, 96
  %v3216 = vpop.permute.xlu0 %3215
  %3217 = vrot.lane.b32.xlu0 %v1826, 96
  %v3218 = vpop.permute.xlu0 %3217
  %3219 = vrot.lane.b32.xlu0 %v1827, 96
  %v3220 = vpop.permute.xlu0 %3219
  %3221 = vrot.lane.b32.xlu0 %v1828, 96
  %v3222 = vpop.permute.xlu0 %3221
  %3223 = vrot.lane.b32.xlu0 %v1829, 96
  %v3224 = vpop.permute.xlu0 %3223
  %3225 = vrot.lane.b32.xlu0 %v1830, 96
  %v3226 = vpop.permute.xlu0 %3225
  %3227 = vrot.lane.b32.xlu0 %v1831, 96
  %v3228 = vpop.permute.xlu0 %3227
  %3229 = vrot.lane.b32.xlu0 %v1832, 96
  %v3230 = vpop.permute.xlu0 %3229
  %3231 = vrot.lane.b32.xlu0 %v1833, 96
  %v3232 = vpop.permute.xlu0 %3231
  %3233 = vrot.lane.b32.xlu0 %v1834, 96
  %v3234 = vpop.permute.xlu0 %3233
  %3235 = vrot.lane.b32.xlu0 %v1835, 96
  %v3236 = vpop.permute.xlu0 %3235
  %3237 = vrot.lane.b32.xlu0 %v1836, 96
  %v3238 = vpop.permute.xlu0 %3237
  %3239 = vrot.lane.b32.xlu0 %v1837, 96
  %v3240 = vpop.permute.xlu0 %3239
  %3241 = vrot.lane.b32.xlu0 %v1838, 96
  %v3242 = vpop.permute.xlu0 %3241
  %3243 = vrot.lane.b32.xlu0 %v1839, 96
  %v3244 = vpop.permute.xlu0 %3243
  %3245 = vrot.lane.b32.xlu0 %v1840, 96
  %v3246 = vpop.permute.xlu0 %3245
  %3263 = vmatprep.subr.bf16.mxu0 0
  %3264 = vmatpush1.bf16.msra.mxu0 %v3216
  %3265 = vmatprep.subr.bf16.mxu0 0
  %3266 = vmatpush1.bf16.msra.mxu0 %v3218
  %3267 = vmatprep.subr.bf16.mxu0 0
  %3268 = vmatpush1.bf16.msra.mxu0 %v3220
  %3269 = vmatprep.subr.bf16.mxu0 0
  %3270 = vmatpush1.bf16.msra.mxu0 %v3222
  %3271 = vmatprep.subr.bf16.mxu0 0
  %3272 = vmatpush1.bf16.msra.mxu0 %v3224
  %3273 = vmatprep.subr.bf16.mxu0 0
  %3274 = vmatpush1.bf16.msra.mxu0 %v3226
  %3275 = vmatprep.subr.bf16.mxu0 0
  %3276 = vmatpush1.bf16.msra.mxu0 %v3228
  %3277 = vmatprep.subr.bf16.mxu0 0
  %3278 = vmatpush1.bf16.msra.mxu0 %v3230
  %3279 = vmatprep.subr.bf16.mxu0 0
  %3280 = vmatpush1.bf16.msra.mxu0 %v3232
  %3281 = vmatprep.subr.bf16.mxu0 0
  %3282 = vmatpush1.bf16.msra.mxu0 %v3234
  %3283 = vmatprep.subr.bf16.mxu0 0
  %3284 = vmatpush1.bf16.msra.mxu0 %v3236
  %3285 = vmatprep.subr.bf16.mxu0 0
  %3286 = vmatpush1.bf16.msra.mxu0 %v3238
  %3287 = vmatprep.subr.bf16.mxu0 0
  %3288 = vmatpush1.bf16.msra.mxu0 %v3240
  %3289 = vmatprep.subr.bf16.mxu0 0
  %3290 = vmatpush1.bf16.msra.mxu0 %v3242
  %3291 = vmatprep.subr.bf16.mxu0 0
  %3292 = vmatpush1.bf16.msra.mxu0 %v3244
  %3293 = vmatprep.subr.bf16.mxu0 0
  %3294 = vmatpush1.bf16.msra.mxu0 %v3246
  %3295 = vmatprep.mubr.bf16.mxu0 %v3184
  %3296 = vmatmul.mubr.bf16.gmra.mrb[0].mxu0 %v3183
  %v3297 = vpop.f32.mrb[0].mxu0
  %v3298 = vadd.f32 0.0, %v3297
  %v3299 = vpop.f32.mrb[0].mxu0
  %v3300 = vpop.f32.mrb[0].mxu0
  %v3301 = vadd.f32 0.0, %v3300
  %v3302 = vpop.f32.mrb[0].mxu0
  %3303 = vmatprep.mubr.bf16.mxu0 %v3186
  %3304 = vmatmul.mubr.bf16.gmra.mrb[0].mxu0 %v3185
  %v3305 = vpop.f32.mrb[0].mxu0
  %v3306 = vadd.f32 0.0, %v3305
  %v3307 = vpop.f32.mrb[0].mxu0
  %v3308 = vpop.f32.mrb[0].mxu0
  %v3309 = vadd.f32 0.0, %v3308
  %v3310 = vpop.f32.mrb[0].mxu0
  %3311 = vmatprep.mubr.bf16.mxu0 %v3188
  %3312 = vmatmul.mubr.bf16.gmra.mrb[0].mxu0 %v3187
  %v3313 = vpop.f32.mrb[0].mxu0
  %v3314 = vadd.f32 0.0, %v3313
  %v3315 = vpop.f32.mrb[0].mxu0
  %v3316 = vpop.f32.mrb[0].mxu0
  %v3317 = vadd.f32 0.0, %v3316
  %v3318 = vpop.f32.mrb[0].mxu0
  %3319 = vmatprep.mubr.bf16.mxu0 %v3190
  %3320 = vmatmul.mubr.bf16.gmra.mrb[0].mxu0 %v3189
  %v3321 = vpop.f32.mrb[0].mxu0
  %v3322 = vadd.f32 0.0, %v3321
  %v3323 = vpop.f32.mrb[0].mxu0
  %v3324 = vpop.f32.mrb[0].mxu0
  %v3325 = vadd.f32 0.0, %v3324
  %v3326 = vpop.f32.mrb[0].mxu0
  %3327 = vmatprep.mubr.bf16.mxu0 %v3192
  %3328 = vmatmul.mubr.bf16.gmra.mrb[0].mxu0 %v3191
  %v3329 = vpop.f32.mrb[0].mxu0
  %v3330 = vadd.f32 0.0, %v3329
  %v3331 = vpop.f32.mrb[0].mxu0
  %v3332 = vpop.f32.mrb[0].mxu0
  %v3333 = vadd.f32 0.0, %v3332
  %v3334 = vpop.f32.mrb[0].mxu0
  %3335 = vmatprep.mubr.bf16.mxu0 %v3194
  %3336 = vmatmul.mubr.bf16.gmra.mrb[0].mxu0 %v3193
  %v3337 = vpop.f32.mrb[0].mxu0
  %v3338 = vadd.f32 0.0, %v3337
  %v3339 = vpop.f32.mrb[0].mxu0
  %v3340 = vpop.f32.mrb[0].mxu0
  %v3341 = vadd.f32 0.0, %v3340
  %v3342 = vpop.f32.mrb[0].mxu0
  %3343 = vmatprep.mubr.bf16.mxu0 %v3196
  %3344 = vmatmul.mubr.bf16.gmra.mrb[0].mxu0 %v3195
  %v3345 = vpop.f32.mrb[0].mxu0
  %v3346 = vadd.f32 0.0, %v3345
  %v3347 = vpop.f32.mrb[0].mxu0
  %v3348 = vpop.f32.mrb[0].mxu0
  %v3349 = vadd.f32 0.0, %v3348
  %v3350 = vpop.f32.mrb[0].mxu0
  %3351 = vmatprep.mubr.bf16.mxu0 %v3198
  %3352 = vmatmul.mubr.bf16.gmra.mrb[0].mxu0 %v3197
  %v3353 = vpop.f32.mrb[0].mxu0
  %v3354 = vadd.f32 0.0, %v3353
  %v3355 = vpop.f32.mrb[0].mxu0
  %v3356 = vpop.f32.mrb[0].mxu0
  %v3357 = vadd.f32 0.0, %v3356
  %v3358 = vpop.f32.mrb[0].mxu0
  %3359 = vmatprep.mubr.bf16.mxu0 %v3200
  %3360 = vmatmul.mubr.bf16.gmra.mrb[0].mxu0 %v3199
  %v3361 = vpop.f32.mrb[0].mxu0
  %v3362 = vadd.f32 0.0, %v3361
  %v3363 = vpop.f32.mrb[0].mxu0
  %v3364 = vpop.f32.mrb[0].mxu0
  %v3365 = vadd.f32 0.0, %v3364
  %v3366 = vpop.f32.mrb[0].mxu0
  %3367 = vmatprep.mubr.bf16.mxu0 %v3202
  %3368 = vmatmul.mubr.bf16.gmra.mrb[0].mxu0 %v3201
  %v3369 = vpop.f32.mrb[0].mxu0
  %v3370 = vadd.f32 0.0, %v3369
  %v3371 = vpop.f32.mrb[0].mxu0
  %v3372 = vpop.f32.mrb[0].mxu0
  %v3373 = vadd.f32 0.0, %v3372
  %v3374 = vpop.f32.mrb[0].mxu0
  %3375 = vmatprep.mubr.bf16.mxu0 %v3204
  %3376 = vmatmul.mubr.bf16.gmra.mrb[0].mxu0 %v3203
  %v3377 = vpop.f32.mrb[0].mxu0
  %v3378 = vadd.f32 0.0, %v3377
  %v3379 = vpop.f32.mrb[0].mxu0
  %v3380 = vpop.f32.mrb[0].mxu0
  %v3381 = vadd.f32 0.0, %v3380
  %v3382 = vpop.f32.mrb[0].mxu0
  %3383 = vmatprep.mubr.bf16.mxu0 %v3206
  %3384 = vmatmul.mubr.bf16.gmra.mrb[0].mxu0 %v3205
  %v3385 = vpop.f32.mrb[0].mxu0
  %v3386 = vadd.f32 0.0, %v3385
  %v3387 = vpop.f32.mrb[0].mxu0
  %v3388 = vpop.f32.mrb[0].mxu0
  %v3389 = vadd.f32 0.0, %v3388
  %v3390 = vpop.f32.mrb[0].mxu0
  %3391 = vmatprep.mubr.bf16.mxu0 %v3208
  %3392 = vmatmul.mubr.bf16.gmra.mrb[0].mxu0 %v3207
  %v3393 = vpop.f32.mrb[0].mxu0
  %v3394 = vadd.f32 0.0, %v3393
  %v3395 = vpop.f32.mrb[0].mxu0
  %v3396 = vpop.f32.mrb[0].mxu0
  %v3397 = vadd.f32 0.0, %v3396
  %v3398 = vpop.f32.mrb[0].mxu0
  %3399 = vmatprep.mubr.bf16.mxu0 %v3210
  %3400 = vmatmul.mubr.bf16.gmra.mrb[0].mxu0 %v3209
  %v3401 = vpop.f32.mrb[0].mxu0
  %v3402 = vadd.f32 0.0, %v3401
  %v3403 = vpop.f32.mrb[0].mxu0
  %v3404 = vpop.f32.mrb[0].mxu0
  %v3405 = vadd.f32 0.0, %v3404
  %v3406 = vpop.f32.mrb[0].mxu0
  %3407 = vmatprep.mubr.bf16.mxu0 %v3212
  %3408 = vmatmul.mubr.bf16.gmra.mrb[0].mxu0 %v3211
  %v3409 = vpop.f32.mrb[0].mxu0
  %v3410 = vadd.f32 0.0, %v3409
  %v3411 = vpop.f32.mrb[0].mxu0
  %v3412 = vpop.f32.mrb[0].mxu0
  %v3413 = vadd.f32 0.0, %v3412
  %v3414 = vpop.f32.mrb[0].mxu0
  %3415 = vmatprep.mubr.bf16.mxu0 %v3214
  %3416 = vmatmul.mubr.bf16.gmra.mrb[0].mxu0 %v3213
  %v3417 = vpop.f32.mrb[0].mxu0
  %v3418 = vadd.f32 0.0, %v3417
  %v3419 = vpop.f32.mrb[0].mxu0
  %v3420 = vpop.f32.mrb[0].mxu0
  %v3421 = vadd.f32 0.0, %v3420
  %v3422 = vpop.f32.mrb[0].mxu0
  %3423 = vdwg.mxu0
  %s3424 = scalar_lea.vmem %s2, 2
  %v3425 = vld [vmem:[%s3424] ss:$4 sm:$0x3]
  %3426 = vset.pattern.permute.xlu0 2
  %3427 = vperm.xlu0 %3426, %v466
  %v3428 = vpop.permute.xlu0 %3427
  %3430 = vset.pattern.permute.xlu0 2
  %3431 = vperm.xlu0 %3430, %v467
  %v3432 = vpop.permute.xlu0 %3431
  %3434 = vset.pattern.permute.xlu0 2
  %3435 = vperm.xlu0 %3434, %v468
  %v3436 = vpop.permute.xlu0 %3435
  %3438 = vset.pattern.permute.xlu0 2
  %3439 = vperm.xlu0 %3438, %v469
  %v3440 = vpop.permute.xlu0 %3439
  %3442 = vset.pattern.permute.xlu0 2
  %3443 = vperm.xlu0 %3442, %v470
  %v3444 = vpop.permute.xlu0 %3443
  %3446 = vset.pattern.permute.xlu0 2
  %3447 = vperm.xlu0 %3446, %v471
  %v3448 = vpop.permute.xlu0 %3447
  %3450 = vset.pattern.permute.xlu0 2
  %3451 = vperm.xlu0 %3450, %v472
  %v3452 = vpop.permute.xlu0 %3451
  %3454 = vset.pattern.permute.xlu0 2
  %3455 = vperm.xlu0 %3454, %v473
  %v3456 = vpop.permute.xlu0 %3455
  %3458 = vset.pattern.permute.xlu0 2
  %3459 = vperm.xlu0 %3458, %v474
  %v3460 = vpop.permute.xlu0 %3459
  %3462 = vset.pattern.permute.xlu0 2
  %3463 = vperm.xlu0 %3462, %v475
  %v3464 = vpop.permute.xlu0 %3463
  %3466 = vset.pattern.permute.xlu0 2
  %3467 = vperm.xlu0 %3466, %v476
  %v3468 = vpop.permute.xlu0 %3467
  %3470 = vset.pattern.permute.xlu0 2
  %3471 = vperm.xlu0 %3470, %v477
  %v3472 = vpop.permute.xlu0 %3471
  %3474 = vset.pattern.permute.xlu0 2
  %3475 = vperm.xlu0 %3474, %v478
  %v3476 = vpop.permute.xlu0 %3475
  %3478 = vset.pattern.permute.xlu0 2
  %3479 = vperm.xlu0 %3478, %v479
  %v3480 = vpop.permute.xlu0 %3479
  %3482 = vset.pattern.permute.xlu0 2
  %3483 = vperm.xlu0 %3482, %v480
  %v3484 = vpop.permute.xlu0 %3483
  %3486 = vset.pattern.permute.xlu0 2
  %3487 = vperm.xlu0 %3486, %v481
  %v3488 = vpop.permute.xlu0 %3487
  %3490 = vset.pattern.permute.xlu0 2
  %3491 = vperm.xlu0 %3490, %v482
  %v3492 = vpop.permute.xlu0 %3491
  %3494 = vset.pattern.permute.xlu0 2
  %3495 = vperm.xlu0 %3494, %v483
  %v3496 = vpop.permute.xlu0 %3495
  %3498 = vset.pattern.permute.xlu0 2
  %3499 = vperm.xlu0 %3498, %v484
  %v3500 = vpop.permute.xlu0 %3499
  %3502 = vset.pattern.permute.xlu0 2
  %3503 = vperm.xlu0 %3502, %v485
  %v3504 = vpop.permute.xlu0 %3503
  %3506 = vset.pattern.permute.xlu0 2
  %3507 = vperm.xlu0 %3506, %v486
  %v3508 = vpop.permute.xlu0 %3507
  %3510 = vset.pattern.permute.xlu0 2
  %3511 = vperm.xlu0 %3510, %v487
  %v3512 = vpop.permute.xlu0 %3511
  %3514 = vset.pattern.permute.xlu0 2
  %3515 = vperm.xlu0 %3514, %v488
  %v3516 = vpop.permute.xlu0 %3515
  %3518 = vset.pattern.permute.xlu0 2
  %3519 = vperm.xlu0 %3518, %v489
  %v3520 = vpop.permute.xlu0 %3519
  %3522 = vset.pattern.permute.xlu0 2
  %3523 = vperm.xlu0 %3522, %v490
  %v3524 = vpop.permute.xlu0 %3523
  %3526 = vset.pattern.permute.xlu0 2
  %3527 = vperm.xlu0 %3526, %v491
  %v3528 = vpop.permute.xlu0 %3527
  %3530 = vset.pattern.permute.xlu0 2
  %3531 = vperm.xlu0 %3530, %v492
  %v3532 = vpop.permute.xlu0 %3531
  %3534 = vset.pattern.permute.xlu0 2
  %3535 = vperm.xlu0 %3534, %v493
  %v3536 = vpop.permute.xlu0 %3535
  %3538 = vset.pattern.permute.xlu0 2
  %3539 = vperm.xlu0 %3538, %v494
  %v3540 = vpop.permute.xlu0 %3539
  %3542 = vset.pattern.permute.xlu0 2
  %3543 = vperm.xlu0 %3542, %v495
  %v3544 = vpop.permute.xlu0 %3543
  %3546 = vset.pattern.permute.xlu0 2
  %3547 = vperm.xlu0 %3546, %v496
  %v3548 = vpop.permute.xlu0 %3547
  %3550 = vset.pattern.permute.xlu0 2
  %3551 = vperm.xlu0 %3550, %v497
  %v3552 = vpop.permute.xlu0 %3551
  %v3555 = vlaneseq
  %v3556 = vshrl.u32 %v3555, 7
  %v3557 = vsub.s32 0, %v3556
  %v3558 = vrot.slane %v3425, %v3557
  %v3559 = vlaneseq
  %v3560 = vshrl.u32 %v3559, 7
  %v3561 = vsub.s32 1, %v3560
  %v3562 = vrot.slane %v3425, %v3561
  %v3565 = vadd.f32 %v3428, %v3558
  %v3566 = vadd.f32 %v3428, %v3562
  %v3567 = vadd.f32 %v3432, %v3558
  %v3568 = vadd.f32 %v3432, %v3562
  %v3569 = vadd.f32 %v3436, %v3558
  %v3570 = vadd.f32 %v3436, %v3562
  %v3571 = vadd.f32 %v3440, %v3558
  %v3572 = vadd.f32 %v3440, %v3562
  %v3573 = vadd.f32 %v3444, %v3558
  %v3574 = vadd.f32 %v3444, %v3562
  %v3575 = vadd.f32 %v3448, %v3558
  %v3576 = vadd.f32 %v3448, %v3562
  %v3577 = vadd.f32 %v3452, %v3558
  %v3578 = vadd.f32 %v3452, %v3562
  %v3579 = vadd.f32 %v3456, %v3558
  %v3580 = vadd.f32 %v3456, %v3562
  %v3581 = vadd.f32 %v3460, %v3558
  %v3582 = vadd.f32 %v3460, %v3562
  %v3583 = vadd.f32 %v3464, %v3558
  %v3584 = vadd.f32 %v3464, %v3562
  %v3585 = vadd.f32 %v3468, %v3558
  %v3586 = vadd.f32 %v3468, %v3562
  %v3587 = vadd.f32 %v3472, %v3558
  %v3588 = vadd.f32 %v3472, %v3562
  %v3589 = vadd.f32 %v3476, %v3558
  %v3590 = vadd.f32 %v3476, %v3562
  %v3591 = vadd.f32 %v3480, %v3558
  %v3592 = vadd.f32 %v3480, %v3562
  %v3593 = vadd.f32 %v3484, %v3558
  %v3594 = vadd.f32 %v3484, %v3562
  %v3595 = vadd.f32 %v3488, %v3558
  %v3596 = vadd.f32 %v3488, %v3562
  %v3597 = vadd.f32 %v3492, %v3558
  %v3598 = vadd.f32 %v3492, %v3562
  %v3599 = vadd.f32 %v3496, %v3558
  %v3600 = vadd.f32 %v3496, %v3562
  %v3601 = vadd.f32 %v3500, %v3558
  %v3602 = vadd.f32 %v3500, %v3562
  %v3603 = vadd.f32 %v3504, %v3558
  %v3604 = vadd.f32 %v3504, %v3562
  %v3605 = vadd.f32 %v3508, %v3558
  %v3606 = vadd.f32 %v3508, %v3562
  %v3607 = vadd.f32 %v3512, %v3558
  %v3608 = vadd.f32 %v3512, %v3562
  %v3609 = vadd.f32 %v3516, %v3558
  %v3610 = vadd.f32 %v3516, %v3562
  %v3611 = vadd.f32 %v3520, %v3558
  %v3612 = vadd.f32 %v3520, %v3562
  %v3613 = vadd.f32 %v3524, %v3558
  %v3614 = vadd.f32 %v3524, %v3562
  %v3615 = vadd.f32 %v3528, %v3558
  %v3616 = vadd.f32 %v3528, %v3562
  %v3617 = vadd.f32 %v3532, %v3558
  %v3618 = vadd.f32 %v3532, %v3562
  %v3619 = vadd.f32 %v3536, %v3558
  %v3620 = vadd.f32 %v3536, %v3562
  %v3621 = vadd.f32 %v3540, %v3558
  %v3622 = vadd.f32 %v3540, %v3562
  %v3623 = vadd.f32 %v3544, %v3558
  %v3624 = vadd.f32 %v3544, %v3562
  %v3625 = vadd.f32 %v3548, %v3558
  %v3626 = vadd.f32 %v3548, %v3562
  %v3627 = vadd.f32 %v3552, %v3558
  %v3628 = vadd.f32 %v3552, %v3562
  %vm3629 = vcmp.ge.f32.partialorder %v3565, 0.0
  %vm3630 = vcmp.ge.f32.partialorder %v3566, 0.0
  %vm3631 = vcmp.ge.f32.partialorder %v3567, 0.0
  %vm3632 = vcmp.ge.f32.partialorder %v3568, 0.0
  %vm3633 = vcmp.ge.f32.partialorder %v3569, 0.0
  %vm3634 = vcmp.ge.f32.partialorder %v3570, 0.0
  %vm3635 = vcmp.ge.f32.partialorder %v3571, 0.0
  %vm3636 = vcmp.ge.f32.partialorder %v3572, 0.0
  %vm3637 = vcmp.ge.f32.partialorder %v3573, 0.0
  %vm3638 = vcmp.ge.f32.partialorder %v3574, 0.0
  %vm3639 = vcmp.ge.f32.partialorder %v3575, 0.0
  %vm3640 = vcmp.ge.f32.partialorder %v3576, 0.0
  %vm3641 = vcmp.ge.f32.partialorder %v3577, 0.0
  %vm3642 = vcmp.ge.f32.partialorder %v3578, 0.0
  %vm3643 = vcmp.ge.f32.partialorder %v3579, 0.0
  %vm3644 = vcmp.ge.f32.partialorder %v3580, 0.0
  %vm3645 = vcmp.ge.f32.partialorder %v3581, 0.0
  %vm3646 = vcmp.ge.f32.partialorder %v3582, 0.0
  %vm3647 = vcmp.ge.f32.partialorder %v3583, 0.0
  %vm3648 = vcmp.ge.f32.partialorder %v3584, 0.0
  %vm3649 = vcmp.ge.f32.partialorder %v3585, 0.0
  %vm3650 = vcmp.ge.f32.partialorder %v3586, 0.0
  %vm3651 = vcmp.ge.f32.partialorder %v3587, 0.0
  %vm3652 = vcmp.ge.f32.partialorder %v3588, 0.0
  %vm3653 = vcmp.ge.f32.partialorder %v3589, 0.0
  %vm3654 = vcmp.ge.f32.partialorder %v3590, 0.0
  %vm3655 = vcmp.ge.f32.partialorder %v3591, 0.0
  %vm3656 = vcmp.ge.f32.partialorder %v3592, 0.0
  %vm3657 = vcmp.ge.f32.partialorder %v3593, 0.0
  %vm3658 = vcmp.ge.f32.partialorder %v3594, 0.0
  %vm3659 = vcmp.ge.f32.partialorder %v3595, 0.0
  %vm3660 = vcmp.ge.f32.partialorder %v3596, 0.0
  %vm3661 = vcmp.ge.f32.partialorder %v3597, 0.0
  %vm3662 = vcmp.ge.f32.partialorder %v3598, 0.0
  %vm3663 = vcmp.ge.f32.partialorder %v3599, 0.0
  %vm3664 = vcmp.ge.f32.partialorder %v3600, 0.0
  %vm3665 = vcmp.ge.f32.partialorder %v3601, 0.0
  %vm3666 = vcmp.ge.f32.partialorder %v3602, 0.0
  %vm3667 = vcmp.ge.f32.partialorder %v3603, 0.0
  %vm3668 = vcmp.ge.f32.partialorder %v3604, 0.0
  %vm3669 = vcmp.ge.f32.partialorder %v3605, 0.0
  %vm3670 = vcmp.ge.f32.partialorder %v3606, 0.0
  %vm3671 = vcmp.ge.f32.partialorder %v3607, 0.0
  %vm3672 = vcmp.ge.f32.partialorder %v3608, 0.0
  %vm3673 = vcmp.ge.f32.partialorder %v3609, 0.0
  %vm3674 = vcmp.ge.f32.partialorder %v3610, 0.0
  %vm3675 = vcmp.ge.f32.partialorder %v3611, 0.0
  %vm3676 = vcmp.ge.f32.partialorder %v3612, 0.0
  %vm3677 = vcmp.ge.f32.partialorder %v3613, 0.0
  %vm3678 = vcmp.ge.f32.partialorder %v3614, 0.0
  %vm3679 = vcmp.ge.f32.partialorder %v3615, 0.0
  %vm3680 = vcmp.ge.f32.partialorder %v3616, 0.0
  %vm3681 = vcmp.ge.f32.partialorder %v3617, 0.0
  %vm3682 = vcmp.ge.f32.partialorder %v3618, 0.0
  %vm3683 = vcmp.ge.f32.partialorder %v3619, 0.0
  %vm3684 = vcmp.ge.f32.partialorder %v3620, 0.0
  %vm3685 = vcmp.ge.f32.partialorder %v3621, 0.0
  %vm3686 = vcmp.ge.f32.partialorder %v3622, 0.0
  %vm3687 = vcmp.ge.f32.partialorder %v3623, 0.0
  %vm3688 = vcmp.ge.f32.partialorder %v3624, 0.0
  %vm3689 = vcmp.ge.f32.partialorder %v3625, 0.0
  %vm3690 = vcmp.ge.f32.partialorder %v3626, 0.0
  %vm3691 = vcmp.ge.f32.partialorder %v3627, 0.0
  %vm3692 = vcmp.ge.f32.partialorder %v3628, 0.0
  %v3693 = vmul.f32 %v3565, 0.2
  %v3694 = vmul.f32 %v3566, 0.2
  %v3695 = vmul.f32 %v3567, 0.2
  %v3696 = vmul.f32 %v3568, 0.2
  %v3697 = vmul.f32 %v3569, 0.2
  %v3698 = vmul.f32 %v3570, 0.2
  %v3699 = vmul.f32 %v3571, 0.2
  %v3700 = vmul.f32 %v3572, 0.2
  %v3701 = vmul.f32 %v3573, 0.2
  %v3702 = vmul.f32 %v3574, 0.2
  %v3703 = vmul.f32 %v3575, 0.2
  %v3704 = vmul.f32 %v3576, 0.2
  %v3705 = vmul.f32 %v3577, 0.2
  %v3706 = vmul.f32 %v3578, 0.2
  %v3707 = vmul.f32 %v3579, 0.2
  %v3708 = vmul.f32 %v3580, 0.2
  %v3709 = vmul.f32 %v3581, 0.2
  %v3710 = vmul.f32 %v3582, 0.2
  %v3711 = vmul.f32 %v3583, 0.2
  %v3712 = vmul.f32 %v3584, 0.2
  %v3713 = vmul.f32 %v3585, 0.2
  %v3714 = vmul.f32 %v3586, 0.2
  %v3715 = vmul.f32 %v3587, 0.2
  %v3716 = vmul.f32 %v3588, 0.2
  %v3717 = vmul.f32 %v3589, 0.2
  %v3718 = vmul.f32 %v3590, 0.2
  %v3719 = vmul.f32 %v3591, 0.2
  %v3720 = vmul.f32 %v3592, 0.2
  %v3721 = vmul.f32 %v3593, 0.2
  %v3722 = vmul.f32 %v3594, 0.2
  %v3723 = vmul.f32 %v3595, 0.2
  %v3724 = vmul.f32 %v3596, 0.2
  %v3725 = vmul.f32 %v3597, 0.2
  %v3726 = vmul.f32 %v3598, 0.2
  %v3727 = vmul.f32 %v3599, 0.2
  %v3728 = vmul.f32 %v3600, 0.2
  %v3729 = vmul.f32 %v3601, 0.2
  %v3730 = vmul.f32 %v3602, 0.2
  %v3731 = vmul.f32 %v3603, 0.2
  %v3732 = vmul.f32 %v3604, 0.2
  %v3733 = vmul.f32 %v3605, 0.2
  %v3734 = vmul.f32 %v3606, 0.2
  %v3735 = vmul.f32 %v3607, 0.2
  %v3736 = vmul.f32 %v3608, 0.2
  %v3737 = vmul.f32 %v3609, 0.2
  %v3738 = vmul.f32 %v3610, 0.2
  %v3739 = vmul.f32 %v3611, 0.2
  %v3740 = vmul.f32 %v3612, 0.2
  %v3741 = vmul.f32 %v3613, 0.2
  %v3742 = vmul.f32 %v3614, 0.2
  %v3743 = vmul.f32 %v3615, 0.2
  %v3744 = vmul.f32 %v3616, 0.2
  %v3745 = vmul.f32 %v3617, 0.2
  %v3746 = vmul.f32 %v3618, 0.2
  %v3747 = vmul.f32 %v3619, 0.2
  %v3748 = vmul.f32 %v3620, 0.2
  %v3749 = vmul.f32 %v3621, 0.2
  %v3750 = vmul.f32 %v3622, 0.2
  %v3751 = vmul.f32 %v3623, 0.2
  %v3752 = vmul.f32 %v3624, 0.2
  %v3753 = vmul.f32 %v3625, 0.2
  %v3754 = vmul.f32 %v3626, 0.2
  %v3755 = vmul.f32 %v3627, 0.2
  %v3756 = vmul.f32 %v3628, 0.2
  %v3757 = vsel %vm3629, %v3565, %v3693
  %v3758 = vsel %vm3630, %v3566, %v3694
  %v3759 = vsel %vm3631, %v3567, %v3695
  %v3760 = vsel %vm3632, %v3568, %v3696
  %v3761 = vsel %vm3633, %v3569, %v3697
  %v3762 = vsel %vm3634, %v3570, %v3698
  %v3763 = vsel %vm3635, %v3571, %v3699
  %v3764 = vsel %vm3636, %v3572, %v3700
  %v3765 = vsel %vm3637, %v3573, %v3701
  %v3766 = vsel %vm3638, %v3574, %v3702
  %v3767 = vsel %vm3639, %v3575, %v3703
  %v3768 = vsel %vm3640, %v3576, %v3704
  %v3769 = vsel %vm3641, %v3577, %v3705
  %v3770 = vsel %vm3642, %v3578, %v3706
  %v3771 = vsel %vm3643, %v3579, %v3707
  %v3772 = vsel %vm3644, %v3580, %v3708
  %v3773 = vsel %vm3645, %v3581, %v3709
  %v3774 = vsel %vm3646, %v3582, %v3710
  %v3775 = vsel %vm3647, %v3583, %v3711
  %v3776 = vsel %vm3648, %v3584, %v3712
  %v3777 = vsel %vm3649, %v3585, %v3713
  %v3778 = vsel %vm3650, %v3586, %v3714
  %v3779 = vsel %vm3651, %v3587, %v3715
  %v3780 = vsel %vm3652, %v3588, %v3716
  %v3781 = vsel %vm3653, %v3589, %v3717
  %v3782 = vsel %vm3654, %v3590, %v3718
  %v3783 = vsel %vm3655, %v3591, %v3719
  %v3784 = vsel %vm3656, %v3592, %v3720
  %v3785 = vsel %vm3657, %v3593, %v3721
  %v3786 = vsel %vm3658, %v3594, %v3722
  %v3787 = vsel %vm3659, %v3595, %v3723
  %v3788 = vsel %vm3660, %v3596, %v3724
  %v3789 = vsel %vm3661, %v3597, %v3725
  %v3790 = vsel %vm3662, %v3598, %v3726
  %v3791 = vsel %vm3663, %v3599, %v3727
  %v3792 = vsel %vm3664, %v3600, %v3728
  %v3793 = vsel %vm3665, %v3601, %v3729
  %v3794 = vsel %vm3666, %v3602, %v3730
  %v3795 = vsel %vm3667, %v3603, %v3731
  %v3796 = vsel %vm3668, %v3604, %v3732
  %v3797 = vsel %vm3669, %v3605, %v3733
  %v3798 = vsel %vm3670, %v3606, %v3734
  %v3799 = vsel %vm3671, %v3607, %v3735
  %v3800 = vsel %vm3672, %v3608, %v3736
  %v3801 = vsel %vm3673, %v3609, %v3737
  %v3802 = vsel %vm3674, %v3610, %v3738
  %v3803 = vsel %vm3675, %v3611, %v3739
  %v3804 = vsel %vm3676, %v3612, %v3740
  %v3805 = vsel %vm3677, %v3613, %v3741
  %v3806 = vsel %vm3678, %v3614, %v3742
  %v3807 = vsel %vm3679, %v3615, %v3743
  %v3808 = vsel %vm3680, %v3616, %v3744
  %v3809 = vsel %vm3681, %v3617, %v3745
  %v3810 = vsel %vm3682, %v3618, %v3746
  %v3811 = vsel %vm3683, %v3619, %v3747
  %v3812 = vsel %vm3684, %v3620, %v3748
  %v3813 = vsel %vm3685, %v3621, %v3749
  %v3814 = vsel %vm3686, %v3622, %v3750
  %v3815 = vsel %vm3687, %v3623, %v3751
  %v3816 = vsel %vm3688, %v3624, %v3752
  %v3817 = vsel %vm3689, %v3625, %v3753
  %v3818 = vsel %vm3690, %v3626, %v3754
  %v3819 = vsel %vm3691, %v3627, %v3755
  %v3820 = vsel %vm3692, %v3628, %v3756
  %v3821 = vmul.f32 %v3757, %v160
  %v3822 = vmul.f32 %v3758, %v161
  %v3823 = vmul.f32 %v3759, %v162
  %v3824 = vmul.f32 %v3760, %v163
  %v3825 = vmul.f32 %v3761, %v164
  %v3826 = vmul.f32 %v3762, %v165
  %v3827 = vmul.f32 %v3763, %v166
  %v3828 = vmul.f32 %v3764, %v167
  %v3829 = vmul.f32 %v3765, %v168
  %v3830 = vmul.f32 %v3766, %v169
  %v3831 = vmul.f32 %v3767, %v170
  %v3832 = vmul.f32 %v3768, %v171
  %v3833 = vmul.f32 %v3769, %v172
  %v3834 = vmul.f32 %v3770, %v173
  %v3835 = vmul.f32 %v3771, %v174
  %v3836 = vmul.f32 %v3772, %v175
  %v3837 = vmul.f32 %v3773, %v176
  %v3838 = vmul.f32 %v3774, %v177
  %v3839 = vmul.f32 %v3775, %v178
  %v3840 = vmul.f32 %v3776, %v179
  %v3841 = vmul.f32 %v3777, %v180
  %v3842 = vmul.f32 %v3778, %v181
  %v3843 = vmul.f32 %v3779, %v182
  %v3844 = vmul.f32 %v3780, %v183
  %v3845 = vmul.f32 %v3781, %v184
  %v3846 = vmul.f32 %v3782, %v185
  %v3847 = vmul.f32 %v3783, %v186
  %v3848 = vmul.f32 %v3784, %v187
  %v3849 = vmul.f32 %v3785, %v188
  %v3850 = vmul.f32 %v3786, %v189
  %v3851 = vmul.f32 %v3787, %v190
  %v3852 = vmul.f32 %v3788, %v191
  %v3853 = vmul.f32 %v3789, %v192
  %v3854 = vmul.f32 %v3790, %v193
  %v3855 = vmul.f32 %v3791, %v194
  %v3856 = vmul.f32 %v3792, %v195
  %v3857 = vmul.f32 %v3793, %v196
  %v3858 = vmul.f32 %v3794, %v197
  %v3859 = vmul.f32 %v3795, %v198
  %v3860 = vmul.f32 %v3796, %v199
  %v3861 = vmul.f32 %v3797, %v200
  %v3862 = vmul.f32 %v3798, %v201
  %v3863 = vmul.f32 %v3799, %v202
  %v3864 = vmul.f32 %v3800, %v203
  %v3865 = vmul.f32 %v3801, %v204
  %v3866 = vmul.f32 %v3802, %v205
  %v3867 = vmul.f32 %v3803, %v206
  %v3868 = vmul.f32 %v3804, %v207
  %v3869 = vmul.f32 %v3805, %v208
  %v3870 = vmul.f32 %v3806, %v209
  %v3871 = vmul.f32 %v3807, %v210
  %v3872 = vmul.f32 %v3808, %v211
  %v3873 = vmul.f32 %v3809, %v212
  %v3874 = vmul.f32 %v3810, %v213
  %v3875 = vmul.f32 %v3811, %v214
  %v3876 = vmul.f32 %v3812, %v215
  %v3877 = vmul.f32 %v3813, %v216
  %v3878 = vmul.f32 %v3814, %v217
  %v3879 = vmul.f32 %v3815, %v218
  %v3880 = vmul.f32 %v3816, %v219
  %v3881 = vmul.f32 %v3817, %v220
  %v3882 = vmul.f32 %v3818, %v221
  %v3883 = vmul.f32 %v3819, %v222
  %v3884 = vmul.f32 %v3820, %v223
  %v3885 = vsel %vm368, %v3821, -1e+30
  %v3886 = vsel %vm369, %v3822, -1e+30
  %v3887 = vsel %vm370, %v3823, -1e+30
  %v3888 = vsel %vm371, %v3824, -1e+30
  %v3889 = vsel %vm372, %v3825, -1e+30
  %v3890 = vsel %vm373, %v3826, -1e+30
  %v3891 = vsel %vm374, %v3827, -1e+30
  %v3892 = vsel %vm375, %v3828, -1e+30
  %v3893 = vsel %vm376, %v3829, -1e+30
  %v3894 = vsel %vm377, %v3830, -1e+30
  %v3895 = vsel %vm378, %v3831, -1e+30
  %v3896 = vsel %vm379, %v3832, -1e+30
  %v3897 = vsel %vm380, %v3833, -1e+30
  %v3898 = vsel %vm381, %v3834, -1e+30
  %v3899 = vsel %vm382, %v3835, -1e+30
  %v3900 = vsel %vm383, %v3836, -1e+30
  %v3901 = vsel %vm384, %v3837, -1e+30
  %v3902 = vsel %vm385, %v3838, -1e+30
  %v3903 = vsel %vm386, %v3839, -1e+30
  %v3904 = vsel %vm387, %v3840, -1e+30
  %v3905 = vsel %vm388, %v3841, -1e+30
  %v3906 = vsel %vm389, %v3842, -1e+30
  %v3907 = vsel %vm390, %v3843, -1e+30
  %v3908 = vsel %vm391, %v3844, -1e+30
  %v3909 = vsel %vm392, %v3845, -1e+30
  %v3910 = vsel %vm393, %v3846, -1e+30
  %v3911 = vsel %vm394, %v3847, -1e+30
  %v3912 = vsel %vm395, %v3848, -1e+30
  %v3913 = vsel %vm396, %v3849, -1e+30
  %v3914 = vsel %vm397, %v3850, -1e+30
  %v3915 = vsel %vm398, %v3851, -1e+30
  %v3916 = vsel %vm399, %v3852, -1e+30
  %v3917 = vsel %vm400, %v3853, -1e+30
  %v3918 = vsel %vm401, %v3854, -1e+30
  %v3919 = vsel %vm402, %v3855, -1e+30
  %v3920 = vsel %vm403, %v3856, -1e+30
  %v3921 = vsel %vm404, %v3857, -1e+30
  %v3922 = vsel %vm405, %v3858, -1e+30
  %v3923 = vsel %vm406, %v3859, -1e+30
  %v3924 = vsel %vm407, %v3860, -1e+30
  %v3925 = vsel %vm408, %v3861, -1e+30
  %v3926 = vsel %vm409, %v3862, -1e+30
  %v3927 = vsel %vm410, %v3863, -1e+30
  %v3928 = vsel %vm411, %v3864, -1e+30
  %v3929 = vsel %vm412, %v3865, -1e+30
  %v3930 = vsel %vm413, %v3866, -1e+30
  %v3931 = vsel %vm414, %v3867, -1e+30
  %v3932 = vsel %vm415, %v3868, -1e+30
  %v3933 = vsel %vm416, %v3869, -1e+30
  %v3934 = vsel %vm417, %v3870, -1e+30
  %v3935 = vsel %vm418, %v3871, -1e+30
  %v3936 = vsel %vm419, %v3872, -1e+30
  %v3937 = vsel %vm420, %v3873, -1e+30
  %v3938 = vsel %vm421, %v3874, -1e+30
  %v3939 = vsel %vm422, %v3875, -1e+30
  %v3940 = vsel %vm423, %v3876, -1e+30
  %v3941 = vsel %vm424, %v3877, -1e+30
  %v3942 = vsel %vm425, %v3878, -1e+30
  %v3943 = vsel %vm426, %v3879, -1e+30
  %v3944 = vsel %vm427, %v3880, -1e+30
  %v3945 = vsel %vm428, %v3881, -1e+30
  %v3946 = vsel %vm429, %v3882, -1e+30
  %v3947 = vsel %vm430, %v3883, -1e+30
  %v3948 = vsel %vm431, %v3884, -1e+30
  %v3949 = vmax.f32 %v3885, %v3886
  %3950 = vmax.xlane.f32.xlu0 %v3949
  %v3951 = vpop.xlane.xlu0 %3950
  %v3952 = vmax.f32 %v3887, %v3888
  %3953 = vmax.xlane.f32.xlu0 %v3952
  %v3954 = vpop.xlane.xlu0 %3953
  %v3955 = vmax.f32 %v3889, %v3890
  %3956 = vmax.xlane.f32.xlu0 %v3955
  %v3957 = vpop.xlane.xlu0 %3956
  %v3958 = vmax.f32 %v3891, %v3892
  %3959 = vmax.xlane.f32.xlu0 %v3958
  %v3960 = vpop.xlane.xlu0 %3959
  %v3961 = vmax.f32 %v3893, %v3894
  %3962 = vmax.xlane.f32.xlu0 %v3961
  %v3963 = vpop.xlane.xlu0 %3962
  %v3964 = vmax.f32 %v3895, %v3896
  %3965 = vmax.xlane.f32.xlu0 %v3964
  %v3966 = vpop.xlane.xlu0 %3965
  %v3967 = vmax.f32 %v3897, %v3898
  %3968 = vmax.xlane.f32.xlu0 %v3967
  %v3969 = vpop.xlane.xlu0 %3968
  %v3970 = vmax.f32 %v3899, %v3900
  %3971 = vmax.xlane.f32.xlu0 %v3970
  %v3972 = vpop.xlane.xlu0 %3971
  %v3973 = vmax.f32 %v3901, %v3902
  %3974 = vmax.xlane.f32.xlu0 %v3973
  %v3975 = vpop.xlane.xlu0 %3974
  %v3976 = vmax.f32 %v3903, %v3904
  %3977 = vmax.xlane.f32.xlu0 %v3976
  %v3978 = vpop.xlane.xlu0 %3977
  %v3979 = vmax.f32 %v3905, %v3906
  %3980 = vmax.xlane.f32.xlu0 %v3979
  %v3981 = vpop.xlane.xlu0 %3980
  %v3982 = vmax.f32 %v3907, %v3908
  %3983 = vmax.xlane.f32.xlu0 %v3982
  %v3984 = vpop.xlane.xlu0 %3983
  %v3985 = vmax.f32 %v3909, %v3910
  %3986 = vmax.xlane.f32.xlu0 %v3985
  %v3987 = vpop.xlane.xlu0 %3986
  %v3988 = vmax.f32 %v3911, %v3912
  %3989 = vmax.xlane.f32.xlu0 %v3988
  %v3990 = vpop.xlane.xlu0 %3989
  %v3991 = vmax.f32 %v3913, %v3914
  %3992 = vmax.xlane.f32.xlu0 %v3991
  %v3993 = vpop.xlane.xlu0 %3992
  %v3994 = vmax.f32 %v3915, %v3916
  %3995 = vmax.xlane.f32.xlu0 %v3994
  %v3996 = vpop.xlane.xlu0 %3995
  %v3997 = vmax.f32 %v3917, %v3918
  %3998 = vmax.xlane.f32.xlu0 %v3997
  %v3999 = vpop.xlane.xlu0 %3998
  %v4000 = vmax.f32 %v3919, %v3920
  %4001 = vmax.xlane.f32.xlu0 %v4000
  %v4002 = vpop.xlane.xlu0 %4001
  %v4003 = vmax.f32 %v3921, %v3922
  %4004 = vmax.xlane.f32.xlu0 %v4003
  %v4005 = vpop.xlane.xlu0 %4004
  %v4006 = vmax.f32 %v3923, %v3924
  %4007 = vmax.xlane.f32.xlu0 %v4006
  %v4008 = vpop.xlane.xlu0 %4007
  %v4009 = vmax.f32 %v3925, %v3926
  %4010 = vmax.xlane.f32.xlu0 %v4009
  %v4011 = vpop.xlane.xlu0 %4010
  %v4012 = vmax.f32 %v3927, %v3928
  %4013 = vmax.xlane.f32.xlu0 %v4012
  %v4014 = vpop.xlane.xlu0 %4013
  %v4015 = vmax.f32 %v3929, %v3930
  %4016 = vmax.xlane.f32.xlu0 %v4015
  %v4017 = vpop.xlane.xlu0 %4016
  %v4018 = vmax.f32 %v3931, %v3932
  %4019 = vmax.xlane.f32.xlu0 %v4018
  %v4020 = vpop.xlane.xlu0 %4019
  %v4021 = vmax.f32 %v3933, %v3934
  %4022 = vmax.xlane.f32.xlu0 %v4021
  %v4023 = vpop.xlane.xlu0 %4022
  %v4024 = vmax.f32 %v3935, %v3936
  %4025 = vmax.xlane.f32.xlu0 %v4024
  %v4026 = vpop.xlane.xlu0 %4025
  %v4027 = vmax.f32 %v3937, %v3938
  %4028 = vmax.xlane.f32.xlu0 %v4027
  %v4029 = vpop.xlane.xlu0 %4028
  %v4030 = vmax.f32 %v3939, %v3940
  %4031 = vmax.xlane.f32.xlu0 %v4030
  %v4032 = vpop.xlane.xlu0 %4031
  %v4033 = vmax.f32 %v3941, %v3942
  %4034 = vmax.xlane.f32.xlu0 %v4033
  %v4035 = vpop.xlane.xlu0 %4034
  %v4036 = vmax.f32 %v3943, %v3944
  %4037 = vmax.xlane.f32.xlu0 %v4036
  %v4038 = vpop.xlane.xlu0 %4037
  %v4039 = vmax.f32 %v3945, %v3946
  %4040 = vmax.xlane.f32.xlu0 %v4039
  %v4041 = vpop.xlane.xlu0 %4040
  %v4042 = vmax.f32 %v3947, %v3948
  %4043 = vmax.xlane.f32.xlu0 %v4042
  %v4044 = vpop.xlane.xlu0 %4043
  %v4045 = vmax.f32 %v432, %v3951
  %v4046 = vmax.f32 %v433, %v3954
  %v4047 = vmax.f32 %v434, %v3957
  %v4048 = vmax.f32 %v435, %v3960
  %v4049 = vmax.f32 %v436, %v3963
  %v4050 = vmax.f32 %v437, %v3966
  %v4051 = vmax.f32 %v438, %v3969
  %v4052 = vmax.f32 %v439, %v3972
  %v4053 = vmax.f32 %v440, %v3975
  %v4054 = vmax.f32 %v441, %v3978
  %v4055 = vmax.f32 %v442, %v3981
  %v4056 = vmax.f32 %v443, %v3984
  %v4057 = vmax.f32 %v444, %v3987
  %v4058 = vmax.f32 %v445, %v3990
  %v4059 = vmax.f32 %v446, %v3993
  %v4060 = vmax.f32 %v447, %v3996
  %v4061 = vmax.f32 %v448, %v3999
  %v4062 = vmax.f32 %v449, %v4002
  %v4063 = vmax.f32 %v450, %v4005
  %v4064 = vmax.f32 %v451, %v4008
  %v4065 = vmax.f32 %v452, %v4011
  %v4066 = vmax.f32 %v453, %v4014
  %v4067 = vmax.f32 %v454, %v4017
  %v4068 = vmax.f32 %v455, %v4020
  %v4069 = vmax.f32 %v456, %v4023
  %v4070 = vmax.f32 %v457, %v4026
  %v4071 = vmax.f32 %v458, %v4029
  %v4072 = vmax.f32 %v459, %v4032
  %v4073 = vmax.f32 %v460, %v4035
  %v4074 = vmax.f32 %v461, %v4038
  %v4075 = vmax.f32 %v462, %v4041
  %v4076 = vmax.f32 %v463, %v4044
  %4078 = vset.pattern.permute.xlu0 2
  %4079 = vperm.xlu0 %4078, %v4045
  %v4080 = vpop.permute.xlu0 %4079
  %4083 = vset.pattern.permute.xlu0 2
  %4084 = vperm.xlu0 %4083, %v4046
  %v4085 = vpop.permute.xlu0 %4084
  %4088 = vset.pattern.permute.xlu0 2
  %4089 = vperm.xlu0 %4088, %v4047
  %v4090 = vpop.permute.xlu0 %4089
  %4093 = vset.pattern.permute.xlu0 2
  %4094 = vperm.xlu0 %4093, %v4048
  %v4095 = vpop.permute.xlu0 %4094
  %4098 = vset.pattern.permute.xlu0 2
  %4099 = vperm.xlu0 %4098, %v4049
  %v4100 = vpop.permute.xlu0 %4099
  %4103 = vset.pattern.permute.xlu0 2
  %4104 = vperm.xlu0 %4103, %v4050
  %v4105 = vpop.permute.xlu0 %4104
  %4108 = vset.pattern.permute.xlu0 2
  %4109 = vperm.xlu0 %4108, %v4051
  %v4110 = vpop.permute.xlu0 %4109
  %4113 = vset.pattern.permute.xlu0 2
  %4114 = vperm.xlu0 %4113, %v4052
  %v4115 = vpop.permute.xlu0 %4114
  %4118 = vset.pattern.permute.xlu0 2
  %4119 = vperm.xlu0 %4118, %v4053
  %v4120 = vpop.permute.xlu0 %4119
  %4123 = vset.pattern.permute.xlu0 2
  %4124 = vperm.xlu0 %4123, %v4054
  %v4125 = vpop.permute.xlu0 %4124
  %4128 = vset.pattern.permute.xlu0 2
  %4129 = vperm.xlu0 %4128, %v4055
  %v4130 = vpop.permute.xlu0 %4129
  %4133 = vset.pattern.permute.xlu0 2
  %4134 = vperm.xlu0 %4133, %v4056
  %v4135 = vpop.permute.xlu0 %4134
  %4138 = vset.pattern.permute.xlu0 2
  %4139 = vperm.xlu0 %4138, %v4057
  %v4140 = vpop.permute.xlu0 %4139
  %4143 = vset.pattern.permute.xlu0 2
  %4144 = vperm.xlu0 %4143, %v4058
  %v4145 = vpop.permute.xlu0 %4144
  %4148 = vset.pattern.permute.xlu0 2
  %4149 = vperm.xlu0 %4148, %v4059
  %v4150 = vpop.permute.xlu0 %4149
  %4153 = vset.pattern.permute.xlu0 2
  %4154 = vperm.xlu0 %4153, %v4060
  %v4155 = vpop.permute.xlu0 %4154
  %4158 = vset.pattern.permute.xlu0 2
  %4159 = vperm.xlu0 %4158, %v4061
  %v4160 = vpop.permute.xlu0 %4159
  %4163 = vset.pattern.permute.xlu0 2
  %4164 = vperm.xlu0 %4163, %v4062
  %v4165 = vpop.permute.xlu0 %4164
  %4168 = vset.pattern.permute.xlu0 2
  %4169 = vperm.xlu0 %4168, %v4063
  %v4170 = vpop.permute.xlu0 %4169
  %4173 = vset.pattern.permute.xlu0 2
  %4174 = vperm.xlu0 %4173, %v4064
  %v4175 = vpop.permute.xlu0 %4174
  %4178 = vset.pattern.permute.xlu0 2
  %4179 = vperm.xlu0 %4178, %v4065
  %v4180 = vpop.permute.xlu0 %4179
  %4183 = vset.pattern.permute.xlu0 2
  %4184 = vperm.xlu0 %4183, %v4066
  %v4185 = vpop.permute.xlu0 %4184
  %4188 = vset.pattern.permute.xlu0 2
  %4189 = vperm.xlu0 %4188, %v4067
  %v4190 = vpop.permute.xlu0 %4189
  %4193 = vset.pattern.permute.xlu0 2
  %4194 = vperm.xlu0 %4193, %v4068
  %v4195 = vpop.permute.xlu0 %4194
  %4198 = vset.pattern.permute.xlu0 2
  %4199 = vperm.xlu0 %4198, %v4069
  %v4200 = vpop.permute.xlu0 %4199
  %4203 = vset.pattern.permute.xlu0 2
  %4204 = vperm.xlu0 %4203, %v4070
  %v4205 = vpop.permute.xlu0 %4204
  %4208 = vset.pattern.permute.xlu0 2
  %4209 = vperm.xlu0 %4208, %v4071
  %v4210 = vpop.permute.xlu0 %4209
  %4213 = vset.pattern.permute.xlu0 2
  %4214 = vperm.xlu0 %4213, %v4072
  %v4215 = vpop.permute.xlu0 %4214
  %4218 = vset.pattern.permute.xlu0 2
  %4219 = vperm.xlu0 %4218, %v4073
  %v4220 = vpop.permute.xlu0 %4219
  %4223 = vset.pattern.permute.xlu0 2
  %4224 = vperm.xlu0 %4223, %v4074
  %v4225 = vpop.permute.xlu0 %4224
  %4228 = vset.pattern.permute.xlu0 2
  %4229 = vperm.xlu0 %4228, %v4075
  %v4230 = vpop.permute.xlu0 %4229
  %4233 = vset.pattern.permute.xlu0 2
  %4234 = vperm.xlu0 %4233, %v4076
  %v4235 = vpop.permute.xlu0 %4234
  %v4237 = vsub.f32 %v3885, %v4080
  %v4238 = vsub.f32 %v3886, %v4080
  %v4239 = vsub.f32 %v3887, %v4085
  %v4240 = vsub.f32 %v3888, %v4085
  %v4241 = vsub.f32 %v3889, %v4090
  %v4242 = vsub.f32 %v3890, %v4090
  %v4243 = vsub.f32 %v3891, %v4095
  %v4244 = vsub.f32 %v3892, %v4095
  %v4245 = vsub.f32 %v3893, %v4100
  %v4246 = vsub.f32 %v3894, %v4100
  %v4247 = vsub.f32 %v3895, %v4105
  %v4248 = vsub.f32 %v3896, %v4105
  %v4249 = vsub.f32 %v3897, %v4110
  %v4250 = vsub.f32 %v3898, %v4110
  %v4251 = vsub.f32 %v3899, %v4115
  %v4252 = vsub.f32 %v3900, %v4115
  %v4253 = vsub.f32 %v3901, %v4120
  %v4254 = vsub.f32 %v3902, %v4120
  %v4255 = vsub.f32 %v3903, %v4125
  %v4256 = vsub.f32 %v3904, %v4125
  %v4257 = vsub.f32 %v3905, %v4130
  %v4258 = vsub.f32 %v3906, %v4130
  %v4259 = vsub.f32 %v3907, %v4135
  %v4260 = vsub.f32 %v3908, %v4135
  %v4261 = vsub.f32 %v3909, %v4140
  %v4262 = vsub.f32 %v3910, %v4140
  %v4263 = vsub.f32 %v3911, %v4145
  %v4264 = vsub.f32 %v3912, %v4145
  %v4265 = vsub.f32 %v3913, %v4150
  %v4266 = vsub.f32 %v3914, %v4150
  %v4267 = vsub.f32 %v3915, %v4155
  %v4268 = vsub.f32 %v3916, %v4155
  %v4269 = vsub.f32 %v3917, %v4160
  %v4270 = vsub.f32 %v3918, %v4160
  %v4271 = vsub.f32 %v3919, %v4165
  %v4272 = vsub.f32 %v3920, %v4165
  %v4273 = vsub.f32 %v3921, %v4170
  %v4274 = vsub.f32 %v3922, %v4170
  %v4275 = vsub.f32 %v3923, %v4175
  %v4276 = vsub.f32 %v3924, %v4175
  %v4277 = vsub.f32 %v3925, %v4180
  %v4278 = vsub.f32 %v3926, %v4180
  %v4279 = vsub.f32 %v3927, %v4185
  %v4280 = vsub.f32 %v3928, %v4185
  %v4281 = vsub.f32 %v3929, %v4190
  %v4282 = vsub.f32 %v3930, %v4190
  %v4283 = vsub.f32 %v3931, %v4195
  %v4284 = vsub.f32 %v3932, %v4195
  %v4285 = vsub.f32 %v3933, %v4200
  %v4286 = vsub.f32 %v3934, %v4200
  %v4287 = vsub.f32 %v3935, %v4205
  %v4288 = vsub.f32 %v3936, %v4205
  %v4289 = vsub.f32 %v3937, %v4210
  %v4290 = vsub.f32 %v3938, %v4210
  %v4291 = vsub.f32 %v3939, %v4215
  %v4292 = vsub.f32 %v3940, %v4215
  %v4293 = vsub.f32 %v3941, %v4220
  %v4294 = vsub.f32 %v3942, %v4220
  %v4295 = vsub.f32 %v3943, %v4225
  %v4296 = vsub.f32 %v3944, %v4225
  %v4297 = vsub.f32 %v3945, %v4230
  %v4298 = vsub.f32 %v3946, %v4230
  %v4299 = vsub.f32 %v3947, %v4235
  %v4300 = vsub.f32 %v3948, %v4235
  %v4301 = vmul.f32 %v4237, 1.442695
  %v4302 = vpow.pop %v4301
  %v4303 = vmul.f32 %v4238, 1.442695
  %v4304 = vpow.pop %v4303
  %v4305 = vmul.f32 %v4239, 1.442695
  %v4306 = vpow.pop %v4305
  %v4307 = vmul.f32 %v4240, 1.442695
  %v4308 = vpow.pop %v4307
  %v4309 = vmul.f32 %v4241, 1.442695
  %v4310 = vpow.pop %v4309
  %v4311 = vmul.f32 %v4242, 1.442695
  %v4312 = vpow.pop %v4311
  %v4313 = vmul.f32 %v4243, 1.442695
  %v4314 = vpow.pop %v4313
  %v4315 = vmul.f32 %v4244, 1.442695
  %v4316 = vpow.pop %v4315
  %v4317 = vmul.f32 %v4245, 1.442695
  %v4318 = vpow.pop %v4317
  %v4319 = vmul.f32 %v4246, 1.442695
  %v4320 = vpow.pop %v4319
  %v4321 = vmul.f32 %v4247, 1.442695
  %v4322 = vpow.pop %v4321
  %v4323 = vmul.f32 %v4248, 1.442695
  %v4324 = vpow.pop %v4323
  %v4325 = vmul.f32 %v4249, 1.442695
  %v4326 = vpow.pop %v4325
  %v4327 = vmul.f32 %v4250, 1.442695
  %v4328 = vpow.pop %v4327
  %v4329 = vmul.f32 %v4251, 1.442695
  %v4330 = vpow.pop %v4329
  %v4331 = vmul.f32 %v4252, 1.442695
  %v4332 = vpow.pop %v4331
  %v4333 = vmul.f32 %v4253, 1.442695
  %v4334 = vpow.pop %v4333
  %v4335 = vmul.f32 %v4254, 1.442695
  %v4336 = vpow.pop %v4335
  %v4337 = vmul.f32 %v4255, 1.442695
  %v4338 = vpow.pop %v4337
  %v4339 = vmul.f32 %v4256, 1.442695
  %v4340 = vpow.pop %v4339
  %v4341 = vmul.f32 %v4257, 1.442695
  %v4342 = vpow.pop %v4341
  %v4343 = vmul.f32 %v4258, 1.442695
  %v4344 = vpow.pop %v4343
  %v4345 = vmul.f32 %v4259, 1.442695
  %v4346 = vpow.pop %v4345
  %v4347 = vmul.f32 %v4260, 1.442695
  %v4348 = vpow.pop %v4347
  %v4349 = vmul.f32 %v4261, 1.442695
  %v4350 = vpow.pop %v4349
  %v4351 = vmul.f32 %v4262, 1.442695
  %v4352 = vpow.pop %v4351
  %v4353 = vmul.f32 %v4263, 1.442695
  %v4354 = vpow.pop %v4353
  %v4355 = vmul.f32 %v4264, 1.442695
  %v4356 = vpow.pop %v4355
  %v4357 = vmul.f32 %v4265, 1.442695
  %v4358 = vpow.pop %v4357
  %v4359 = vmul.f32 %v4266, 1.442695
  %v4360 = vpow.pop %v4359
  %v4361 = vmul.f32 %v4267, 1.442695
  %v4362 = vpow.pop %v4361
  %v4363 = vmul.f32 %v4268, 1.442695
  %v4364 = vpow.pop %v4363
  %v4365 = vmul.f32 %v4269, 1.442695
  %v4366 = vpow.pop %v4365
  %v4367 = vmul.f32 %v4270, 1.442695
  %v4368 = vpow.pop %v4367
  %v4369 = vmul.f32 %v4271, 1.442695
  %v4370 = vpow.pop %v4369
  %v4371 = vmul.f32 %v4272, 1.442695
  %v4372 = vpow.pop %v4371
  %v4373 = vmul.f32 %v4273, 1.442695
  %v4374 = vpow.pop %v4373
  %v4375 = vmul.f32 %v4274, 1.442695
  %v4376 = vpow.pop %v4375
  %v4377 = vmul.f32 %v4275, 1.442695
  %v4378 = vpow.pop %v4377
  %v4379 = vmul.f32 %v4276, 1.442695
  %v4380 = vpow.pop %v4379
  %v4381 = vmul.f32 %v4277, 1.442695
  %v4382 = vpow.pop %v4381
  %v4383 = vmul.f32 %v4278, 1.442695
  %v4384 = vpow.pop %v4383
  %v4385 = vmul.f32 %v4279, 1.442695
  %v4386 = vpow.pop %v4385
  %v4387 = vmul.f32 %v4280, 1.442695
  %v4388 = vpow.pop %v4387
  %v4389 = vmul.f32 %v4281, 1.442695
  %v4390 = vpow.pop %v4389
  %v4391 = vmul.f32 %v4282, 1.442695
  %v4392 = vpow.pop %v4391
  %v4393 = vmul.f32 %v4283, 1.442695
  %v4394 = vpow.pop %v4393
  %v4395 = vmul.f32 %v4284, 1.442695
  %v4396 = vpow.pop %v4395
  %v4397 = vmul.f32 %v4285, 1.442695
  %v4398 = vpow.pop %v4397
  %v4399 = vmul.f32 %v4286, 1.442695
  %v4400 = vpow.pop %v4399
  %v4401 = vmul.f32 %v4287, 1.442695
  %v4402 = vpow.pop %v4401
  %v4403 = vmul.f32 %v4288, 1.442695
  %v4404 = vpow.pop %v4403
  %v4405 = vmul.f32 %v4289, 1.442695
  %v4406 = vpow.pop %v4405
  %v4407 = vmul.f32 %v4290, 1.442695
  %v4408 = vpow.pop %v4407
  %v4409 = vmul.f32 %v4291, 1.442695
  %v4410 = vpow.pop %v4409
  %v4411 = vmul.f32 %v4292, 1.442695
  %v4412 = vpow.pop %v4411
  %v4413 = vmul.f32 %v4293, 1.442695
  %v4414 = vpow.pop %v4413
  %v4415 = vmul.f32 %v4294, 1.442695
  %v4416 = vpow.pop %v4415
  %v4417 = vmul.f32 %v4295, 1.442695
  %v4418 = vpow.pop %v4417
  %v4419 = vmul.f32 %v4296, 1.442695
  %v4420 = vpow.pop %v4419
  %v4421 = vmul.f32 %v4297, 1.442695
  %v4422 = vpow.pop %v4421
  %v4423 = vmul.f32 %v4298, 1.442695
  %v4424 = vpow.pop %v4423
  %v4425 = vmul.f32 %v4299, 1.442695
  %v4426 = vpow.pop %v4425
  %v4427 = vmul.f32 %v4300, 1.442695
  %v4428 = vpow.pop %v4427
  %v4429 = vmul.f32 %v4302, %v304
  %v4430 = vmul.f32 %v4304, %v305
  %v4431 = vmul.f32 %v4306, %v306
  %v4432 = vmul.f32 %v4308, %v307
  %v4433 = vmul.f32 %v4310, %v308
  %v4434 = vmul.f32 %v4312, %v309
  %v4435 = vmul.f32 %v4314, %v310
  %v4436 = vmul.f32 %v4316, %v311
  %v4437 = vmul.f32 %v4318, %v312
  %v4438 = vmul.f32 %v4320, %v313
  %v4439 = vmul.f32 %v4322, %v314
  %v4440 = vmul.f32 %v4324, %v315
  %v4441 = vmul.f32 %v4326, %v316
  %v4442 = vmul.f32 %v4328, %v317
  %v4443 = vmul.f32 %v4330, %v318
  %v4444 = vmul.f32 %v4332, %v319
  %v4445 = vmul.f32 %v4334, %v320
  %v4446 = vmul.f32 %v4336, %v321
  %v4447 = vmul.f32 %v4338, %v322
  %v4448 = vmul.f32 %v4340, %v323
  %v4449 = vmul.f32 %v4342, %v324
  %v4450 = vmul.f32 %v4344, %v325
  %v4451 = vmul.f32 %v4346, %v326
  %v4452 = vmul.f32 %v4348, %v327
  %v4453 = vmul.f32 %v4350, %v328
  %v4454 = vmul.f32 %v4352, %v329
  %v4455 = vmul.f32 %v4354, %v330
  %v4456 = vmul.f32 %v4356, %v331
  %v4457 = vmul.f32 %v4358, %v332
  %v4458 = vmul.f32 %v4360, %v333
  %v4459 = vmul.f32 %v4362, %v334
  %v4460 = vmul.f32 %v4364, %v335
  %v4461 = vmul.f32 %v4366, %v336
  %v4462 = vmul.f32 %v4368, %v337
  %v4463 = vmul.f32 %v4370, %v338
  %v4464 = vmul.f32 %v4372, %v339
  %v4465 = vmul.f32 %v4374, %v340
  %v4466 = vmul.f32 %v4376, %v341
  %v4467 = vmul.f32 %v4378, %v342
  %v4468 = vmul.f32 %v4380, %v343
  %v4469 = vmul.f32 %v4382, %v344
  %v4470 = vmul.f32 %v4384, %v345
  %v4471 = vmul.f32 %v4386, %v346
  %v4472 = vmul.f32 %v4388, %v347
  %v4473 = vmul.f32 %v4390, %v348
  %v4474 = vmul.f32 %v4392, %v349
  %v4475 = vmul.f32 %v4394, %v350
  %v4476 = vmul.f32 %v4396, %v351
  %v4477 = vmul.f32 %v4398, %v352
  %v4478 = vmul.f32 %v4400, %v353
  %v4479 = vmul.f32 %v4402, %v354
  %v4480 = vmul.f32 %v4404, %v355
  %v4481 = vmul.f32 %v4406, %v356
  %v4482 = vmul.f32 %v4408, %v357
  %v4483 = vmul.f32 %v4410, %v358
  %v4484 = vmul.f32 %v4412, %v359
  %v4485 = vmul.f32 %v4414, %v360
  %v4486 = vmul.f32 %v4416, %v361
  %v4487 = vmul.f32 %v4418, %v362
  %v4488 = vmul.f32 %v4420, %v363
  %v4489 = vmul.f32 %v4422, %v364
  %v4490 = vmul.f32 %v4424, %v365
  %v4491 = vmul.f32 %v4426, %v366
  %v4492 = vmul.f32 %v4428, %v367
  %v4493 = vadd.f32 %v4429, %v4430
  %4494 = vadd.xlane.f32.xlu0 %v4493
  %v4495 = vpop.xlane.xlu0 %4494
  %v4496 = vadd.f32 %v4431, %v4432
  %4497 = vadd.xlane.f32.xlu0 %v4496
  %v4498 = vpop.xlane.xlu0 %4497
  %v4499 = vadd.f32 %v4433, %v4434
  %4500 = vadd.xlane.f32.xlu0 %v4499
  %v4501 = vpop.xlane.xlu0 %4500
  %v4502 = vadd.f32 %v4435, %v4436
  %4503 = vadd.xlane.f32.xlu0 %v4502
  %v4504 = vpop.xlane.xlu0 %4503
  %v4505 = vadd.f32 %v4437, %v4438
  %4506 = vadd.xlane.f32.xlu0 %v4505
  %v4507 = vpop.xlane.xlu0 %4506
  %v4508 = vadd.f32 %v4439, %v4440
  %4509 = vadd.xlane.f32.xlu0 %v4508
  %v4510 = vpop.xlane.xlu0 %4509
  %v4511 = vadd.f32 %v4441, %v4442
  %4512 = vadd.xlane.f32.xlu0 %v4511
  %v4513 = vpop.xlane.xlu0 %4512
  %v4514 = vadd.f32 %v4443, %v4444
  %4515 = vadd.xlane.f32.xlu0 %v4514
  %v4516 = vpop.xlane.xlu0 %4515
  %v4517 = vadd.f32 %v4445, %v4446
  %4518 = vadd.xlane.f32.xlu0 %v4517
  %v4519 = vpop.xlane.xlu0 %4518
  %v4520 = vadd.f32 %v4447, %v4448
  %4521 = vadd.xlane.f32.xlu0 %v4520
  %v4522 = vpop.xlane.xlu0 %4521
  %v4523 = vadd.f32 %v4449, %v4450
  %4524 = vadd.xlane.f32.xlu0 %v4523
  %v4525 = vpop.xlane.xlu0 %4524
  %v4526 = vadd.f32 %v4451, %v4452
  %4527 = vadd.xlane.f32.xlu0 %v4526
  %v4528 = vpop.xlane.xlu0 %4527
  %v4529 = vadd.f32 %v4453, %v4454
  %4530 = vadd.xlane.f32.xlu0 %v4529
  %v4531 = vpop.xlane.xlu0 %4530
  %v4532 = vadd.f32 %v4455, %v4456
  %4533 = vadd.xlane.f32.xlu0 %v4532
  %v4534 = vpop.xlane.xlu0 %4533
  %v4535 = vadd.f32 %v4457, %v4458
  %4536 = vadd.xlane.f32.xlu0 %v4535
  %v4537 = vpop.xlane.xlu0 %4536
  %v4538 = vadd.f32 %v4459, %v4460
  %4539 = vadd.xlane.f32.xlu0 %v4538
  %v4540 = vpop.xlane.xlu0 %4539
  %v4541 = vadd.f32 %v4461, %v4462
  %4542 = vadd.xlane.f32.xlu0 %v4541
  %v4543 = vpop.xlane.xlu0 %4542
  %v4544 = vadd.f32 %v4463, %v4464
  %4545 = vadd.xlane.f32.xlu0 %v4544
  %v4546 = vpop.xlane.xlu0 %4545
  %v4547 = vadd.f32 %v4465, %v4466
  %4548 = vadd.xlane.f32.xlu0 %v4547
  %v4549 = vpop.xlane.xlu0 %4548
  %v4550 = vadd.f32 %v4467, %v4468
  %4551 = vadd.xlane.f32.xlu0 %v4550
  %v4552 = vpop.xlane.xlu0 %4551
  %v4553 = vadd.f32 %v4469, %v4470
  %4554 = vadd.xlane.f32.xlu0 %v4553
  %v4555 = vpop.xlane.xlu0 %4554
  %v4556 = vadd.f32 %v4471, %v4472
  %4557 = vadd.xlane.f32.xlu0 %v4556
  %v4558 = vpop.xlane.xlu0 %4557
  %v4559 = vadd.f32 %v4473, %v4474
  %4560 = vadd.xlane.f32.xlu0 %v4559
  %v4561 = vpop.xlane.xlu0 %4560
  %v4562 = vadd.f32 %v4475, %v4476
  %4563 = vadd.xlane.f32.xlu0 %v4562
  %v4564 = vpop.xlane.xlu0 %4563
  %v4565 = vadd.f32 %v4477, %v4478
  %4566 = vadd.xlane.f32.xlu0 %v4565
  %v4567 = vpop.xlane.xlu0 %4566
  %v4568 = vadd.f32 %v4479, %v4480
  %4569 = vadd.xlane.f32.xlu0 %v4568
  %v4570 = vpop.xlane.xlu0 %4569
  %v4571 = vadd.f32 %v4481, %v4482
  %4572 = vadd.xlane.f32.xlu0 %v4571
  %v4573 = vpop.xlane.xlu0 %4572
  %v4574 = vadd.f32 %v4483, %v4484
  %4575 = vadd.xlane.f32.xlu0 %v4574
  %v4576 = vpop.xlane.xlu0 %4575
  %v4577 = vadd.f32 %v4485, %v4486
  %4578 = vadd.xlane.f32.xlu0 %v4577
  %v4579 = vpop.xlane.xlu0 %4578
  %v4580 = vadd.f32 %v4487, %v4488
  %4581 = vadd.xlane.f32.xlu0 %v4580
  %v4582 = vpop.xlane.xlu0 %4581
  %v4583 = vadd.f32 %v4489, %v4490
  %4584 = vadd.xlane.f32.xlu0 %v4583
  %v4585 = vpop.xlane.xlu0 %4584
  %v4586 = vadd.f32 %v4491, %v4492
  %4587 = vadd.xlane.f32.xlu0 %v4586
  %v4588 = vpop.xlane.xlu0 %4587
  %v4589 = vpack.c.bf16 %v4431, %v4429
  %v4590 = vpack.c.bf16 %v4432, %v4430
  %v4591 = vpack.c.bf16 %v4435, %v4433
  %v4592 = vpack.c.bf16 %v4436, %v4434
  %v4593 = vpack.c.bf16 %v4439, %v4437
  %v4594 = vpack.c.bf16 %v4440, %v4438
  %v4595 = vpack.c.bf16 %v4443, %v4441
  %v4596 = vpack.c.bf16 %v4444, %v4442
  %v4597 = vpack.c.bf16 %v4447, %v4445
  %v4598 = vpack.c.bf16 %v4448, %v4446
  %v4599 = vpack.c.bf16 %v4451, %v4449
  %v4600 = vpack.c.bf16 %v4452, %v4450
  %v4601 = vpack.c.bf16 %v4455, %v4453
  %v4602 = vpack.c.bf16 %v4456, %v4454
  %v4603 = vpack.c.bf16 %v4459, %v4457
  %v4604 = vpack.c.bf16 %v4460, %v4458
  %v4605 = vpack.c.bf16 %v4463, %v4461
  %v4606 = vpack.c.bf16 %v4464, %v4462
  %v4607 = vpack.c.bf16 %v4467, %v4465
  %v4608 = vpack.c.bf16 %v4468, %v4466
  %v4609 = vpack.c.bf16 %v4471, %v4469
  %v4610 = vpack.c.bf16 %v4472, %v4470
  %v4611 = vpack.c.bf16 %v4475, %v4473
  %v4612 = vpack.c.bf16 %v4476, %v4474
  %v4613 = vpack.c.bf16 %v4479, %v4477
  %v4614 = vpack.c.bf16 %v4480, %v4478
  %v4615 = vpack.c.bf16 %v4483, %v4481
  %v4616 = vpack.c.bf16 %v4484, %v4482
  %v4617 = vpack.c.bf16 %v4487, %v4485
  %v4618 = vpack.c.bf16 %v4488, %v4486
  %v4619 = vpack.c.bf16 %v4491, %v4489
  %v4620 = vpack.c.bf16 %v4492, %v4490
  %4621 = vrot.lane.b32.xlu0 %v1825, 64
  %v4622 = vpop.permute.xlu0 %4621
  %4623 = vrot.lane.b32.xlu0 %v1826, 64
  %v4624 = vpop.permute.xlu0 %4623
  %4625 = vrot.lane.b32.xlu0 %v1827, 64
  %v4626 = vpop.permute.xlu0 %4625
  %4627 = vrot.lane.b32.xlu0 %v1828, 64
  %v4628 = vpop.permute.xlu0 %4627
  %4629 = vrot.lane.b32.xlu0 %v1829, 64
  %v4630 = vpop.permute.xlu0 %4629
  %4631 = vrot.lane.b32.xlu0 %v1830, 64
  %v4632 = vpop.permute.xlu0 %4631
  %4633 = vrot.lane.b32.xlu0 %v1831, 64
  %v4634 = vpop.permute.xlu0 %4633
  %4635 = vrot.lane.b32.xlu0 %v1832, 64
  %v4636 = vpop.permute.xlu0 %4635
  %4637 = vrot.lane.b32.xlu0 %v1833, 64
  %v4638 = vpop.permute.xlu0 %4637
  %4639 = vrot.lane.b32.xlu0 %v1834, 64
  %v4640 = vpop.permute.xlu0 %4639
  %4641 = vrot.lane.b32.xlu0 %v1835, 64
  %v4642 = vpop.permute.xlu0 %4641
  %4643 = vrot.lane.b32.xlu0 %v1836, 64
  %v4644 = vpop.permute.xlu0 %4643
  %4645 = vrot.lane.b32.xlu0 %v1837, 64
  %v4646 = vpop.permute.xlu0 %4645
  %4647 = vrot.lane.b32.xlu0 %v1838, 64
  %v4648 = vpop.permute.xlu0 %4647
  %4649 = vrot.lane.b32.xlu0 %v1839, 64
  %v4650 = vpop.permute.xlu0 %4649
  %4651 = vrot.lane.b32.xlu0 %v1840, 64
  %v4652 = vpop.permute.xlu0 %4651
  %4669 = vmatprep.subr.bf16.mxu0 0
  %4670 = vmatpush1.bf16.msra.mxu0 %v4622
  %4671 = vmatprep.subr.bf16.mxu0 0
  %4672 = vmatpush1.bf16.msra.mxu0 %v4624
  %4673 = vmatprep.subr.bf16.mxu0 0
  %4674 = vmatpush1.bf16.msra.mxu0 %v4626
  %4675 = vmatprep.subr.bf16.mxu0 0
  %4676 = vmatpush1.bf16.msra.mxu0 %v4628
  %4677 = vmatprep.subr.bf16.mxu0 0
  %4678 = vmatpush1.bf16.msra.mxu0 %v4630
  %4679 = vmatprep.subr.bf16.mxu0 0
  %4680 = vmatpush1.bf16.msra.mxu0 %v4632
  %4681 = vmatprep.subr.bf16.mxu0 0
  %4682 = vmatpush1.bf16.msra.mxu0 %v4634
  %4683 = vmatprep.subr.bf16.mxu0 0
  %4684 = vmatpush1.bf16.msra.mxu0 %v4636
  %4685 = vmatprep.subr.bf16.mxu0 0
  %4686 = vmatpush1.bf16.msra.mxu0 %v4638
  %4687 = vmatprep.subr.bf16.mxu0 0
  %4688 = vmatpush1.bf16.msra.mxu0 %v4640
  %4689 = vmatprep.subr.bf16.mxu0 0
  %4690 = vmatpush1.bf16.msra.mxu0 %v4642
  %4691 = vmatprep.subr.bf16.mxu0 0
  %4692 = vmatpush1.bf16.msra.mxu0 %v4644
  %4693 = vmatprep.subr.bf16.mxu0 0
  %4694 = vmatpush1.bf16.msra.mxu0 %v4646
  %4695 = vmatprep.subr.bf16.mxu0 0
  %4696 = vmatpush1.bf16.msra.mxu0 %v4648
  %4697 = vmatprep.subr.bf16.mxu0 0
  %4698 = vmatpush1.bf16.msra.mxu0 %v4650
  %4699 = vmatprep.subr.bf16.mxu0 0
  %4700 = vmatpush1.bf16.msra.mxu0 %v4652
  %4701 = vmatprep.mubr.bf16.mxu0 %v4590
  %4702 = vmatmul.mubr.bf16.gmra.mrb[0].mxu0 %v4589
  %v4703 = vpop.f32.mrb[0].mxu0
  %v4704 = vadd.f32 0.0, %v4703
  %v4705 = vpop.f32.mrb[0].mxu0
  %v4706 = vpop.f32.mrb[0].mxu0
  %v4707 = vadd.f32 0.0, %v4706
  %v4708 = vpop.f32.mrb[0].mxu0
  %4709 = vmatprep.mubr.bf16.mxu0 %v4592
  %4710 = vmatmul.mubr.bf16.gmra.mrb[0].mxu0 %v4591
  %v4711 = vpop.f32.mrb[0].mxu0
  %v4712 = vadd.f32 0.0, %v4711
  %v4713 = vpop.f32.mrb[0].mxu0
  %v4714 = vpop.f32.mrb[0].mxu0
  %v4715 = vadd.f32 0.0, %v4714
  %v4716 = vpop.f32.mrb[0].mxu0
  %4717 = vmatprep.mubr.bf16.mxu0 %v4594
  %4718 = vmatmul.mubr.bf16.gmra.mrb[0].mxu0 %v4593
  %v4719 = vpop.f32.mrb[0].mxu0
  %v4720 = vadd.f32 0.0, %v4719
  %v4721 = vpop.f32.mrb[0].mxu0
  %v4722 = vpop.f32.mrb[0].mxu0
  %v4723 = vadd.f32 0.0, %v4722
  %v4724 = vpop.f32.mrb[0].mxu0
  %4725 = vmatprep.mubr.bf16.mxu0 %v4596
  %4726 = vmatmul.mubr.bf16.gmra.mrb[0].mxu0 %v4595
  %v4727 = vpop.f32.mrb[0].mxu0
  %v4728 = vadd.f32 0.0, %v4727
  %v4729 = vpop.f32.mrb[0].mxu0
  %v4730 = vpop.f32.mrb[0].mxu0
  %v4731 = vadd.f32 0.0, %v4730
  %v4732 = vpop.f32.mrb[0].mxu0
  %4733 = vmatprep.mubr.bf16.mxu0 %v4598
  %4734 = vmatmul.mubr.bf16.gmra.mrb[0].mxu0 %v4597
  %v4735 = vpop.f32.mrb[0].mxu0
  %v4736 = vadd.f32 0.0, %v4735
  %v4737 = vpop.f32.mrb[0].mxu0
  %v4738 = vpop.f32.mrb[0].mxu0
  %v4739 = vadd.f32 0.0, %v4738
  %v4740 = vpop.f32.mrb[0].mxu0
  %4741 = vmatprep.mubr.bf16.mxu0 %v4600
  %4742 = vmatmul.mubr.bf16.gmra.mrb[0].mxu0 %v4599
  %v4743 = vpop.f32.mrb[0].mxu0
  %v4744 = vadd.f32 0.0, %v4743
  %v4745 = vpop.f32.mrb[0].mxu0
  %v4746 = vpop.f32.mrb[0].mxu0
  %v4747 = vadd.f32 0.0, %v4746
  %v4748 = vpop.f32.mrb[0].mxu0
  %4749 = vmatprep.mubr.bf16.mxu0 %v4602
  %4750 = vmatmul.mubr.bf16.gmra.mrb[0].mxu0 %v4601
  %v4751 = vpop.f32.mrb[0].mxu0
  %v4752 = vadd.f32 0.0, %v4751
  %v4753 = vpop.f32.mrb[0].mxu0
  %v4754 = vpop.f32.mrb[0].mxu0
  %v4755 = vadd.f32 0.0, %v4754
  %v4756 = vpop.f32.mrb[0].mxu0
  %4757 = vmatprep.mubr.bf16.mxu0 %v4604
  %4758 = vmatmul.mubr.bf16.gmra.mrb[0].mxu0 %v4603
  %v4759 = vpop.f32.mrb[0].mxu0
  %v4760 = vadd.f32 0.0, %v4759
  %v4761 = vpop.f32.mrb[0].mxu0
  %v4762 = vpop.f32.mrb[0].mxu0
  %v4763 = vadd.f32 0.0, %v4762
  %v4764 = vpop.f32.mrb[0].mxu0
  %4765 = vmatprep.mubr.bf16.mxu0 %v4606
  %4766 = vmatmul.mubr.bf16.gmra.mrb[0].mxu0 %v4605
  %v4767 = vpop.f32.mrb[0].mxu0
  %v4768 = vadd.f32 0.0, %v4767
  %v4769 = vpop.f32.mrb[0].mxu0
  %v4770 = vpop.f32.mrb[0].mxu0
  %v4771 = vadd.f32 0.0, %v4770
  %v4772 = vpop.f32.mrb[0].mxu0
  %4773 = vmatprep.mubr.bf16.mxu0 %v4608
  %4774 = vmatmul.mubr.bf16.gmra.mrb[0].mxu0 %v4607
  %v4775 = vpop.f32.mrb[0].mxu0
  %v4776 = vadd.f32 0.0, %v4775
  %v4777 = vpop.f32.mrb[0].mxu0
  %v4778 = vpop.f32.mrb[0].mxu0
  %v4779 = vadd.f32 0.0, %v4778
  %v4780 = vpop.f32.mrb[0].mxu0
  %4781 = vmatprep.mubr.bf16.mxu0 %v4610
  %4782 = vmatmul.mubr.bf16.gmra.mrb[0].mxu0 %v4609
  %v4783 = vpop.f32.mrb[0].mxu0
  %v4784 = vadd.f32 0.0, %v4783
  %v4785 = vpop.f32.mrb[0].mxu0
  %v4786 = vpop.f32.mrb[0].mxu0
  %v4787 = vadd.f32 0.0, %v4786
  %v4788 = vpop.f32.mrb[0].mxu0
  %4789 = vmatprep.mubr.bf16.mxu0 %v4612
  %4790 = vmatmul.mubr.bf16.gmra.mrb[0].mxu0 %v4611
  %v4791 = vpop.f32.mrb[0].mxu0
  %v4792 = vadd.f32 0.0, %v4791
  %v4793 = vpop.f32.mrb[0].mxu0
  %v4794 = vpop.f32.mrb[0].mxu0
  %v4795 = vadd.f32 0.0, %v4794
  %v4796 = vpop.f32.mrb[0].mxu0
  %4797 = vmatprep.mubr.bf16.mxu0 %v4614
  %4798 = vmatmul.mubr.bf16.gmra.mrb[0].mxu0 %v4613
  %v4799 = vpop.f32.mrb[0].mxu0
  %v4800 = vadd.f32 0.0, %v4799
  %v4801 = vpop.f32.mrb[0].mxu0
  %v4802 = vpop.f32.mrb[0].mxu0
  %v4803 = vadd.f32 0.0, %v4802
  %v4804 = vpop.f32.mrb[0].mxu0
  %4805 = vmatprep.mubr.bf16.mxu0 %v4616
  %4806 = vmatmul.mubr.bf16.gmra.mrb[0].mxu0 %v4615
  %v4807 = vpop.f32.mrb[0].mxu0
  %v4808 = vadd.f32 0.0, %v4807
  %v4809 = vpop.f32.mrb[0].mxu0
  %v4810 = vpop.f32.mrb[0].mxu0
  %v4811 = vadd.f32 0.0, %v4810
  %v4812 = vpop.f32.mrb[0].mxu0
  %4813 = vmatprep.mubr.bf16.mxu0 %v4618
  %4814 = vmatmul.mubr.bf16.gmra.mrb[0].mxu0 %v4617
  %v4815 = vpop.f32.mrb[0].mxu0
  %v4816 = vadd.f32 0.0, %v4815
  %v4817 = vpop.f32.mrb[0].mxu0
  %v4818 = vpop.f32.mrb[0].mxu0
  %v4819 = vadd.f32 0.0, %v4818
  %v4820 = vpop.f32.mrb[0].mxu0
  %4821 = vmatprep.mubr.bf16.mxu0 %v4620
  %4822 = vmatmul.mubr.bf16.gmra.mrb[0].mxu0 %v4619
  %v4823 = vpop.f32.mrb[0].mxu0
  %v4824 = vadd.f32 0.0, %v4823
  %v4825 = vpop.f32.mrb[0].mxu0
  %v4826 = vpop.f32.mrb[0].mxu0
  %v4827 = vadd.f32 0.0, %v4826
  %v4828 = vpop.f32.mrb[0].mxu0
  %4829 = vdwg.mxu0
  %s4830 = scalar_lea.vmem %s2, 3
  %v4831 = vld [vmem:[%s4830] ss:$4 sm:$0x3]
  %4832 = vset.pattern.permute.xlu0 3
  %4833 = vperm.xlu0 %4832, %v466
  %v4834 = vpop.permute.xlu0 %4833
  %4836 = vset.pattern.permute.xlu0 3
  %4837 = vperm.xlu0 %4836, %v467
  %v4838 = vpop.permute.xlu0 %4837
  %4840 = vset.pattern.permute.xlu0 3
  %4841 = vperm.xlu0 %4840, %v468
  %v4842 = vpop.permute.xlu0 %4841
  %4844 = vset.pattern.permute.xlu0 3
  %4845 = vperm.xlu0 %4844, %v469
  %v4846 = vpop.permute.xlu0 %4845
  %4848 = vset.pattern.permute.xlu0 3
  %4849 = vperm.xlu0 %4848, %v470
  %v4850 = vpop.permute.xlu0 %4849
  %4852 = vset.pattern.permute.xlu0 3
  %4853 = vperm.xlu0 %4852, %v471
  %v4854 = vpop.permute.xlu0 %4853
  %4856 = vset.pattern.permute.xlu0 3
  %4857 = vperm.xlu0 %4856, %v472
  %v4858 = vpop.permute.xlu0 %4857
  %4860 = vset.pattern.permute.xlu0 3
  %4861 = vperm.xlu0 %4860, %v473
  %v4862 = vpop.permute.xlu0 %4861
  %4864 = vset.pattern.permute.xlu0 3
  %4865 = vperm.xlu0 %4864, %v474
  %v4866 = vpop.permute.xlu0 %4865
  %4868 = vset.pattern.permute.xlu0 3
  %4869 = vperm.xlu0 %4868, %v475
  %v4870 = vpop.permute.xlu0 %4869
  %4872 = vset.pattern.permute.xlu0 3
  %4873 = vperm.xlu0 %4872, %v476
  %v4874 = vpop.permute.xlu0 %4873
  %4876 = vset.pattern.permute.xlu0 3
  %4877 = vperm.xlu0 %4876, %v477
  %v4878 = vpop.permute.xlu0 %4877
  %4880 = vset.pattern.permute.xlu0 3
  %4881 = vperm.xlu0 %4880, %v478
  %v4882 = vpop.permute.xlu0 %4881
  %4884 = vset.pattern.permute.xlu0 3
  %4885 = vperm.xlu0 %4884, %v479
  %v4886 = vpop.permute.xlu0 %4885
  %4888 = vset.pattern.permute.xlu0 3
  %4889 = vperm.xlu0 %4888, %v480
  %v4890 = vpop.permute.xlu0 %4889
  %4892 = vset.pattern.permute.xlu0 3
  %4893 = vperm.xlu0 %4892, %v481
  %v4894 = vpop.permute.xlu0 %4893
  %4896 = vset.pattern.permute.xlu0 3
  %4897 = vperm.xlu0 %4896, %v482
  %v4898 = vpop.permute.xlu0 %4897
  %4900 = vset.pattern.permute.xlu0 3
  %4901 = vperm.xlu0 %4900, %v483
  %v4902 = vpop.permute.xlu0 %4901
  %4904 = vset.pattern.permute.xlu0 3
  %4905 = vperm.xlu0 %4904, %v484
  %v4906 = vpop.permute.xlu0 %4905
  %4908 = vset.pattern.permute.xlu0 3
  %4909 = vperm.xlu0 %4908, %v485
  %v4910 = vpop.permute.xlu0 %4909
  %4912 = vset.pattern.permute.xlu0 3
  %4913 = vperm.xlu0 %4912, %v486
  %v4914 = vpop.permute.xlu0 %4913
  %4916 = vset.pattern.permute.xlu0 3
  %4917 = vperm.xlu0 %4916, %v487
  %v4918 = vpop.permute.xlu0 %4917
  %4920 = vset.pattern.permute.xlu0 3
  %4921 = vperm.xlu0 %4920, %v488
  %v4922 = vpop.permute.xlu0 %4921
  %4924 = vset.pattern.permute.xlu0 3
  %4925 = vperm.xlu0 %4924, %v489
  %v4926 = vpop.permute.xlu0 %4925
  %4928 = vset.pattern.permute.xlu0 3
  %4929 = vperm.xlu0 %4928, %v490
  %v4930 = vpop.permute.xlu0 %4929
  %4932 = vset.pattern.permute.xlu0 3
  %4933 = vperm.xlu0 %4932, %v491
  %v4934 = vpop.permute.xlu0 %4933
  %4936 = vset.pattern.permute.xlu0 3
  %4937 = vperm.xlu0 %4936, %v492
  %v4938 = vpop.permute.xlu0 %4937
  %4940 = vset.pattern.permute.xlu0 3
  %4941 = vperm.xlu0 %4940, %v493
  %v4942 = vpop.permute.xlu0 %4941
  %4944 = vset.pattern.permute.xlu0 3
  %4945 = vperm.xlu0 %4944, %v494
  %v4946 = vpop.permute.xlu0 %4945
  %4948 = vset.pattern.permute.xlu0 3
  %4949 = vperm.xlu0 %4948, %v495
  %v4950 = vpop.permute.xlu0 %4949
  %4952 = vset.pattern.permute.xlu0 3
  %4953 = vperm.xlu0 %4952, %v496
  %v4954 = vpop.permute.xlu0 %4953
  %4956 = vset.pattern.permute.xlu0 3
  %4957 = vperm.xlu0 %4956, %v497
  %v4958 = vpop.permute.xlu0 %4957
  %v4961 = vlaneseq
  %v4962 = vshrl.u32 %v4961, 7
  %v4963 = vsub.s32 0, %v4962
  %v4964 = vrot.slane %v4831, %v4963
  %v4965 = vlaneseq
  %v4966 = vshrl.u32 %v4965, 7
  %v4967 = vsub.s32 1, %v4966
  %v4968 = vrot.slane %v4831, %v4967
  %v4971 = vadd.f32 %v4834, %v4964
  %v4972 = vadd.f32 %v4834, %v4968
  %v4973 = vadd.f32 %v4838, %v4964
  %v4974 = vadd.f32 %v4838, %v4968
  %v4975 = vadd.f32 %v4842, %v4964
  %v4976 = vadd.f32 %v4842, %v4968
  %v4977 = vadd.f32 %v4846, %v4964
  %v4978 = vadd.f32 %v4846, %v4968
  %v4979 = vadd.f32 %v4850, %v4964
  %v4980 = vadd.f32 %v4850, %v4968
  %v4981 = vadd.f32 %v4854, %v4964
  %v4982 = vadd.f32 %v4854, %v4968
  %v4983 = vadd.f32 %v4858, %v4964
  %v4984 = vadd.f32 %v4858, %v4968
  %v4985 = vadd.f32 %v4862, %v4964
  %v4986 = vadd.f32 %v4862, %v4968
  %v4987 = vadd.f32 %v4866, %v4964
  %v4988 = vadd.f32 %v4866, %v4968
  %v4989 = vadd.f32 %v4870, %v4964
  %v4990 = vadd.f32 %v4870, %v4968
  %v4991 = vadd.f32 %v4874, %v4964
  %v4992 = vadd.f32 %v4874, %v4968
  %v4993 = vadd.f32 %v4878, %v4964
  %v4994 = vadd.f32 %v4878, %v4968
  %v4995 = vadd.f32 %v4882, %v4964
  %v4996 = vadd.f32 %v4882, %v4968
  %v4997 = vadd.f32 %v4886, %v4964
  %v4998 = vadd.f32 %v4886, %v4968
  %v4999 = vadd.f32 %v4890, %v4964
  %v5000 = vadd.f32 %v4890, %v4968
  %v5001 = vadd.f32 %v4894, %v4964
  %v5002 = vadd.f32 %v4894, %v4968
  %v5003 = vadd.f32 %v4898, %v4964
  %v5004 = vadd.f32 %v4898, %v4968
  %v5005 = vadd.f32 %v4902, %v4964
  %v5006 = vadd.f32 %v4902, %v4968
  %v5007 = vadd.f32 %v4906, %v4964
  %v5008 = vadd.f32 %v4906, %v4968
  %v5009 = vadd.f32 %v4910, %v4964
  %v5010 = vadd.f32 %v4910, %v4968
  %v5011 = vadd.f32 %v4914, %v4964
  %v5012 = vadd.f32 %v4914, %v4968
  %v5013 = vadd.f32 %v4918, %v4964
  %v5014 = vadd.f32 %v4918, %v4968
  %v5015 = vadd.f32 %v4922, %v4964
  %v5016 = vadd.f32 %v4922, %v4968
  %v5017 = vadd.f32 %v4926, %v4964
  %v5018 = vadd.f32 %v4926, %v4968
  %v5019 = vadd.f32 %v4930, %v4964
  %v5020 = vadd.f32 %v4930, %v4968
  %v5021 = vadd.f32 %v4934, %v4964
  %v5022 = vadd.f32 %v4934, %v4968
  %v5023 = vadd.f32 %v4938, %v4964
  %v5024 = vadd.f32 %v4938, %v4968
  %v5025 = vadd.f32 %v4942, %v4964
  %v5026 = vadd.f32 %v4942, %v4968
  %v5027 = vadd.f32 %v4946, %v4964
  %v5028 = vadd.f32 %v4946, %v4968
  %v5029 = vadd.f32 %v4950, %v4964
  %v5030 = vadd.f32 %v4950, %v4968
  %v5031 = vadd.f32 %v4954, %v4964
  %v5032 = vadd.f32 %v4954, %v4968
  %v5033 = vadd.f32 %v4958, %v4964
  %v5034 = vadd.f32 %v4958, %v4968
  %vm5035 = vcmp.ge.f32.partialorder %v4971, 0.0
  %vm5036 = vcmp.ge.f32.partialorder %v4972, 0.0
  %vm5037 = vcmp.ge.f32.partialorder %v4973, 0.0
  %vm5038 = vcmp.ge.f32.partialorder %v4974, 0.0
  %vm5039 = vcmp.ge.f32.partialorder %v4975, 0.0
  %vm5040 = vcmp.ge.f32.partialorder %v4976, 0.0
  %vm5041 = vcmp.ge.f32.partialorder %v4977, 0.0
  %vm5042 = vcmp.ge.f32.partialorder %v4978, 0.0
  %vm5043 = vcmp.ge.f32.partialorder %v4979, 0.0
  %vm5044 = vcmp.ge.f32.partialorder %v4980, 0.0
  %vm5045 = vcmp.ge.f32.partialorder %v4981, 0.0
  %vm5046 = vcmp.ge.f32.partialorder %v4982, 0.0
  %vm5047 = vcmp.ge.f32.partialorder %v4983, 0.0
  %vm5048 = vcmp.ge.f32.partialorder %v4984, 0.0
  %vm5049 = vcmp.ge.f32.partialorder %v4985, 0.0
  %vm5050 = vcmp.ge.f32.partialorder %v4986, 0.0
  %vm5051 = vcmp.ge.f32.partialorder %v4987, 0.0
  %vm5052 = vcmp.ge.f32.partialorder %v4988, 0.0
  %vm5053 = vcmp.ge.f32.partialorder %v4989, 0.0
  %vm5054 = vcmp.ge.f32.partialorder %v4990, 0.0
  %vm5055 = vcmp.ge.f32.partialorder %v4991, 0.0
  %vm5056 = vcmp.ge.f32.partialorder %v4992, 0.0
  %vm5057 = vcmp.ge.f32.partialorder %v4993, 0.0
  %vm5058 = vcmp.ge.f32.partialorder %v4994, 0.0
  %vm5059 = vcmp.ge.f32.partialorder %v4995, 0.0
  %vm5060 = vcmp.ge.f32.partialorder %v4996, 0.0
  %vm5061 = vcmp.ge.f32.partialorder %v4997, 0.0
  %vm5062 = vcmp.ge.f32.partialorder %v4998, 0.0
  %vm5063 = vcmp.ge.f32.partialorder %v4999, 0.0
  %vm5064 = vcmp.ge.f32.partialorder %v5000, 0.0
  %vm5065 = vcmp.ge.f32.partialorder %v5001, 0.0
  %vm5066 = vcmp.ge.f32.partialorder %v5002, 0.0
  %vm5067 = vcmp.ge.f32.partialorder %v5003, 0.0
  %vm5068 = vcmp.ge.f32.partialorder %v5004, 0.0
  %vm5069 = vcmp.ge.f32.partialorder %v5005, 0.0
  %vm5070 = vcmp.ge.f32.partialorder %v5006, 0.0
  %vm5071 = vcmp.ge.f32.partialorder %v5007, 0.0
  %vm5072 = vcmp.ge.f32.partialorder %v5008, 0.0
  %vm5073 = vcmp.ge.f32.partialorder %v5009, 0.0
  %vm5074 = vcmp.ge.f32.partialorder %v5010, 0.0
  %vm5075 = vcmp.ge.f32.partialorder %v5011, 0.0
  %vm5076 = vcmp.ge.f32.partialorder %v5012, 0.0
  %vm5077 = vcmp.ge.f32.partialorder %v5013, 0.0
  %vm5078 = vcmp.ge.f32.partialorder %v5014, 0.0
  %vm5079 = vcmp.ge.f32.partialorder %v5015, 0.0
  %vm5080 = vcmp.ge.f32.partialorder %v5016, 0.0
  %vm5081 = vcmp.ge.f32.partialorder %v5017, 0.0
  %vm5082 = vcmp.ge.f32.partialorder %v5018, 0.0
  %vm5083 = vcmp.ge.f32.partialorder %v5019, 0.0
  %vm5084 = vcmp.ge.f32.partialorder %v5020, 0.0
  %vm5085 = vcmp.ge.f32.partialorder %v5021, 0.0
  %vm5086 = vcmp.ge.f32.partialorder %v5022, 0.0
  %vm5087 = vcmp.ge.f32.partialorder %v5023, 0.0
  %vm5088 = vcmp.ge.f32.partialorder %v5024, 0.0
  %vm5089 = vcmp.ge.f32.partialorder %v5025, 0.0
  %vm5090 = vcmp.ge.f32.partialorder %v5026, 0.0
  %vm5091 = vcmp.ge.f32.partialorder %v5027, 0.0
  %vm5092 = vcmp.ge.f32.partialorder %v5028, 0.0
  %vm5093 = vcmp.ge.f32.partialorder %v5029, 0.0
  %vm5094 = vcmp.ge.f32.partialorder %v5030, 0.0
  %vm5095 = vcmp.ge.f32.partialorder %v5031, 0.0
  %vm5096 = vcmp.ge.f32.partialorder %v5032, 0.0
  %vm5097 = vcmp.ge.f32.partialorder %v5033, 0.0
  %vm5098 = vcmp.ge.f32.partialorder %v5034, 0.0
  %v5099 = vmul.f32 %v4971, 0.2
  %v5100 = vmul.f32 %v4972, 0.2
  %v5101 = vmul.f32 %v4973, 0.2
  %v5102 = vmul.f32 %v4974, 0.2
  %v5103 = vmul.f32 %v4975, 0.2
  %v5104 = vmul.f32 %v4976, 0.2
  %v5105 = vmul.f32 %v4977, 0.2
  %v5106 = vmul.f32 %v4978, 0.2
  %v5107 = vmul.f32 %v4979, 0.2
  %v5108 = vmul.f32 %v4980, 0.2
  %v5109 = vmul.f32 %v4981, 0.2
  %v5110 = vmul.f32 %v4982, 0.2
  %v5111 = vmul.f32 %v4983, 0.2
  %v5112 = vmul.f32 %v4984, 0.2
  %v5113 = vmul.f32 %v4985, 0.2
  %v5114 = vmul.f32 %v4986, 0.2
  %v5115 = vmul.f32 %v4987, 0.2
  %v5116 = vmul.f32 %v4988, 0.2
  %v5117 = vmul.f32 %v4989, 0.2
  %v5118 = vmul.f32 %v4990, 0.2
  %v5119 = vmul.f32 %v4991, 0.2
  %v5120 = vmul.f32 %v4992, 0.2
  %v5121 = vmul.f32 %v4993, 0.2
  %v5122 = vmul.f32 %v4994, 0.2
  %v5123 = vmul.f32 %v4995, 0.2
  %v5124 = vmul.f32 %v4996, 0.2
  %v5125 = vmul.f32 %v4997, 0.2
  %v5126 = vmul.f32 %v4998, 0.2
  %v5127 = vmul.f32 %v4999, 0.2
  %v5128 = vmul.f32 %v5000, 0.2
  %v5129 = vmul.f32 %v5001, 0.2
  %v5130 = vmul.f32 %v5002, 0.2
  %v5131 = vmul.f32 %v5003, 0.2
  %v5132 = vmul.f32 %v5004, 0.2
  %v5133 = vmul.f32 %v5005, 0.2
  %v5134 = vmul.f32 %v5006, 0.2
  %v5135 = vmul.f32 %v5007, 0.2
  %v5136 = vmul.f32 %v5008, 0.2
  %v5137 = vmul.f32 %v5009, 0.2
  %v5138 = vmul.f32 %v5010, 0.2
  %v5139 = vmul.f32 %v5011, 0.2
  %v5140 = vmul.f32 %v5012, 0.2
  %v5141 = vmul.f32 %v5013, 0.2
  %v5142 = vmul.f32 %v5014, 0.2
  %v5143 = vmul.f32 %v5015, 0.2
  %v5144 = vmul.f32 %v5016, 0.2
  %v5145 = vmul.f32 %v5017, 0.2
  %v5146 = vmul.f32 %v5018, 0.2
  %v5147 = vmul.f32 %v5019, 0.2
  %v5148 = vmul.f32 %v5020, 0.2
  %v5149 = vmul.f32 %v5021, 0.2
  %v5150 = vmul.f32 %v5022, 0.2
  %v5151 = vmul.f32 %v5023, 0.2
  %v5152 = vmul.f32 %v5024, 0.2
  %v5153 = vmul.f32 %v5025, 0.2
  %v5154 = vmul.f32 %v5026, 0.2
  %v5155 = vmul.f32 %v5027, 0.2
  %v5156 = vmul.f32 %v5028, 0.2
  %v5157 = vmul.f32 %v5029, 0.2
  %v5158 = vmul.f32 %v5030, 0.2
  %v5159 = vmul.f32 %v5031, 0.2
  %v5160 = vmul.f32 %v5032, 0.2
  %v5161 = vmul.f32 %v5033, 0.2
  %v5162 = vmul.f32 %v5034, 0.2
  %v5163 = vsel %vm5035, %v4971, %v5099
  %v5164 = vsel %vm5036, %v4972, %v5100
  %v5165 = vsel %vm5037, %v4973, %v5101
  %v5166 = vsel %vm5038, %v4974, %v5102
  %v5167 = vsel %vm5039, %v4975, %v5103
  %v5168 = vsel %vm5040, %v4976, %v5104
  %v5169 = vsel %vm5041, %v4977, %v5105
  %v5170 = vsel %vm5042, %v4978, %v5106
  %v5171 = vsel %vm5043, %v4979, %v5107
  %v5172 = vsel %vm5044, %v4980, %v5108
  %v5173 = vsel %vm5045, %v4981, %v5109
  %v5174 = vsel %vm5046, %v4982, %v5110
  %v5175 = vsel %vm5047, %v4983, %v5111
  %v5176 = vsel %vm5048, %v4984, %v5112
  %v5177 = vsel %vm5049, %v4985, %v5113
  %v5178 = vsel %vm5050, %v4986, %v5114
  %v5179 = vsel %vm5051, %v4987, %v5115
  %v5180 = vsel %vm5052, %v4988, %v5116
  %v5181 = vsel %vm5053, %v4989, %v5117
  %v5182 = vsel %vm5054, %v4990, %v5118
  %v5183 = vsel %vm5055, %v4991, %v5119
  %v5184 = vsel %vm5056, %v4992, %v5120
  %v5185 = vsel %vm5057, %v4993, %v5121
  %v5186 = vsel %vm5058, %v4994, %v5122
  %v5187 = vsel %vm5059, %v4995, %v5123
  %v5188 = vsel %vm5060, %v4996, %v5124
  %v5189 = vsel %vm5061, %v4997, %v5125
  %v5190 = vsel %vm5062, %v4998, %v5126
  %v5191 = vsel %vm5063, %v4999, %v5127
  %v5192 = vsel %vm5064, %v5000, %v5128
  %v5193 = vsel %vm5065, %v5001, %v5129
  %v5194 = vsel %vm5066, %v5002, %v5130
  %v5195 = vsel %vm5067, %v5003, %v5131
  %v5196 = vsel %vm5068, %v5004, %v5132
  %v5197 = vsel %vm5069, %v5005, %v5133
  %v5198 = vsel %vm5070, %v5006, %v5134
  %v5199 = vsel %vm5071, %v5007, %v5135
  %v5200 = vsel %vm5072, %v5008, %v5136
  %v5201 = vsel %vm5073, %v5009, %v5137
  %v5202 = vsel %vm5074, %v5010, %v5138
  %v5203 = vsel %vm5075, %v5011, %v5139
  %v5204 = vsel %vm5076, %v5012, %v5140
  %v5205 = vsel %vm5077, %v5013, %v5141
  %v5206 = vsel %vm5078, %v5014, %v5142
  %v5207 = vsel %vm5079, %v5015, %v5143
  %v5208 = vsel %vm5080, %v5016, %v5144
  %v5209 = vsel %vm5081, %v5017, %v5145
  %v5210 = vsel %vm5082, %v5018, %v5146
  %v5211 = vsel %vm5083, %v5019, %v5147
  %v5212 = vsel %vm5084, %v5020, %v5148
  %v5213 = vsel %vm5085, %v5021, %v5149
  %v5214 = vsel %vm5086, %v5022, %v5150
  %v5215 = vsel %vm5087, %v5023, %v5151
  %v5216 = vsel %vm5088, %v5024, %v5152
  %v5217 = vsel %vm5089, %v5025, %v5153
  %v5218 = vsel %vm5090, %v5026, %v5154
  %v5219 = vsel %vm5091, %v5027, %v5155
  %v5220 = vsel %vm5092, %v5028, %v5156
  %v5221 = vsel %vm5093, %v5029, %v5157
  %v5222 = vsel %vm5094, %v5030, %v5158
  %v5223 = vsel %vm5095, %v5031, %v5159
  %v5224 = vsel %vm5096, %v5032, %v5160
  %v5225 = vsel %vm5097, %v5033, %v5161
  %v5226 = vsel %vm5098, %v5034, %v5162
  %v5227 = vmul.f32 %v5163, %v160
  %v5228 = vmul.f32 %v5164, %v161
  %v5229 = vmul.f32 %v5165, %v162
  %v5230 = vmul.f32 %v5166, %v163
  %v5231 = vmul.f32 %v5167, %v164
  %v5232 = vmul.f32 %v5168, %v165
  %v5233 = vmul.f32 %v5169, %v166
  %v5234 = vmul.f32 %v5170, %v167
  %v5235 = vmul.f32 %v5171, %v168
  %v5236 = vmul.f32 %v5172, %v169
  %v5237 = vmul.f32 %v5173, %v170
  %v5238 = vmul.f32 %v5174, %v171
  %v5239 = vmul.f32 %v5175, %v172
  %v5240 = vmul.f32 %v5176, %v173
  %v5241 = vmul.f32 %v5177, %v174
  %v5242 = vmul.f32 %v5178, %v175
  %v5243 = vmul.f32 %v5179, %v176
  %v5244 = vmul.f32 %v5180, %v177
  %v5245 = vmul.f32 %v5181, %v178
  %v5246 = vmul.f32 %v5182, %v179
  %v5247 = vmul.f32 %v5183, %v180
  %v5248 = vmul.f32 %v5184, %v181
  %v5249 = vmul.f32 %v5185, %v182
  %v5250 = vmul.f32 %v5186, %v183
  %v5251 = vmul.f32 %v5187, %v184
  %v5252 = vmul.f32 %v5188, %v185
  %v5253 = vmul.f32 %v5189, %v186
  %v5254 = vmul.f32 %v5190, %v187
  %v5255 = vmul.f32 %v5191, %v188
  %v5256 = vmul.f32 %v5192, %v189
  %v5257 = vmul.f32 %v5193, %v190
  %v5258 = vmul.f32 %v5194, %v191
  %v5259 = vmul.f32 %v5195, %v192
  %v5260 = vmul.f32 %v5196, %v193
  %v5261 = vmul.f32 %v5197, %v194
  %v5262 = vmul.f32 %v5198, %v195
  %v5263 = vmul.f32 %v5199, %v196
  %v5264 = vmul.f32 %v5200, %v197
  %v5265 = vmul.f32 %v5201, %v198
  %v5266 = vmul.f32 %v5202, %v199
  %v5267 = vmul.f32 %v5203, %v200
  %v5268 = vmul.f32 %v5204, %v201
  %v5269 = vmul.f32 %v5205, %v202
  %v5270 = vmul.f32 %v5206, %v203
  %v5271 = vmul.f32 %v5207, %v204
  %v5272 = vmul.f32 %v5208, %v205
  %v5273 = vmul.f32 %v5209, %v206
  %v5274 = vmul.f32 %v5210, %v207
  %v5275 = vmul.f32 %v5211, %v208
  %v5276 = vmul.f32 %v5212, %v209
  %v5277 = vmul.f32 %v5213, %v210
  %v5278 = vmul.f32 %v5214, %v211
  %v5279 = vmul.f32 %v5215, %v212
  %v5280 = vmul.f32 %v5216, %v213
  %v5281 = vmul.f32 %v5217, %v214
  %v5282 = vmul.f32 %v5218, %v215
  %v5283 = vmul.f32 %v5219, %v216
  %v5284 = vmul.f32 %v5220, %v217
  %v5285 = vmul.f32 %v5221, %v218
  %v5286 = vmul.f32 %v5222, %v219
  %v5287 = vmul.f32 %v5223, %v220
  %v5288 = vmul.f32 %v5224, %v221
  %v5289 = vmul.f32 %v5225, %v222
  %v5290 = vmul.f32 %v5226, %v223
  %v5291 = vsel %vm368, %v5227, -1e+30
  %v5292 = vsel %vm369, %v5228, -1e+30
  %v5293 = vsel %vm370, %v5229, -1e+30
  %v5294 = vsel %vm371, %v5230, -1e+30
  %v5295 = vsel %vm372, %v5231, -1e+30
  %v5296 = vsel %vm373, %v5232, -1e+30
  %v5297 = vsel %vm374, %v5233, -1e+30
  %v5298 = vsel %vm375, %v5234, -1e+30
  %v5299 = vsel %vm376, %v5235, -1e+30
  %v5300 = vsel %vm377, %v5236, -1e+30
  %v5301 = vsel %vm378, %v5237, -1e+30
  %v5302 = vsel %vm379, %v5238, -1e+30
  %v5303 = vsel %vm380, %v5239, -1e+30
  %v5304 = vsel %vm381, %v5240, -1e+30
  %v5305 = vsel %vm382, %v5241, -1e+30
  %v5306 = vsel %vm383, %v5242, -1e+30
  %v5307 = vsel %vm384, %v5243, -1e+30
  %v5308 = vsel %vm385, %v5244, -1e+30
  %v5309 = vsel %vm386, %v5245, -1e+30
  %v5310 = vsel %vm387, %v5246, -1e+30
  %v5311 = vsel %vm388, %v5247, -1e+30
  %v5312 = vsel %vm389, %v5248, -1e+30
  %v5313 = vsel %vm390, %v5249, -1e+30
  %v5314 = vsel %vm391, %v5250, -1e+30
  %v5315 = vsel %vm392, %v5251, -1e+30
  %v5316 = vsel %vm393, %v5252, -1e+30
  %v5317 = vsel %vm394, %v5253, -1e+30
  %v5318 = vsel %vm395, %v5254, -1e+30
  %v5319 = vsel %vm396, %v5255, -1e+30
  %v5320 = vsel %vm397, %v5256, -1e+30
  %v5321 = vsel %vm398, %v5257, -1e+30
  %v5322 = vsel %vm399, %v5258, -1e+30
  %v5323 = vsel %vm400, %v5259, -1e+30
  %v5324 = vsel %vm401, %v5260, -1e+30
  %v5325 = vsel %vm402, %v5261, -1e+30
  %v5326 = vsel %vm403, %v5262, -1e+30
  %v5327 = vsel %vm404, %v5263, -1e+30
  %v5328 = vsel %vm405, %v5264, -1e+30
  %v5329 = vsel %vm406, %v5265, -1e+30
  %v5330 = vsel %vm407, %v5266, -1e+30
  %v5331 = vsel %vm408, %v5267, -1e+30
  %v5332 = vsel %vm409, %v5268, -1e+30
  %v5333 = vsel %vm410, %v5269, -1e+30
  %v5334 = vsel %vm411, %v5270, -1e+30
  %v5335 = vsel %vm412, %v5271, -1e+30
  %v5336 = vsel %vm413, %v5272, -1e+30
  %v5337 = vsel %vm414, %v5273, -1e+30
  %v5338 = vsel %vm415, %v5274, -1e+30
  %v5339 = vsel %vm416, %v5275, -1e+30
  %v5340 = vsel %vm417, %v5276, -1e+30
  %v5341 = vsel %vm418, %v5277, -1e+30
  %v5342 = vsel %vm419, %v5278, -1e+30
  %v5343 = vsel %vm420, %v5279, -1e+30
  %v5344 = vsel %vm421, %v5280, -1e+30
  %v5345 = vsel %vm422, %v5281, -1e+30
  %v5346 = vsel %vm423, %v5282, -1e+30
  %v5347 = vsel %vm424, %v5283, -1e+30
  %v5348 = vsel %vm425, %v5284, -1e+30
  %v5349 = vsel %vm426, %v5285, -1e+30
  %v5350 = vsel %vm427, %v5286, -1e+30
  %v5351 = vsel %vm428, %v5287, -1e+30
  %v5352 = vsel %vm429, %v5288, -1e+30
  %v5353 = vsel %vm430, %v5289, -1e+30
  %v5354 = vsel %vm431, %v5290, -1e+30
  %v5355 = vmax.f32 %v5291, %v5292
  %5356 = vmax.xlane.f32.xlu0 %v5355
  %v5357 = vpop.xlane.xlu0 %5356
  %v5358 = vmax.f32 %v5293, %v5294
  %5359 = vmax.xlane.f32.xlu0 %v5358
  %v5360 = vpop.xlane.xlu0 %5359
  %v5361 = vmax.f32 %v5295, %v5296
  %5362 = vmax.xlane.f32.xlu0 %v5361
  %v5363 = vpop.xlane.xlu0 %5362
  %v5364 = vmax.f32 %v5297, %v5298
  %5365 = vmax.xlane.f32.xlu0 %v5364
  %v5366 = vpop.xlane.xlu0 %5365
  %v5367 = vmax.f32 %v5299, %v5300
  %5368 = vmax.xlane.f32.xlu0 %v5367
  %v5369 = vpop.xlane.xlu0 %5368
  %v5370 = vmax.f32 %v5301, %v5302
  %5371 = vmax.xlane.f32.xlu0 %v5370
  %v5372 = vpop.xlane.xlu0 %5371
  %v5373 = vmax.f32 %v5303, %v5304
  %5374 = vmax.xlane.f32.xlu0 %v5373
  %v5375 = vpop.xlane.xlu0 %5374
  %v5376 = vmax.f32 %v5305, %v5306
  %5377 = vmax.xlane.f32.xlu0 %v5376
  %v5378 = vpop.xlane.xlu0 %5377
  %v5379 = vmax.f32 %v5307, %v5308
  %5380 = vmax.xlane.f32.xlu0 %v5379
  %v5381 = vpop.xlane.xlu0 %5380
  %v5382 = vmax.f32 %v5309, %v5310
  %5383 = vmax.xlane.f32.xlu0 %v5382
  %v5384 = vpop.xlane.xlu0 %5383
  %v5385 = vmax.f32 %v5311, %v5312
  %5386 = vmax.xlane.f32.xlu0 %v5385
  %v5387 = vpop.xlane.xlu0 %5386
  %v5388 = vmax.f32 %v5313, %v5314
  %5389 = vmax.xlane.f32.xlu0 %v5388
  %v5390 = vpop.xlane.xlu0 %5389
  %v5391 = vmax.f32 %v5315, %v5316
  %5392 = vmax.xlane.f32.xlu0 %v5391
  %v5393 = vpop.xlane.xlu0 %5392
  %v5394 = vmax.f32 %v5317, %v5318
  %5395 = vmax.xlane.f32.xlu0 %v5394
  %v5396 = vpop.xlane.xlu0 %5395
  %v5397 = vmax.f32 %v5319, %v5320
  %5398 = vmax.xlane.f32.xlu0 %v5397
  %v5399 = vpop.xlane.xlu0 %5398
  %v5400 = vmax.f32 %v5321, %v5322
  %5401 = vmax.xlane.f32.xlu0 %v5400
  %v5402 = vpop.xlane.xlu0 %5401
  %v5403 = vmax.f32 %v5323, %v5324
  %5404 = vmax.xlane.f32.xlu0 %v5403
  %v5405 = vpop.xlane.xlu0 %5404
  %v5406 = vmax.f32 %v5325, %v5326
  %5407 = vmax.xlane.f32.xlu0 %v5406
  %v5408 = vpop.xlane.xlu0 %5407
  %v5409 = vmax.f32 %v5327, %v5328
  %5410 = vmax.xlane.f32.xlu0 %v5409
  %v5411 = vpop.xlane.xlu0 %5410
  %v5412 = vmax.f32 %v5329, %v5330
  %5413 = vmax.xlane.f32.xlu0 %v5412
  %v5414 = vpop.xlane.xlu0 %5413
  %v5415 = vmax.f32 %v5331, %v5332
  %5416 = vmax.xlane.f32.xlu0 %v5415
  %v5417 = vpop.xlane.xlu0 %5416
  %v5418 = vmax.f32 %v5333, %v5334
  %5419 = vmax.xlane.f32.xlu0 %v5418
  %v5420 = vpop.xlane.xlu0 %5419
  %v5421 = vmax.f32 %v5335, %v5336
  %5422 = vmax.xlane.f32.xlu0 %v5421
  %v5423 = vpop.xlane.xlu0 %5422
  %v5424 = vmax.f32 %v5337, %v5338
  %5425 = vmax.xlane.f32.xlu0 %v5424
  %v5426 = vpop.xlane.xlu0 %5425
  %v5427 = vmax.f32 %v5339, %v5340
  %5428 = vmax.xlane.f32.xlu0 %v5427
  %v5429 = vpop.xlane.xlu0 %5428
  %v5430 = vmax.f32 %v5341, %v5342
  %5431 = vmax.xlane.f32.xlu0 %v5430
  %v5432 = vpop.xlane.xlu0 %5431
  %v5433 = vmax.f32 %v5343, %v5344
  %5434 = vmax.xlane.f32.xlu0 %v5433
  %v5435 = vpop.xlane.xlu0 %5434
  %v5436 = vmax.f32 %v5345, %v5346
  %5437 = vmax.xlane.f32.xlu0 %v5436
  %v5438 = vpop.xlane.xlu0 %5437
  %v5439 = vmax.f32 %v5347, %v5348
  %5440 = vmax.xlane.f32.xlu0 %v5439
  %v5441 = vpop.xlane.xlu0 %5440
  %v5442 = vmax.f32 %v5349, %v5350
  %5443 = vmax.xlane.f32.xlu0 %v5442
  %v5444 = vpop.xlane.xlu0 %5443
  %v5445 = vmax.f32 %v5351, %v5352
  %5446 = vmax.xlane.f32.xlu0 %v5445
  %v5447 = vpop.xlane.xlu0 %5446
  %v5448 = vmax.f32 %v5353, %v5354
  %5449 = vmax.xlane.f32.xlu0 %v5448
  %v5450 = vpop.xlane.xlu0 %5449
  %v5451 = vmax.f32 %v432, %v5357
  %v5452 = vmax.f32 %v433, %v5360
  %v5453 = vmax.f32 %v434, %v5363
  %v5454 = vmax.f32 %v435, %v5366
  %v5455 = vmax.f32 %v436, %v5369
  %v5456 = vmax.f32 %v437, %v5372
  %v5457 = vmax.f32 %v438, %v5375
  %v5458 = vmax.f32 %v439, %v5378
  %v5459 = vmax.f32 %v440, %v5381
  %v5460 = vmax.f32 %v441, %v5384
  %v5461 = vmax.f32 %v442, %v5387
  %v5462 = vmax.f32 %v443, %v5390
  %v5463 = vmax.f32 %v444, %v5393
  %v5464 = vmax.f32 %v445, %v5396
  %v5465 = vmax.f32 %v446, %v5399
  %v5466 = vmax.f32 %v447, %v5402
  %v5467 = vmax.f32 %v448, %v5405
  %v5468 = vmax.f32 %v449, %v5408
  %v5469 = vmax.f32 %v450, %v5411
  %v5470 = vmax.f32 %v451, %v5414
  %v5471 = vmax.f32 %v452, %v5417
  %v5472 = vmax.f32 %v453, %v5420
  %v5473 = vmax.f32 %v454, %v5423
  %v5474 = vmax.f32 %v455, %v5426
  %v5475 = vmax.f32 %v456, %v5429
  %v5476 = vmax.f32 %v457, %v5432
  %v5477 = vmax.f32 %v458, %v5435
  %v5478 = vmax.f32 %v459, %v5438
  %v5479 = vmax.f32 %v460, %v5441
  %v5480 = vmax.f32 %v461, %v5444
  %v5481 = vmax.f32 %v462, %v5447
  %v5482 = vmax.f32 %v463, %v5450
  %5484 = vset.pattern.permute.xlu0 3
  %5485 = vperm.xlu0 %5484, %v5451
  %v5486 = vpop.permute.xlu0 %5485
  %5489 = vset.pattern.permute.xlu0 3
  %5490 = vperm.xlu0 %5489, %v5452
  %v5491 = vpop.permute.xlu0 %5490
  %5494 = vset.pattern.permute.xlu0 3
  %5495 = vperm.xlu0 %5494, %v5453
  %v5496 = vpop.permute.xlu0 %5495
  %5499 = vset.pattern.permute.xlu0 3
  %5500 = vperm.xlu0 %5499, %v5454
  %v5501 = vpop.permute.xlu0 %5500
  %5504 = vset.pattern.permute.xlu0 3
  %5505 = vperm.xlu0 %5504, %v5455
  %v5506 = vpop.permute.xlu0 %5505
  %5509 = vset.pattern.permute.xlu0 3
  %5510 = vperm.xlu0 %5509, %v5456
  %v5511 = vpop.permute.xlu0 %5510
  %5514 = vset.pattern.permute.xlu0 3
  %5515 = vperm.xlu0 %5514, %v5457
  %v5516 = vpop.permute.xlu0 %5515
  %5519 = vset.pattern.permute.xlu0 3
  %5520 = vperm.xlu0 %5519, %v5458
  %v5521 = vpop.permute.xlu0 %5520
  %5524 = vset.pattern.permute.xlu0 3
  %5525 = vperm.xlu0 %5524, %v5459
  %v5526 = vpop.permute.xlu0 %5525
  %5529 = vset.pattern.permute.xlu0 3
  %5530 = vperm.xlu0 %5529, %v5460
  %v5531 = vpop.permute.xlu0 %5530
  %5534 = vset.pattern.permute.xlu0 3
  %5535 = vperm.xlu0 %5534, %v5461
  %v5536 = vpop.permute.xlu0 %5535
  %5539 = vset.pattern.permute.xlu0 3
  %5540 = vperm.xlu0 %5539, %v5462
  %v5541 = vpop.permute.xlu0 %5540
  %5544 = vset.pattern.permute.xlu0 3
  %5545 = vperm.xlu0 %5544, %v5463
  %v5546 = vpop.permute.xlu0 %5545
  %5549 = vset.pattern.permute.xlu0 3
  %5550 = vperm.xlu0 %5549, %v5464
  %v5551 = vpop.permute.xlu0 %5550
  %5554 = vset.pattern.permute.xlu0 3
  %5555 = vperm.xlu0 %5554, %v5465
  %v5556 = vpop.permute.xlu0 %5555
  %5559 = vset.pattern.permute.xlu0 3
  %5560 = vperm.xlu0 %5559, %v5466
  %v5561 = vpop.permute.xlu0 %5560
  %5564 = vset.pattern.permute.xlu0 3
  %5565 = vperm.xlu0 %5564, %v5467
  %v5566 = vpop.permute.xlu0 %5565
  %5569 = vset.pattern.permute.xlu0 3
  %5570 = vperm.xlu0 %5569, %v5468
  %v5571 = vpop.permute.xlu0 %5570
  %5574 = vset.pattern.permute.xlu0 3
  %5575 = vperm.xlu0 %5574, %v5469
  %v5576 = vpop.permute.xlu0 %5575
  %5579 = vset.pattern.permute.xlu0 3
  %5580 = vperm.xlu0 %5579, %v5470
  %v5581 = vpop.permute.xlu0 %5580
  %5584 = vset.pattern.permute.xlu0 3
  %5585 = vperm.xlu0 %5584, %v5471
  %v5586 = vpop.permute.xlu0 %5585
  %5589 = vset.pattern.permute.xlu0 3
  %5590 = vperm.xlu0 %5589, %v5472
  %v5591 = vpop.permute.xlu0 %5590
  %5594 = vset.pattern.permute.xlu0 3
  %5595 = vperm.xlu0 %5594, %v5473
  %v5596 = vpop.permute.xlu0 %5595
  %5599 = vset.pattern.permute.xlu0 3
  %5600 = vperm.xlu0 %5599, %v5474
  %v5601 = vpop.permute.xlu0 %5600
  %5604 = vset.pattern.permute.xlu0 3
  %5605 = vperm.xlu0 %5604, %v5475
  %v5606 = vpop.permute.xlu0 %5605
  %5609 = vset.pattern.permute.xlu0 3
  %5610 = vperm.xlu0 %5609, %v5476
  %v5611 = vpop.permute.xlu0 %5610
  %5614 = vset.pattern.permute.xlu0 3
  %5615 = vperm.xlu0 %5614, %v5477
  %v5616 = vpop.permute.xlu0 %5615
  %5619 = vset.pattern.permute.xlu0 3
  %5620 = vperm.xlu0 %5619, %v5478
  %v5621 = vpop.permute.xlu0 %5620
  %5624 = vset.pattern.permute.xlu0 3
  %5625 = vperm.xlu0 %5624, %v5479
  %v5626 = vpop.permute.xlu0 %5625
  %5629 = vset.pattern.permute.xlu0 3
  %5630 = vperm.xlu0 %5629, %v5480
  %v5631 = vpop.permute.xlu0 %5630
  %5634 = vset.pattern.permute.xlu0 3
  %5635 = vperm.xlu0 %5634, %v5481
  %v5636 = vpop.permute.xlu0 %5635
  %5639 = vset.pattern.permute.xlu0 3
  %5640 = vperm.xlu0 %5639, %v5482
  %v5641 = vpop.permute.xlu0 %5640
  %v5643 = vsub.f32 %v5291, %v5486
  %v5644 = vsub.f32 %v5292, %v5486
  %v5645 = vsub.f32 %v5293, %v5491
  %v5646 = vsub.f32 %v5294, %v5491
  %v5647 = vsub.f32 %v5295, %v5496
  %v5648 = vsub.f32 %v5296, %v5496
  %v5649 = vsub.f32 %v5297, %v5501
  %v5650 = vsub.f32 %v5298, %v5501
  %v5651 = vsub.f32 %v5299, %v5506
  %v5652 = vsub.f32 %v5300, %v5506
  %v5653 = vsub.f32 %v5301, %v5511
  %v5654 = vsub.f32 %v5302, %v5511
  %v5655 = vsub.f32 %v5303, %v5516
  %v5656 = vsub.f32 %v5304, %v5516
  %v5657 = vsub.f32 %v5305, %v5521
  %v5658 = vsub.f32 %v5306, %v5521
  %v5659 = vsub.f32 %v5307, %v5526
  %v5660 = vsub.f32 %v5308, %v5526
  %v5661 = vsub.f32 %v5309, %v5531
  %v5662 = vsub.f32 %v5310, %v5531
  %v5663 = vsub.f32 %v5311, %v5536
  %v5664 = vsub.f32 %v5312, %v5536
  %v5665 = vsub.f32 %v5313, %v5541
  %v5666 = vsub.f32 %v5314, %v5541
  %v5667 = vsub.f32 %v5315, %v5546
  %v5668 = vsub.f32 %v5316, %v5546
  %v5669 = vsub.f32 %v5317, %v5551
  %v5670 = vsub.f32 %v5318, %v5551
  %v5671 = vsub.f32 %v5319, %v5556
  %v5672 = vsub.f32 %v5320, %v5556
  %v5673 = vsub.f32 %v5321, %v5561
  %v5674 = vsub.f32 %v5322, %v5561
  %v5675 = vsub.f32 %v5323, %v5566
  %v5676 = vsub.f32 %v5324, %v5566
  %v5677 = vsub.f32 %v5325, %v5571
  %v5678 = vsub.f32 %v5326, %v5571
  %v5679 = vsub.f32 %v5327, %v5576
  %v5680 = vsub.f32 %v5328, %v5576
  %v5681 = vsub.f32 %v5329, %v5581
  %v5682 = vsub.f32 %v5330, %v5581
  %v5683 = vsub.f32 %v5331, %v5586
  %v5684 = vsub.f32 %v5332, %v5586
  %v5685 = vsub.f32 %v5333, %v5591
  %v5686 = vsub.f32 %v5334, %v5591
  %v5687 = vsub.f32 %v5335, %v5596
  %v5688 = vsub.f32 %v5336, %v5596
  %v5689 = vsub.f32 %v5337, %v5601
  %v5690 = vsub.f32 %v5338, %v5601
  %v5691 = vsub.f32 %v5339, %v5606
  %v5692 = vsub.f32 %v5340, %v5606
  %v5693 = vsub.f32 %v5341, %v5611
  %v5694 = vsub.f32 %v5342, %v5611
  %v5695 = vsub.f32 %v5343, %v5616
  %v5696 = vsub.f32 %v5344, %v5616
  %v5697 = vsub.f32 %v5345, %v5621
  %v5698 = vsub.f32 %v5346, %v5621
  %v5699 = vsub.f32 %v5347, %v5626
  %v5700 = vsub.f32 %v5348, %v5626
  %v5701 = vsub.f32 %v5349, %v5631
  %v5702 = vsub.f32 %v5350, %v5631
  %v5703 = vsub.f32 %v5351, %v5636
  %v5704 = vsub.f32 %v5352, %v5636
  %v5705 = vsub.f32 %v5353, %v5641
  %v5706 = vsub.f32 %v5354, %v5641
  %v5707 = vmul.f32 %v5643, 1.442695
  %v5708 = vpow.pop %v5707
  %v5709 = vmul.f32 %v5644, 1.442695
  %v5710 = vpow.pop %v5709
  %v5711 = vmul.f32 %v5645, 1.442695
  %v5712 = vpow.pop %v5711
  %v5713 = vmul.f32 %v5646, 1.442695
  %v5714 = vpow.pop %v5713
  %v5715 = vmul.f32 %v5647, 1.442695
  %v5716 = vpow.pop %v5715
  %v5717 = vmul.f32 %v5648, 1.442695
  %v5718 = vpow.pop %v5717
  %v5719 = vmul.f32 %v5649, 1.442695
  %v5720 = vpow.pop %v5719
  %v5721 = vmul.f32 %v5650, 1.442695
  %v5722 = vpow.pop %v5721
  %v5723 = vmul.f32 %v5651, 1.442695
  %v5724 = vpow.pop %v5723
  %v5725 = vmul.f32 %v5652, 1.442695
  %v5726 = vpow.pop %v5725
  %v5727 = vmul.f32 %v5653, 1.442695
  %v5728 = vpow.pop %v5727
  %v5729 = vmul.f32 %v5654, 1.442695
  %v5730 = vpow.pop %v5729
  %v5731 = vmul.f32 %v5655, 1.442695
  %v5732 = vpow.pop %v5731
  %v5733 = vmul.f32 %v5656, 1.442695
  %v5734 = vpow.pop %v5733
  %v5735 = vmul.f32 %v5657, 1.442695
  %v5736 = vpow.pop %v5735
  %v5737 = vmul.f32 %v5658, 1.442695
  %v5738 = vpow.pop %v5737
  %v5739 = vmul.f32 %v5659, 1.442695
  %v5740 = vpow.pop %v5739
  %v5741 = vmul.f32 %v5660, 1.442695
  %v5742 = vpow.pop %v5741
  %v5743 = vmul.f32 %v5661, 1.442695
  %v5744 = vpow.pop %v5743
  %v5745 = vmul.f32 %v5662, 1.442695
  %v5746 = vpow.pop %v5745
  %v5747 = vmul.f32 %v5663, 1.442695
  %v5748 = vpow.pop %v5747
  %v5749 = vmul.f32 %v5664, 1.442695
  %v5750 = vpow.pop %v5749
  %v5751 = vmul.f32 %v5665, 1.442695
  %v5752 = vpow.pop %v5751
  %v5753 = vmul.f32 %v5666, 1.442695
  %v5754 = vpow.pop %v5753
  %v5755 = vmul.f32 %v5667, 1.442695
  %v5756 = vpow.pop %v5755
  %v5757 = vmul.f32 %v5668, 1.442695
  %v5758 = vpow.pop %v5757
  %v5759 = vmul.f32 %v5669, 1.442695
  %v5760 = vpow.pop %v5759
  %v5761 = vmul.f32 %v5670, 1.442695
  %v5762 = vpow.pop %v5761
  %v5763 = vmul.f32 %v5671, 1.442695
  %v5764 = vpow.pop %v5763
  %v5765 = vmul.f32 %v5672, 1.442695
  %v5766 = vpow.pop %v5765
  %v5767 = vmul.f32 %v5673, 1.442695
  %v5768 = vpow.pop %v5767
  %v5769 = vmul.f32 %v5674, 1.442695
  %v5770 = vpow.pop %v5769
  %v5771 = vmul.f32 %v5675, 1.442695
  %v5772 = vpow.pop %v5771
  %v5773 = vmul.f32 %v5676, 1.442695
  %v5774 = vpow.pop %v5773
  %v5775 = vmul.f32 %v5677, 1.442695
  %v5776 = vpow.pop %v5775
  %v5777 = vmul.f32 %v5678, 1.442695
  %v5778 = vpow.pop %v5777
  %v5779 = vmul.f32 %v5679, 1.442695
  %v5780 = vpow.pop %v5779
  %v5781 = vmul.f32 %v5680, 1.442695
  %v5782 = vpow.pop %v5781
  %v5783 = vmul.f32 %v5681, 1.442695
  %v5784 = vpow.pop %v5783
  %v5785 = vmul.f32 %v5682, 1.442695
  %v5786 = vpow.pop %v5785
  %v5787 = vmul.f32 %v5683, 1.442695
  %v5788 = vpow.pop %v5787
  %v5789 = vmul.f32 %v5684, 1.442695
  %v5790 = vpow.pop %v5789
  %v5791 = vmul.f32 %v5685, 1.442695
  %v5792 = vpow.pop %v5791
  %v5793 = vmul.f32 %v5686, 1.442695
  %v5794 = vpow.pop %v5793
  %v5795 = vmul.f32 %v5687, 1.442695
  %v5796 = vpow.pop %v5795
  %v5797 = vmul.f32 %v5688, 1.442695
  %v5798 = vpow.pop %v5797
  %v5799 = vmul.f32 %v5689, 1.442695
  %v5800 = vpow.pop %v5799
  %v5801 = vmul.f32 %v5690, 1.442695
  %v5802 = vpow.pop %v5801
  %v5803 = vmul.f32 %v5691, 1.442695
  %v5804 = vpow.pop %v5803
  %v5805 = vmul.f32 %v5692, 1.442695
  %v5806 = vpow.pop %v5805
  %v5807 = vmul.f32 %v5693, 1.442695
  %v5808 = vpow.pop %v5807
  %v5809 = vmul.f32 %v5694, 1.442695
  %v5810 = vpow.pop %v5809
  %v5811 = vmul.f32 %v5695, 1.442695
  %v5812 = vpow.pop %v5811
  %v5813 = vmul.f32 %v5696, 1.442695
  %v5814 = vpow.pop %v5813
  %v5815 = vmul.f32 %v5697, 1.442695
  %v5816 = vpow.pop %v5815
  %v5817 = vmul.f32 %v5698, 1.442695
  %v5818 = vpow.pop %v5817
  %v5819 = vmul.f32 %v5699, 1.442695
  %v5820 = vpow.pop %v5819
  %v5821 = vmul.f32 %v5700, 1.442695
  %v5822 = vpow.pop %v5821
  %v5823 = vmul.f32 %v5701, 1.442695
  %v5824 = vpow.pop %v5823
  %v5825 = vmul.f32 %v5702, 1.442695
  %v5826 = vpow.pop %v5825
  %v5827 = vmul.f32 %v5703, 1.442695
  %v5828 = vpow.pop %v5827
  %v5829 = vmul.f32 %v5704, 1.442695
  %v5830 = vpow.pop %v5829
  %v5831 = vmul.f32 %v5705, 1.442695
  %v5832 = vpow.pop %v5831
  %v5833 = vmul.f32 %v5706, 1.442695
  %v5834 = vpow.pop %v5833
  %v5835 = vmul.f32 %v5708, %v304
  %v5836 = vmul.f32 %v5710, %v305
  %v5837 = vmul.f32 %v5712, %v306
  %v5838 = vmul.f32 %v5714, %v307
  %v5839 = vmul.f32 %v5716, %v308
  %v5840 = vmul.f32 %v5718, %v309
  %v5841 = vmul.f32 %v5720, %v310
  %v5842 = vmul.f32 %v5722, %v311
  %v5843 = vmul.f32 %v5724, %v312
  %v5844 = vmul.f32 %v5726, %v313
  %v5845 = vmul.f32 %v5728, %v314
  %v5846 = vmul.f32 %v5730, %v315
  %v5847 = vmul.f32 %v5732, %v316
  %v5848 = vmul.f32 %v5734, %v317
  %v5849 = vmul.f32 %v5736, %v318
  %v5850 = vmul.f32 %v5738, %v319
  %v5851 = vmul.f32 %v5740, %v320
  %v5852 = vmul.f32 %v5742, %v321
  %v5853 = vmul.f32 %v5744, %v322
  %v5854 = vmul.f32 %v5746, %v323
  %v5855 = vmul.f32 %v5748, %v324
  %v5856 = vmul.f32 %v5750, %v325
  %v5857 = vmul.f32 %v5752, %v326
  %v5858 = vmul.f32 %v5754, %v327
  %v5859 = vmul.f32 %v5756, %v328
  %v5860 = vmul.f32 %v5758, %v329
  %v5861 = vmul.f32 %v5760, %v330
  %v5862 = vmul.f32 %v5762, %v331
  %v5863 = vmul.f32 %v5764, %v332
  %v5864 = vmul.f32 %v5766, %v333
  %v5865 = vmul.f32 %v5768, %v334
  %v5866 = vmul.f32 %v5770, %v335
  %v5867 = vmul.f32 %v5772, %v336
  %v5868 = vmul.f32 %v5774, %v337
  %v5869 = vmul.f32 %v5776, %v338
  %v5870 = vmul.f32 %v5778, %v339
  %v5871 = vmul.f32 %v5780, %v340
  %v5872 = vmul.f32 %v5782, %v341
  %v5873 = vmul.f32 %v5784, %v342
  %v5874 = vmul.f32 %v5786, %v343
  %v5875 = vmul.f32 %v5788, %v344
  %v5876 = vmul.f32 %v5790, %v345
  %v5877 = vmul.f32 %v5792, %v346
  %v5878 = vmul.f32 %v5794, %v347
  %v5879 = vmul.f32 %v5796, %v348
  %v5880 = vmul.f32 %v5798, %v349
  %v5881 = vmul.f32 %v5800, %v350
  %v5882 = vmul.f32 %v5802, %v351
  %v5883 = vmul.f32 %v5804, %v352
  %v5884 = vmul.f32 %v5806, %v353
  %v5885 = vmul.f32 %v5808, %v354
  %v5886 = vmul.f32 %v5810, %v355
  %v5887 = vmul.f32 %v5812, %v356
  %v5888 = vmul.f32 %v5814, %v357
  %v5889 = vmul.f32 %v5816, %v358
  %v5890 = vmul.f32 %v5818, %v359
  %v5891 = vmul.f32 %v5820, %v360
  %v5892 = vmul.f32 %v5822, %v361
  %v5893 = vmul.f32 %v5824, %v362
  %v5894 = vmul.f32 %v5826, %v363
  %v5895 = vmul.f32 %v5828, %v364
  %v5896 = vmul.f32 %v5830, %v365
  %v5897 = vmul.f32 %v5832, %v366
  %v5898 = vmul.f32 %v5834, %v367
  %v5899 = vadd.f32 %v5835, %v5836
  %5900 = vadd.xlane.f32.xlu0 %v5899
  %v5901 = vpop.xlane.xlu0 %5900
  %v5902 = vadd.f32 %v5837, %v5838
  %5903 = vadd.xlane.f32.xlu0 %v5902
  %v5904 = vpop.xlane.xlu0 %5903
  %v5905 = vadd.f32 %v5839, %v5840
  %5906 = vadd.xlane.f32.xlu0 %v5905
  %v5907 = vpop.xlane.xlu0 %5906
  %v5908 = vadd.f32 %v5841, %v5842
  %5909 = vadd.xlane.f32.xlu0 %v5908
  %v5910 = vpop.xlane.xlu0 %5909
  %v5911 = vadd.f32 %v5843, %v5844
  %5912 = vadd.xlane.f32.xlu0 %v5911
  %v5913 = vpop.xlane.xlu0 %5912
  %v5914 = vadd.f32 %v5845, %v5846
  %5915 = vadd.xlane.f32.xlu0 %v5914
  %v5916 = vpop.xlane.xlu0 %5915
  %v5917 = vadd.f32 %v5847, %v5848
  %5918 = vadd.xlane.f32.xlu0 %v5917
  %v5919 = vpop.xlane.xlu0 %5918
  %v5920 = vadd.f32 %v5849, %v5850
  %5921 = vadd.xlane.f32.xlu0 %v5920
  %v5922 = vpop.xlane.xlu0 %5921
  %v5923 = vadd.f32 %v5851, %v5852
  %5924 = vadd.xlane.f32.xlu0 %v5923
  %v5925 = vpop.xlane.xlu0 %5924
  %v5926 = vadd.f32 %v5853, %v5854
  %5927 = vadd.xlane.f32.xlu0 %v5926
  %v5928 = vpop.xlane.xlu0 %5927
  %v5929 = vadd.f32 %v5855, %v5856
  %5930 = vadd.xlane.f32.xlu0 %v5929
  %v5931 = vpop.xlane.xlu0 %5930
  %v5932 = vadd.f32 %v5857, %v5858
  %5933 = vadd.xlane.f32.xlu0 %v5932
  %v5934 = vpop.xlane.xlu0 %5933
  %v5935 = vadd.f32 %v5859, %v5860
  %5936 = vadd.xlane.f32.xlu0 %v5935
  %v5937 = vpop.xlane.xlu0 %5936
  %v5938 = vadd.f32 %v5861, %v5862
  %5939 = vadd.xlane.f32.xlu0 %v5938
  %v5940 = vpop.xlane.xlu0 %5939
  %v5941 = vadd.f32 %v5863, %v5864
  %5942 = vadd.xlane.f32.xlu0 %v5941
  %v5943 = vpop.xlane.xlu0 %5942
  %v5944 = vadd.f32 %v5865, %v5866
  %5945 = vadd.xlane.f32.xlu0 %v5944
  %v5946 = vpop.xlane.xlu0 %5945
  %v5947 = vadd.f32 %v5867, %v5868
  %5948 = vadd.xlane.f32.xlu0 %v5947
  %v5949 = vpop.xlane.xlu0 %5948
  %v5950 = vadd.f32 %v5869, %v5870
  %5951 = vadd.xlane.f32.xlu0 %v5950
  %v5952 = vpop.xlane.xlu0 %5951
  %v5953 = vadd.f32 %v5871, %v5872
  %5954 = vadd.xlane.f32.xlu0 %v5953
  %v5955 = vpop.xlane.xlu0 %5954
  %v5956 = vadd.f32 %v5873, %v5874
  %5957 = vadd.xlane.f32.xlu0 %v5956
  %v5958 = vpop.xlane.xlu0 %5957
  %v5959 = vadd.f32 %v5875, %v5876
  %5960 = vadd.xlane.f32.xlu0 %v5959
  %v5961 = vpop.xlane.xlu0 %5960
  %v5962 = vadd.f32 %v5877, %v5878
  %5963 = vadd.xlane.f32.xlu0 %v5962
  %v5964 = vpop.xlane.xlu0 %5963
  %v5965 = vadd.f32 %v5879, %v5880
  %5966 = vadd.xlane.f32.xlu0 %v5965
  %v5967 = vpop.xlane.xlu0 %5966
  %v5968 = vadd.f32 %v5881, %v5882
  %5969 = vadd.xlane.f32.xlu0 %v5968
  %v5970 = vpop.xlane.xlu0 %5969
  %v5971 = vadd.f32 %v5883, %v5884
  %5972 = vadd.xlane.f32.xlu0 %v5971
  %v5973 = vpop.xlane.xlu0 %5972
  %v5974 = vadd.f32 %v5885, %v5886
  %5975 = vadd.xlane.f32.xlu0 %v5974
  %v5976 = vpop.xlane.xlu0 %5975
  %v5977 = vadd.f32 %v5887, %v5888
  %5978 = vadd.xlane.f32.xlu0 %v5977
  %v5979 = vpop.xlane.xlu0 %5978
  %v5980 = vadd.f32 %v5889, %v5890
  %5981 = vadd.xlane.f32.xlu0 %v5980
  %v5982 = vpop.xlane.xlu0 %5981
  %v5983 = vadd.f32 %v5891, %v5892
  %5984 = vadd.xlane.f32.xlu0 %v5983
  %v5985 = vpop.xlane.xlu0 %5984
  %v5986 = vadd.f32 %v5893, %v5894
  %5987 = vadd.xlane.f32.xlu0 %v5986
  %v5988 = vpop.xlane.xlu0 %5987
  %v5989 = vadd.f32 %v5895, %v5896
  %5990 = vadd.xlane.f32.xlu0 %v5989
  %v5991 = vpop.xlane.xlu0 %5990
  %v5992 = vadd.f32 %v5897, %v5898
  %5993 = vadd.xlane.f32.xlu0 %v5992
  %v5994 = vpop.xlane.xlu0 %5993
  %v5995 = vpack.c.bf16 %v5837, %v5835
  %v5996 = vpack.c.bf16 %v5838, %v5836
  %v5997 = vpack.c.bf16 %v5841, %v5839
  %v5998 = vpack.c.bf16 %v5842, %v5840
  %v5999 = vpack.c.bf16 %v5845, %v5843
  %v6000 = vpack.c.bf16 %v5846, %v5844
  %v6001 = vpack.c.bf16 %v5849, %v5847
  %v6002 = vpack.c.bf16 %v5850, %v5848
  %v6003 = vpack.c.bf16 %v5853, %v5851
  %v6004 = vpack.c.bf16 %v5854, %v5852
  %v6005 = vpack.c.bf16 %v5857, %v5855
  %v6006 = vpack.c.bf16 %v5858, %v5856
  %v6007 = vpack.c.bf16 %v5861, %v5859
  %v6008 = vpack.c.bf16 %v5862, %v5860
  %v6009 = vpack.c.bf16 %v5865, %v5863
  %v6010 = vpack.c.bf16 %v5866, %v5864
  %v6011 = vpack.c.bf16 %v5869, %v5867
  %v6012 = vpack.c.bf16 %v5870, %v5868
  %v6013 = vpack.c.bf16 %v5873, %v5871
  %v6014 = vpack.c.bf16 %v5874, %v5872
  %v6015 = vpack.c.bf16 %v5877, %v5875
  %v6016 = vpack.c.bf16 %v5878, %v5876
  %v6017 = vpack.c.bf16 %v5881, %v5879
  %v6018 = vpack.c.bf16 %v5882, %v5880
  %v6019 = vpack.c.bf16 %v5885, %v5883
  %v6020 = vpack.c.bf16 %v5886, %v5884
  %v6021 = vpack.c.bf16 %v5889, %v5887
  %v6022 = vpack.c.bf16 %v5890, %v5888
  %v6023 = vpack.c.bf16 %v5893, %v5891
  %v6024 = vpack.c.bf16 %v5894, %v5892
  %v6025 = vpack.c.bf16 %v5897, %v5895
  %v6026 = vpack.c.bf16 %v5898, %v5896
  %6027 = vrot.lane.b32.xlu0 %v1825, 32
  %v6028 = vpop.permute.xlu0 %6027
  %6029 = vrot.lane.b32.xlu0 %v1826, 32
  %v6030 = vpop.permute.xlu0 %6029
  %6031 = vrot.lane.b32.xlu0 %v1827, 32
  %v6032 = vpop.permute.xlu0 %6031
  %6033 = vrot.lane.b32.xlu0 %v1828, 32
  %v6034 = vpop.permute.xlu0 %6033
  %6035 = vrot.lane.b32.xlu0 %v1829, 32
  %v6036 = vpop.permute.xlu0 %6035
  %6037 = vrot.lane.b32.xlu0 %v1830, 32
  %v6038 = vpop.permute.xlu0 %6037
  %6039 = vrot.lane.b32.xlu0 %v1831, 32
  %v6040 = vpop.permute.xlu0 %6039
  %6041 = vrot.lane.b32.xlu0 %v1832, 32
  %v6042 = vpop.permute.xlu0 %6041
  %6043 = vrot.lane.b32.xlu0 %v1833, 32
  %v6044 = vpop.permute.xlu0 %6043
  %6045 = vrot.lane.b32.xlu0 %v1834, 32
  %v6046 = vpop.permute.xlu0 %6045
  %6047 = vrot.lane.b32.xlu0 %v1835, 32
  %v6048 = vpop.permute.xlu0 %6047
  %6049 = vrot.lane.b32.xlu0 %v1836, 32
  %v6050 = vpop.permute.xlu0 %6049
  %6051 = vrot.lane.b32.xlu0 %v1837, 32
  %v6052 = vpop.permute.xlu0 %6051
  %6053 = vrot.lane.b32.xlu0 %v1838, 32
  %v6054 = vpop.permute.xlu0 %6053
  %6055 = vrot.lane.b32.xlu0 %v1839, 32
  %v6056 = vpop.permute.xlu0 %6055
  %6057 = vrot.lane.b32.xlu0 %v1840, 32
  %v6058 = vpop.permute.xlu0 %6057
  %6075 = vmatprep.subr.bf16.mxu0 0
  %6076 = vmatpush1.bf16.msra.mxu0 %v6028
  %6077 = vmatprep.subr.bf16.mxu0 0
  %6078 = vmatpush1.bf16.msra.mxu0 %v6030
  %6079 = vmatprep.subr.bf16.mxu0 0
  %6080 = vmatpush1.bf16.msra.mxu0 %v6032
  %6081 = vmatprep.subr.bf16.mxu0 0
  %6082 = vmatpush1.bf16.msra.mxu0 %v6034
  %6083 = vmatprep.subr.bf16.mxu0 0
  %6084 = vmatpush1.bf16.msra.mxu0 %v6036
  %6085 = vmatprep.subr.bf16.mxu0 0
  %6086 = vmatpush1.bf16.msra.mxu0 %v6038
  %6087 = vmatprep.subr.bf16.mxu0 0
  %6088 = vmatpush1.bf16.msra.mxu0 %v6040
  %6089 = vmatprep.subr.bf16.mxu0 0
  %6090 = vmatpush1.bf16.msra.mxu0 %v6042
  %6091 = vmatprep.subr.bf16.mxu0 0
  %6092 = vmatpush1.bf16.msra.mxu0 %v6044
  %6093 = vmatprep.subr.bf16.mxu0 0
  %6094 = vmatpush1.bf16.msra.mxu0 %v6046
  %6095 = vmatprep.subr.bf16.mxu0 0
  %6096 = vmatpush1.bf16.msra.mxu0 %v6048
  %6097 = vmatprep.subr.bf16.mxu0 0
  %6098 = vmatpush1.bf16.msra.mxu0 %v6050
  %6099 = vmatprep.subr.bf16.mxu0 0
  %6100 = vmatpush1.bf16.msra.mxu0 %v6052
  %6101 = vmatprep.subr.bf16.mxu0 0
  %6102 = vmatpush1.bf16.msra.mxu0 %v6054
  %6103 = vmatprep.subr.bf16.mxu0 0
  %6104 = vmatpush1.bf16.msra.mxu0 %v6056
  %6105 = vmatprep.subr.bf16.mxu0 0
  %6106 = vmatpush1.bf16.msra.mxu0 %v6058
  %6107 = vmatprep.mubr.bf16.mxu0 %v5996
  %6108 = vmatmul.mubr.bf16.gmra.mrb[0].mxu0 %v5995
  %v6109 = vpop.f32.mrb[0].mxu0
  %v6110 = vadd.f32 0.0, %v6109
  %v6111 = vpop.f32.mrb[0].mxu0
  %v6112 = vpop.f32.mrb[0].mxu0
  %v6113 = vadd.f32 0.0, %v6112
  %v6114 = vpop.f32.mrb[0].mxu0
  %6115 = vmatprep.mubr.bf16.mxu0 %v5998
  %6116 = vmatmul.mubr.bf16.gmra.mrb[0].mxu0 %v5997
  %v6117 = vpop.f32.mrb[0].mxu0
  %v6118 = vadd.f32 0.0, %v6117
  %v6119 = vpop.f32.mrb[0].mxu0
  %v6120 = vpop.f32.mrb[0].mxu0
  %v6121 = vadd.f32 0.0, %v6120
  %v6122 = vpop.f32.mrb[0].mxu0
  %6123 = vmatprep.mubr.bf16.mxu0 %v6000
  %6124 = vmatmul.mubr.bf16.gmra.mrb[0].mxu0 %v5999
  %v6125 = vpop.f32.mrb[0].mxu0
  %v6126 = vadd.f32 0.0, %v6125
  %v6127 = vpop.f32.mrb[0].mxu0
  %v6128 = vpop.f32.mrb[0].mxu0
  %v6129 = vadd.f32 0.0, %v6128
  %v6130 = vpop.f32.mrb[0].mxu0
  %6131 = vmatprep.mubr.bf16.mxu0 %v6002
  %6132 = vmatmul.mubr.bf16.gmra.mrb[0].mxu0 %v6001
  %v6133 = vpop.f32.mrb[0].mxu0
  %v6134 = vadd.f32 0.0, %v6133
  %v6135 = vpop.f32.mrb[0].mxu0
  %v6136 = vpop.f32.mrb[0].mxu0
  %v6137 = vadd.f32 0.0, %v6136
  %v6138 = vpop.f32.mrb[0].mxu0
  %6139 = vmatprep.mubr.bf16.mxu0 %v6004
  %6140 = vmatmul.mubr.bf16.gmra.mrb[0].mxu0 %v6003
  %v6141 = vpop.f32.mrb[0].mxu0
  %v6142 = vadd.f32 0.0, %v6141
  %v6143 = vpop.f32.mrb[0].mxu0
  %v6144 = vpop.f32.mrb[0].mxu0
  %v6145 = vadd.f32 0.0, %v6144
  %v6146 = vpop.f32.mrb[0].mxu0
  %6147 = vmatprep.mubr.bf16.mxu0 %v6006
  %6148 = vmatmul.mubr.bf16.gmra.mrb[0].mxu0 %v6005
  %v6149 = vpop.f32.mrb[0].mxu0
  %v6150 = vadd.f32 0.0, %v6149
  %v6151 = vpop.f32.mrb[0].mxu0
  %v6152 = vpop.f32.mrb[0].mxu0
  %v6153 = vadd.f32 0.0, %v6152
  %v6154 = vpop.f32.mrb[0].mxu0
  %6155 = vmatprep.mubr.bf16.mxu0 %v6008
  %6156 = vmatmul.mubr.bf16.gmra.mrb[0].mxu0 %v6007
  %v6157 = vpop.f32.mrb[0].mxu0
  %v6158 = vadd.f32 0.0, %v6157
  %v6159 = vpop.f32.mrb[0].mxu0
  %v6160 = vpop.f32.mrb[0].mxu0
  %v6161 = vadd.f32 0.0, %v6160
  %v6162 = vpop.f32.mrb[0].mxu0
  %6163 = vmatprep.mubr.bf16.mxu0 %v6010
  %6164 = vmatmul.mubr.bf16.gmra.mrb[0].mxu0 %v6009
  %v6165 = vpop.f32.mrb[0].mxu0
  %v6166 = vadd.f32 0.0, %v6165
  %v6167 = vpop.f32.mrb[0].mxu0
  %v6168 = vpop.f32.mrb[0].mxu0
  %v6169 = vadd.f32 0.0, %v6168
  %v6170 = vpop.f32.mrb[0].mxu0
  %6171 = vmatprep.mubr.bf16.mxu0 %v6012
  %6172 = vmatmul.mubr.bf16.gmra.mrb[0].mxu0 %v6011
  %v6173 = vpop.f32.mrb[0].mxu0
  %v6174 = vadd.f32 0.0, %v6173
  %v6175 = vpop.f32.mrb[0].mxu0
  %v6176 = vpop.f32.mrb[0].mxu0
  %v6177 = vadd.f32 0.0, %v6176
  %v6178 = vpop.f32.mrb[0].mxu0
  %6179 = vmatprep.mubr.bf16.mxu0 %v6014
  %6180 = vmatmul.mubr.bf16.gmra.mrb[0].mxu0 %v6013
  %v6181 = vpop.f32.mrb[0].mxu0
  %v6182 = vadd.f32 0.0, %v6181
  %v6183 = vpop.f32.mrb[0].mxu0
  %v6184 = vpop.f32.mrb[0].mxu0
  %v6185 = vadd.f32 0.0, %v6184
  %v6186 = vpop.f32.mrb[0].mxu0
  %6187 = vmatprep.mubr.bf16.mxu0 %v6016
  %6188 = vmatmul.mubr.bf16.gmra.mrb[0].mxu0 %v6015
  %v6189 = vpop.f32.mrb[0].mxu0
  %v6190 = vadd.f32 0.0, %v6189
  %v6191 = vpop.f32.mrb[0].mxu0
  %v6192 = vpop.f32.mrb[0].mxu0
  %v6193 = vadd.f32 0.0, %v6192
  %v6194 = vpop.f32.mrb[0].mxu0
  %6195 = vmatprep.mubr.bf16.mxu0 %v6018
  %6196 = vmatmul.mubr.bf16.gmra.mrb[0].mxu0 %v6017
  %v6197 = vpop.f32.mrb[0].mxu0
  %v6198 = vadd.f32 0.0, %v6197
  %v6199 = vpop.f32.mrb[0].mxu0
  %v6200 = vpop.f32.mrb[0].mxu0
  %v6201 = vadd.f32 0.0, %v6200
  %v6202 = vpop.f32.mrb[0].mxu0
  %6203 = vmatprep.mubr.bf16.mxu0 %v6020
  %6204 = vmatmul.mubr.bf16.gmra.mrb[0].mxu0 %v6019
  %v6205 = vpop.f32.mrb[0].mxu0
  %v6206 = vadd.f32 0.0, %v6205
  %v6207 = vpop.f32.mrb[0].mxu0
  %v6208 = vpop.f32.mrb[0].mxu0
  %v6209 = vadd.f32 0.0, %v6208
  %v6210 = vpop.f32.mrb[0].mxu0
  %6211 = vmatprep.mubr.bf16.mxu0 %v6022
  %6212 = vmatmul.mubr.bf16.gmra.mrb[0].mxu0 %v6021
  %v6213 = vpop.f32.mrb[0].mxu0
  %v6214 = vadd.f32 0.0, %v6213
  %v6215 = vpop.f32.mrb[0].mxu0
  %v6216 = vpop.f32.mrb[0].mxu0
  %v6217 = vadd.f32 0.0, %v6216
  %v6218 = vpop.f32.mrb[0].mxu0
  %6219 = vmatprep.mubr.bf16.mxu0 %v6024
  %6220 = vmatmul.mubr.bf16.gmra.mrb[0].mxu0 %v6023
  %v6221 = vpop.f32.mrb[0].mxu0
  %v6222 = vadd.f32 0.0, %v6221
  %v6223 = vpop.f32.mrb[0].mxu0
  %v6224 = vpop.f32.mrb[0].mxu0
  %v6225 = vadd.f32 0.0, %v6224
  %v6226 = vpop.f32.mrb[0].mxu0
  %6227 = vmatprep.mubr.bf16.mxu0 %v6026
  %6228 = vmatmul.mubr.bf16.gmra.mrb[0].mxu0 %v6025
  %v6229 = vpop.f32.mrb[0].mxu0
  %v6230 = vadd.f32 0.0, %v6229
  %v6231 = vpop.f32.mrb[0].mxu0
  %v6232 = vpop.f32.mrb[0].mxu0
  %v6233 = vadd.f32 0.0, %v6232
  %v6234 = vpop.f32.mrb[0].mxu0
  %6235 = vdwg.mxu0
  %vm6236 = vcmask 7168
  %v6237 = vsel %vm6236, %v1149, %v2639
  %v6238 = vsel %vm6236, %v1150, %v2640
  %v6239 = vsel %vm6236, %v1151, %v2641
  %v6240 = vsel %vm6236, %v1152, %v2642
  %v6241 = vsel %vm6236, %v1153, %v2643
  %v6242 = vsel %vm6236, %v1154, %v2644
  %v6243 = vsel %vm6236, %v1155, %v2645
  %v6244 = vsel %vm6236, %v1156, %v2646
  %v6245 = vsel %vm6236, %v1157, %v2647
  %v6246 = vsel %vm6236, %v1158, %v2648
  %v6247 = vsel %vm6236, %v1159, %v2649
  %v6248 = vsel %vm6236, %v1160, %v2650
  %v6249 = vsel %vm6236, %v1161, %v2651
  %v6250 = vsel %vm6236, %v1162, %v2652
  %v6251 = vsel %vm6236, %v1163, %v2653
  %v6252 = vsel %vm6236, %v1164, %v2654
  %v6253 = vsel %vm6236, %v1165, %v2655
  %v6254 = vsel %vm6236, %v1166, %v2656
  %v6255 = vsel %vm6236, %v1167, %v2657
  %v6256 = vsel %vm6236, %v1168, %v2658
  %v6257 = vsel %vm6236, %v1169, %v2659
  %v6258 = vsel %vm6236, %v1170, %v2660
  %v6259 = vsel %vm6236, %v1171, %v2661
  %v6260 = vsel %vm6236, %v1172, %v2662
  %v6261 = vsel %vm6236, %v1173, %v2663
  %v6262 = vsel %vm6236, %v1174, %v2664
  %v6263 = vsel %vm6236, %v1175, %v2665
  %v6264 = vsel %vm6236, %v1176, %v2666
  %v6265 = vsel %vm6236, %v1177, %v2667
  %v6266 = vsel %vm6236, %v1178, %v2668
  %v6267 = vsel %vm6236, %v1179, %v2669
  %v6268 = vsel %vm6236, %v1180, %v2670
  %vm6269 = vcmask 15360
  %v6270 = vsel %vm6269, %v6237, %v4045
  %v6271 = vsel %vm6269, %v6238, %v4046
  %v6272 = vsel %vm6269, %v6239, %v4047
  %v6273 = vsel %vm6269, %v6240, %v4048
  %v6274 = vsel %vm6269, %v6241, %v4049
  %v6275 = vsel %vm6269, %v6242, %v4050
  %v6276 = vsel %vm6269, %v6243, %v4051
  %v6277 = vsel %vm6269, %v6244, %v4052
  %v6278 = vsel %vm6269, %v6245, %v4053
  %v6279 = vsel %vm6269, %v6246, %v4054
  %v6280 = vsel %vm6269, %v6247, %v4055
  %v6281 = vsel %vm6269, %v6248, %v4056
  %v6282 = vsel %vm6269, %v6249, %v4057
  %v6283 = vsel %vm6269, %v6250, %v4058
  %v6284 = vsel %vm6269, %v6251, %v4059
  %v6285 = vsel %vm6269, %v6252, %v4060
  %v6286 = vsel %vm6269, %v6253, %v4061
  %v6287 = vsel %vm6269, %v6254, %v4062
  %v6288 = vsel %vm6269, %v6255, %v4063
  %v6289 = vsel %vm6269, %v6256, %v4064
  %v6290 = vsel %vm6269, %v6257, %v4065
  %v6291 = vsel %vm6269, %v6258, %v4066
  %v6292 = vsel %vm6269, %v6259, %v4067
  %v6293 = vsel %vm6269, %v6260, %v4068
  %v6294 = vsel %vm6269, %v6261, %v4069
  %v6295 = vsel %vm6269, %v6262, %v4070
  %v6296 = vsel %vm6269, %v6263, %v4071
  %v6297 = vsel %vm6269, %v6264, %v4072
  %v6298 = vsel %vm6269, %v6265, %v4073
  %v6299 = vsel %vm6269, %v6266, %v4074
  %v6300 = vsel %vm6269, %v6267, %v4075
  %v6301 = vsel %vm6269, %v6268, %v4076
  %vm6302 = vcmask 23552
  %v6303 = vsel %vm6302, %v6270, %v5451
  %v6304 = vsel %vm6302, %v6271, %v5452
  %v6305 = vsel %vm6302, %v6272, %v5453
  %v6306 = vsel %vm6302, %v6273, %v5454
  %v6307 = vsel %vm6302, %v6274, %v5455
  %v6308 = vsel %vm6302, %v6275, %v5456
  %v6309 = vsel %vm6302, %v6276, %v5457
  %v6310 = vsel %vm6302, %v6277, %v5458
  %v6311 = vsel %vm6302, %v6278, %v5459
  %v6312 = vsel %vm6302, %v6279, %v5460
  %v6313 = vsel %vm6302, %v6280, %v5461
  %v6314 = vsel %vm6302, %v6281, %v5462
  %v6315 = vsel %vm6302, %v6282, %v5463
  %v6316 = vsel %vm6302, %v6283, %v5464
  %v6317 = vsel %vm6302, %v6284, %v5465
  %v6318 = vsel %vm6302, %v6285, %v5466
  %v6319 = vsel %vm6302, %v6286, %v5467
  %v6320 = vsel %vm6302, %v6287, %v5468
  %v6321 = vsel %vm6302, %v6288, %v5469
  %v6322 = vsel %vm6302, %v6289, %v5470
  %v6323 = vsel %vm6302, %v6290, %v5471
  %v6324 = vsel %vm6302, %v6291, %v5472
  %v6325 = vsel %vm6302, %v6292, %v5473
  %v6326 = vsel %vm6302, %v6293, %v5474
  %v6327 = vsel %vm6302, %v6294, %v5475
  %v6328 = vsel %vm6302, %v6295, %v5476
  %v6329 = vsel %vm6302, %v6296, %v5477
  %v6330 = vsel %vm6302, %v6297, %v5478
  %v6331 = vsel %vm6302, %v6298, %v5479
  %v6332 = vsel %vm6302, %v6299, %v5480
  %v6333 = vsel %vm6302, %v6300, %v5481
  %v6334 = vsel %vm6302, %v6301, %v5482
  %v6335 = vsub.f32 %v432, %v6303
  %v6336 = vsub.f32 %v433, %v6304
  %v6337 = vsub.f32 %v434, %v6305
  %v6338 = vsub.f32 %v435, %v6306
  %v6339 = vsub.f32 %v436, %v6307
  %v6340 = vsub.f32 %v437, %v6308
  %v6341 = vsub.f32 %v438, %v6309
  %v6342 = vsub.f32 %v439, %v6310
  %v6343 = vsub.f32 %v440, %v6311
  %v6344 = vsub.f32 %v441, %v6312
  %v6345 = vsub.f32 %v442, %v6313
  %v6346 = vsub.f32 %v443, %v6314
  %v6347 = vsub.f32 %v444, %v6315
  %v6348 = vsub.f32 %v445, %v6316
  %v6349 = vsub.f32 %v446, %v6317
  %v6350 = vsub.f32 %v447, %v6318
  %v6351 = vsub.f32 %v448, %v6319
  %v6352 = vsub.f32 %v449, %v6320
  %v6353 = vsub.f32 %v450, %v6321
  %v6354 = vsub.f32 %v451, %v6322
  %v6355 = vsub.f32 %v452, %v6323
  %v6356 = vsub.f32 %v453, %v6324
  %v6357 = vsub.f32 %v454, %v6325
  %v6358 = vsub.f32 %v455, %v6326
  %v6359 = vsub.f32 %v456, %v6327
  %v6360 = vsub.f32 %v457, %v6328
  %v6361 = vsub.f32 %v458, %v6329
  %v6362 = vsub.f32 %v459, %v6330
  %v6363 = vsub.f32 %v460, %v6331
  %v6364 = vsub.f32 %v461, %v6332
  %v6365 = vsub.f32 %v462, %v6333
  %v6366 = vsub.f32 %v463, %v6334
  %v6367 = vmul.f32 %v6335, 1.442695
  %v6368 = vpow.pop %v6367
  %v6369 = vmul.f32 %v6336, 1.442695
  %v6370 = vpow.pop %v6369
  %v6371 = vmul.f32 %v6337, 1.442695
  %v6372 = vpow.pop %v6371
  %v6373 = vmul.f32 %v6338, 1.442695
  %v6374 = vpow.pop %v6373
  %v6375 = vmul.f32 %v6339, 1.442695
  %v6376 = vpow.pop %v6375
  %v6377 = vmul.f32 %v6340, 1.442695
  %v6378 = vpow.pop %v6377
  %v6379 = vmul.f32 %v6341, 1.442695
  %v6380 = vpow.pop %v6379
  %v6381 = vmul.f32 %v6342, 1.442695
  %v6382 = vpow.pop %v6381
  %v6383 = vmul.f32 %v6343, 1.442695
  %v6384 = vpow.pop %v6383
  %v6385 = vmul.f32 %v6344, 1.442695
  %v6386 = vpow.pop %v6385
  %v6387 = vmul.f32 %v6345, 1.442695
  %v6388 = vpow.pop %v6387
  %v6389 = vmul.f32 %v6346, 1.442695
  %v6390 = vpow.pop %v6389
  %v6391 = vmul.f32 %v6347, 1.442695
  %v6392 = vpow.pop %v6391
  %v6393 = vmul.f32 %v6348, 1.442695
  %v6394 = vpow.pop %v6393
  %v6395 = vmul.f32 %v6349, 1.442695
  %v6396 = vpow.pop %v6395
  %v6397 = vmul.f32 %v6350, 1.442695
  %v6398 = vpow.pop %v6397
  %v6399 = vmul.f32 %v6351, 1.442695
  %v6400 = vpow.pop %v6399
  %v6401 = vmul.f32 %v6352, 1.442695
  %v6402 = vpow.pop %v6401
  %v6403 = vmul.f32 %v6353, 1.442695
  %v6404 = vpow.pop %v6403
  %v6405 = vmul.f32 %v6354, 1.442695
  %v6406 = vpow.pop %v6405
  %v6407 = vmul.f32 %v6355, 1.442695
  %v6408 = vpow.pop %v6407
  %v6409 = vmul.f32 %v6356, 1.442695
  %v6410 = vpow.pop %v6409
  %v6411 = vmul.f32 %v6357, 1.442695
  %v6412 = vpow.pop %v6411
  %v6413 = vmul.f32 %v6358, 1.442695
  %v6414 = vpow.pop %v6413
  %v6415 = vmul.f32 %v6359, 1.442695
  %v6416 = vpow.pop %v6415
  %v6417 = vmul.f32 %v6360, 1.442695
  %v6418 = vpow.pop %v6417
  %v6419 = vmul.f32 %v6361, 1.442695
  %v6420 = vpow.pop %v6419
  %v6421 = vmul.f32 %v6362, 1.442695
  %v6422 = vpow.pop %v6421
  %v6423 = vmul.f32 %v6363, 1.442695
  %v6424 = vpow.pop %v6423
  %v6425 = vmul.f32 %v6364, 1.442695
  %v6426 = vpow.pop %v6425
  %v6427 = vmul.f32 %v6365, 1.442695
  %v6428 = vpow.pop %v6427
  %v6429 = vmul.f32 %v6366, 1.442695
  %v6430 = vpow.pop %v6429
  %v6431 = vld [vmem:[#allocation3] sm:$0xff]
  %v6432 = vld [vmem:[#allocation3 + $0x8] sm:$0xff]
  %v6433 = vld [vmem:[#allocation3 + $0x10] sm:$0xff]
  %v6434 = vld [vmem:[#allocation3 + $0x18] sm:$0xff]
  %v6435 = vld [vmem:[#allocation3 + $0x20] sm:$0xff]
  %v6436 = vld [vmem:[#allocation3 + $0x28] sm:$0xff]
  %v6437 = vld [vmem:[#allocation3 + $0x30] sm:$0xff]
  %v6438 = vld [vmem:[#allocation3 + $0x38] sm:$0xff]
  %v6439 = vld [vmem:[#allocation3 + $0x40] sm:$0xff]
  %v6440 = vld [vmem:[#allocation3 + $0x48] sm:$0xff]
  %v6441 = vld [vmem:[#allocation3 + $0x50] sm:$0xff]
  %v6442 = vld [vmem:[#allocation3 + $0x58] sm:$0xff]
  %v6443 = vld [vmem:[#allocation3 + $0x60] sm:$0xff]
  %v6444 = vld [vmem:[#allocation3 + $0x68] sm:$0xff]
  %v6445 = vld [vmem:[#allocation3 + $0x70] sm:$0xff]
  %v6446 = vld [vmem:[#allocation3 + $0x78] sm:$0xff]
  %v6447 = vld [vmem:[#allocation3 + $0x80] sm:$0xff]
  %v6448 = vld [vmem:[#allocation3 + $0x88] sm:$0xff]
  %v6449 = vld [vmem:[#allocation3 + $0x90] sm:$0xff]
  %v6450 = vld [vmem:[#allocation3 + $0x98] sm:$0xff]
  %v6451 = vld [vmem:[#allocation3 + $0xa0] sm:$0xff]
  %v6452 = vld [vmem:[#allocation3 + $0xa8] sm:$0xff]
  %v6453 = vld [vmem:[#allocation3 + $0xb0] sm:$0xff]
  %v6454 = vld [vmem:[#allocation3 + $0xb8] sm:$0xff]
  %v6455 = vld [vmem:[#allocation3 + $0xc0] sm:$0xff]
  %v6456 = vld [vmem:[#allocation3 + $0xc8] sm:$0xff]
  %v6457 = vld [vmem:[#allocation3 + $0xd0] sm:$0xff]
  %v6458 = vld [vmem:[#allocation3 + $0xd8] sm:$0xff]
  %v6459 = vld [vmem:[#allocation3 + $0xe0] sm:$0xff]
  %v6460 = vld [vmem:[#allocation3 + $0xe8] sm:$0xff]
  %v6461 = vld [vmem:[#allocation3 + $0xf0] sm:$0xff]
  %v6462 = vld [vmem:[#allocation3 + $0xf8] sm:$0xff]
  %v6463 = vmul.f32 %v6368, %v6431
  %v6464 = vmul.f32 %v6370, %v6432
  %v6465 = vmul.f32 %v6372, %v6433
  %v6466 = vmul.f32 %v6374, %v6434
  %v6467 = vmul.f32 %v6376, %v6435
  %v6468 = vmul.f32 %v6378, %v6436
  %v6469 = vmul.f32 %v6380, %v6437
  %v6470 = vmul.f32 %v6382, %v6438
  %v6471 = vmul.f32 %v6384, %v6439
  %v6472 = vmul.f32 %v6386, %v6440
  %v6473 = vmul.f32 %v6388, %v6441
  %v6474 = vmul.f32 %v6390, %v6442
  %v6475 = vmul.f32 %v6392, %v6443
  %v6476 = vmul.f32 %v6394, %v6444
  %v6477 = vmul.f32 %v6396, %v6445
  %v6478 = vmul.f32 %v6398, %v6446
  %v6479 = vmul.f32 %v6400, %v6447
  %v6480 = vmul.f32 %v6402, %v6448
  %v6481 = vmul.f32 %v6404, %v6449
  %v6482 = vmul.f32 %v6406, %v6450
  %v6483 = vmul.f32 %v6408, %v6451
  %v6484 = vmul.f32 %v6410, %v6452
  %v6485 = vmul.f32 %v6412, %v6453
  %v6486 = vmul.f32 %v6414, %v6454
  %v6487 = vmul.f32 %v6416, %v6455
  %v6488 = vmul.f32 %v6418, %v6456
  %v6489 = vmul.f32 %v6420, %v6457
  %v6490 = vmul.f32 %v6422, %v6458
  %v6491 = vmul.f32 %v6424, %v6459
  %v6492 = vmul.f32 %v6426, %v6460
  %v6493 = vmul.f32 %v6428, %v6461
  %v6494 = vmul.f32 %v6430, %v6462
  %v6495 = vsel %vm6236, %v1599, %v3089
  %v6496 = vsel %vm6236, %v1602, %v3092
  %v6497 = vsel %vm6236, %v1605, %v3095
  %v6498 = vsel %vm6236, %v1608, %v3098
  %v6499 = vsel %vm6236, %v1611, %v3101
  %v6500 = vsel %vm6236, %v1614, %v3104
  %v6501 = vsel %vm6236, %v1617, %v3107
  %v6502 = vsel %vm6236, %v1620, %v3110
  %v6503 = vsel %vm6236, %v1623, %v3113
  %v6504 = vsel %vm6236, %v1626, %v3116
  %v6505 = vsel %vm6236, %v1629, %v3119
  %v6506 = vsel %vm6236, %v1632, %v3122
  %v6507 = vsel %vm6236, %v1635, %v3125
  %v6508 = vsel %vm6236, %v1638, %v3128
  %v6509 = vsel %vm6236, %v1641, %v3131
  %v6510 = vsel %vm6236, %v1644, %v3134
  %v6511 = vsel %vm6236, %v1647, %v3137
  %v6512 = vsel %vm6236, %v1650, %v3140
  %v6513 = vsel %vm6236, %v1653, %v3143
  %v6514 = vsel %vm6236, %v1656, %v3146
  %v6515 = vsel %vm6236, %v1659, %v3149
  %v6516 = vsel %vm6236, %v1662, %v3152
  %v6517 = vsel %vm6236, %v1665, %v3155
  %v6518 = vsel %vm6236, %v1668, %v3158
  %v6519 = vsel %vm6236, %v1671, %v3161
  %v6520 = vsel %vm6236, %v1674, %v3164
  %v6521 = vsel %vm6236, %v1677, %v3167
  %v6522 = vsel %vm6236, %v1680, %v3170
  %v6523 = vsel %vm6236, %v1683, %v3173
  %v6524 = vsel %vm6236, %v1686, %v3176
  %v6525 = vsel %vm6236, %v1689, %v3179
  %v6526 = vsel %vm6236, %v1692, %v3182
  %v6527 = vsel %vm6269, %v6495, %v4495
  %v6528 = vsel %vm6269, %v6496, %v4498
  %v6529 = vsel %vm6269, %v6497, %v4501
  %v6530 = vsel %vm6269, %v6498, %v4504
  %v6531 = vsel %vm6269, %v6499, %v4507
  %v6532 = vsel %vm6269, %v6500, %v4510
  %v6533 = vsel %vm6269, %v6501, %v4513
  %v6534 = vsel %vm6269, %v6502, %v4516
  %v6535 = vsel %vm6269, %v6503, %v4519
  %v6536 = vsel %vm6269, %v6504, %v4522
  %v6537 = vsel %vm6269, %v6505, %v4525
  %v6538 = vsel %vm6269, %v6506, %v4528
  %v6539 = vsel %vm6269, %v6507, %v4531
  %v6540 = vsel %vm6269, %v6508, %v4534
  %v6541 = vsel %vm6269, %v6509, %v4537
  %v6542 = vsel %vm6269, %v6510, %v4540
  %v6543 = vsel %vm6269, %v6511, %v4543
  %v6544 = vsel %vm6269, %v6512, %v4546
  %v6545 = vsel %vm6269, %v6513, %v4549
  %v6546 = vsel %vm6269, %v6514, %v4552
  %v6547 = vsel %vm6269, %v6515, %v4555
  %v6548 = vsel %vm6269, %v6516, %v4558
  %v6549 = vsel %vm6269, %v6517, %v4561
  %v6550 = vsel %vm6269, %v6518, %v4564
  %v6551 = vsel %vm6269, %v6519, %v4567
  %v6552 = vsel %vm6269, %v6520, %v4570
  %v6553 = vsel %vm6269, %v6521, %v4573
  %v6554 = vsel %vm6269, %v6522, %v4576
  %v6555 = vsel %vm6269, %v6523, %v4579
  %v6556 = vsel %vm6269, %v6524, %v4582
  %v6557 = vsel %vm6269, %v6525, %v4585
  %v6558 = vsel %vm6269, %v6526, %v4588
  %v6559 = vsel %vm6302, %v6527, %v5901
  %v6560 = vsel %vm6302, %v6528, %v5904
  %v6561 = vsel %vm6302, %v6529, %v5907
  %v6562 = vsel %vm6302, %v6530, %v5910
  %v6563 = vsel %vm6302, %v6531, %v5913
  %v6564 = vsel %vm6302, %v6532, %v5916
  %v6565 = vsel %vm6302, %v6533, %v5919
  %v6566 = vsel %vm6302, %v6534, %v5922
  %v6567 = vsel %vm6302, %v6535, %v5925
  %v6568 = vsel %vm6302, %v6536, %v5928
  %v6569 = vsel %vm6302, %v6537, %v5931
  %v6570 = vsel %vm6302, %v6538, %v5934
  %v6571 = vsel %vm6302, %v6539, %v5937
  %v6572 = vsel %vm6302, %v6540, %v5940
  %v6573 = vsel %vm6302, %v6541, %v5943
  %v6574 = vsel %vm6302, %v6542, %v5946
  %v6575 = vsel %vm6302, %v6543, %v5949
  %v6576 = vsel %vm6302, %v6544, %v5952
  %v6577 = vsel %vm6302, %v6545, %v5955
  %v6578 = vsel %vm6302, %v6546, %v5958
  %v6579 = vsel %vm6302, %v6547, %v5961
  %v6580 = vsel %vm6302, %v6548, %v5964
  %v6581 = vsel %vm6302, %v6549, %v5967
  %v6582 = vsel %vm6302, %v6550, %v5970
  %v6583 = vsel %vm6302, %v6551, %v5973
  %v6584 = vsel %vm6302, %v6552, %v5976
  %v6585 = vsel %vm6302, %v6553, %v5979
  %v6586 = vsel %vm6302, %v6554, %v5982
  %v6587 = vsel %vm6302, %v6555, %v5985
  %v6588 = vsel %vm6302, %v6556, %v5988
  %v6589 = vsel %vm6302, %v6557, %v5991
  %v6590 = vsel %vm6302, %v6558, %v5994
  %v6591 = vadd.f32 %v6463, %v6559
  %v6592 = vadd.f32 %v6464, %v6560
  %v6593 = vadd.f32 %v6465, %v6561
  %v6594 = vadd.f32 %v6466, %v6562
  %v6595 = vadd.f32 %v6467, %v6563
  %v6596 = vadd.f32 %v6468, %v6564
  %v6597 = vadd.f32 %v6469, %v6565
  %v6598 = vadd.f32 %v6470, %v6566
  %v6599 = vadd.f32 %v6471, %v6567
  %v6600 = vadd.f32 %v6472, %v6568
  %v6601 = vadd.f32 %v6473, %v6569
  %v6602 = vadd.f32 %v6474, %v6570
  %v6603 = vadd.f32 %v6475, %v6571
  %v6604 = vadd.f32 %v6476, %v6572
  %v6605 = vadd.f32 %v6477, %v6573
  %v6606 = vadd.f32 %v6478, %v6574
  %v6607 = vadd.f32 %v6479, %v6575
  %v6608 = vadd.f32 %v6480, %v6576
  %v6609 = vadd.f32 %v6481, %v6577
  %v6610 = vadd.f32 %v6482, %v6578
  %v6611 = vadd.f32 %v6483, %v6579
  %v6612 = vadd.f32 %v6484, %v6580
  %v6613 = vadd.f32 %v6485, %v6581
  %v6614 = vadd.f32 %v6486, %v6582
  %v6615 = vadd.f32 %v6487, %v6583
  %v6616 = vadd.f32 %v6488, %v6584
  %v6617 = vadd.f32 %v6489, %v6585
  %v6618 = vadd.f32 %v6490, %v6586
  %v6619 = vadd.f32 %v6491, %v6587
  %v6620 = vadd.f32 %v6492, %v6588
  %v6621 = vadd.f32 %v6493, %v6589
  %v6622 = vadd.f32 %v6494, %v6590
  %vm6623 = vcmask 31744
  %6624 = vst.msk [vmem:[#allocation3] sm:$0xff] %vm6623, %v6591
  %6625 = vst.msk [vmem:[#allocation3 + $0x8] sm:$0xff] %vm6623, %v6592
  %6626 = vst.msk [vmem:[#allocation3 + $0x10] sm:$0xff] %vm6623, %v6593
  %6627 = vst.msk [vmem:[#allocation3 + $0x18] sm:$0xff] %vm6623, %v6594
  %6628 = vst.msk [vmem:[#allocation3 + $0x20] sm:$0xff] %vm6623, %v6595
  %6629 = vst.msk [vmem:[#allocation3 + $0x28] sm:$0xff] %vm6623, %v6596
  %6630 = vst.msk [vmem:[#allocation3 + $0x30] sm:$0xff] %vm6623, %v6597
  %6631 = vst.msk [vmem:[#allocation3 + $0x38] sm:$0xff] %vm6623, %v6598
  %6632 = vst.msk [vmem:[#allocation3 + $0x40] sm:$0xff] %vm6623, %v6599
  %6633 = vst.msk [vmem:[#allocation3 + $0x48] sm:$0xff] %vm6623, %v6600
  %6634 = vst.msk [vmem:[#allocation3 + $0x50] sm:$0xff] %vm6623, %v6601
  %6635 = vst.msk [vmem:[#allocation3 + $0x58] sm:$0xff] %vm6623, %v6602
  %6636 = vst.msk [vmem:[#allocation3 + $0x60] sm:$0xff] %vm6623, %v6603
  %6637 = vst.msk [vmem:[#allocation3 + $0x68] sm:$0xff] %vm6623, %v6604
  %6638 = vst.msk [vmem:[#allocation3 + $0x70] sm:$0xff] %vm6623, %v6605
  %6639 = vst.msk [vmem:[#allocation3 + $0x78] sm:$0xff] %vm6623, %v6606
  %6640 = vst.msk [vmem:[#allocation3 + $0x80] sm:$0xff] %vm6623, %v6607
  %6641 = vst.msk [vmem:[#allocation3 + $0x88] sm:$0xff] %vm6623, %v6608
  %6642 = vst.msk [vmem:[#allocation3 + $0x90] sm:$0xff] %vm6623, %v6609
  %6643 = vst.msk [vmem:[#allocation3 + $0x98] sm:$0xff] %vm6623, %v6610
  %6644 = vst.msk [vmem:[#allocation3 + $0xa0] sm:$0xff] %vm6623, %v6611
  %6645 = vst.msk [vmem:[#allocation3 + $0xa8] sm:$0xff] %vm6623, %v6612
  %6646 = vst.msk [vmem:[#allocation3 + $0xb0] sm:$0xff] %vm6623, %v6613
  %6647 = vst.msk [vmem:[#allocation3 + $0xb8] sm:$0xff] %vm6623, %v6614
  %6648 = vst.msk [vmem:[#allocation3 + $0xc0] sm:$0xff] %vm6623, %v6615
  %6649 = vst.msk [vmem:[#allocation3 + $0xc8] sm:$0xff] %vm6623, %v6616
  %6650 = vst.msk [vmem:[#allocation3 + $0xd0] sm:$0xff] %vm6623, %v6617
  %6651 = vst.msk [vmem:[#allocation3 + $0xd8] sm:$0xff] %vm6623, %v6618
  %6652 = vst.msk [vmem:[#allocation3 + $0xe0] sm:$0xff] %vm6623, %v6619
  %6653 = vst.msk [vmem:[#allocation3 + $0xe8] sm:$0xff] %vm6623, %v6620
  %6654 = vst.msk [vmem:[#allocation3 + $0xf0] sm:$0xff] %vm6623, %v6621
  %6655 = vst.msk [vmem:[#allocation3 + $0xf8] sm:$0xff] %vm6623, %v6622
  %6656 = vst.msk [vmem:[#allocation2] sm:$0xff] %vm6623, %v6303
  %6657 = vst.msk [vmem:[#allocation2 + $0x8] sm:$0xff] %vm6623, %v6304
  %6658 = vst.msk [vmem:[#allocation2 + $0x10] sm:$0xff] %vm6623, %v6305
  %6659 = vst.msk [vmem:[#allocation2 + $0x18] sm:$0xff] %vm6623, %v6306
  %6660 = vst.msk [vmem:[#allocation2 + $0x20] sm:$0xff] %vm6623, %v6307
  %6661 = vst.msk [vmem:[#allocation2 + $0x28] sm:$0xff] %vm6623, %v6308
  %6662 = vst.msk [vmem:[#allocation2 + $0x30] sm:$0xff] %vm6623, %v6309
  %6663 = vst.msk [vmem:[#allocation2 + $0x38] sm:$0xff] %vm6623, %v6310
  %6664 = vst.msk [vmem:[#allocation2 + $0x40] sm:$0xff] %vm6623, %v6311
  %6665 = vst.msk [vmem:[#allocation2 + $0x48] sm:$0xff] %vm6623, %v6312
  %6666 = vst.msk [vmem:[#allocation2 + $0x50] sm:$0xff] %vm6623, %v6313
  %6667 = vst.msk [vmem:[#allocation2 + $0x58] sm:$0xff] %vm6623, %v6314
  %6668 = vst.msk [vmem:[#allocation2 + $0x60] sm:$0xff] %vm6623, %v6315
  %6669 = vst.msk [vmem:[#allocation2 + $0x68] sm:$0xff] %vm6623, %v6316
  %6670 = vst.msk [vmem:[#allocation2 + $0x70] sm:$0xff] %vm6623, %v6317
  %6671 = vst.msk [vmem:[#allocation2 + $0x78] sm:$0xff] %vm6623, %v6318
  %6672 = vst.msk [vmem:[#allocation2 + $0x80] sm:$0xff] %vm6623, %v6319
  %6673 = vst.msk [vmem:[#allocation2 + $0x88] sm:$0xff] %vm6623, %v6320
  %6674 = vst.msk [vmem:[#allocation2 + $0x90] sm:$0xff] %vm6623, %v6321
  %6675 = vst.msk [vmem:[#allocation2 + $0x98] sm:$0xff] %vm6623, %v6322
  %6676 = vst.msk [vmem:[#allocation2 + $0xa0] sm:$0xff] %vm6623, %v6323
  %6677 = vst.msk [vmem:[#allocation2 + $0xa8] sm:$0xff] %vm6623, %v6324
  %6678 = vst.msk [vmem:[#allocation2 + $0xb0] sm:$0xff] %vm6623, %v6325
  %6679 = vst.msk [vmem:[#allocation2 + $0xb8] sm:$0xff] %vm6623, %v6326
  %6680 = vst.msk [vmem:[#allocation2 + $0xc0] sm:$0xff] %vm6623, %v6327
  %6681 = vst.msk [vmem:[#allocation2 + $0xc8] sm:$0xff] %vm6623, %v6328
  %6682 = vst.msk [vmem:[#allocation2 + $0xd0] sm:$0xff] %vm6623, %v6329
  %6683 = vst.msk [vmem:[#allocation2 + $0xd8] sm:$0xff] %vm6623, %v6330
  %6684 = vst.msk [vmem:[#allocation2 + $0xe0] sm:$0xff] %vm6623, %v6331
  %6685 = vst.msk [vmem:[#allocation2 + $0xe8] sm:$0xff] %vm6623, %v6332
  %6686 = vst.msk [vmem:[#allocation2 + $0xf0] sm:$0xff] %vm6623, %v6333
  %6687 = vst.msk [vmem:[#allocation2 + $0xf8] sm:$0xff] %vm6623, %v6334
  %v6688 = vld [vmem:[%s5] sm:$0xf]
  %v6690 = vsel %vm6623, %v6368, 0
  %v6693 = vsel %vm6623, %v6370, 0
  %v6696 = vsel %vm6623, %v6372, 0
  %v6699 = vsel %vm6623, %v6374, 0
  %v6702 = vsel %vm6623, %v6376, 0
  %v6705 = vsel %vm6623, %v6378, 0
  %v6708 = vsel %vm6623, %v6380, 0
  %v6711 = vsel %vm6623, %v6382, 0
  %v6714 = vsel %vm6623, %v6384, 0
  %v6717 = vsel %vm6623, %v6386, 0
  %v6720 = vsel %vm6623, %v6388, 0
  %v6723 = vsel %vm6623, %v6390, 0
  %v6726 = vsel %vm6623, %v6392, 0
  %v6729 = vsel %vm6623, %v6394, 0
  %v6732 = vsel %vm6623, %v6396, 0
  %v6735 = vsel %vm6623, %v6398, 0
  %v6738 = vsel %vm6623, %v6400, 0
  %v6741 = vsel %vm6623, %v6402, 0
  %v6744 = vsel %vm6623, %v6404, 0
  %v6747 = vsel %vm6623, %v6406, 0
  %v6750 = vsel %vm6623, %v6408, 0
  %v6753 = vsel %vm6623, %v6410, 0
  %v6756 = vsel %vm6623, %v6412, 0
  %v6759 = vsel %vm6623, %v6414, 0
  %v6762 = vsel %vm6623, %v6416, 0
  %v6765 = vsel %vm6623, %v6418, 0
  %v6768 = vsel %vm6623, %v6420, 0
  %v6771 = vsel %vm6623, %v6422, 0
  %v6774 = vsel %vm6623, %v6424, 0
  %v6777 = vsel %vm6623, %v6426, 0
  %v6780 = vsel %vm6623, %v6428, 0
  %v6783 = vsel %vm6623, %v6430, 0
  %vm6785 = vcmask 1043456
  %v6787 = vsel %vm6785, %v6688, 0
  %6789 = vmatprep.subr.mxu0 0.0
  %6790 = vmatpush1.msra.mxu0 %v6787
  %6791 = vmatprep.subr.mxu0 0.0
  %6792 = vmatpush1.msra.mxu0 0.0
  %6793 = vmatprep.subr.mxu0 0.0
  %6794 = vmatpush1.msra.mxu0 0.0
  %6795 = vmatprep.subr.mxu0 0.0
  %6796 = vmatpush1.msra.mxu0 0.0
  %6797 = vmatprep.subr.mxu0 0.0
  %6798 = vmatpush1.msra.mxu0 0.0
  %6799 = vmatprep.subr.mxu0 0.0
  %6800 = vmatpush1.msra.mxu0 0.0
  %6801 = vmatprep.subr.mxu0 0.0
  %6802 = vmatpush1.msra.mxu0 0.0
  %6803 = vmatprep.subr.mxu0 0.0
  %6804 = vmatpush1.msra.mxu0 0.0
  %6805 = vmatprep.subr.mxu0 0.0
  %6806 = vmatpush1.msra.mxu0 0.0
  %6807 = vmatprep.subr.mxu0 0.0
  %6808 = vmatpush1.msra.mxu0 0.0
  %6809 = vmatprep.subr.mxu0 0.0
  %6810 = vmatpush1.msra.mxu0 0.0
  %6811 = vmatprep.subr.mxu0 0.0
  %6812 = vmatpush1.msra.mxu0 0.0
  %6813 = vmatprep.subr.mxu0 0.0
  %6814 = vmatpush1.msra.mxu0 0.0
  %6815 = vmatprep.subr.mxu0 0.0
  %6816 = vmatpush1.msra.mxu0 0.0
  %6817 = vmatprep.subr.mxu0 0.0
  %6818 = vmatpush1.msra.mxu0 0.0
  %6819 = vmatprep.subr.mxu0 0.0
  %6820 = vmatpush1.msra.mxu0 0.0
  %6821 = vmatprep.subr.mxu0 0.0
  %6822 = vmatpush1.msra.mxu0 0.0
  %6823 = vmatprep.subr.mxu0 0.0
  %6824 = vmatpush1.msra.mxu0 0.0
  %6825 = vmatprep.subr.mxu0 0.0
  %6826 = vmatpush1.msra.mxu0 0.0
  %6827 = vmatprep.subr.mxu0 0.0
  %6828 = vmatpush1.msra.mxu0 0.0
  %6829 = vmatprep.subr.mxu0 0.0
  %6830 = vmatpush1.msra.mxu0 0.0
  %6831 = vmatprep.subr.mxu0 0.0
  %6832 = vmatpush1.msra.mxu0 0.0
  %6833 = vmatprep.subr.mxu0 0.0
  %6834 = vmatpush1.msra.mxu0 0.0
  %6835 = vmatprep.subr.mxu0 0.0
  %6836 = vmatpush1.msra.mxu0 0.0
  %6837 = vmatprep.subr.mxu0 0.0
  %6838 = vmatpush1.msra.mxu0 0.0
  %6839 = vmatprep.subr.mxu0 0.0
  %6840 = vmatpush1.msra.mxu0 0.0
  %6841 = vmatprep.subr.mxu0 0.0
  %6842 = vmatpush1.msra.mxu0 0.0
  %6843 = vmatprep.subr.mxu0 0.0
  %6844 = vmatpush1.msra.mxu0 0.0
  %6845 = vmatprep.subr.mxu0 0.0
  %6846 = vmatpush1.msra.mxu0 0.0
  %6847 = vmatprep.subr.mxu0 0.0
  %6848 = vmatpush1.msra.mxu0 0.0
  %6849 = vmatprep.subr.mxu0 0.0
  %6850 = vmatpush1.msra.mxu0 0.0
  %6851 = vmatprep.subr.mxu0 0.0
  %6852 = vmatpush1.msra.mxu0 0.0
  %6853 = vmatprep.mubr.f32.mxu0 0.0
  %6854 = vmatmul.mubr.f32.gmra.mrb[0].mxu0 %v6690
  %v6855 = vpop.f32.mrb[0].mxu0
  %v6856 = vadd.f32 0.0, %v6855
  %v6857 = vpop.f32.mrb[0].mxu0
  %6858 = vmatprep.mubr.f32.mxu0 0.0
  %6859 = vmatmul.mubr.f32.gmra.mrb[0].mxu0 %v6693
  %v6860 = vpop.f32.mrb[0].mxu0
  %v6861 = vadd.f32 0.0, %v6860
  %v6862 = vpop.f32.mrb[0].mxu0
  %6863 = vmatprep.mubr.f32.mxu0 0.0
  %6864 = vmatmul.mubr.f32.gmra.mrb[0].mxu0 %v6696
  %v6865 = vpop.f32.mrb[0].mxu0
  %v6866 = vadd.f32 0.0, %v6865
  %v6867 = vpop.f32.mrb[0].mxu0
  %6868 = vmatprep.mubr.f32.mxu0 0.0
  %6869 = vmatmul.mubr.f32.gmra.mrb[0].mxu0 %v6699
  %v6870 = vpop.f32.mrb[0].mxu0
  %v6871 = vadd.f32 0.0, %v6870
  %v6872 = vpop.f32.mrb[0].mxu0
  %6873 = vmatprep.mubr.f32.mxu0 0.0
  %6874 = vmatmul.mubr.f32.gmra.mrb[0].mxu0 %v6702
  %v6875 = vpop.f32.mrb[0].mxu0
  %v6876 = vadd.f32 0.0, %v6875
  %v6877 = vpop.f32.mrb[0].mxu0
  %6878 = vmatprep.mubr.f32.mxu0 0.0
  %6879 = vmatmul.mubr.f32.gmra.mrb[0].mxu0 %v6705
  %v6880 = vpop.f32.mrb[0].mxu0
  %v6881 = vadd.f32 0.0, %v6880
  %v6882 = vpop.f32.mrb[0].mxu0
  %6883 = vmatprep.mubr.f32.mxu0 0.0
  %6884 = vmatmul.mubr.f32.gmra.mrb[0].mxu0 %v6708
  %v6885 = vpop.f32.mrb[0].mxu0
  %v6886 = vadd.f32 0.0, %v6885
  %v6887 = vpop.f32.mrb[0].mxu0
  %6888 = vmatprep.mubr.f32.mxu0 0.0
  %6889 = vmatmul.mubr.f32.gmra.mrb[0].mxu0 %v6711
  %v6890 = vpop.f32.mrb[0].mxu0
  %v6891 = vadd.f32 0.0, %v6890
  %v6892 = vpop.f32.mrb[0].mxu0
  %6893 = vmatprep.mubr.f32.mxu0 0.0
  %6894 = vmatmul.mubr.f32.gmra.mrb[0].mxu0 %v6714
  %v6895 = vpop.f32.mrb[0].mxu0
  %v6896 = vadd.f32 0.0, %v6895
  %v6897 = vpop.f32.mrb[0].mxu0
  %6898 = vmatprep.mubr.f32.mxu0 0.0
  %6899 = vmatmul.mubr.f32.gmra.mrb[0].mxu0 %v6717
  %v6900 = vpop.f32.mrb[0].mxu0
  %v6901 = vadd.f32 0.0, %v6900
  %v6902 = vpop.f32.mrb[0].mxu0
  %6903 = vmatprep.mubr.f32.mxu0 0.0
  %6904 = vmatmul.mubr.f32.gmra.mrb[0].mxu0 %v6720
  %v6905 = vpop.f32.mrb[0].mxu0
  %v6906 = vadd.f32 0.0, %v6905
  %v6907 = vpop.f32.mrb[0].mxu0
  %6908 = vmatprep.mubr.f32.mxu0 0.0
  %6909 = vmatmul.mubr.f32.gmra.mrb[0].mxu0 %v6723
  %v6910 = vpop.f32.mrb[0].mxu0
  %v6911 = vadd.f32 0.0, %v6910
  %v6912 = vpop.f32.mrb[0].mxu0
  %6913 = vmatprep.mubr.f32.mxu0 0.0
  %6914 = vmatmul.mubr.f32.gmra.mrb[0].mxu0 %v6726
  %v6915 = vpop.f32.mrb[0].mxu0
  %v6916 = vadd.f32 0.0, %v6915
  %v6917 = vpop.f32.mrb[0].mxu0
  %6918 = vmatprep.mubr.f32.mxu0 0.0
  %6919 = vmatmul.mubr.f32.gmra.mrb[0].mxu0 %v6729
  %v6920 = vpop.f32.mrb[0].mxu0
  %v6921 = vadd.f32 0.0, %v6920
  %v6922 = vpop.f32.mrb[0].mxu0
  %6923 = vmatprep.mubr.f32.mxu0 0.0
  %6924 = vmatmul.mubr.f32.gmra.mrb[0].mxu0 %v6732
  %v6925 = vpop.f32.mrb[0].mxu0
  %v6926 = vadd.f32 0.0, %v6925
  %v6927 = vpop.f32.mrb[0].mxu0
  %6928 = vmatprep.mubr.f32.mxu0 0.0
  %6929 = vmatmul.mubr.f32.gmra.mrb[0].mxu0 %v6735
  %v6930 = vpop.f32.mrb[0].mxu0
  %v6931 = vadd.f32 0.0, %v6930
  %v6932 = vpop.f32.mrb[0].mxu0
  %6933 = vmatprep.mubr.f32.mxu0 0.0
  %6934 = vmatmul.mubr.f32.gmra.mrb[0].mxu0 %v6738
  %v6935 = vpop.f32.mrb[0].mxu0
  %v6936 = vadd.f32 0.0, %v6935
  %v6937 = vpop.f32.mrb[0].mxu0
  %6938 = vmatprep.mubr.f32.mxu0 0.0
  %6939 = vmatmul.mubr.f32.gmra.mrb[0].mxu0 %v6741
  %v6940 = vpop.f32.mrb[0].mxu0
  %v6941 = vadd.f32 0.0, %v6940
  %v6942 = vpop.f32.mrb[0].mxu0
  %6943 = vmatprep.mubr.f32.mxu0 0.0
  %6944 = vmatmul.mubr.f32.gmra.mrb[0].mxu0 %v6744
  %v6945 = vpop.f32.mrb[0].mxu0
  %v6946 = vadd.f32 0.0, %v6945
  %v6947 = vpop.f32.mrb[0].mxu0
  %6948 = vmatprep.mubr.f32.mxu0 0.0
  %6949 = vmatmul.mubr.f32.gmra.mrb[0].mxu0 %v6747
  %v6950 = vpop.f32.mrb[0].mxu0
  %v6951 = vadd.f32 0.0, %v6950
  %v6952 = vpop.f32.mrb[0].mxu0
  %6953 = vmatprep.mubr.f32.mxu0 0.0
  %6954 = vmatmul.mubr.f32.gmra.mrb[0].mxu0 %v6750
  %v6955 = vpop.f32.mrb[0].mxu0
  %v6956 = vadd.f32 0.0, %v6955
  %v6957 = vpop.f32.mrb[0].mxu0
  %6958 = vmatprep.mubr.f32.mxu0 0.0
  %6959 = vmatmul.mubr.f32.gmra.mrb[0].mxu0 %v6753
  %v6960 = vpop.f32.mrb[0].mxu0
  %v6961 = vadd.f32 0.0, %v6960
  %v6962 = vpop.f32.mrb[0].mxu0
  %6963 = vmatprep.mubr.f32.mxu0 0.0
  %6964 = vmatmul.mubr.f32.gmra.mrb[0].mxu0 %v6756
  %v6965 = vpop.f32.mrb[0].mxu0
  %v6966 = vadd.f32 0.0, %v6965
  %v6967 = vpop.f32.mrb[0].mxu0
  %6968 = vmatprep.mubr.f32.mxu0 0.0
  %6969 = vmatmul.mubr.f32.gmra.mrb[0].mxu0 %v6759
  %v6970 = vpop.f32.mrb[0].mxu0
  %v6971 = vadd.f32 0.0, %v6970
  %v6972 = vpop.f32.mrb[0].mxu0
  %6973 = vmatprep.mubr.f32.mxu0 0.0
  %6974 = vmatmul.mubr.f32.gmra.mrb[0].mxu0 %v6762
  %v6975 = vpop.f32.mrb[0].mxu0
  %v6976 = vadd.f32 0.0, %v6975
  %v6977 = vpop.f32.mrb[0].mxu0
  %6978 = vmatprep.mubr.f32.mxu0 0.0
  %6979 = vmatmul.mubr.f32.gmra.mrb[0].mxu0 %v6765
  %v6980 = vpop.f32.mrb[0].mxu0
  %v6981 = vadd.f32 0.0, %v6980
  %v6982 = vpop.f32.mrb[0].mxu0
  %6983 = vmatprep.mubr.f32.mxu0 0.0
  %6984 = vmatmul.mubr.f32.gmra.mrb[0].mxu0 %v6768
  %v6985 = vpop.f32.mrb[0].mxu0
  %v6986 = vadd.f32 0.0, %v6985
  %v6987 = vpop.f32.mrb[0].mxu0
  %6988 = vmatprep.mubr.f32.mxu0 0.0
  %6989 = vmatmul.mubr.f32.gmra.mrb[0].mxu0 %v6771
  %v6990 = vpop.f32.mrb[0].mxu0
  %v6991 = vadd.f32 0.0, %v6990
  %v6992 = vpop.f32.mrb[0].mxu0
  %6993 = vmatprep.mubr.f32.mxu0 0.0
  %6994 = vmatmul.mubr.f32.gmra.mrb[0].mxu0 %v6774
  %v6995 = vpop.f32.mrb[0].mxu0
  %v6996 = vadd.f32 0.0, %v6995
  %v6997 = vpop.f32.mrb[0].mxu0
  %6998 = vmatprep.mubr.f32.mxu0 0.0
  %6999 = vmatmul.mubr.f32.gmra.mrb[0].mxu0 %v6777
  %v7000 = vpop.f32.mrb[0].mxu0
  %v7001 = vadd.f32 0.0, %v7000
  %v7002 = vpop.f32.mrb[0].mxu0
  %7003 = vmatprep.mubr.f32.mxu0 0.0
  %7004 = vmatmul.mubr.f32.gmra.mrb[0].mxu0 %v6780
  %v7005 = vpop.f32.mrb[0].mxu0
  %v7006 = vadd.f32 0.0, %v7005
  %v7007 = vpop.f32.mrb[0].mxu0
  %7008 = vmatprep.mubr.f32.mxu0 0.0
  %7009 = vmatmul.mubr.f32.gmra.mrb[0].mxu0 %v6783
  %v7010 = vpop.f32.mrb[0].mxu0
  %v7011 = vadd.f32 0.0, %v7010
  %v7012 = vpop.f32.mrb[0].mxu0
  %7013 = vdwg.mxu0
  %v7014 = vld [vmem:[#allocation4] sm:$0xff]
  %v7015 = vld [vmem:[#allocation4 + $0x8] sm:$0xff]
  %v7016 = vld [vmem:[#allocation4 + $0x10] sm:$0xff]
  %v7017 = vld [vmem:[#allocation4 + $0x18] sm:$0xff]
  %v7018 = vld [vmem:[#allocation4 + $0x20] sm:$0xff]
  %v7019 = vld [vmem:[#allocation4 + $0x28] sm:$0xff]
  %v7020 = vld [vmem:[#allocation4 + $0x30] sm:$0xff]
  %v7021 = vld [vmem:[#allocation4 + $0x38] sm:$0xff]
  %v7022 = vld [vmem:[#allocation4 + $0x40] sm:$0xff]
  %v7023 = vld [vmem:[#allocation4 + $0x48] sm:$0xff]
  %v7024 = vld [vmem:[#allocation4 + $0x50] sm:$0xff]
  %v7025 = vld [vmem:[#allocation4 + $0x58] sm:$0xff]
  %v7026 = vld [vmem:[#allocation4 + $0x60] sm:$0xff]
  %v7027 = vld [vmem:[#allocation4 + $0x68] sm:$0xff]
  %v7028 = vld [vmem:[#allocation4 + $0x70] sm:$0xff]
  %v7029 = vld [vmem:[#allocation4 + $0x78] sm:$0xff]
  %v7030 = vld [vmem:[#allocation4 + $0x80] sm:$0xff]
  %v7031 = vld [vmem:[#allocation4 + $0x88] sm:$0xff]
  %v7032 = vld [vmem:[#allocation4 + $0x90] sm:$0xff]
  %v7033 = vld [vmem:[#allocation4 + $0x98] sm:$0xff]
  %v7034 = vld [vmem:[#allocation4 + $0xa0] sm:$0xff]
  %v7035 = vld [vmem:[#allocation4 + $0xa8] sm:$0xff]
  %v7036 = vld [vmem:[#allocation4 + $0xb0] sm:$0xff]
  %v7037 = vld [vmem:[#allocation4 + $0xb8] sm:$0xff]
  %v7038 = vld [vmem:[#allocation4 + $0xc0] sm:$0xff]
  %v7039 = vld [vmem:[#allocation4 + $0xc8] sm:$0xff]
  %v7040 = vld [vmem:[#allocation4 + $0xd0] sm:$0xff]
  %v7041 = vld [vmem:[#allocation4 + $0xd8] sm:$0xff]
  %v7042 = vld [vmem:[#allocation4 + $0xe0] sm:$0xff]
  %v7043 = vld [vmem:[#allocation4 + $0xe8] sm:$0xff]
  %v7044 = vld [vmem:[#allocation4 + $0xf0] sm:$0xff]
  %v7045 = vld [vmem:[#allocation4 + $0xf8] sm:$0xff]
  %v7046 = vmul.f32 %v6856, %v7014
  %v7047 = vmul.f32 %v6861, %v7015
  %v7048 = vmul.f32 %v6866, %v7016
  %v7049 = vmul.f32 %v6871, %v7017
  %v7050 = vmul.f32 %v6876, %v7018
  %v7051 = vmul.f32 %v6881, %v7019
  %v7052 = vmul.f32 %v6886, %v7020
  %v7053 = vmul.f32 %v6891, %v7021
  %v7054 = vmul.f32 %v6896, %v7022
  %v7055 = vmul.f32 %v6901, %v7023
  %v7056 = vmul.f32 %v6906, %v7024
  %v7057 = vmul.f32 %v6911, %v7025
  %v7058 = vmul.f32 %v6916, %v7026
  %v7059 = vmul.f32 %v6921, %v7027
  %v7060 = vmul.f32 %v6926, %v7028
  %v7061 = vmul.f32 %v6931, %v7029
  %v7062 = vmul.f32 %v6936, %v7030
  %v7063 = vmul.f32 %v6941, %v7031
  %v7064 = vmul.f32 %v6946, %v7032
  %v7065 = vmul.f32 %v6951, %v7033
  %v7066 = vmul.f32 %v6956, %v7034
  %v7067 = vmul.f32 %v6961, %v7035
  %v7068 = vmul.f32 %v6966, %v7036
  %v7069 = vmul.f32 %v6971, %v7037
  %v7070 = vmul.f32 %v6976, %v7038
  %v7071 = vmul.f32 %v6981, %v7039
  %v7072 = vmul.f32 %v6986, %v7040
  %v7073 = vmul.f32 %v6991, %v7041
  %v7074 = vmul.f32 %v6996, %v7042
  %v7075 = vmul.f32 %v7001, %v7043
  %v7076 = vmul.f32 %v7006, %v7044
  %v7077 = vmul.f32 %v7011, %v7045
  %7110 = vrot.lane.b32.xlu0 %v3298, 32
  %v7111 = vpop.permute.xlu0 %7110
  %7112 = vrot.lane.b32.xlu0 %v3301, 32
  %v7113 = vpop.permute.xlu0 %7112
  %7114 = vrot.lane.b32.xlu0 %v3306, 32
  %v7115 = vpop.permute.xlu0 %7114
  %7116 = vrot.lane.b32.xlu0 %v3309, 32
  %v7117 = vpop.permute.xlu0 %7116
  %7118 = vrot.lane.b32.xlu0 %v3314, 32
  %v7119 = vpop.permute.xlu0 %7118
  %7120 = vrot.lane.b32.xlu0 %v3317, 32
  %v7121 = vpop.permute.xlu0 %7120
  %7122 = vrot.lane.b32.xlu0 %v3322, 32
  %v7123 = vpop.permute.xlu0 %7122
  %7124 = vrot.lane.b32.xlu0 %v3325, 32
  %v7125 = vpop.permute.xlu0 %7124
  %7126 = vrot.lane.b32.xlu0 %v3330, 32
  %v7127 = vpop.permute.xlu0 %7126
  %7128 = vrot.lane.b32.xlu0 %v3333, 32
  %v7129 = vpop.permute.xlu0 %7128
  %7130 = vrot.lane.b32.xlu0 %v3338, 32
  %v7131 = vpop.permute.xlu0 %7130
  %7132 = vrot.lane.b32.xlu0 %v3341, 32
  %v7133 = vpop.permute.xlu0 %7132
  %7134 = vrot.lane.b32.xlu0 %v3346, 32
  %v7135 = vpop.permute.xlu0 %7134
  %7136 = vrot.lane.b32.xlu0 %v3349, 32
  %v7137 = vpop.permute.xlu0 %7136
  %7138 = vrot.lane.b32.xlu0 %v3354, 32
  %v7139 = vpop.permute.xlu0 %7138
  %7140 = vrot.lane.b32.xlu0 %v3357, 32
  %v7141 = vpop.permute.xlu0 %7140
  %7142 = vrot.lane.b32.xlu0 %v3362, 32
  %v7143 = vpop.permute.xlu0 %7142
  %7144 = vrot.lane.b32.xlu0 %v3365, 32
  %v7145 = vpop.permute.xlu0 %7144
  %7146 = vrot.lane.b32.xlu0 %v3370, 32
  %v7147 = vpop.permute.xlu0 %7146
  %7148 = vrot.lane.b32.xlu0 %v3373, 32
  %v7149 = vpop.permute.xlu0 %7148
  %7150 = vrot.lane.b32.xlu0 %v3378, 32
  %v7151 = vpop.permute.xlu0 %7150
  %7152 = vrot.lane.b32.xlu0 %v3381, 32
  %v7153 = vpop.permute.xlu0 %7152
  %7154 = vrot.lane.b32.xlu0 %v3386, 32
  %v7155 = vpop.permute.xlu0 %7154
  %7156 = vrot.lane.b32.xlu0 %v3389, 32
  %v7157 = vpop.permute.xlu0 %7156
  %7158 = vrot.lane.b32.xlu0 %v3394, 32
  %v7159 = vpop.permute.xlu0 %7158
  %7160 = vrot.lane.b32.xlu0 %v3397, 32
  %v7161 = vpop.permute.xlu0 %7160
  %7162 = vrot.lane.b32.xlu0 %v3402, 32
  %v7163 = vpop.permute.xlu0 %7162
  %7164 = vrot.lane.b32.xlu0 %v3405, 32
  %v7165 = vpop.permute.xlu0 %7164
  %7166 = vrot.lane.b32.xlu0 %v3410, 32
  %v7167 = vpop.permute.xlu0 %7166
  %7168 = vrot.lane.b32.xlu0 %v3413, 32
  %v7169 = vpop.permute.xlu0 %7168
  %7170 = vrot.lane.b32.xlu0 %v3418, 32
  %v7171 = vpop.permute.xlu0 %7170
  %7172 = vrot.lane.b32.xlu0 %v3421, 32
  %v7173 = vpop.permute.xlu0 %7172
  %7238 = vrot.lane.b32.xlu0 %v4704, 64
  %v7239 = vpop.permute.xlu0 %7238
  %7240 = vrot.lane.b32.xlu0 %v4707, 64
  %v7241 = vpop.permute.xlu0 %7240
  %7242 = vrot.lane.b32.xlu0 %v4712, 64
  %v7243 = vpop.permute.xlu0 %7242
  %7244 = vrot.lane.b32.xlu0 %v4715, 64
  %v7245 = vpop.permute.xlu0 %7244
  %7246 = vrot.lane.b32.xlu0 %v4720, 64
  %v7247 = vpop.permute.xlu0 %7246
  %7248 = vrot.lane.b32.xlu0 %v4723, 64
  %v7249 = vpop.permute.xlu0 %7248
  %7250 = vrot.lane.b32.xlu0 %v4728, 64
  %v7251 = vpop.permute.xlu0 %7250
  %7252 = vrot.lane.b32.xlu0 %v4731, 64
  %v7253 = vpop.permute.xlu0 %7252
  %7254 = vrot.lane.b32.xlu0 %v4736, 64
  %v7255 = vpop.permute.xlu0 %7254
  %7256 = vrot.lane.b32.xlu0 %v4739, 64
  %v7257 = vpop.permute.xlu0 %7256
  %7258 = vrot.lane.b32.xlu0 %v4744, 64
  %v7259 = vpop.permute.xlu0 %7258
  %7260 = vrot.lane.b32.xlu0 %v4747, 64
  %v7261 = vpop.permute.xlu0 %7260
  %7262 = vrot.lane.b32.xlu0 %v4752, 64
  %v7263 = vpop.permute.xlu0 %7262
  %7264 = vrot.lane.b32.xlu0 %v4755, 64
  %v7265 = vpop.permute.xlu0 %7264
  %7266 = vrot.lane.b32.xlu0 %v4760, 64
  %v7267 = vpop.permute.xlu0 %7266
  %7268 = vrot.lane.b32.xlu0 %v4763, 64
  %v7269 = vpop.permute.xlu0 %7268
  %7270 = vrot.lane.b32.xlu0 %v4768, 64
  %v7271 = vpop.permute.xlu0 %7270
  %7272 = vrot.lane.b32.xlu0 %v4771, 64
  %v7273 = vpop.permute.xlu0 %7272
  %7274 = vrot.lane.b32.xlu0 %v4776, 64
  %v7275 = vpop.permute.xlu0 %7274
  %7276 = vrot.lane.b32.xlu0 %v4779, 64
  %v7277 = vpop.permute.xlu0 %7276
  %7278 = vrot.lane.b32.xlu0 %v4784, 64
  %v7279 = vpop.permute.xlu0 %7278
  %7280 = vrot.lane.b32.xlu0 %v4787, 64
  %v7281 = vpop.permute.xlu0 %7280
  %7282 = vrot.lane.b32.xlu0 %v4792, 64
  %v7283 = vpop.permute.xlu0 %7282
  %7284 = vrot.lane.b32.xlu0 %v4795, 64
  %v7285 = vpop.permute.xlu0 %7284
  %7286 = vrot.lane.b32.xlu0 %v4800, 64
  %v7287 = vpop.permute.xlu0 %7286
  %7288 = vrot.lane.b32.xlu0 %v4803, 64
  %v7289 = vpop.permute.xlu0 %7288
  %7290 = vrot.lane.b32.xlu0 %v4808, 64
  %v7291 = vpop.permute.xlu0 %7290
  %7292 = vrot.lane.b32.xlu0 %v4811, 64
  %v7293 = vpop.permute.xlu0 %7292
  %7294 = vrot.lane.b32.xlu0 %v4816, 64
  %v7295 = vpop.permute.xlu0 %7294
  %7296 = vrot.lane.b32.xlu0 %v4819, 64
  %v7297 = vpop.permute.xlu0 %7296
  %7298 = vrot.lane.b32.xlu0 %v4824, 64
  %v7299 = vpop.permute.xlu0 %7298
  %7300 = vrot.lane.b32.xlu0 %v4827, 64
  %v7301 = vpop.permute.xlu0 %7300
  %7366 = vrot.lane.b32.xlu0 %v6110, 96
  %v7367 = vpop.permute.xlu0 %7366
  %7368 = vrot.lane.b32.xlu0 %v6113, 96
  %v7369 = vpop.permute.xlu0 %7368
  %7370 = vrot.lane.b32.xlu0 %v6118, 96
  %v7371 = vpop.permute.xlu0 %7370
  %7372 = vrot.lane.b32.xlu0 %v6121, 96
  %v7373 = vpop.permute.xlu0 %7372
  %7374 = vrot.lane.b32.xlu0 %v6126, 96
  %v7375 = vpop.permute.xlu0 %7374
  %7376 = vrot.lane.b32.xlu0 %v6129, 96
  %v7377 = vpop.permute.xlu0 %7376
  %7378 = vrot.lane.b32.xlu0 %v6134, 96
  %v7379 = vpop.permute.xlu0 %7378
  %7380 = vrot.lane.b32.xlu0 %v6137, 96
  %v7381 = vpop.permute.xlu0 %7380
  %7382 = vrot.lane.b32.xlu0 %v6142, 96
  %v7383 = vpop.permute.xlu0 %7382
  %7384 = vrot.lane.b32.xlu0 %v6145, 96
  %v7385 = vpop.permute.xlu0 %7384
  %7386 = vrot.lane.b32.xlu0 %v6150, 96
  %v7387 = vpop.permute.xlu0 %7386
  %7388 = vrot.lane.b32.xlu0 %v6153, 96
  %v7389 = vpop.permute.xlu0 %7388
  %7390 = vrot.lane.b32.xlu0 %v6158, 96
  %v7391 = vpop.permute.xlu0 %7390
  %7392 = vrot.lane.b32.xlu0 %v6161, 96
  %v7393 = vpop.permute.xlu0 %7392
  %7394 = vrot.lane.b32.xlu0 %v6166, 96
  %v7395 = vpop.permute.xlu0 %7394
  %7396 = vrot.lane.b32.xlu0 %v6169, 96
  %v7397 = vpop.permute.xlu0 %7396
  %7398 = vrot.lane.b32.xlu0 %v6174, 96
  %v7399 = vpop.permute.xlu0 %7398
  %7400 = vrot.lane.b32.xlu0 %v6177, 96
  %v7401 = vpop.permute.xlu0 %7400
  %7402 = vrot.lane.b32.xlu0 %v6182, 96
  %v7403 = vpop.permute.xlu0 %7402
  %7404 = vrot.lane.b32.xlu0 %v6185, 96
  %v7405 = vpop.permute.xlu0 %7404
  %7406 = vrot.lane.b32.xlu0 %v6190, 96
  %v7407 = vpop.permute.xlu0 %7406
  %7408 = vrot.lane.b32.xlu0 %v6193, 96
  %v7409 = vpop.permute.xlu0 %7408
  %7410 = vrot.lane.b32.xlu0 %v6198, 96
  %v7411 = vpop.permute.xlu0 %7410
  %7412 = vrot.lane.b32.xlu0 %v6201, 96
  %v7413 = vpop.permute.xlu0 %7412
  %7414 = vrot.lane.b32.xlu0 %v6206, 96
  %v7415 = vpop.permute.xlu0 %7414
  %7416 = vrot.lane.b32.xlu0 %v6209, 96
  %v7417 = vpop.permute.xlu0 %7416
  %7418 = vrot.lane.b32.xlu0 %v6214, 96
  %v7419 = vpop.permute.xlu0 %7418
  %7420 = vrot.lane.b32.xlu0 %v6217, 96
  %v7421 = vpop.permute.xlu0 %7420
  %7422 = vrot.lane.b32.xlu0 %v6222, 96
  %v7423 = vpop.permute.xlu0 %7422
  %7424 = vrot.lane.b32.xlu0 %v6225, 96
  %v7425 = vpop.permute.xlu0 %7424
  %7426 = vrot.lane.b32.xlu0 %v6230, 96
  %v7427 = vpop.permute.xlu0 %7426
  %7428 = vrot.lane.b32.xlu0 %v6233, 96
  %v7429 = vpop.permute.xlu0 %7428
  %vm7462 = vcmask 261120
  %v7463 = vsel %vm7462, %v1892, %v7111
  %v7464 = vsel %vm7462, %v1895, %v7113
  %v7465 = vsel %vm7462, %v1900, %v7115
  %v7466 = vsel %vm7462, %v1903, %v7117
  %v7467 = vsel %vm7462, %v1908, %v7119
  %v7468 = vsel %vm7462, %v1911, %v7121
  %v7469 = vsel %vm7462, %v1916, %v7123
  %v7470 = vsel %vm7462, %v1919, %v7125
  %v7471 = vsel %vm7462, %v1924, %v7127
  %v7472 = vsel %vm7462, %v1927, %v7129
  %v7473 = vsel %vm7462, %v1932, %v7131
  %v7474 = vsel %vm7462, %v1935, %v7133
  %v7475 = vsel %vm7462, %v1940, %v7135
  %v7476 = vsel %vm7462, %v1943, %v7137
  %v7477 = vsel %vm7462, %v1948, %v7139
  %v7478 = vsel %vm7462, %v1951, %v7141
  %v7479 = vsel %vm7462, %v1956, %v7143
  %v7480 = vsel %vm7462, %v1959, %v7145
  %v7481 = vsel %vm7462, %v1964, %v7147
  %v7482 = vsel %vm7462, %v1967, %v7149
  %v7483 = vsel %vm7462, %v1972, %v7151
  %v7484 = vsel %vm7462, %v1975, %v7153
  %v7485 = vsel %vm7462, %v1980, %v7155
  %v7486 = vsel %vm7462, %v1983, %v7157
  %v7487 = vsel %vm7462, %v1988, %v7159
  %v7488 = vsel %vm7462, %v1991, %v7161
  %v7489 = vsel %vm7462, %v1996, %v7163
  %v7490 = vsel %vm7462, %v1999, %v7165
  %v7491 = vsel %vm7462, %v2004, %v7167
  %v7492 = vsel %vm7462, %v2007, %v7169
  %v7493 = vsel %vm7462, %v2012, %v7171
  %v7494 = vsel %vm7462, %v2015, %v7173
  %vm7495 = vcmask 523264
  %v7496 = vsel %vm7495, %v7463, %v7239
  %v7497 = vsel %vm7495, %v7464, %v7241
  %v7498 = vsel %vm7495, %v7465, %v7243
  %v7499 = vsel %vm7495, %v7466, %v7245
  %v7500 = vsel %vm7495, %v7467, %v7247
  %v7501 = vsel %vm7495, %v7468, %v7249
  %v7502 = vsel %vm7495, %v7469, %v7251
  %v7503 = vsel %vm7495, %v7470, %v7253
  %v7504 = vsel %vm7495, %v7471, %v7255
  %v7505 = vsel %vm7495, %v7472, %v7257
  %v7506 = vsel %vm7495, %v7473, %v7259
  %v7507 = vsel %vm7495, %v7474, %v7261
  %v7508 = vsel %vm7495, %v7475, %v7263
  %v7509 = vsel %vm7495, %v7476, %v7265
  %v7510 = vsel %vm7495, %v7477, %v7267
  %v7511 = vsel %vm7495, %v7478, %v7269
  %v7512 = vsel %vm7495, %v7479, %v7271
  %v7513 = vsel %vm7495, %v7480, %v7273
  %v7514 = vsel %vm7495, %v7481, %v7275
  %v7515 = vsel %vm7495, %v7482, %v7277
  %v7516 = vsel %vm7495, %v7483, %v7279
  %v7517 = vsel %vm7495, %v7484, %v7281
  %v7518 = vsel %vm7495, %v7485, %v7283
  %v7519 = vsel %vm7495, %v7486, %v7285
  %v7520 = vsel %vm7495, %v7487, %v7287
  %v7521 = vsel %vm7495, %v7488, %v7289
  %v7522 = vsel %vm7495, %v7489, %v7291
  %v7523 = vsel %vm7495, %v7490, %v7293
  %v7524 = vsel %vm7495, %v7491, %v7295
  %v7525 = vsel %vm7495, %v7492, %v7297
  %v7526 = vsel %vm7495, %v7493, %v7299
  %v7527 = vsel %vm7495, %v7494, %v7301
  %vm7528 = vcmask 785408
  %v7529 = vsel %vm7528, %v7496, %v7367
  %v7530 = vsel %vm7528, %v7497, %v7369
  %v7531 = vsel %vm7528, %v7498, %v7371
  %v7532 = vsel %vm7528, %v7499, %v7373
  %v7533 = vsel %vm7528, %v7500, %v7375
  %v7534 = vsel %vm7528, %v7501, %v7377
  %v7535 = vsel %vm7528, %v7502, %v7379
  %v7536 = vsel %vm7528, %v7503, %v7381
  %v7537 = vsel %vm7528, %v7504, %v7383
  %v7538 = vsel %vm7528, %v7505, %v7385
  %v7539 = vsel %vm7528, %v7506, %v7387
  %v7540 = vsel %vm7528, %v7507, %v7389
  %v7541 = vsel %vm7528, %v7508, %v7391
  %v7542 = vsel %vm7528, %v7509, %v7393
  %v7543 = vsel %vm7528, %v7510, %v7395
  %v7544 = vsel %vm7528, %v7511, %v7397
  %v7545 = vsel %vm7528, %v7512, %v7399
  %v7546 = vsel %vm7528, %v7513, %v7401
  %v7547 = vsel %vm7528, %v7514, %v7403
  %v7548 = vsel %vm7528, %v7515, %v7405
  %v7549 = vsel %vm7528, %v7516, %v7407
  %v7550 = vsel %vm7528, %v7517, %v7409
  %v7551 = vsel %vm7528, %v7518, %v7411
  %v7552 = vsel %vm7528, %v7519, %v7413
  %v7553 = vsel %vm7528, %v7520, %v7415
  %v7554 = vsel %vm7528, %v7521, %v7417
  %v7555 = vsel %vm7528, %v7522, %v7419
  %v7556 = vsel %vm7528, %v7523, %v7421
  %v7557 = vsel %vm7528, %v7524, %v7423
  %v7558 = vsel %vm7528, %v7525, %v7425
  %v7559 = vsel %vm7528, %v7526, %v7427
  %v7560 = vsel %vm7528, %v7527, %v7429
  %v7561 = vadd.f32 %v7046, %v7529
  %v7562 = vadd.f32 %v7047, %v7530
  %v7563 = vadd.f32 %v7048, %v7531
  %v7564 = vadd.f32 %v7049, %v7532
  %v7565 = vadd.f32 %v7050, %v7533
  %v7566 = vadd.f32 %v7051, %v7534
  %v7567 = vadd.f32 %v7052, %v7535
  %v7568 = vadd.f32 %v7053, %v7536
  %v7569 = vadd.f32 %v7054, %v7537
  %v7570 = vadd.f32 %v7055, %v7538
  %v7571 = vadd.f32 %v7056, %v7539
  %v7572 = vadd.f32 %v7057, %v7540
  %v7573 = vadd.f32 %v7058, %v7541
  %v7574 = vadd.f32 %v7059, %v7542
  %v7575 = vadd.f32 %v7060, %v7543
  %v7576 = vadd.f32 %v7061, %v7544
  %v7577 = vadd.f32 %v7062, %v7545
  %v7578 = vadd.f32 %v7063, %v7546
  %v7579 = vadd.f32 %v7064, %v7547
  %v7580 = vadd.f32 %v7065, %v7548
  %v7581 = vadd.f32 %v7066, %v7549
  %v7582 = vadd.f32 %v7067, %v7550
  %v7583 = vadd.f32 %v7068, %v7551
  %v7584 = vadd.f32 %v7069, %v7552
  %v7585 = vadd.f32 %v7070, %v7553
  %v7586 = vadd.f32 %v7071, %v7554
  %v7587 = vadd.f32 %v7072, %v7555
  %v7588 = vadd.f32 %v7073, %v7556
  %v7589 = vadd.f32 %v7074, %v7557
  %v7590 = vadd.f32 %v7075, %v7558
  %v7591 = vadd.f32 %v7076, %v7559
  %v7592 = vadd.f32 %v7077, %v7560
  %7593 = vst [vmem:[#allocation4] sm:$0xff] %v7561
  %7594 = vst [vmem:[#allocation4 + $0x8] sm:$0xff] %v7562
  %7595 = vst [vmem:[#allocation4 + $0x10] sm:$0xff] %v7563
  %7596 = vst [vmem:[#allocation4 + $0x18] sm:$0xff] %v7564
  %7597 = vst [vmem:[#allocation4 + $0x20] sm:$0xff] %v7565
  %7598 = vst [vmem:[#allocation4 + $0x28] sm:$0xff] %v7566
  %7599 = vst [vmem:[#allocation4 + $0x30] sm:$0xff] %v7567
  %7600 = vst [vmem:[#allocation4 + $0x38] sm:$0xff] %v7568
  %7601 = vst [vmem:[#allocation4 + $0x40] sm:$0xff] %v7569
  %7602 = vst [vmem:[#allocation4 + $0x48] sm:$0xff] %v7570
  %7603 = vst [vmem:[#allocation4 + $0x50] sm:$0xff] %v7571
  %7604 = vst [vmem:[#allocation4 + $0x58] sm:$0xff] %v7572
  %7605 = vst [vmem:[#allocation4 + $0x60] sm:$0xff] %v7573
  %7606 = vst [vmem:[#allocation4 + $0x68] sm:$0xff] %v7574
  %7607 = vst [vmem:[#allocation4 + $0x70] sm:$0xff] %v7575
  %7608 = vst [vmem:[#allocation4 + $0x78] sm:$0xff] %v7576
  %7609 = vst [vmem:[#allocation4 + $0x80] sm:$0xff] %v7577
  %7610 = vst [vmem:[#allocation4 + $0x88] sm:$0xff] %v7578
  %7611 = vst [vmem:[#allocation4 + $0x90] sm:$0xff] %v7579
  %7612 = vst [vmem:[#allocation4 + $0x98] sm:$0xff] %v7580
  %7613 = vst [vmem:[#allocation4 + $0xa0] sm:$0xff] %v7581
  %7614 = vst [vmem:[#allocation4 + $0xa8] sm:$0xff] %v7582
  %7615 = vst [vmem:[#allocation4 + $0xb0] sm:$0xff] %v7583
  %7616 = vst [vmem:[#allocation4 + $0xb8] sm:$0xff] %v7584
  %7617 = vst [vmem:[#allocation4 + $0xc0] sm:$0xff] %v7585
  %7618 = vst [vmem:[#allocation4 + $0xc8] sm:$0xff] %v7586
  %7619 = vst [vmem:[#allocation4 + $0xd0] sm:$0xff] %v7587
  %7620 = vst [vmem:[#allocation4 + $0xd8] sm:$0xff] %v7588
  %7621 = vst [vmem:[#allocation4 + $0xe0] sm:$0xff] %v7589
  %7622 = vst [vmem:[#allocation4 + $0xe8] sm:$0xff] %v7590
  %7623 = vst [vmem:[#allocation4 + $0xf0] sm:$0xff] %v7591
  %7624 = vst [vmem:[#allocation4 + $0xf8] sm:$0xff] %v7592
  // Predicated region
  $region34: #{guide_encoder_body_forward.5} parent=0 // pred_check
    %p7625 = pneg %p27
  $region35: #{guide_encoder_body_forward.5} parent=0 // pred_check_branch
    %7627 = sbr.rel (%p7625) target = $region37
  $region36: #{guide_encoder_body_forward.5} parent=0 // pred_region
    %v7628 = vld [vmem:[#allocation3] sm:$0xff]
    %v7629 = vld [vmem:[#allocation3 + $0x8] sm:$0xff]
    %v7630 = vld [vmem:[#allocation3 + $0x10] sm:$0xff]
    %v7631 = vld [vmem:[#allocation3 + $0x18] sm:$0xff]
    %v7632 = vld [vmem:[#allocation3 + $0x20] sm:$0xff]
    %v7633 = vld [vmem:[#allocation3 + $0x28] sm:$0xff]
    %v7634 = vld [vmem:[#allocation3 + $0x30] sm:$0xff]
    %v7635 = vld [vmem:[#allocation3 + $0x38] sm:$0xff]
    %v7636 = vld [vmem:[#allocation3 + $0x40] sm:$0xff]
    %v7637 = vld [vmem:[#allocation3 + $0x48] sm:$0xff]
    %v7638 = vld [vmem:[#allocation3 + $0x50] sm:$0xff]
    %v7639 = vld [vmem:[#allocation3 + $0x58] sm:$0xff]
    %v7640 = vld [vmem:[#allocation3 + $0x60] sm:$0xff]
    %v7641 = vld [vmem:[#allocation3 + $0x68] sm:$0xff]
    %v7642 = vld [vmem:[#allocation3 + $0x70] sm:$0xff]
    %v7643 = vld [vmem:[#allocation3 + $0x78] sm:$0xff]
    %v7644 = vld [vmem:[#allocation3 + $0x80] sm:$0xff]
    %v7645 = vld [vmem:[#allocation3 + $0x88] sm:$0xff]
    %v7646 = vld [vmem:[#allocation3 + $0x90] sm:$0xff]
    %v7647 = vld [vmem:[#allocation3 + $0x98] sm:$0xff]
    %v7648 = vld [vmem:[#allocation3 + $0xa0] sm:$0xff]
    %v7649 = vld [vmem:[#allocation3 + $0xa8] sm:$0xff]
    %v7650 = vld [vmem:[#allocation3 + $0xb0] sm:$0xff]
    %v7651 = vld [vmem:[#allocation3 + $0xb8] sm:$0xff]
    %v7652 = vld [vmem:[#allocation3 + $0xc0] sm:$0xff]
    %v7653 = vld [vmem:[#allocation3 + $0xc8] sm:$0xff]
    %v7654 = vld [vmem:[#allocation3 + $0xd0] sm:$0xff]
    %v7655 = vld [vmem:[#allocation3 + $0xd8] sm:$0xff]
    %v7656 = vld [vmem:[#allocation3 + $0xe0] sm:$0xff]
    %v7657 = vld [vmem:[#allocation3 + $0xe8] sm:$0xff]
    %v7658 = vld [vmem:[#allocation3 + $0xf0] sm:$0xff]
    %v7659 = vld [vmem:[#allocation3 + $0xf8] sm:$0xff]
    %vm7660 = vcmp.gt.f32.partialorder %v7628, 0.0
    %vm7661 = vcmp.gt.f32.partialorder %v7629, 0.0
    %vm7662 = vcmp.gt.f32.partialorder %v7630, 0.0
    %vm7663 = vcmp.gt.f32.partialorder %v7631, 0.0
    %vm7664 = vcmp.gt.f32.partialorder %v7632, 0.0
    %vm7665 = vcmp.gt.f32.partialorder %v7633, 0.0
    %vm7666 = vcmp.gt.f32.partialorder %v7634, 0.0
    %vm7667 = vcmp.gt.f32.partialorder %v7635, 0.0
    %vm7668 = vcmp.gt.f32.partialorder %v7636, 0.0
    %vm7669 = vcmp.gt.f32.partialorder %v7637, 0.0
    %vm7670 = vcmp.gt.f32.partialorder %v7638, 0.0
    %vm7671 = vcmp.gt.f32.partialorder %v7639, 0.0
    %vm7672 = vcmp.gt.f32.partialorder %v7640, 0.0
    %vm7673 = vcmp.gt.f32.partialorder %v7641, 0.0
    %vm7674 = vcmp.gt.f32.partialorder %v7642, 0.0
    %vm7675 = vcmp.gt.f32.partialorder %v7643, 0.0
    %vm7676 = vcmp.gt.f32.partialorder %v7644, 0.0
    %vm7677 = vcmp.gt.f32.partialorder %v7645, 0.0
    %vm7678 = vcmp.gt.f32.partialorder %v7646, 0.0
    %vm7679 = vcmp.gt.f32.partialorder %v7647, 0.0
    %vm7680 = vcmp.gt.f32.partialorder %v7648, 0.0
    %vm7681 = vcmp.gt.f32.partialorder %v7649, 0.0
    %vm7682 = vcmp.gt.f32.partialorder %v7650, 0.0
    %vm7683 = vcmp.gt.f32.partialorder %v7651, 0.0
    %vm7684 = vcmp.gt.f32.partialorder %v7652, 0.0
    %vm7685 = vcmp.gt.f32.partialorder %v7653, 0.0
    %vm7686 = vcmp.gt.f32.partialorder %v7654, 0.0
    %vm7687 = vcmp.gt.f32.partialorder %v7655, 0.0
    %vm7688 = vcmp.gt.f32.partialorder %v7656, 0.0
    %vm7689 = vcmp.gt.f32.partialorder %v7657, 0.0
    %vm7690 = vcmp.gt.f32.partialorder %v7658, 0.0
    %vm7691 = vcmp.gt.f32.partialorder %v7659, 0.0
    %v7692 = vrcp.pop %v7628
    %v7693 = vrcp.pop %v7629
    %v7694 = vrcp.pop %v7630
    %v7695 = vrcp.pop %v7631
    %v7696 = vrcp.pop %v7632
    %v7697 = vrcp.pop %v7633
    %v7698 = vrcp.pop %v7634
    %v7699 = vrcp.pop %v7635
    %v7700 = vrcp.pop %v7636
    %v7701 = vrcp.pop %v7637
    %v7702 = vrcp.pop %v7638
    %v7703 = vrcp.pop %v7639
    %v7704 = vrcp.pop %v7640
    %v7705 = vrcp.pop %v7641
    %v7706 = vrcp.pop %v7642
    %v7707 = vrcp.pop %v7643
    %v7708 = vrcp.pop %v7644
    %v7709 = vrcp.pop %v7645
    %v7710 = vrcp.pop %v7646
    %v7711 = vrcp.pop %v7647
    %v7712 = vrcp.pop %v7648
    %v7713 = vrcp.pop %v7649
    %v7714 = vrcp.pop %v7650
    %v7715 = vrcp.pop %v7651
    %v7716 = vrcp.pop %v7652
    %v7717 = vrcp.pop %v7653
    %v7718 = vrcp.pop %v7654
    %v7719 = vrcp.pop %v7655
    %v7720 = vrcp.pop %v7656
    %v7721 = vrcp.pop %v7657
    %v7722 = vrcp.pop %v7658
    %v7723 = vrcp.pop %v7659
    %v7724 = vsel %vm7660, %v7692, 0.0
    %v7725 = vsel %vm7661, %v7693, 0.0
    %v7726 = vsel %vm7662, %v7694, 0.0
    %v7727 = vsel %vm7663, %v7695, 0.0
    %v7728 = vsel %vm7664, %v7696, 0.0
    %v7729 = vsel %vm7665, %v7697, 0.0
    %v7730 = vsel %vm7666, %v7698, 0.0
    %v7731 = vsel %vm7667, %v7699, 0.0
    %v7732 = vsel %vm7668, %v7700, 0.0
    %v7733 = vsel %vm7669, %v7701, 0.0
    %v7734 = vsel %vm7670, %v7702, 0.0
    %v7735 = vsel %vm7671, %v7703, 0.0
    %v7736 = vsel %vm7672, %v7704, 0.0
    %v7737 = vsel %vm7673, %v7705, 0.0
    %v7738 = vsel %vm7674, %v7706, 0.0
    %v7739 = vsel %vm7675, %v7707, 0.0
    %v7740 = vsel %vm7676, %v7708, 0.0
    %v7741 = vsel %vm7677, %v7709, 0.0
    %v7742 = vsel %vm7678, %v7710, 0.0
    %v7743 = vsel %vm7679, %v7711, 0.0
    %v7744 = vsel %vm7680, %v7712, 0.0
    %v7745 = vsel %vm7681, %v7713, 0.0
    %v7746 = vsel %vm7682, %v7714, 0.0
    %v7747 = vsel %vm7683, %v7715, 0.0
    %v7748 = vsel %vm7684, %v7716, 0.0
    %v7749 = vsel %vm7685, %v7717, 0.0
    %v7750 = vsel %vm7686, %v7718, 0.0
    %v7751 = vsel %vm7687, %v7719, 0.0
    %v7752 = vsel %vm7688, %v7720, 0.0
    %v7753 = vsel %vm7689, %v7721, 0.0
    %v7754 = vsel %vm7690, %v7722, 0.0
    %v7755 = vsel %vm7691, %v7723, 0.0
    %v7756 = vld [vmem:[%s5] sm:$0xf]
    %v7758 = vsel %vm6623, %v7724, 0
    %v7761 = vsel %vm6623, %v7725, 0
    %v7764 = vsel %vm6623, %v7726, 0
    %v7767 = vsel %vm6623, %v7727, 0
    %v7770 = vsel %vm6623, %v7728, 0
    %v7773 = vsel %vm6623, %v7729, 0
    %v7776 = vsel %vm6623, %v7730, 0
    %v7779 = vsel %vm6623, %v7731, 0
    %v7782 = vsel %vm6623, %v7732, 0
    %v7785 = vsel %vm6623, %v7733, 0
    %v7788 = vsel %vm6623, %v7734, 0
    %v7791 = vsel %vm6623, %v7735, 0
    %v7794 = vsel %vm6623, %v7736, 0
    %v7797 = vsel %vm6623, %v7737, 0
    %v7800 = vsel %vm6623, %v7738, 0
    %v7803 = vsel %vm6623, %v7739, 0
    %v7806 = vsel %vm6623, %v7740, 0
    %v7809 = vsel %vm6623, %v7741, 0
    %v7812 = vsel %vm6623, %v7742, 0
    %v7815 = vsel %vm6623, %v7743, 0
    %v7818 = vsel %vm6623, %v7744, 0
    %v7821 = vsel %vm6623, %v7745, 0
    %v7824 = vsel %vm6623, %v7746, 0
    %v7827 = vsel %vm6623, %v7747, 0
    %v7830 = vsel %vm6623, %v7748, 0
    %v7833 = vsel %vm6623, %v7749, 0
    %v7836 = vsel %vm6623, %v7750, 0
    %v7839 = vsel %vm6623, %v7751, 0
    %v7842 = vsel %vm6623, %v7752, 0
    %v7845 = vsel %vm6623, %v7753, 0
    %v7848 = vsel %vm6623, %v7754, 0
    %v7851 = vsel %vm6623, %v7755, 0
    %v7854 = vsel %vm6785, %v7756, 0
    %7856 = vmatprep.subr.mxu0 0.0
    %7857 = vmatpush1.msra.mxu0 %v7854
    %7858 = vmatprep.subr.mxu0 0.0
    %7859 = vmatpush1.msra.mxu0 0.0
    %7860 = vmatprep.subr.mxu0 0.0
    %7861 = vmatpush1.msra.mxu0 0.0
    %7862 = vmatprep.subr.mxu0 0.0
    %7863 = vmatpush1.msra.mxu0 0.0
    %7864 = vmatprep.subr.mxu0 0.0
    %7865 = vmatpush1.msra.mxu0 0.0
    %7866 = vmatprep.subr.mxu0 0.0
    %7867 = vmatpush1.msra.mxu0 0.0
    %7868 = vmatprep.subr.mxu0 0.0
    %7869 = vmatpush1.msra.mxu0 0.0
    %7870 = vmatprep.subr.mxu0 0.0
    %7871 = vmatpush1.msra.mxu0 0.0
    %7872 = vmatprep.subr.mxu0 0.0
    %7873 = vmatpush1.msra.mxu0 0.0
    %7874 = vmatprep.subr.mxu0 0.0
    %7875 = vmatpush1.msra.mxu0 0.0
    %7876 = vmatprep.subr.mxu0 0.0
    %7877 = vmatpush1.msra.mxu0 0.0
    %7878 = vmatprep.subr.mxu0 0.0
    %7879 = vmatpush1.msra.mxu0 0.0
    %7880 = vmatprep.subr.mxu0 0.0
    %7881 = vmatpush1.msra.mxu0 0.0
    %7882 = vmatprep.subr.mxu0 0.0
    %7883 = vmatpush1.msra.mxu0 0.0
    %7884 = vmatprep.subr.mxu0 0.0
    %7885 = vmatpush1.msra.mxu0 0.0
    %7886 = vmatprep.subr.mxu0 0.0
    %7887 = vmatpush1.msra.mxu0 0.0
    %7888 = vmatprep.subr.mxu0 0.0
    %7889 = vmatpush1.msra.mxu0 0.0
    %7890 = vmatprep.subr.mxu0 0.0
    %7891 = vmatpush1.msra.mxu0 0.0
    %7892 = vmatprep.subr.mxu0 0.0
    %7893 = vmatpush1.msra.mxu0 0.0
    %7894 = vmatprep.subr.mxu0 0.0
    %7895 = vmatpush1.msra.mxu0 0.0
    %7896 = vmatprep.subr.mxu0 0.0
    %7897 = vmatpush1.msra.mxu0 0.0
    %7898 = vmatprep.subr.mxu0 0.0
    %7899 = vmatpush1.msra.mxu0 0.0
    %7900 = vmatprep.subr.mxu0 0.0
    %7901 = vmatpush1.msra.mxu0 0.0
    %7902 = vmatprep.subr.mxu0 0.0
    %7903 = vmatpush1.msra.mxu0 0.0
    %7904 = vmatprep.subr.mxu0 0.0
    %7905 = vmatpush1.msra.mxu0 0.0
    %7906 = vmatprep.subr.mxu0 0.0
    %7907 = vmatpush1.msra.mxu0 0.0
    %7908 = vmatprep.subr.mxu0 0.0
    %7909 = vmatpush1.msra.mxu0 0.0
    %7910 = vmatprep.subr.mxu0 0.0
    %7911 = vmatpush1.msra.mxu0 0.0
    %7912 = vmatprep.subr.mxu0 0.0
    %7913 = vmatpush1.msra.mxu0 0.0
    %7914 = vmatprep.subr.mxu0 0.0
    %7915 = vmatpush1.msra.mxu0 0.0
    %7916 = vmatprep.subr.mxu0 0.0
    %7917 = vmatpush1.msra.mxu0 0.0
    %7918 = vmatprep.subr.mxu0 0.0
    %7919 = vmatpush1.msra.mxu0 0.0
    %7920 = vmatprep.mubr.f32.mxu0 0.0
    %7921 = vmatmul.mubr.f32.gmra.mrb[0].mxu0 %v7758
    %v7922 = vpop.f32.mrb[0].mxu0
    %v7923 = vadd.f32 0.0, %v7922
    %v7924 = vpop.f32.mrb[0].mxu0
    %7925 = vmatprep.mubr.f32.mxu0 0.0
    %7926 = vmatmul.mubr.f32.gmra.mrb[0].mxu0 %v7761
    %v7927 = vpop.f32.mrb[0].mxu0
    %v7928 = vadd.f32 0.0, %v7927
    %v7929 = vpop.f32.mrb[0].mxu0
    %7930 = vmatprep.mubr.f32.mxu0 0.0
    %7931 = vmatmul.mubr.f32.gmra.mrb[0].mxu0 %v7764
    %v7932 = vpop.f32.mrb[0].mxu0
    %v7933 = vadd.f32 0.0, %v7932
    %v7934 = vpop.f32.mrb[0].mxu0
    %7935 = vmatprep.mubr.f32.mxu0 0.0
    %7936 = vmatmul.mubr.f32.gmra.mrb[0].mxu0 %v7767
    %v7937 = vpop.f32.mrb[0].mxu0
    %v7938 = vadd.f32 0.0, %v7937
    %v7939 = vpop.f32.mrb[0].mxu0
    %7940 = vmatprep.mubr.f32.mxu0 0.0
    %7941 = vmatmul.mubr.f32.gmra.mrb[0].mxu0 %v7770
    %v7942 = vpop.f32.mrb[0].mxu0
    %v7943 = vadd.f32 0.0, %v7942
    %v7944 = vpop.f32.mrb[0].mxu0
    %7945 = vmatprep.mubr.f32.mxu0 0.0
    %7946 = vmatmul.mubr.f32.gmra.mrb[0].mxu0 %v7773
    %v7947 = vpop.f32.mrb[0].mxu0
    %v7948 = vadd.f32 0.0, %v7947
    %v7949 = vpop.f32.mrb[0].mxu0
    %7950 = vmatprep.mubr.f32.mxu0 0.0
    %7951 = vmatmul.mubr.f32.gmra.mrb[0].mxu0 %v7776
    %v7952 = vpop.f32.mrb[0].mxu0
    %v7953 = vadd.f32 0.0, %v7952
    %v7954 = vpop.f32.mrb[0].mxu0
    %7955 = vmatprep.mubr.f32.mxu0 0.0
    %7956 = vmatmul.mubr.f32.gmra.mrb[0].mxu0 %v7779
    %v7957 = vpop.f32.mrb[0].mxu0
    %v7958 = vadd.f32 0.0, %v7957
    %v7959 = vpop.f32.mrb[0].mxu0
    %7960 = vmatprep.mubr.f32.mxu0 0.0
    %7961 = vmatmul.mubr.f32.gmra.mrb[0].mxu0 %v7782
    %v7962 = vpop.f32.mrb[0].mxu0
    %v7963 = vadd.f32 0.0, %v7962
    %v7964 = vpop.f32.mrb[0].mxu0
    %7965 = vmatprep.mubr.f32.mxu0 0.0
    %7966 = vmatmul.mubr.f32.gmra.mrb[0].mxu0 %v7785
    %v7967 = vpop.f32.mrb[0].mxu0
    %v7968 = vadd.f32 0.0, %v7967
    %v7969 = vpop.f32.mrb[0].mxu0
    %7970 = vmatprep.mubr.f32.mxu0 0.0
    %7971 = vmatmul.mubr.f32.gmra.mrb[0].mxu0 %v7788
    %v7972 = vpop.f32.mrb[0].mxu0
    %v7973 = vadd.f32 0.0, %v7972
    %v7974 = vpop.f32.mrb[0].mxu0
    %7975 = vmatprep.mubr.f32.mxu0 0.0
    %7976 = vmatmul.mubr.f32.gmra.mrb[0].mxu0 %v7791
    %v7977 = vpop.f32.mrb[0].mxu0
    %v7978 = vadd.f32 0.0, %v7977
    %v7979 = vpop.f32.mrb[0].mxu0
    %7980 = vmatprep.mubr.f32.mxu0 0.0
    %7981 = vmatmul.mubr.f32.gmra.mrb[0].mxu0 %v7794
    %v7982 = vpop.f32.mrb[0].mxu0
    %v7983 = vadd.f32 0.0, %v7982
    %v7984 = vpop.f32.mrb[0].mxu0
    %7985 = vmatprep.mubr.f32.mxu0 0.0
    %7986 = vmatmul.mubr.f32.gmra.mrb[0].mxu0 %v7797
    %v7987 = vpop.f32.mrb[0].mxu0
    %v7988 = vadd.f32 0.0, %v7987
    %v7989 = vpop.f32.mrb[0].mxu0
    %7990 = vmatprep.mubr.f32.mxu0 0.0
    %7991 = vmatmul.mubr.f32.gmra.mrb[0].mxu0 %v7800
    %v7992 = vpop.f32.mrb[0].mxu0
    %v7993 = vadd.f32 0.0, %v7992
    %v7994 = vpop.f32.mrb[0].mxu0
    %7995 = vmatprep.mubr.f32.mxu0 0.0
    %7996 = vmatmul.mubr.f32.gmra.mrb[0].mxu0 %v7803
    %v7997 = vpop.f32.mrb[0].mxu0
    %v7998 = vadd.f32 0.0, %v7997
    %v7999 = vpop.f32.mrb[0].mxu0
    %8000 = vmatprep.mubr.f32.mxu0 0.0
    %8001 = vmatmul.mubr.f32.gmra.mrb[0].mxu0 %v7806
    %v8002 = vpop.f32.mrb[0].mxu0
    %v8003 = vadd.f32 0.0, %v8002
    %v8004 = vpop.f32.mrb[0].mxu0
    %8005 = vmatprep.mubr.f32.mxu0 0.0
    %8006 = vmatmul.mubr.f32.gmra.mrb[0].mxu0 %v7809
    %v8007 = vpop.f32.mrb[0].mxu0
    %v8008 = vadd.f32 0.0, %v8007
    %v8009 = vpop.f32.mrb[0].mxu0
    %8010 = vmatprep.mubr.f32.mxu0 0.0
    %8011 = vmatmul.mubr.f32.gmra.mrb[0].mxu0 %v7812
    %v8012 = vpop.f32.mrb[0].mxu0
    %v8013 = vadd.f32 0.0, %v8012
    %v8014 = vpop.f32.mrb[0].mxu0
    %8015 = vmatprep.mubr.f32.mxu0 0.0
    %8016 = vmatmul.mubr.f32.gmra.mrb[0].mxu0 %v7815
    %v8017 = vpop.f32.mrb[0].mxu0
    %v8018 = vadd.f32 0.0, %v8017
    %v8019 = vpop.f32.mrb[0].mxu0
    %8020 = vmatprep.mubr.f32.mxu0 0.0
    %8021 = vmatmul.mubr.f32.gmra.mrb[0].mxu0 %v7818
    %v8022 = vpop.f32.mrb[0].mxu0
    %v8023 = vadd.f32 0.0, %v8022
    %v8024 = vpop.f32.mrb[0].mxu0
    %8025 = vmatprep.mubr.f32.mxu0 0.0
    %8026 = vmatmul.mubr.f32.gmra.mrb[0].mxu0 %v7821
    %v8027 = vpop.f32.mrb[0].mxu0
    %v8028 = vadd.f32 0.0, %v8027
    %v8029 = vpop.f32.mrb[0].mxu0
    %8030 = vmatprep.mubr.f32.mxu0 0.0
    %8031 = vmatmul.mubr.f32.gmra.mrb[0].mxu0 %v7824
    %v8032 = vpop.f32.mrb[0].mxu0
    %v8033 = vadd.f32 0.0, %v8032
    %v8034 = vpop.f32.mrb[0].mxu0
    %8035 = vmatprep.mubr.f32.mxu0 0.0
    %8036 = vmatmul.mubr.f32.gmra.mrb[0].mxu0 %v7827
    %v8037 = vpop.f32.mrb[0].mxu0
    %v8038 = vadd.f32 0.0, %v8037
    %v8039 = vpop.f32.mrb[0].mxu0
    %8040 = vmatprep.mubr.f32.mxu0 0.0
    %8041 = vmatmul.mubr.f32.gmra.mrb[0].mxu0 %v7830
    %v8042 = vpop.f32.mrb[0].mxu0
    %v8043 = vadd.f32 0.0, %v8042
    %v8044 = vpop.f32.mrb[0].mxu0
    %8045 = vmatprep.mubr.f32.mxu0 0.0
    %8046 = vmatmul.mubr.f32.gmra.mrb[0].mxu0 %v7833
    %v8047 = vpop.f32.mrb[0].mxu0
    %v8048 = vadd.f32 0.0, %v8047
    %v8049 = vpop.f32.mrb[0].mxu0
    %8050 = vmatprep.mubr.f32.mxu0 0.0
    %8051 = vmatmul.mubr.f32.gmra.mrb[0].mxu0 %v7836
    %v8052 = vpop.f32.mrb[0].mxu0
    %v8053 = vadd.f32 0.0, %v8052
    %v8054 = vpop.f32.mrb[0].mxu0
    %8055 = vmatprep.mubr.f32.mxu0 0.0
    %8056 = vmatmul.mubr.f32.gmra.mrb[0].mxu0 %v7839
    %v8057 = vpop.f32.mrb[0].mxu0
    %v8058 = vadd.f32 0.0, %v8057
    %v8059 = vpop.f32.mrb[0].mxu0
    %8060 = vmatprep.mubr.f32.mxu0 0.0
    %8061 = vmatmul.mubr.f32.gmra.mrb[0].mxu0 %v7842
    %v8062 = vpop.f32.mrb[0].mxu0
    %v8063 = vadd.f32 0.0, %v8062
    %v8064 = vpop.f32.mrb[0].mxu0
    %8065 = vmatprep.mubr.f32.mxu0 0.0
    %8066 = vmatmul.mubr.f32.gmra.mrb[0].mxu0 %v7845
    %v8067 = vpop.f32.mrb[0].mxu0
    %v8068 = vadd.f32 0.0, %v8067
    %v8069 = vpop.f32.mrb[0].mxu0
    %8070 = vmatprep.mubr.f32.mxu0 0.0
    %8071 = vmatmul.mubr.f32.gmra.mrb[0].mxu0 %v7848
    %v8072 = vpop.f32.mrb[0].mxu0
    %v8073 = vadd.f32 0.0, %v8072
    %v8074 = vpop.f32.mrb[0].mxu0
    %8075 = vmatprep.mubr.f32.mxu0 0.0
    %8076 = vmatmul.mubr.f32.gmra.mrb[0].mxu0 %v7851
    %v8077 = vpop.f32.mrb[0].mxu0
    %v8078 = vadd.f32 0.0, %v8077
    %v8079 = vpop.f32.mrb[0].mxu0
    %8080 = vdwg.mxu0
    %v8081 = vld [vmem:[#allocation4] sm:$0xff]
    %v8082 = vld [vmem:[#allocation4 + $0x8] sm:$0xff]
    %v8083 = vld [vmem:[#allocation4 + $0x10] sm:$0xff]
    %v8084 = vld [vmem:[#allocation4 + $0x18] sm:$0xff]
    %v8085 = vld [vmem:[#allocation4 + $0x20] sm:$0xff]
    %v8086 = vld [vmem:[#allocation4 + $0x28] sm:$0xff]
    %v8087 = vld [vmem:[#allocation4 + $0x30] sm:$0xff]
    %v8088 = vld [vmem:[#allocation4 + $0x38] sm:$0xff]
    %v8089 = vld [vmem:[#allocation4 + $0x40] sm:$0xff]
    %v8090 = vld [vmem:[#allocation4 + $0x48] sm:$0xff]
    %v8091 = vld [vmem:[#allocation4 + $0x50] sm:$0xff]
    %v8092 = vld [vmem:[#allocation4 + $0x58] sm:$0xff]
    %v8093 = vld [vmem:[#allocation4 + $0x60] sm:$0xff]
    %v8094 = vld [vmem:[#allocation4 + $0x68] sm:$0xff]
    %v8095 = vld [vmem:[#allocation4 + $0x70] sm:$0xff]
    %v8096 = vld [vmem:[#allocation4 + $0x78] sm:$0xff]
    %v8097 = vld [vmem:[#allocation4 + $0x80] sm:$0xff]
    %v8098 = vld [vmem:[#allocation4 + $0x88] sm:$0xff]
    %v8099 = vld [vmem:[#allocation4 + $0x90] sm:$0xff]
    %v8100 = vld [vmem:[#allocation4 + $0x98] sm:$0xff]
    %v8101 = vld [vmem:[#allocation4 + $0xa0] sm:$0xff]
    %v8102 = vld [vmem:[#allocation4 + $0xa8] sm:$0xff]
    %v8103 = vld [vmem:[#allocation4 + $0xb0] sm:$0xff]
    %v8104 = vld [vmem:[#allocation4 + $0xb8] sm:$0xff]
    %v8105 = vld [vmem:[#allocation4 + $0xc0] sm:$0xff]
    %v8106 = vld [vmem:[#allocation4 + $0xc8] sm:$0xff]
    %v8107 = vld [vmem:[#allocation4 + $0xd0] sm:$0xff]
    %v8108 = vld [vmem:[#allocation4 + $0xd8] sm:$0xff]
    %v8109 = vld [vmem:[#allocation4 + $0xe0] sm:$0xff]
    %v8110 = vld [vmem:[#allocation4 + $0xe8] sm:$0xff]
    %v8111 = vld [vmem:[#allocation4 + $0xf0] sm:$0xff]
    %v8112 = vld [vmem:[#allocation4 + $0xf8] sm:$0xff]
    %v8113 = vmul.f32 %v8081, %v7923
    %v8114 = vmul.f32 %v8082, %v7928
    %v8115 = vmul.f32 %v8083, %v7933
    %v8116 = vmul.f32 %v8084, %v7938
    %v8117 = vmul.f32 %v8085, %v7943
    %v8118 = vmul.f32 %v8086, %v7948
    %v8119 = vmul.f32 %v8087, %v7953
    %v8120 = vmul.f32 %v8088, %v7958
    %v8121 = vmul.f32 %v8089, %v7963
    %v8122 = vmul.f32 %v8090, %v7968
    %v8123 = vmul.f32 %v8091, %v7973
    %v8124 = vmul.f32 %v8092, %v7978
    %v8125 = vmul.f32 %v8093, %v7983
    %v8126 = vmul.f32 %v8094, %v7988
    %v8127 = vmul.f32 %v8095, %v7993
    %v8128 = vmul.f32 %v8096, %v7998
    %v8129 = vmul.f32 %v8097, %v8003
    %v8130 = vmul.f32 %v8098, %v8008
    %v8131 = vmul.f32 %v8099, %v8013
    %v8132 = vmul.f32 %v8100, %v8018
    %v8133 = vmul.f32 %v8101, %v8023
    %v8134 = vmul.f32 %v8102, %v8028
    %v8135 = vmul.f32 %v8103, %v8033
    %v8136 = vmul.f32 %v8104, %v8038
    %v8137 = vmul.f32 %v8105, %v8043
    %v8138 = vmul.f32 %v8106, %v8048
    %v8139 = vmul.f32 %v8107, %v8053
    %v8140 = vmul.f32 %v8108, %v8058
    %v8141 = vmul.f32 %v8109, %v8063
    %v8142 = vmul.f32 %v8110, %v8068
    %v8143 = vmul.f32 %v8111, %v8073
    %v8144 = vmul.f32 %v8112, %v8078
    %v8145 = vld [vmem:[%s6] sm:$0x1]
    %v8147 = vlaneseq
    %v8148 = vshrl.u32 %v8147, 7
    %v8149 = vsub.s32 0, %v8148
    %v8150 = vrot.slane %v8145, %v8149
    %v8152 = vadd.f32 %v8113, %v8150
    %v8153 = vadd.f32 %v8114, %v8150
    %v8154 = vadd.f32 %v8115, %v8150
    %v8155 = vadd.f32 %v8116, %v8150
    %v8156 = vadd.f32 %v8117, %v8150
    %v8157 = vadd.f32 %v8118, %v8150
    %v8158 = vadd.f32 %v8119, %v8150
    %v8159 = vadd.f32 %v8120, %v8150
    %v8160 = vadd.f32 %v8121, %v8150
    %v8161 = vadd.f32 %v8122, %v8150
    %v8162 = vadd.f32 %v8123, %v8150
    %v8163 = vadd.f32 %v8124, %v8150
    %v8164 = vadd.f32 %v8125, %v8150
    %v8165 = vadd.f32 %v8126, %v8150
    %v8166 = vadd.f32 %v8127, %v8150
    %v8167 = vadd.f32 %v8128, %v8150
    %v8168 = vadd.f32 %v8129, %v8150
    %v8169 = vadd.f32 %v8130, %v8150
    %v8170 = vadd.f32 %v8131, %v8150
    %v8171 = vadd.f32 %v8132, %v8150
    %v8172 = vadd.f32 %v8133, %v8150
    %v8173 = vadd.f32 %v8134, %v8150
    %v8174 = vadd.f32 %v8135, %v8150
    %v8175 = vadd.f32 %v8136, %v8150
    %v8176 = vadd.f32 %v8137, %v8150
    %v8177 = vadd.f32 %v8138, %v8150
    %v8178 = vadd.f32 %v8139, %v8150
    %v8179 = vadd.f32 %v8140, %v8150
    %v8180 = vadd.f32 %v8141, %v8150
    %v8181 = vadd.f32 %v8142, %v8150
    %v8182 = vadd.f32 %v8143, %v8150
    %v8183 = vadd.f32 %v8144, %v8150
    %8184 = vst [vmem:[%s7] sm:$0xff] %v8152
    %8185 = vst [vmem:[%s7 + $0x8] sm:$0xff] %v8153
    %8186 = vst [vmem:[%s7 + $0x10] sm:$0xff] %v8154
    %8187 = vst [vmem:[%s7 + $0x18] sm:$0xff] %v8155
    %8188 = vst [vmem:[%s7 + $0x20] sm:$0xff] %v8156
    %8189 = vst [vmem:[%s7 + $0x28] sm:$0xff] %v8157
    %8190 = vst [vmem:[%s7 + $0x30] sm:$0xff] %v8158
    %8191 = vst [vmem:[%s7 + $0x38] sm:$0xff] %v8159
    %8192 = vst [vmem:[%s7 + $0x40] sm:$0xff] %v8160
    %8193 = vst [vmem:[%s7 + $0x48] sm:$0xff] %v8161
    %8194 = vst [vmem:[%s7 + $0x50] sm:$0xff] %v8162
    %8195 = vst [vmem:[%s7 + $0x58] sm:$0xff] %v8163
    %8196 = vst [vmem:[%s7 + $0x60] sm:$0xff] %v8164
    %8197 = vst [vmem:[%s7 + $0x68] sm:$0xff] %v8165
    %8198 = vst [vmem:[%s7 + $0x70] sm:$0xff] %v8166
    %8199 = vst [vmem:[%s7 + $0x78] sm:$0xff] %v8167
    %8200 = vst [vmem:[%s7 + $0x80] sm:$0xff] %v8168
    %8201 = vst [vmem:[%s7 + $0x88] sm:$0xff] %v8169
    %8202 = vst [vmem:[%s7 + $0x90] sm:$0xff] %v8170
    %8203 = vst [vmem:[%s7 + $0x98] sm:$0xff] %v8171
    %8204 = vst [vmem:[%s7 + $0xa0] sm:$0xff] %v8172
    %8205 = vst [vmem:[%s7 + $0xa8] sm:$0xff] %v8173
    %8206 = vst [vmem:[%s7 + $0xb0] sm:$0xff] %v8174
    %8207 = vst [vmem:[%s7 + $0xb8] sm:$0xff] %v8175
    %8208 = vst [vmem:[%s7 + $0xc0] sm:$0xff] %v8176
    %8209 = vst [vmem:[%s7 + $0xc8] sm:$0xff] %v8177
    %8210 = vst [vmem:[%s7 + $0xd0] sm:$0xff] %v8178
    %8211 = vst [vmem:[%s7 + $0xd8] sm:$0xff] %v8179
    %8212 = vst [vmem:[%s7 + $0xe0] sm:$0xff] %v8180
    %8213 = vst [vmem:[%s7 + $0xe8] sm:$0xff] %v8181
    %8214 = vst [vmem:[%s7 + $0xf0] sm:$0xff] %v8182
    %8215 = vst [vmem:[%s7 + $0xf8] sm:$0xff] %v8183
  $region37: #{guide_encoder_body_forward.5} parent=0 // pred_fallthru
    _
  // Predicated region
  $region38: #{guide_encoder_body_forward.5} parent=0 // pred_check
    _
  $region39: #{guide_encoder_body_forward.5} parent=0 // pred_check_branch
    %8217 = sbr.rel (0) target = $region41
  $region40: #{guide_encoder_body_forward.5} parent=0 // pred_region
    _
  $region41: #{guide_encoder_body_forward.5} parent=0 // pred_fallthru
    _
  // Predicated region
  $region42: #{guide_encoder_body_forward.5} parent=0 // pred_check
    _
  $region43: #{guide_encoder_body_forward.5} parent=0 // pred_check_branch
    %8219 = sbr.rel (0) target = $region45
  $region44: #{guide_encoder_body_forward.5} parent=0 // pred_region
    _
  $region45: #{guide_encoder_body_forward.5} parent=0 // pred_fallthru
    _

</llo_original>
